<compile_context>
chip_gen: v7x
topology: tpu7x:2x2x1
jax: 0.10.0
libtpu: 0.0.40
codegen_flags: <defaults>
</compile_context>

<pallas_src>
import jax
import jax.numpy as jnp
import numpy as np
from jax.experimental import pallas as pl
from jax.experimental.pallas import tpu as pltpu

NODE_DIM = 128
RELATION_DIM = 404                        # == GRU hidden size (unpadded)
INPUT_SIZE_GRU = 3 * NODE_DIM             # 384
NEIGHBOR_DIM = NODE_DIM + RELATION_DIM    # 532
HIDDEN = RELATION_DIM

H_PAD = 512      # hidden padded to a multiple of 128
NBR_PAD = 640    # neighbor feature dim padded to a multiple of 128
MAX_N = 8        # max neighbors per step (one sublane tile)
OUT_PAD = 128    # lane-dense output width


# ----------------------------- fused kernel -----------------------------
def _policy_kernel(counts_ref, action_ref,                 # SMEM scalars
                   query_ref, node_ref, nbr_ref,           # activations (VMEM)
                   wi_ref, wh_ref, bi_ref, bh_ref,         # GRU (gates concatenated)
                   fa_w_ref, fa_b_ref, fs_w_ref, fs_b_ref, fp_w_ref, fp_b_ref,
                   out_ref):
    num_nodes = node_ref.shape[0]
    max_n = MAX_N
    h_pad = query_ref.shape[1]
    node_dim = node_ref.shape[1]

    def mm(a, w):           # bf16 MXU matmul, f32 accumulation
        return jnp.dot(a.astype(jnp.bfloat16), w,
                       preferred_element_type=jnp.float32)

    # ---------------- hoisted FA: one wide matmul for every step's neighbors ----------------
    # nbr_ref is pre-flattened (num_nodes*MAX_N, NBR_PAD) bf16.
    hnts_all = mm(nbr_ref[...], fa_w_ref[...]) + fa_b_ref[...]        # (num_nodes*MAX_N, 128) f32

    rows = jax.lax.broadcasted_iota(jnp.int32, (max_n, node_dim), 0)  # hoisted once
    zeros_row = jnp.zeros((1, node_dim), jnp.float32)

    hAt_rows = []            # _Max per step (also used by the head)
    hat_rows = []            # taken-action row per non-final step
    for i in range(num_nodes):
        hnts_i = hnts_all[i * max_n:(i + 1) * max_n, :]
        hAt_rows.append(jnp.max(jnp.where(rows < counts_ref[i], hnts_i, -jnp.inf),
                                axis=0, keepdims=True))
        if i < num_nodes - 1:
            hat_rows.append(jnp.sum(jnp.where(rows == action_ref[i], hnts_i, 0.0),
                                    axis=0, keepdims=True))

    # ---------------- hoisted GRU-input matmul: GI = X @ W_i + b_i (M = num_nodes) ----------------
    x_all = jnp.concatenate(
        [jnp.concatenate([zeros_row] + hAt_rows[:-1], axis=0),        # hAt_{i-1} (0 for step 0)
         jnp.concatenate([zeros_row] + hat_rows, axis=0),             # hat_{i-1} (0 for step 0)
         node_ref[...]], axis=1)                                      # (num_nodes, 384)
    gi_all = mm(x_all, wi_ref[...]) + bi_ref[...]                     # (num_nodes, 3*H_PAD)

    # ---------------- serial GRU recurrence: only h @ W_h stays on the critical path ----------------
    wh = wh_ref[...]
    bh = bh_ref[...]
    h = query_ref[...]                                                # (1, H_PAD) f32
    for i in range(num_nodes):
        gi = gi_all[i:i + 1, :]
        gh = mm(h, wh) + bh
        i_r, i_z, i_n = gi[:, :h_pad], gi[:, h_pad:2 * h_pad], gi[:, 2 * h_pad:]
        h_r, h_z, h_n = gh[:, :h_pad], gh[:, h_pad:2 * h_pad], gh[:, 2 * h_pad:]
        r = jax.nn.sigmoid(i_r + h_r)
        z = jax.nn.sigmoid(i_z + h_z)
        n = jnp.tanh(i_n + r * h_n)
        h = (1.0 - z) * n + z * h                                     # padded lanes stay 0

    # ---------------- head: FS, FP, uks = hSt @ hnts^T, masked joint softmax ----------------
    hst = mm(h, fs_w_ref[...]) + fs_b_ref[...]                        # (1, 128)
    hAt_last = hAt_rows[-1]                                           # (1, 128)
    u0 = mm(jnp.concatenate([hst, hAt_last], axis=1), fp_w_ref[...]) + fp_b_ref[...]   # (1, 1)
    hnts_last = hnts_all[(num_nodes - 1) * max_n:, :]                 # (MAX_N, 128)
    uks = jax.lax.dot_general(hst.astype(jnp.bfloat16), hnts_last.astype(jnp.bfloat16),
                              (((1,), (1,)), ((), ())),
                              preferred_element_type=jnp.float32)     # (1, MAX_N)
    lane_valid = (jax.lax.broadcasted_iota(jnp.int32, (1, max_n), 1)
                  < counts_ref[num_nodes - 1])
    uks = jnp.where(lane_valid, uks, -jnp.inf)

    m = jnp.maximum(u0, jnp.max(uks, axis=1, keepdims=True))          # (1, 1)
    e0 = jnp.exp(u0 - m)                                              # (1, 1)
    eks = jnp.where(lane_valid, jnp.exp(uks - m), 0.0)                # (1, MAX_N)
    denom = e0 + jnp.sum(eks, axis=1, keepdims=True)
    inv = pl.reciprocal(denom, approx=False)                          # exact: probs must sum to 1
    # single lane-dense (1, 128) store: [p0 | pks | zero pad]
    out_ref[...] = jnp.concatenate(
        [e0 * inv, eks * inv,
         jnp.zeros((1, OUT_PAD - 1 - max_n), jnp.float32)], axis=1)


# ----------------------------- wrapper -----------------------------
def policy_forward_pallas(query, node_embs, neighbors, action_idx, packed):
    num_nodes = len(node_embs)
    assert len(neighbors) == num_nodes and len(action_idx) == num_nodes - 1
    assert max(nb.shape[0] for nb in neighbors) <= MAX_N
    n_last = neighbors[-1].shape[0]

    query_pad = jnp.pad(query, ((0, 0), (0, H_PAD - query.shape[1])))
    node_arr = jnp.concatenate(node_embs, axis=0)                     # (num_nodes, 128) f32
    # neighbors: zero-pad to (MAX_N, NBR_PAD) per step, flatten, pre-cast to bf16 (MXU LHS only)
    nbr_arr = jnp.concatenate(
        [jnp.pad(nb, ((0, MAX_N - nb.shape[0]), (0, NBR_PAD - nb.shape[1])))
         for nb in neighbors], axis=0).astype(jnp.bfloat16)           # (num_nodes*MAX_N, NBR_PAD)
    counts = jnp.asarray([nb.shape[0] for nb in neighbors], dtype=jnp.int32)
    action = jnp.asarray(list(action_idx) + [0] * (num_nodes - len(action_idx)),
                         dtype=jnp.int32)

    args = (counts, action, query_pad, node_arr, nbr_arr,
            packed['wi'], packed['wh'], packed['bi'], packed['bh'],
            packed['fa_w'], packed['fa_b'], packed['fs_w'], packed['fs_b'],
            packed['fp_w'], packed['fp_b'])
    smem = pl.BlockSpec(memory_space=pltpu.MemorySpace.SMEM)
    vmem = pl.BlockSpec(memory_space=pltpu.MemorySpace.VMEM)

    out = pl.pallas_call(
        _policy_kernel,
        out_shape=jax.ShapeDtypeStruct((1, OUT_PAD), jnp.float32),
        in_specs=[smem, smem] + [vmem] * (len(args) - 2),
        out_specs=vmem,
    )(*args)
    return out[:, :n_last + 1]                                        # (1, n_last + 1)


# ----------------------- parameter construction / packing -----------------------
def make_params(key):
    ks = jax.random.split(key, 20)
    s = 0.05

    def w(k, shape):
        return jax.random.normal(k, shape, jnp.float32) * s

    gru = {
        'wir': w(ks[0], (INPUT_SIZE_GRU, HIDDEN)), 'wiz': w(ks[1], (INPUT_SIZE_GRU, HIDDEN)),
        'win': w(ks[2], (INPUT_SIZE_GRU, HIDDEN)),
        'whr': w(ks[3], (HIDDEN, HIDDEN)), 'whz': w(ks[4], (HIDDEN, HIDDEN)),
        'whn': w(ks[5], (HIDDEN, HIDDEN)),
        'bir': w(ks[6], (1, HIDDEN)), 'biz': w(ks[7], (1, HIDDEN)), 'bin': w(ks[8], (1, HIDDEN)),
        'bhr': w(ks[9], (1, HIDDEN)), 'bhz': w(ks[10], (1, HIDDEN)), 'bhn': w(ks[11], (1, HIDDEN)),
    }
    return {
        'gru': gru,
        'fa_w': w(ks[12], (NEIGHBOR_DIM, NODE_DIM)), 'fa_b': w(ks[13], (1, NODE_DIM)),
        'fs_w': w(ks[14], (HIDDEN, NODE_DIM)),       'fs_b': w(ks[15], (1, NODE_DIM)),
        'fp_w_s': w(ks[16], (NODE_DIM, 1)),          'fp_w_a': w(ks[17], (NODE_DIM, 1)),
        'fp_b': w(ks[18], (1, 1)),
    }


def pack_params(p):
    """Zero-pad to 128-multiples, concatenate GRU gates, cast matrices to bf16."""
    def pad_to(x, rows, cols):
        return jnp.pad(x, ((0, rows - x.shape[0]), (0, cols - x.shape[1])))

    g = p['gru']
    wi = jnp.concatenate([pad_to(g['wir'], INPUT_SIZE_GRU, H_PAD),
                          pad_to(g['wiz'], INPUT_SIZE_GRU, H_PAD),
                          pad_to(g['win'], INPUT_SIZE_GRU, H_PAD)], axis=1)
    wh = jnp.concatenate([pad_to(g['whr'], H_PAD, H_PAD),
                          pad_to(g['whz'], H_PAD, H_PAD),
                          pad_to(g['whn'], H_PAD, H_PAD)], axis=1)
    bi = jnp.concatenate([pad_to(g['bir'], 1, H_PAD),
                          pad_to(g['biz'], 1, H_PAD),
                          pad_to(g['bin'], 1, H_PAD)], axis=1)
    bh = jnp.concatenate([pad_to(g['bhr'], 1, H_PAD),
                          pad_to(g['bhz'], 1, H_PAD),
                          pad_to(g['bhn'], 1, H_PAD)], axis=1)
    return {
        'wi': wi.astype(jnp.bfloat16), 'wh': wh.astype(jnp.bfloat16),
        'bi': bi, 'bh': bh,
        'fa_w': pad_to(p['fa_w'], NBR_PAD, NODE_DIM).astype(jnp.bfloat16),
        'fa_b': p['fa_b'],
        'fs_w': pad_to(p['fs_w'], H_PAD, NODE_DIM).astype(jnp.bfloat16),
        'fs_b': p['fs_b'],
        'fp_w': jnp.concatenate([p['fp_w_s'], p['fp_w_a']], axis=0).astype(jnp.bfloat16),
        'fp_b': p['fp_b'],
    }


# ------------- pure-JAX reference (same math, same bf16 weight quantization) -------------
def _mmq(a, w):
    return jnp.dot(a.astype(jnp.bfloat16), w.astype(jnp.bfloat16),
                   preferred_element_type=jnp.float32)


def _gru_ref(x, h, g):
    i_r = _mmq(x, g['wir']) + g['bir']
    i_z = _mmq(x, g['wiz']) + g['biz']
    i_n = _mmq(x, g['win']) + g['bin']
    h_r = _mmq(h, g['whr']) + g['bhr']
    h_z = _mmq(h, g['whz']) + g['bhz']
    h_n = _mmq(h, g['whn']) + g['bhn']
    r = jax.nn.sigmoid(i_r + h_r)
    z = jax.nn.sigmoid(i_z + h_z)
    n = jnp.tanh(i_n + r * h_n)
    return (1.0 - z) * n + z * h


def policy_forward_ref(query, node_embs, neighbors, action_idx, p):
    zeros = jnp.zeros((1, 2 * NODE_DIM), jnp.float32)
    qt = _gru_ref(jnp.concatenate([zeros, node_embs[0]], 1), query, p['gru'])
    for i in range(len(node_embs) - 1):
        hnts = _mmq(neighbors[i], p['fa_w']) + p['fa_b']
        hAt_ = jnp.max(hnts, axis=0, keepdims=True)
        hat_ = hnts[action_idx[i]:action_idx[i] + 1]
        qt = _gru_ref(jnp.concatenate([hAt_, hat_, node_embs[i + 1]], 1), qt, p['gru'])
    hSt = _mmq(qt, p['fs_w']) + p['fs_b']
    hnts = _mmq(neighbors[-1], p['fa_w']) + p['fa_b']
    hAt = jnp.max(hnts, axis=0, keepdims=True)
    fp_w = jnp.concatenate([p['fp_w_s'], p['fp_w_a']], axis=0)
    u0 = _mmq(jnp.concatenate([hSt, hAt], 1), fp_w) + p['fp_b']
    uks = _mmq(hSt, hnts.T)
    logits = jnp.concatenate([u0, uks], axis=1)
    return jax.nn.softmax(logits, axis=1)


if __name__ == "__main__":
    key = jax.random.PRNGKey(0)
    k_par, k_q, k_n, k_nb = jax.random.split(key, 4)

    params = make_params(k_par)
    packed = pack_params(params)

    # dataX equivalent: query edge embedding, 3 path-node embeddings, per-node
    # neighbor (node||relation) rows, and the taken-action local index per step.
    query = jax.random.normal(k_q, (1, RELATION_DIM), jnp.float32)
    node_keys = jax.random.split(k_n, 3)
    node_embs = [jax.random.normal(nk, (1, NODE_DIM), jnp.float32) for nk in node_keys]
    nbr_counts = [4, 5, 6]
    nbr_keys = jax.random.split(k_nb, 3)
    neighbors = [jax.random.normal(nk, (c, NEIGHBOR_DIM), jnp.float32)
                 for nk, c in zip(nbr_keys, nbr_counts)]
    action_idx = [1, 2]                              # local taken-action index per step
    action_candidate = [-1, 10, 11, 12, 13, 14, 15]  # analogue of self.action_candidate

    probs = policy_forward_pallas(query, node_embs, neighbors, action_idx, packed)
    probs = jax.block_until_ready(probs)

    ref = policy_forward_ref(query, node_embs, neighbors, action_idx, params)
    np.testing.assert_allclose(np.asarray(probs), np.asarray(ref), rtol=2e-3, atol=5e-5)
    assert probs.shape == (1, nbr_counts[-1] + 1)
    np.testing.assert_allclose(float(jnp.sum(probs)), 1.0, rtol=1e-5)

    print("KERNEL_OK")
</pallas_src>

<mosaic_0001>
module attributes {stable_mosaic.version = 11 : i64} {
  func.func @_policy_kernel(%arg0: memref<3xi32, #tpu.memory_space<smem>>, %arg1: memref<3xi32, #tpu.memory_space<smem>>, %arg2: memref<1x512xf32, #tpu.memory_space<vmem>>, %arg3: memref<3x128xf32, #tpu.memory_space<vmem>>, %arg4: memref<24x640xbf16, #tpu.memory_space<vmem>>, %arg5: memref<384x1536xbf16, #tpu.memory_space<vmem>>, %arg6: memref<512x1536xbf16, #tpu.memory_space<vmem>>, %arg7: memref<1x1536xf32, #tpu.memory_space<vmem>>, %arg8: memref<1x1536xf32, #tpu.memory_space<vmem>>, %arg9: memref<640x128xbf16, #tpu.memory_space<vmem>>, %arg10: memref<1x128xf32, #tpu.memory_space<vmem>>, %arg11: memref<512x128xbf16, #tpu.memory_space<vmem>>, %arg12: memref<1x128xf32, #tpu.memory_space<vmem>>, %arg13: memref<256x1xbf16, #tpu.memory_space<vmem>>, %arg14: memref<1x1xf32, #tpu.memory_space<vmem>>, %arg15: memref<1x128xf32, #tpu.memory_space<vmem>>) attributes {dimension_semantics = [], scalar_prefetch = 0 : i64, scratch_operands = 0 : i64, tpu.core_type = #tpu.core_type<tc>} {
    %c0 = arith.constant 0 : index
    %c0_0 = arith.constant 0 : index
    %0 = vector.load %arg4[%c0, %c0_0] : memref<24x640xbf16, #tpu.memory_space<vmem>>, vector<24x640xbf16>
    %c0_1 = arith.constant 0 : index
    %c0_2 = arith.constant 0 : index
    %1 = vector.load %arg9[%c0_1, %c0_2] : memref<640x128xbf16, #tpu.memory_space<vmem>>, vector<640x128xbf16>
    %cst = arith.constant dense<0.000000e+00> : vector<24x128xf32>
    %2 = tpu.matmul %0, %1, %cst {dimension_numbers = #tpu.dot_dimension_numbers<[1], [0], [0], [1], [0, 0, 1, 1], [], []>} : vector<24x640xbf16>, vector<640x128xbf16>, vector<24x128xf32> -> vector<24x128xf32>
    %c0_3 = arith.constant 0 : index
    %c0_4 = arith.constant 0 : index
    %3 = vector.load %arg10[%c0_3, %c0_4] : memref<1x128xf32, #tpu.memory_space<vmem>>, vector<1x128xf32>
    %4 = vector.broadcast %3 : vector<1x128xf32> to vector<24x128xf32>
    %5 = arith.addf %2, %4 : vector<24x128xf32>
    %6 = tpu.iota {dimensions = array<i32: 0>} : vector<8x128xi32>
    %cst_5 = arith.constant 0.000000e+00 : f32
    %7 = vector.broadcast %cst_5 : f32 to vector<1x128xf32>
    %8 = vector.extract_strided_slice %5 {offsets = [0, 0], sizes = [8, 128], strides = [1, 1]} : vector<24x128xf32> to vector<8x128xf32>
    %c0_6 = arith.constant 0 : index
    %9 = memref.load %arg0[%c0_6] : memref<3xi32, #tpu.memory_space<smem>>
    %10 = vector.broadcast %9 : i32 to vector<8x128xi32>
    %11 = arith.cmpi slt, %6, %10 : vector<8x128xi32>
    %cst_7 = arith.constant 0xFF800000 : f32
    %12 = vector.broadcast %cst_7 : f32 to vector<8x128xf32>
    %13 = arith.select %11, %8, %12 : vector<8x128xi1>, vector<8x128xf32>
    %cst_8 = arith.constant dense<0xFF800000> : vector<128xf32>
    %14 = vector.multi_reduction <maximumf>, %13, %cst_8 [0] : vector<8x128xf32> to vector<128xf32>
    %15 = vector.shape_cast %14 : vector<128xf32> to vector<1x128xf32>
    %c0_9 = arith.constant 0 : index
    %16 = memref.load %arg1[%c0_9] : memref<3xi32, #tpu.memory_space<smem>>
    %17 = vector.broadcast %16 : i32 to vector<8x128xi32>
    %18 = arith.cmpi eq, %6, %17 : vector<8x128xi32>
    %cst_10 = arith.constant 0.000000e+00 : f32
    %19 = vector.broadcast %cst_10 : f32 to vector<8x128xf32>
    %20 = arith.select %18, %8, %19 : vector<8x128xi1>, vector<8x128xf32>
    %cst_11 = arith.constant dense<0.000000e+00> : vector<128xf32>
    %21 = vector.multi_reduction <add>, %20, %cst_11 [0] : vector<8x128xf32> to vector<128xf32>
    %22 = vector.shape_cast %21 : vector<128xf32> to vector<1x128xf32>
    %23 = vector.extract_strided_slice %5 {offsets = [8, 0], sizes = [8, 128], strides = [1, 1]} : vector<24x128xf32> to vector<8x128xf32>
    %c1 = arith.constant 1 : index
    %24 = memref.load %arg0[%c1] : memref<3xi32, #tpu.memory_space<smem>>
    %25 = vector.broadcast %24 : i32 to vector<8x128xi32>
    %26 = arith.cmpi slt, %6, %25 : vector<8x128xi32>
    %cst_12 = arith.constant 0xFF800000 : f32
    %27 = vector.broadcast %cst_12 : f32 to vector<8x128xf32>
    %28 = arith.select %26, %23, %27 : vector<8x128xi1>, vector<8x128xf32>
    %cst_13 = arith.constant dense<0xFF800000> : vector<128xf32>
    %29 = vector.multi_reduction <maximumf>, %28, %cst_13 [0] : vector<8x128xf32> to vector<128xf32>
    %30 = vector.shape_cast %29 : vector<128xf32> to vector<1x128xf32>
    %c1_14 = arith.constant 1 : index
    %31 = memref.load %arg1[%c1_14] : memref<3xi32, #tpu.memory_space<smem>>
    %32 = vector.broadcast %31 : i32 to vector<8x128xi32>
    %33 = arith.cmpi eq, %6, %32 : vector<8x128xi32>
    %cst_15 = arith.constant 0.000000e+00 : f32
    %34 = vector.broadcast %cst_15 : f32 to vector<8x128xf32>
    %35 = arith.select %33, %23, %34 : vector<8x128xi1>, vector<8x128xf32>
    %cst_16 = arith.constant dense<0.000000e+00> : vector<128xf32>
    %36 = vector.multi_reduction <add>, %35, %cst_16 [0] : vector<8x128xf32> to vector<128xf32>
    %37 = vector.shape_cast %36 : vector<128xf32> to vector<1x128xf32>
    %38 = vector.extract_strided_slice %5 {offsets = [16, 0], sizes = [8, 128], strides = [1, 1]} : vector<24x128xf32> to vector<8x128xf32>
    %c2 = arith.constant 2 : index
    %39 = memref.load %arg0[%c2] : memref<3xi32, #tpu.memory_space<smem>>
    %40 = vector.broadcast %39 : i32 to vector<8x128xi32>
    %41 = arith.cmpi slt, %6, %40 : vector<8x128xi32>
    %cst_17 = arith.constant 0xFF800000 : f32
    %42 = vector.broadcast %cst_17 : f32 to vector<8x128xf32>
    %43 = arith.select %41, %38, %42 : vector<8x128xi1>, vector<8x128xf32>
    %cst_18 = arith.constant dense<0xFF800000> : vector<128xf32>
    %44 = vector.multi_reduction <maximumf>, %43, %cst_18 [0] : vector<8x128xf32> to vector<128xf32>
    %45 = vector.shape_cast %44 : vector<128xf32> to vector<1x128xf32>
    %46 = tpu.concatenate %7, %15, %30 in 0 : vector<1x128xf32>, vector<1x128xf32>, vector<1x128xf32> -> vector<3x128xf32>
    %47 = tpu.concatenate %7, %22, %37 in 0 : vector<1x128xf32>, vector<1x128xf32>, vector<1x128xf32> -> vector<3x128xf32>
    %c0_19 = arith.constant 0 : index
    %c0_20 = arith.constant 0 : index
    %48 = vector.load %arg3[%c0_19, %c0_20] : memref<3x128xf32, #tpu.memory_space<vmem>>, vector<3x128xf32>
    %49 = tpu.concatenate %46, %47, %48 in 1 : vector<3x128xf32>, vector<3x128xf32>, vector<3x128xf32> -> vector<3x384xf32>
    %c0_21 = arith.constant 0 : index
    %c0_22 = arith.constant 0 : index
    %50 = vector.load %arg5[%c0_21, %c0_22] : memref<384x1536xbf16, #tpu.memory_space<vmem>>, vector<384x1536xbf16>
    %51 = arith.truncf %49 : vector<3x384xf32> to vector<3x384xbf16>
    %cst_23 = arith.constant dense<0.000000e+00> : vector<3x1536xf32>
    %52 = tpu.matmul %51, %50, %cst_23 {dimension_numbers = #tpu.dot_dimension_numbers<[1], [0], [0], [1], [0, 0, 1, 1], [], []>} : vector<3x384xbf16>, vector<384x1536xbf16>, vector<3x1536xf32> -> vector<3x1536xf32>
    %c0_24 = arith.constant 0 : index
    %c0_25 = arith.constant 0 : index
    %53 = vector.load %arg7[%c0_24, %c0_25] : memref<1x1536xf32, #tpu.memory_space<vmem>>, vector<1x1536xf32>
    %54 = vector.broadcast %53 : vector<1x1536xf32> to vector<3x1536xf32>
    %55 = arith.addf %52, %54 : vector<3x1536xf32>
    %c0_26 = arith.constant 0 : index
    %c0_27 = arith.constant 0 : index
    %56 = vector.load %arg6[%c0_26, %c0_27] : memref<512x1536xbf16, #tpu.memory_space<vmem>>, vector<512x1536xbf16>
    %c0_28 = arith.constant 0 : index
    %c0_29 = arith.constant 0 : index
    %57 = vector.load %arg8[%c0_28, %c0_29] : memref<1x1536xf32, #tpu.memory_space<vmem>>, vector<1x1536xf32>
    %c0_30 = arith.constant 0 : index
    %c0_31 = arith.constant 0 : index
    %58 = vector.load %arg2[%c0_30, %c0_31] : memref<1x512xf32, #tpu.memory_space<vmem>>, vector<1x512xf32>
    %59 = vector.extract_strided_slice %55 {offsets = [0, 0], sizes = [1, 1536], strides = [1, 1]} : vector<3x1536xf32> to vector<1x1536xf32>
    %60 = arith.truncf %58 : vector<1x512xf32> to vector<1x512xbf16>
    %cst_32 = arith.constant dense<0.000000e+00> : vector<1x1536xf32>
    %61 = tpu.matmul %60, %56, %cst_32 {dimension_numbers = #tpu.dot_dimension_numbers<[1], [0], [0], [1], [0, 0, 1, 1], [], []>} : vector<1x512xbf16>, vector<512x1536xbf16>, vector<1x1536xf32> -> vector<1x1536xf32>
    %62 = arith.addf %61, %57 : vector<1x1536xf32>
    %63 = vector.extract_strided_slice %59 {offsets = [0, 0], sizes = [1, 512], strides = [1, 1]} : vector<1x1536xf32> to vector<1x512xf32>
    %64 = vector.extract_strided_slice %59 {offsets = [0, 512], sizes = [1, 512], strides = [1, 1]} : vector<1x1536xf32> to vector<1x512xf32>
    %65 = vector.extract_strided_slice %59 {offsets = [0, 1024], sizes = [1, 512], strides = [1, 1]} : vector<1x1536xf32> to vector<1x512xf32>
    %66 = vector.extract_strided_slice %62 {offsets = [0, 0], sizes = [1, 512], strides = [1, 1]} : vector<1x1536xf32> to vector<1x512xf32>
    %67 = vector.extract_strided_slice %62 {offsets = [0, 512], sizes = [1, 512], strides = [1, 1]} : vector<1x1536xf32> to vector<1x512xf32>
    %68 = vector.extract_strided_slice %62 {offsets = [0, 1024], sizes = [1, 512], strides = [1, 1]} : vector<1x1536xf32> to vector<1x512xf32>
    %69 = arith.addf %63, %66 : vector<1x512xf32>
    %70 = arith.negf %69 : vector<1x512xf32>
    %71 = math.exp %70 : vector<1x512xf32>
    %cst_33 = arith.constant 1.000000e+00 : f32
    %72 = vector.broadcast %cst_33 : f32 to vector<1x512xf32>
    %73 = arith.addf %72, %71 : vector<1x512xf32>
    %74 = arith.divf %72, %73 : vector<1x512xf32>
    %75 = arith.addf %64, %67 : vector<1x512xf32>
    %76 = arith.negf %75 : vector<1x512xf32>
    %77 = math.exp %76 : vector<1x512xf32>
    %cst_34 = arith.constant 1.000000e+00 : f32
    %78 = vector.broadcast %cst_34 : f32 to vector<1x512xf32>
    %79 = arith.addf %78, %77 : vector<1x512xf32>
    %80 = arith.divf %78, %79 : vector<1x512xf32>
    %81 = arith.mulf %74, %68 : vector<1x512xf32>
    %82 = arith.addf %65, %81 : vector<1x512xf32>
    %83 = math.tanh %82 : vector<1x512xf32>
    %cst_35 = arith.constant 1.000000e+00 : f32
    %84 = vector.broadcast %cst_35 : f32 to vector<1x512xf32>
    %85 = arith.subf %84, %80 : vector<1x512xf32>
    %86 = arith.mulf %85, %83 : vector<1x512xf32>
    %87 = arith.mulf %80, %58 : vector<1x512xf32>
    %88 = arith.addf %86, %87 : vector<1x512xf32>
    %89 = vector.extract_strided_slice %55 {offsets = [1, 0], sizes = [1, 1536], strides = [1, 1]} : vector<3x1536xf32> to vector<1x1536xf32>
    %90 = arith.truncf %88 : vector<1x512xf32> to vector<1x512xbf16>
    %cst_36 = arith.constant dense<0.000000e+00> : vector<1x1536xf32>
    %91 = tpu.matmul %90, %56, %cst_36 {dimension_numbers = #tpu.dot_dimension_numbers<[1], [0], [0], [1], [0, 0, 1, 1], [], []>} : vector<1x512xbf16>, vector<512x1536xbf16>, vector<1x1536xf32> -> vector<1x1536xf32>
    %92 = arith.addf %91, %57 : vector<1x1536xf32>
    %93 = vector.extract_strided_slice %89 {offsets = [0, 0], sizes = [1, 512], strides = [1, 1]} : vector<1x1536xf32> to vector<1x512xf32>
    %94 = vector.extract_strided_slice %89 {offsets = [0, 512], sizes = [1, 512], strides = [1, 1]} : vector<1x1536xf32> to vector<1x512xf32>
    %95 = vector.extract_strided_slice %89 {offsets = [0, 1024], sizes = [1, 512], strides = [1, 1]} : vector<1x1536xf32> to vector<1x512xf32>
    %96 = vector.extract_strided_slice %92 {offsets = [0, 0], sizes = [1, 512], strides = [1, 1]} : vector<1x1536xf32> to vector<1x512xf32>
    %97 = vector.extract_strided_slice %92 {offsets = [0, 512], sizes = [1, 512], strides = [1, 1]} : vector<1x1536xf32> to vector<1x512xf32>
    %98 = vector.extract_strided_slice %92 {offsets = [0, 1024], sizes = [1, 512], strides = [1, 1]} : vector<1x1536xf32> to vector<1x512xf32>
    %99 = arith.addf %93, %96 : vector<1x512xf32>
    %100 = arith.negf %99 : vector<1x512xf32>
    %101 = math.exp %100 : vector<1x512xf32>
    %cst_37 = arith.constant 1.000000e+00 : f32
    %102 = vector.broadcast %cst_37 : f32 to vector<1x512xf32>
    %103 = arith.addf %102, %101 : vector<1x512xf32>
    %104 = arith.divf %102, %103 : vector<1x512xf32>
    %105 = arith.addf %94, %97 : vector<1x512xf32>
    %106 = arith.negf %105 : vector<1x512xf32>
    %107 = math.exp %106 : vector<1x512xf32>
    %cst_38 = arith.constant 1.000000e+00 : f32
    %108 = vector.broadcast %cst_38 : f32 to vector<1x512xf32>
    %109 = arith.addf %108, %107 : vector<1x512xf32>
    %110 = arith.divf %108, %109 : vector<1x512xf32>
    %111 = arith.mulf %104, %98 : vector<1x512xf32>
    %112 = arith.addf %95, %111 : vector<1x512xf32>
    %113 = math.tanh %112 : vector<1x512xf32>
    %cst_39 = arith.constant 1.000000e+00 : f32
    %114 = vector.broadcast %cst_39 : f32 to vector<1x512xf32>
    %115 = arith.subf %114, %110 : vector<1x512xf32>
    %116 = arith.mulf %115, %113 : vector<1x512xf32>
    %117 = arith.mulf %110, %88 : vector<1x512xf32>
    %118 = arith.addf %116, %117 : vector<1x512xf32>
    %119 = vector.extract_strided_slice %55 {offsets = [2, 0], sizes = [1, 1536], strides = [1, 1]} : vector<3x1536xf32> to vector<1x1536xf32>
    %120 = arith.truncf %118 : vector<1x512xf32> to vector<1x512xbf16>
    %cst_40 = arith.constant dense<0.000000e+00> : vector<1x1536xf32>
    %121 = tpu.matmul %120, %56, %cst_40 {dimension_numbers = #tpu.dot_dimension_numbers<[1], [0], [0], [1], [0, 0, 1, 1], [], []>} : vector<1x512xbf16>, vector<512x1536xbf16>, vector<1x1536xf32> -> vector<1x1536xf32>
    %122 = arith.addf %121, %57 : vector<1x1536xf32>
    %123 = vector.extract_strided_slice %119 {offsets = [0, 0], sizes = [1, 512], strides = [1, 1]} : vector<1x1536xf32> to vector<1x512xf32>
    %124 = vector.extract_strided_slice %119 {offsets = [0, 512], sizes = [1, 512], strides = [1, 1]} : vector<1x1536xf32> to vector<1x512xf32>
    %125 = vector.extract_strided_slice %119 {offsets = [0, 1024], sizes = [1, 512], strides = [1, 1]} : vector<1x1536xf32> to vector<1x512xf32>
    %126 = vector.extract_strided_slice %122 {offsets = [0, 0], sizes = [1, 512], strides = [1, 1]} : vector<1x1536xf32> to vector<1x512xf32>
    %127 = vector.extract_strided_slice %122 {offsets = [0, 512], sizes = [1, 512], strides = [1, 1]} : vector<1x1536xf32> to vector<1x512xf32>
    %128 = vector.extract_strided_slice %122 {offsets = [0, 1024], sizes = [1, 512], strides = [1, 1]} : vector<1x1536xf32> to vector<1x512xf32>
    %129 = arith.addf %123, %126 : vector<1x512xf32>
    %130 = arith.negf %129 : vector<1x512xf32>
    %131 = math.exp %130 : vector<1x512xf32>
    %cst_41 = arith.constant 1.000000e+00 : f32
    %132 = vector.broadcast %cst_41 : f32 to vector<1x512xf32>
    %133 = arith.addf %132, %131 : vector<1x512xf32>
    %134 = arith.divf %132, %133 : vector<1x512xf32>
    %135 = arith.addf %124, %127 : vector<1x512xf32>
    %136 = arith.negf %135 : vector<1x512xf32>
    %137 = math.exp %136 : vector<1x512xf32>
    %cst_42 = arith.constant 1.000000e+00 : f32
    %138 = vector.broadcast %cst_42 : f32 to vector<1x512xf32>
    %139 = arith.addf %138, %137 : vector<1x512xf32>
    %140 = arith.divf %138, %139 : vector<1x512xf32>
    %141 = arith.mulf %134, %128 : vector<1x512xf32>
    %142 = arith.addf %125, %141 : vector<1x512xf32>
    %143 = math.tanh %142 : vector<1x512xf32>
    %cst_43 = arith.constant 1.000000e+00 : f32
    %144 = vector.broadcast %cst_43 : f32 to vector<1x512xf32>
    %145 = arith.subf %144, %140 : vector<1x512xf32>
    %146 = arith.mulf %145, %143 : vector<1x512xf32>
    %147 = arith.mulf %140, %118 : vector<1x512xf32>
    %148 = arith.addf %146, %147 : vector<1x512xf32>
    %c0_44 = arith.constant 0 : index
    %c0_45 = arith.constant 0 : index
    %149 = vector.load %arg11[%c0_44, %c0_45] : memref<512x128xbf16, #tpu.memory_space<vmem>>, vector<512x128xbf16>
    %150 = arith.truncf %148 : vector<1x512xf32> to vector<1x512xbf16>
    %cst_46 = arith.constant dense<0.000000e+00> : vector<1x128xf32>
    %151 = tpu.matmul %150, %149, %cst_46 {dimension_numbers = #tpu.dot_dimension_numbers<[1], [0], [0], [1], [0, 0, 1, 1], [], []>} : vector<1x512xbf16>, vector<512x128xbf16>, vector<1x128xf32> -> vector<1x128xf32>
    %c0_47 = arith.constant 0 : index
    %c0_48 = arith.constant 0 : index
    %152 = vector.load %arg12[%c0_47, %c0_48] : memref<1x128xf32, #tpu.memory_space<vmem>>, vector<1x128xf32>
    %153 = arith.addf %151, %152 : vector<1x128xf32>
    %154 = tpu.concatenate %153, %45 in 1 : vector<1x128xf32>, vector<1x128xf32> -> vector<1x256xf32>
    %c0_49 = arith.constant 0 : index
    %c0_50 = arith.constant 0 : index
    %155 = vector.load %arg13[%c0_49, %c0_50] : memref<256x1xbf16, #tpu.memory_space<vmem>>, vector<256x1xbf16>
    %156 = arith.truncf %154 : vector<1x256xf32> to vector<1x256xbf16>
    %cst_51 = arith.constant dense<0.000000e+00> : vector<1x1xf32>
    %157 = tpu.matmul %156, %155, %cst_51 {dimension_numbers = #tpu.dot_dimension_numbers<[1], [0], [0], [1], [0, 0, 1, 1], [], []>} : vector<1x256xbf16>, vector<256x1xbf16>, vector<1x1xf32> -> vector<1x1xf32>
    %c0_52 = arith.constant 0 : index
    %c0_53 = arith.constant 0 : index
    %158 = vector.load %arg14[%c0_52, %c0_53] : memref<1x1xf32, #tpu.memory_space<vmem>>, vector<1x1xf32>
    %159 = arith.addf %157, %158 : vector<1x1xf32>
    %160 = vector.extract_strided_slice %5 {offsets = [16, 0], sizes = [8, 128], strides = [1, 1]} : vector<24x128xf32> to vector<8x128xf32>
    %161 = arith.truncf %153 : vector<1x128xf32> to vector<1x128xbf16>
    %162 = arith.truncf %160 : vector<8x128xf32> to vector<8x128xbf16>
    %cst_54 = arith.constant dense<0.000000e+00> : vector<1x8xf32>
    %163 = tpu.matmul %161, %162, %cst_54 {dimension_numbers = #tpu.dot_dimension_numbers<[1], [1], [0], [0], [0, 0, 1, 0], [], []>} : vector<1x128xbf16>, vector<8x128xbf16>, vector<1x8xf32> -> vector<1x8xf32>
    %164 = tpu.iota {dimensions = array<i32: 1>} : vector<1x8xi32>
    %c2_55 = arith.constant 2 : index
    %165 = memref.load %arg0[%c2_55] : memref<3xi32, #tpu.memory_space<smem>>
    %166 = vector.broadcast %165 : i32 to vector<1x8xi32>
    %167 = arith.cmpi slt, %164, %166 : vector<1x8xi32>
    %cst_56 = arith.constant 0xFF800000 : f32
    %168 = vector.broadcast %cst_56 : f32 to vector<1x8xf32>
    %169 = arith.select %167, %163, %168 : vector<1x8xi1>, vector<1x8xf32>
    %cst_57 = arith.constant dense<0xFF800000> : vector<1xf32>
    %170 = vector.multi_reduction <maximumf>, %169, %cst_57 [1] : vector<1x8xf32> to vector<1xf32>
    %171 = vector.shape_cast %170 : vector<1xf32> to vector<1x1xf32>
    %172 = arith.maximumf %159, %171 : vector<1x1xf32>
    %173 = arith.subf %159, %172 : vector<1x1xf32>
    %174 = math.exp %173 : vector<1x1xf32>
    %175 = vector.broadcast %172 : vector<1x1xf32> to vector<1x8xf32>
    %176 = arith.subf %169, %175 : vector<1x8xf32>
    %177 = math.exp %176 : vector<1x8xf32>
    %cst_58 = arith.constant 0.000000e+00 : f32
    %178 = vector.broadcast %cst_58 : f32 to vector<1x8xf32>
    %179 = arith.select %167, %177, %178 : vector<1x8xi1>, vector<1x8xf32>
    %cst_59 = arith.constant dense<0.000000e+00> : vector<1xf32>
    %180 = vector.multi_reduction <add>, %179, %cst_59 [1] : vector<1x8xf32> to vector<1xf32>
    %181 = vector.shape_cast %180 : vector<1xf32> to vector<1x1xf32>
    %182 = arith.addf %174, %181 : vector<1x1xf32>
    %183 = tpu.reciprocal %182 : vector<1x1xf32> -> vector<1x1xf32>
    %184 = arith.mulf %174, %183 : vector<1x1xf32>
    %185 = vector.broadcast %183 : vector<1x1xf32> to vector<1x8xf32>
    %186 = arith.mulf %179, %185 : vector<1x8xf32>
    %cst_60 = arith.constant 0.000000e+00 : f32
    %187 = vector.broadcast %cst_60 : f32 to vector<1x119xf32>
    %188 = tpu.concatenate %184, %186, %187 in 1 : vector<1x1xf32>, vector<1x8xf32>, vector<1x119xf32> -> vector<1x128xf32>
    %c0_61 = arith.constant 0 : index
    %c0_62 = arith.constant 0 : index
    %189 = vector.load %arg15[%c0_61, %c0_62] : memref<1x128xf32, #tpu.memory_space<vmem>>, vector<1x128xf32>
    tpu.vector_store %arg15[%c0_61, %c0_62], %188 {strides = array<i32>} : memref<1x128xf32, #tpu.memory_space<vmem>>, vector<1x128xf32>,
    return
  }
}

</mosaic_0001>

<llo_original>
// kernel: tpu_custom_call.1
$region0: #{tpu_custom_call.1}
  #allocation0 [shape = 'u32[]', space=smem, size = 0x4, offset = 0x4, fixed_abs, tag = 'smem constant byte address 0x4 - core index']
  #allocation1 [shape = 'u32[144,128]{1,0:T(1,128)}', space=vmem, size = 0x12000, scoped, tag = 'internal scratch']
  #allocation2 [shape = 'f32[1,1]{1,0:T(1,128)S(1)}', space=vmem, size = 0x200, scoped, tag = 'scoped memory for tpu_custom_call.1']
  %s0 = inlined_call_operand.hbm [shape: s32[3], index: 0, kind: input, shape index: {}]
  %s1 = inlined_call_operand.hbm [shape: s32[3], index: 1, kind: input, shape index: {}]
  %s2 = inlined_call_operand.hbm [shape: f32[1,512], index: 2, kind: input, shape index: {}]
  %s3 = inlined_call_operand.hbm [shape: f32[3,128], index: 3, kind: input, shape index: {}]
  %s4 = inlined_call_operand.hbm [shape: bf16[24,640], index: 4, kind: input, shape index: {}]
  %s5 = inlined_call_operand.hbm [shape: bf16[384,1536], index: 5, kind: input, shape index: {}]
  %s6 = inlined_call_operand.hbm [shape: bf16[512,1536], index: 6, kind: input, shape index: {}]
  %s7 = inlined_call_operand.hbm [shape: f32[1,1536], index: 7, kind: input, shape index: {}]
  %s8 = inlined_call_operand.hbm [shape: f32[1,1536], index: 8, kind: input, shape index: {}]
  %s9 = inlined_call_operand.hbm [shape: bf16[640,128], index: 9, kind: input, shape index: {}]
  %s10 = inlined_call_operand.hbm [shape: f32[1,128], index: 10, kind: input, shape index: {}]
  %s11 = inlined_call_operand.hbm [shape: bf16[512,128], index: 11, kind: input, shape index: {}]
  %s12 = inlined_call_operand.hbm [shape: f32[1,128], index: 12, kind: input, shape index: {}]
  %s13 = inlined_call_operand.vmem [shape: bf16[256,1], index: 13, kind: input, shape index: {}]
  %s14 = inlined_call_operand.<no memory space> [shape: f32[1,1], index: 14, kind: input, shape index: {}]
  %s15 = inlined_call_operand.hbm [shape: f32[1,128], index: 15, kind: output, shape index: {}]
  %s16 = sld [smem:[#allocation0]]
  $region122: #{tpu_custom_call.1} parent=0
    _
  %s18 = ssub.s32 1, %s16
  %s19 = scalar_select 0, %s18, %s16
  %v20 = vstv %s14
  %21 = vst [vmem:[#allocation2] sm:$0x1] %v20
  $region1: #{tpu_custom_call.1} parent=0
    #allocation3 [shape = 'u8[512]{0}', space=smem, size = 0x200, scoped, tag = 'input window, operand 0, single buffered']
    #allocation4 [shape = 's32[1]{0}', space=sflag, size = 0x4, scoped, tag = 'scoped memory for tpu_custom_call.1']
    #allocation5 [shape = 's32[1]{0}', space=sflag, size = 0x4, scoped, tag = 'scoped memory for tpu_custom_call.1']
    #allocation6 [shape = 's32[1]{0}', space=sflag, size = 0x4, scoped, tag = 'scoped memory for tpu_custom_call.1']
    #allocation7 [shape = 'u8[512]{0}', space=smem, size = 0x200, scoped, tag = 'input window, operand 1, single buffered']
    #allocation8 [shape = 's32[1]{0}', space=sflag, size = 0x4, scoped, tag = 'scoped memory for tpu_custom_call.1']
    #allocation9 [shape = 'u8[2048]{0}', space=vmem, size = 0x800, scoped, tag = 'input window, operand 2, single buffered']
    #allocation10 [shape = 'u8[2048]{0}', space=vmem, size = 0x800, scoped, tag = 'input window, operand 3, single buffered']
    #allocation11 [shape = 's32[1]{0}', space=sflag, size = 0x4, scoped, tag = 'scoped memory for tpu_custom_call.1']
    #allocation12 [shape = 'u8[30720]{0}', space=vmem, size = 0x7800, scoped, tag = 'input window, operand 4, single buffered']
    #allocation13 [shape = 'u8[1179648]{0}', space=vmem, size = 0x120000, scoped, tag = 'input window, operand 5, single buffered']
    #allocation14 [shape = 's32[1]{0}', space=sflag, size = 0x4, scoped, tag = 'scoped memory for tpu_custom_call.1']
    #allocation15 [shape = 'u8[1572864]{0}', space=vmem, size = 0x180000, scoped, tag = 'input window, operand 6, single buffered']
    #allocation16 [shape = 'u8[6144]{0}', space=vmem, size = 0x1800, scoped, tag = 'input window, operand 7, single buffered']
    #allocation17 [shape = 's32[1]{0}', space=sflag, size = 0x4, scoped, tag = 'scoped memory for tpu_custom_call.1']
    #allocation18 [shape = 'u8[6144]{0}', space=vmem, size = 0x1800, scoped, tag = 'input window, operand 8, single buffered']
    #allocation19 [shape = 'u8[163840]{0}', space=vmem, size = 0x28000, scoped, tag = 'input window, operand 9, single buffered']
    #allocation20 [shape = 's32[1]{0}', space=sflag, size = 0x4, scoped, tag = 'scoped memory for tpu_custom_call.1']
    #allocation21 [shape = 'u8[512]{0}', space=vmem, size = 0x400, scoped, tag = 'input window, operand 10, single buffered']
    #allocation22 [shape = 'u8[131072]{0}', space=vmem, size = 0x20000, scoped, tag = 'input window, operand 11, single buffered']
    #allocation23 [shape = 's32[1]{0}', space=sflag, size = 0x4, scoped, tag = 'scoped memory for tpu_custom_call.1']
    #allocation24 [shape = 'u8[512]{0}', space=vmem, size = 0x400, scoped, tag = 'input window, operand 12, single buffered']
    #allocation25 [shape = 'u8[512]{0}', space=vmem, size = 0x400, scoped, tag = 'output window, operand 0, single buffered']
    %22 = vsyncpa [#allocation6], 0
    %23 = vsyncpa [#allocation8], 0
    %24 = vsyncpa [#allocation4], 0
    %25 = vsyncpa [#allocation11], 0
    %26 = vsyncpa [#allocation14], 0
    %27 = vsyncpa [#allocation17], 0
    %28 = vsyncpa [#allocation20], 0
    %29 = vsyncpa [#allocation23], 0
    %30 = vsyncpa [#allocation5], 0
    // Predicated region
    $region2: #{tpu_custom_call.1} parent=1 // pred_check
      _
    $region3: #{tpu_custom_call.1} parent=1 // pred_check_branch
      %32 = sbr.rel (0) target = $region5
    $region4: #{tpu_custom_call.1} parent=1 // pred_region
      %s34 = ssub.s32 16, 16
      %35 = vsyncadd [#allocation6], %s34
      %38 = dma.hbm_to_smem %s0, 16, [#allocation3], [#allocation6]
    $region5: #{tpu_custom_call.1} parent=1 // pred_fallthru
      _
    // Predicated region
    $region6: #{tpu_custom_call.1} parent=1 // pred_check
      _
    $region7: #{tpu_custom_call.1} parent=1 // pred_check_branch
      %40 = sbr.rel (0) target = $region9
    $region8: #{tpu_custom_call.1} parent=1 // pred_region
      %s42 = ssub.s32 16, 16
      %43 = vsyncadd [#allocation8], %s42
      %46 = dma.hbm_to_smem %s1, 16, [#allocation7], [#allocation8]
    $region9: #{tpu_custom_call.1} parent=1 // pred_fallthru
      _
    // Predicated region
    $region10: #{tpu_custom_call.1} parent=1 // pred_check
      _
    $region11: #{tpu_custom_call.1} parent=1 // pred_check_branch
      %48 = sbr.rel (0) target = $region13
    $region12: #{tpu_custom_call.1} parent=1 // pred_region
      %s50 = ssub.s32 64, 64
      %51 = vsyncadd [#allocation4], %s50
      %s53 = sshll.u32 [#allocation9], 4
      %s54 = int_to_ptr.vmem [resolvable:$true] %s53
      %56 = dma.hbm_to_vmem [thread:$0]  %s2, 64, %s54, [#allocation4]
    $region13: #{tpu_custom_call.1} parent=1 // pred_fallthru
      _
    // Predicated region
    $region14: #{tpu_custom_call.1} parent=1 // pred_check
      _
    $region15: #{tpu_custom_call.1} parent=1 // pred_check_branch
      %58 = sbr.rel (0) target = $region17
    $region16: #{tpu_custom_call.1} parent=1 // pred_region
      %s60 = ssub.s32 64, 64
      %61 = vsyncadd [#allocation11], %s60
      %s63 = sshll.u32 [#allocation10], 4
      %s64 = int_to_ptr.vmem [resolvable:$true] %s63
      %66 = dma.hbm_to_vmem [thread:$0]  %s3, 64, %s64, [#allocation11]
    $region17: #{tpu_custom_call.1} parent=1 // pred_fallthru
      _
    // Predicated region
    $region18: #{tpu_custom_call.1} parent=1 // pred_check
      _
    $region19: #{tpu_custom_call.1} parent=1 // pred_check_branch
      %68 = sbr.rel (0) target = $region21
    $region20: #{tpu_custom_call.1} parent=1 // pred_region
      %s70 = ssub.s32 960, 960
      %71 = vsyncadd [#allocation11], %s70
      %s72 = sshll.u32 [#allocation12], 4
      %s73 = int_to_ptr.vmem [resolvable:$true] %s72
      %78 = dma.hbm_to_vmem [thread:$0]  %s4, 960, %s73, [#allocation11], 320, 320, 20
    $region21: #{tpu_custom_call.1} parent=1 // pred_fallthru
      _
    // Predicated region
    $region22: #{tpu_custom_call.1} parent=1 // pred_check
      _
    $region23: #{tpu_custom_call.1} parent=1 // pred_check_branch
      %80 = sbr.rel (0) target = $region25
    $region24: #{tpu_custom_call.1} parent=1 // pred_region
      %s82 = ssub.s32 36864, 36864
      %83 = vsyncadd [#allocation14], %s82
      %s84 = sshll.u32 [#allocation13], 4
      %s85 = int_to_ptr.vmem [resolvable:$true] %s84
      %90 = dma.hbm_to_vmem [thread:$0]  %s5, 36864, %s85, [#allocation14], 768, 768, 48
    $region25: #{tpu_custom_call.1} parent=1 // pred_fallthru
      _
    // Predicated region
    $region26: #{tpu_custom_call.1} parent=1 // pred_check
      _
    $region27: #{tpu_custom_call.1} parent=1 // pred_check_branch
      %92 = sbr.rel (0) target = $region29
    $region28: #{tpu_custom_call.1} parent=1 // pred_region
      %s94 = ssub.s32 49152, 49152
      %95 = vsyncadd [#allocation14], %s94
      %s96 = sshll.u32 [#allocation15], 4
      %s97 = int_to_ptr.vmem [resolvable:$true] %s96
      %102 = dma.hbm_to_vmem [thread:$0]  %s6, 49152, %s97, [#allocation14], 768, 768, 48
    $region29: #{tpu_custom_call.1} parent=1 // pred_fallthru
      _
    // Predicated region
    $region30: #{tpu_custom_call.1} parent=1 // pred_check
      _
    $region31: #{tpu_custom_call.1} parent=1 // pred_check_branch
      %104 = sbr.rel (0) target = $region33
    $region32: #{tpu_custom_call.1} parent=1 // pred_region
      %s106 = ssub.s32 192, 192
      %107 = vsyncadd [#allocation17], %s106
      %s109 = sshll.u32 [#allocation16], 4
      %s110 = int_to_ptr.vmem [resolvable:$true] %s109
      %112 = dma.hbm_to_vmem [thread:$0]  %s7, 192, %s110, [#allocation17]
    $region33: #{tpu_custom_call.1} parent=1 // pred_fallthru
      _
    // Predicated region
    $region34: #{tpu_custom_call.1} parent=1 // pred_check
      _
    $region35: #{tpu_custom_call.1} parent=1 // pred_check_branch
      %114 = sbr.rel (0) target = $region37
    $region36: #{tpu_custom_call.1} parent=1 // pred_region
      %s116 = ssub.s32 192, 192
      %117 = vsyncadd [#allocation17], %s116
      %s119 = sshll.u32 [#allocation18], 4
      %s120 = int_to_ptr.vmem [resolvable:$true] %s119
      %122 = dma.hbm_to_vmem [thread:$0]  %s8, 192, %s120, [#allocation17]
    $region37: #{tpu_custom_call.1} parent=1 // pred_fallthru
      _
    // Predicated region
    $region38: #{tpu_custom_call.1} parent=1 // pred_check
      _
    $region39: #{tpu_custom_call.1} parent=1 // pred_check_branch
      %124 = sbr.rel (0) target = $region41
    $region40: #{tpu_custom_call.1} parent=1 // pred_region
      %s126 = ssub.s32 5120, 5120
      %127 = vsyncadd [#allocation20], %s126
      %s128 = sshll.u32 [#allocation19], 4
      %s129 = int_to_ptr.vmem [resolvable:$true] %s128
      %134 = dma.hbm_to_vmem [thread:$0]  %s9, 5120, %s129, [#allocation20], 64, 64, 4
    $region41: #{tpu_custom_call.1} parent=1 // pred_fallthru
      _
    // Predicated region
    $region42: #{tpu_custom_call.1} parent=1 // pred_check
      _
    $region43: #{tpu_custom_call.1} parent=1 // pred_check_branch
      %136 = sbr.rel (0) target = $region45
    $region44: #{tpu_custom_call.1} parent=1 // pred_region
      %s138 = ssub.s32 16, 16
      %139 = vsyncadd [#allocation20], %s138
      %s141 = sshll.u32 [#allocation21], 4
      %s142 = int_to_ptr.vmem [resolvable:$true] %s141
      %144 = dma.hbm_to_vmem [thread:$0]  %s10, 16, %s142, [#allocation20]
    $region45: #{tpu_custom_call.1} parent=1 // pred_fallthru
      _
    // Predicated region
    $region46: #{tpu_custom_call.1} parent=1 // pred_check
      _
    $region47: #{tpu_custom_call.1} parent=1 // pred_check_branch
      %146 = sbr.rel (0) target = $region49
    $region48: #{tpu_custom_call.1} parent=1 // pred_region
      %s148 = ssub.s32 4096, 4096
      %149 = vsyncadd [#allocation23], %s148
      %s150 = sshll.u32 [#allocation22], 4
      %s151 = int_to_ptr.vmem [resolvable:$true] %s150
      %156 = dma.hbm_to_vmem [thread:$0]  %s11, 4096, %s151, [#allocation23], 64, 64, 4
    $region49: #{tpu_custom_call.1} parent=1 // pred_fallthru
      _
    // Predicated region
    $region50: #{tpu_custom_call.1} parent=1 // pred_check
      _
    $region51: #{tpu_custom_call.1} parent=1 // pred_check_branch
      %158 = sbr.rel (0) target = $region53
    $region52: #{tpu_custom_call.1} parent=1 // pred_region
      %s160 = ssub.s32 16, 16
      %161 = vsyncadd [#allocation23], %s160
      %s163 = sshll.u32 [#allocation24], 4
      %s164 = int_to_ptr.vmem [resolvable:$true] %s163
      %166 = dma.hbm_to_vmem [thread:$0]  %s12, 16, %s164, [#allocation23]
    $region53: #{tpu_custom_call.1} parent=1 // pred_fallthru
      _
    // Predicated region
    $region54: #{tpu_custom_call.1} parent=1 // pred_check
      _
    $region55: #{tpu_custom_call.1} parent=1 // pred_check_branch
      %168 = sbr.rel (0) target = $region57
    $region56: #{tpu_custom_call.1} parent=1 // pred_region
      _
    $region57: #{tpu_custom_call.1} parent=1 // pred_fallthru
      _
    // Predicated region
    $region58: #{tpu_custom_call.1} parent=1 // pred_check
      _
    $region59: #{tpu_custom_call.1} parent=1 // pred_check_branch
      %170 = sbr.rel (0) target = $region61
    $region60: #{tpu_custom_call.1} parent=1 // pred_region
      _
    $region61: #{tpu_custom_call.1} parent=1 // pred_fallthru
      _
    // Predicated region
    $region62: #{tpu_custom_call.1} parent=1 // pred_check
      _
    $region63: #{tpu_custom_call.1} parent=1 // pred_check_branch
      %172 = sbr.rel (0) target = $region65
    $region64: #{tpu_custom_call.1} parent=1 // pred_region
      %173 = dma.done [#allocation6], 16
    $region65: #{tpu_custom_call.1} parent=1 // pred_fallthru
      _
    // Predicated region
    $region66: #{tpu_custom_call.1} parent=1 // pred_check
      _
    $region67: #{tpu_custom_call.1} parent=1 // pred_check_branch
      %175 = sbr.rel (0) target = $region69
    $region68: #{tpu_custom_call.1} parent=1 // pred_region
      %176 = dma.done [#allocation8], 16
    $region69: #{tpu_custom_call.1} parent=1 // pred_fallthru
      _
    // Predicated region
    $region70: #{tpu_custom_call.1} parent=1 // pred_check
      _
    $region71: #{tpu_custom_call.1} parent=1 // pred_check_branch
      %178 = sbr.rel (0) target = $region73
    $region72: #{tpu_custom_call.1} parent=1 // pred_region
      %179 = dma.done [#allocation4], 64
    $region73: #{tpu_custom_call.1} parent=1 // pred_fallthru
      _
    // Predicated region
    $region74: #{tpu_custom_call.1} parent=1 // pred_check
      _
    $region75: #{tpu_custom_call.1} parent=1 // pred_check_branch
      %181 = sbr.rel (0) target = $region77
    $region76: #{tpu_custom_call.1} parent=1 // pred_region
      %182 = dma.done [#allocation11], 64
    $region77: #{tpu_custom_call.1} parent=1 // pred_fallthru
      _
    // Predicated region
    $region78: #{tpu_custom_call.1} parent=1 // pred_check
      _
    $region79: #{tpu_custom_call.1} parent=1 // pred_check_branch
      %184 = sbr.rel (0) target = $region81
    $region80: #{tpu_custom_call.1} parent=1 // pred_region
      %185 = dma.done [#allocation11], 960
    $region81: #{tpu_custom_call.1} parent=1 // pred_fallthru
      _
    // Predicated region
    $region82: #{tpu_custom_call.1} parent=1 // pred_check
      _
    $region83: #{tpu_custom_call.1} parent=1 // pred_check_branch
      %187 = sbr.rel (0) target = $region85
    $region84: #{tpu_custom_call.1} parent=1 // pred_region
      %188 = dma.done [#allocation14], 36864
    $region85: #{tpu_custom_call.1} parent=1 // pred_fallthru
      _
    // Predicated region
    $region86: #{tpu_custom_call.1} parent=1 // pred_check
      _
    $region87: #{tpu_custom_call.1} parent=1 // pred_check_branch
      %190 = sbr.rel (0) target = $region89
    $region88: #{tpu_custom_call.1} parent=1 // pred_region
      %191 = dma.done [#allocation14], 49152
    $region89: #{tpu_custom_call.1} parent=1 // pred_fallthru
      _
    // Predicated region
    $region90: #{tpu_custom_call.1} parent=1 // pred_check
      _
    $region91: #{tpu_custom_call.1} parent=1 // pred_check_branch
      %193 = sbr.rel (0) target = $region93
    $region92: #{tpu_custom_call.1} parent=1 // pred_region
      %194 = dma.done [#allocation17], 192
    $region93: #{tpu_custom_call.1} parent=1 // pred_fallthru
      _
    // Predicated region
    $region94: #{tpu_custom_call.1} parent=1 // pred_check
      _
    $region95: #{tpu_custom_call.1} parent=1 // pred_check_branch
      %196 = sbr.rel (0) target = $region97
    $region96: #{tpu_custom_call.1} parent=1 // pred_region
      %197 = dma.done [#allocation17], 192
    $region97: #{tpu_custom_call.1} parent=1 // pred_fallthru
      _
    // Predicated region
    $region98: #{tpu_custom_call.1} parent=1 // pred_check
      _
    $region99: #{tpu_custom_call.1} parent=1 // pred_check_branch
      %199 = sbr.rel (0) target = $region101
    $region100: #{tpu_custom_call.1} parent=1 // pred_region
      %200 = dma.done [#allocation20], 5120
    $region101: #{tpu_custom_call.1} parent=1 // pred_fallthru
      _
    // Predicated region
    $region102: #{tpu_custom_call.1} parent=1 // pred_check
      _
    $region103: #{tpu_custom_call.1} parent=1 // pred_check_branch
      %202 = sbr.rel (0) target = $region105
    $region104: #{tpu_custom_call.1} parent=1 // pred_region
      %203 = dma.done [#allocation20], 16
    $region105: #{tpu_custom_call.1} parent=1 // pred_fallthru
      _
    // Predicated region
    $region106: #{tpu_custom_call.1} parent=1 // pred_check
      _
    $region107: #{tpu_custom_call.1} parent=1 // pred_check_branch
      %205 = sbr.rel (0) target = $region109
    $region108: #{tpu_custom_call.1} parent=1 // pred_region
      %206 = dma.done [#allocation23], 4096
    $region109: #{tpu_custom_call.1} parent=1 // pred_fallthru
      _
    // Predicated region
    $region110: #{tpu_custom_call.1} parent=1 // pred_check
      _
    $region111: #{tpu_custom_call.1} parent=1 // pred_check_branch
      %208 = sbr.rel (0) target = $region113
    $region112: #{tpu_custom_call.1} parent=1 // pred_region
      %209 = dma.done [#allocation23], 16
    $region113: #{tpu_custom_call.1} parent=1 // pred_fallthru
      _
    %210 = sfence
    %v212 = vld [vmem:[#allocation12] sm:$0xff]
    %v213 = vld [vmem:[#allocation12 + $0x8] sm:$0xff]
    %v214 = vld [vmem:[#allocation12 + $0x10] sm:$0xf]
    %v215 = vld [vmem:[#allocation12 + $0x14] sm:$0xff]
    %v216 = vld [vmem:[#allocation12 + $0x1c] sm:$0xff]
    %v217 = vld [vmem:[#allocation12 + $0x24] sm:$0xf]
    %v218 = vld [vmem:[#allocation12 + $0x28] sm:$0xff]
    %v219 = vld [vmem:[#allocation12 + $0x30] sm:$0xff]
    %v220 = vld [vmem:[#allocation12 + $0x38] sm:$0xf]
    %v221 = vld [vmem:[#allocation19] sm:$0xf]
    %v222 = vld [vmem:[#allocation19 + $0x4] sm:$0xf]
    %v223 = vld [vmem:[#allocation19 + $0x8] sm:$0xf]
    %v224 = vld [vmem:[#allocation19 + $0xc] sm:$0xf]
    %v225 = vld [vmem:[#allocation19 + $0x10] sm:$0xf]
    %v226 = vld [vmem:[#allocation19 + $0x14] sm:$0xf]
    %v227 = vld [vmem:[#allocation19 + $0x18] sm:$0xf]
    %v228 = vld [vmem:[#allocation19 + $0x1c] sm:$0xf]
    %v229 = vld [vmem:[#allocation19 + $0x20] sm:$0xf]
    %v230 = vld [vmem:[#allocation19 + $0x24] sm:$0xf]
    %v231 = vld [vmem:[#allocation19 + $0x28] sm:$0xf]
    %v232 = vld [vmem:[#allocation19 + $0x2c] sm:$0xf]
    %v233 = vld [vmem:[#allocation19 + $0x30] sm:$0xf]
    %v234 = vld [vmem:[#allocation19 + $0x34] sm:$0xf]
    %v235 = vld [vmem:[#allocation19 + $0x38] sm:$0xf]
    %v236 = vld [vmem:[#allocation19 + $0x3c] sm:$0xf]
    %v237 = vld [vmem:[#allocation19 + $0x40] sm:$0xf]
    %v238 = vld [vmem:[#allocation19 + $0x44] sm:$0xf]
    %v239 = vld [vmem:[#allocation19 + $0x48] sm:$0xf]
    %v240 = vld [vmem:[#allocation19 + $0x4c] sm:$0xf]
    %v241 = vld [vmem:[#allocation19 + $0x50] sm:$0xf]
    %v242 = vld [vmem:[#allocation19 + $0x54] sm:$0xf]
    %v243 = vld [vmem:[#allocation19 + $0x58] sm:$0xf]
    %v244 = vld [vmem:[#allocation19 + $0x5c] sm:$0xf]
    %v245 = vld [vmem:[#allocation19 + $0x60] sm:$0xf]
    %v246 = vld [vmem:[#allocation19 + $0x64] sm:$0xf]
    %v247 = vld [vmem:[#allocation19 + $0x68] sm:$0xf]
    %v248 = vld [vmem:[#allocation19 + $0x6c] sm:$0xf]
    %v249 = vld [vmem:[#allocation19 + $0x70] sm:$0xf]
    %v250 = vld [vmem:[#allocation19 + $0x74] sm:$0xf]
    %v251 = vld [vmem:[#allocation19 + $0x78] sm:$0xf]
    %v252 = vld [vmem:[#allocation19 + $0x7c] sm:$0xf]
    %v253 = vld [vmem:[#allocation19 + $0x80] sm:$0xf]
    %v254 = vld [vmem:[#allocation19 + $0x84] sm:$0xf]
    %v255 = vld [vmem:[#allocation19 + $0x88] sm:$0xf]
    %v256 = vld [vmem:[#allocation19 + $0x8c] sm:$0xf]
    %v257 = vld [vmem:[#allocation19 + $0x90] sm:$0xf]
    %v258 = vld [vmem:[#allocation19 + $0x94] sm:$0xf]
    %v259 = vld [vmem:[#allocation19 + $0x98] sm:$0xf]
    %v260 = vld [vmem:[#allocation19 + $0x9c] sm:$0xf]
    %v261 = vld [vmem:[#allocation19 + $0xa0] sm:$0xf]
    %v262 = vld [vmem:[#allocation19 + $0xa4] sm:$0xf]
    %v263 = vld [vmem:[#allocation19 + $0xa8] sm:$0xf]
    %v264 = vld [vmem:[#allocation19 + $0xac] sm:$0xf]
    %v265 = vld [vmem:[#allocation19 + $0xb0] sm:$0xf]
    %v266 = vld [vmem:[#allocation19 + $0xb4] sm:$0xf]
    %v267 = vld [vmem:[#allocation19 + $0xb8] sm:$0xf]
    %v268 = vld [vmem:[#allocation19 + $0xbc] sm:$0xf]
    %v269 = vld [vmem:[#allocation19 + $0xc0] sm:$0xf]
    %v270 = vld [vmem:[#allocation19 + $0xc4] sm:$0xf]
    %v271 = vld [vmem:[#allocation19 + $0xc8] sm:$0xf]
    %v272 = vld [vmem:[#allocation19 + $0xcc] sm:$0xf]
    %v273 = vld [vmem:[#allocation19 + $0xd0] sm:$0xf]
    %v274 = vld [vmem:[#allocation19 + $0xd4] sm:$0xf]
    %v275 = vld [vmem:[#allocation19 + $0xd8] sm:$0xf]
    %v276 = vld [vmem:[#allocation19 + $0xdc] sm:$0xf]
    %v277 = vld [vmem:[#allocation19 + $0xe0] sm:$0xf]
    %v278 = vld [vmem:[#allocation19 + $0xe4] sm:$0xf]
    %v279 = vld [vmem:[#allocation19 + $0xe8] sm:$0xf]
    %v280 = vld [vmem:[#allocation19 + $0xec] sm:$0xf]
    %v281 = vld [vmem:[#allocation19 + $0xf0] sm:$0xf]
    %v282 = vld [vmem:[#allocation19 + $0xf4] sm:$0xf]
    %v283 = vld [vmem:[#allocation19 + $0xf8] sm:$0xf]
    %v284 = vld [vmem:[#allocation19 + $0xfc] sm:$0xf]
    %v285 = vld [vmem:[#allocation19 + $0x100] sm:$0xf]
    %v286 = vld [vmem:[#allocation19 + $0x104] sm:$0xf]
    %v287 = vld [vmem:[#allocation19 + $0x108] sm:$0xf]
    %v288 = vld [vmem:[#allocation19 + $0x10c] sm:$0xf]
    %v289 = vld [vmem:[#allocation19 + $0x110] sm:$0xf]
    %v290 = vld [vmem:[#allocation19 + $0x114] sm:$0xf]
    %v291 = vld [vmem:[#allocation19 + $0x118] sm:$0xf]
    %v292 = vld [vmem:[#allocation19 + $0x11c] sm:$0xf]
    %v293 = vld [vmem:[#allocation19 + $0x120] sm:$0xf]
    %v294 = vld [vmem:[#allocation19 + $0x124] sm:$0xf]
    %v295 = vld [vmem:[#allocation19 + $0x128] sm:$0xf]
    %v296 = vld [vmem:[#allocation19 + $0x12c] sm:$0xf]
    %v297 = vld [vmem:[#allocation19 + $0x130] sm:$0xf]
    %v298 = vld [vmem:[#allocation19 + $0x134] sm:$0xf]
    %v299 = vld [vmem:[#allocation19 + $0x138] sm:$0xf]
    %v300 = vld [vmem:[#allocation19 + $0x13c] sm:$0xf]
    %v301 = vld [vmem:[#allocation21] sm:$0x1]
    %v303 = vlaneseq
    %v304 = vshrl.u32 %v303, 7
    %v305 = vsub.s32 0, %v304
    %v306 = vrot.slane %v301, %v305
    %v317 = vunpack.c.l.b16 %v212
    %v318 = vunpack.c.h.b16 %v212
    %v319 = vunpack.c.l.b16 %v213
    %v320 = vunpack.c.h.b16 %v213
    %v321 = vunpack.c.l.b16 %v214
    %v322 = vunpack.c.l.b16 %v215
    %v323 = vunpack.c.h.b16 %v215
    %v324 = vunpack.c.l.b16 %v216
    %v325 = vunpack.c.h.b16 %v216
    %v326 = vunpack.c.l.b16 %v217
    %v327 = vunpack.c.l.b16 %v218
    %v328 = vunpack.c.h.b16 %v218
    %v329 = vunpack.c.l.b16 %v219
    %v330 = vunpack.c.h.b16 %v219
    %v331 = vunpack.c.l.b16 %v220
    %v332 = vpack.c.b16 %v322, %v317
    %v333 = vpack.c.b16 %v323, %v318
    %v334 = vpack.c.b16 %v324, %v319
    %v335 = vpack.c.b16 %v325, %v320
    %v336 = vpack.c.b16 %v326, %v321
    %v337 = vpack.c.b16 %v327, %v327
    %v338 = vpack.c.b16 %v328, %v328
    %v339 = vpack.c.b16 %v329, %v329
    %v340 = vpack.c.b16 %v330, %v330
    %v341 = vpack.c.b16 %v331, %v331
    %v432 = vunpack.c.l.b16 %v221
    %v433 = vunpack.c.l.b16 %v222
    %v434 = vunpack.c.l.b16 %v223
    %v435 = vunpack.c.l.b16 %v224
    %v436 = vunpack.c.l.b16 %v225
    %v437 = vunpack.c.l.b16 %v226
    %v438 = vunpack.c.l.b16 %v227
    %v439 = vunpack.c.l.b16 %v228
    %v440 = vunpack.c.l.b16 %v229
    %v441 = vunpack.c.l.b16 %v230
    %v442 = vunpack.c.l.b16 %v231
    %v443 = vunpack.c.l.b16 %v232
    %v444 = vunpack.c.l.b16 %v233
    %v445 = vunpack.c.l.b16 %v234
    %v446 = vunpack.c.l.b16 %v235
    %v447 = vunpack.c.l.b16 %v236
    %v448 = vunpack.c.l.b16 %v237
    %v449 = vunpack.c.l.b16 %v238
    %v450 = vunpack.c.l.b16 %v239
    %v451 = vunpack.c.l.b16 %v240
    %v452 = vunpack.c.l.b16 %v241
    %v453 = vunpack.c.l.b16 %v242
    %v454 = vunpack.c.l.b16 %v243
    %v455 = vunpack.c.l.b16 %v244
    %v456 = vunpack.c.l.b16 %v245
    %v457 = vunpack.c.l.b16 %v246
    %v458 = vunpack.c.l.b16 %v247
    %v459 = vunpack.c.l.b16 %v248
    %v460 = vunpack.c.l.b16 %v249
    %v461 = vunpack.c.l.b16 %v250
    %v462 = vunpack.c.l.b16 %v251
    %v463 = vunpack.c.l.b16 %v252
    %v464 = vunpack.c.l.b16 %v253
    %v465 = vunpack.c.l.b16 %v254
    %v466 = vunpack.c.l.b16 %v255
    %v467 = vunpack.c.l.b16 %v256
    %v468 = vunpack.c.l.b16 %v257
    %v469 = vunpack.c.l.b16 %v258
    %v470 = vunpack.c.l.b16 %v259
    %v471 = vunpack.c.l.b16 %v260
    %v472 = vunpack.c.l.b16 %v261
    %v473 = vunpack.c.l.b16 %v262
    %v474 = vunpack.c.l.b16 %v263
    %v475 = vunpack.c.l.b16 %v264
    %v476 = vunpack.c.l.b16 %v265
    %v477 = vunpack.c.l.b16 %v266
    %v478 = vunpack.c.l.b16 %v267
    %v479 = vunpack.c.l.b16 %v268
    %v480 = vunpack.c.l.b16 %v269
    %v481 = vunpack.c.l.b16 %v270
    %v482 = vunpack.c.l.b16 %v271
    %v483 = vunpack.c.l.b16 %v272
    %v484 = vunpack.c.l.b16 %v273
    %v485 = vunpack.c.l.b16 %v274
    %v486 = vunpack.c.l.b16 %v275
    %v487 = vunpack.c.l.b16 %v276
    %v488 = vunpack.c.l.b16 %v277
    %v489 = vunpack.c.l.b16 %v278
    %v490 = vunpack.c.l.b16 %v279
    %v491 = vunpack.c.l.b16 %v280
    %v492 = vunpack.c.l.b16 %v281
    %v493 = vunpack.c.l.b16 %v282
    %v494 = vunpack.c.l.b16 %v283
    %v495 = vunpack.c.l.b16 %v284
    %v496 = vunpack.c.l.b16 %v285
    %v497 = vunpack.c.l.b16 %v286
    %v498 = vunpack.c.l.b16 %v287
    %v499 = vunpack.c.l.b16 %v288
    %v500 = vunpack.c.l.b16 %v289
    %v501 = vunpack.c.l.b16 %v290
    %v502 = vunpack.c.l.b16 %v291
    %v503 = vunpack.c.l.b16 %v292
    %v504 = vunpack.c.l.b16 %v293
    %v505 = vunpack.c.l.b16 %v294
    %v506 = vunpack.c.l.b16 %v295
    %v507 = vunpack.c.l.b16 %v296
    %v508 = vunpack.c.l.b16 %v297
    %v509 = vunpack.c.l.b16 %v298
    %v510 = vunpack.c.l.b16 %v299
    %v511 = vunpack.c.l.b16 %v300
    %v512 = vpack.c.b16 %v433, %v432
    %v513 = vpack.c.b16 %v435, %v434
    %v514 = vpack.c.b16 %v437, %v436
    %v515 = vpack.c.b16 %v439, %v438
    %v516 = vpack.c.b16 %v441, %v440
    %v517 = vpack.c.b16 %v443, %v442
    %v518 = vpack.c.b16 %v445, %v444
    %v519 = vpack.c.b16 %v447, %v446
    %v520 = vpack.c.b16 %v449, %v448
    %v521 = vpack.c.b16 %v451, %v450
    %v522 = vpack.c.b16 %v453, %v452
    %v523 = vpack.c.b16 %v455, %v454
    %v524 = vpack.c.b16 %v457, %v456
    %v525 = vpack.c.b16 %v459, %v458
    %v526 = vpack.c.b16 %v461, %v460
    %v527 = vpack.c.b16 %v463, %v462
    %v528 = vpack.c.b16 %v465, %v464
    %v529 = vpack.c.b16 %v467, %v466
    %v530 = vpack.c.b16 %v469, %v468
    %v531 = vpack.c.b16 %v471, %v470
    %v532 = vpack.c.b16 %v473, %v472
    %v533 = vpack.c.b16 %v475, %v474
    %v534 = vpack.c.b16 %v477, %v476
    %v535 = vpack.c.b16 %v479, %v478
    %v536 = vpack.c.b16 %v481, %v480
    %v537 = vpack.c.b16 %v483, %v482
    %v538 = vpack.c.b16 %v485, %v484
    %v539 = vpack.c.b16 %v487, %v486
    %v540 = vpack.c.b16 %v489, %v488
    %v541 = vpack.c.b16 %v491, %v490
    %v542 = vpack.c.b16 %v493, %v492
    %v543 = vpack.c.b16 %v495, %v494
    %v544 = vpack.c.b16 %v497, %v496
    %v545 = vpack.c.b16 %v499, %v498
    %v546 = vpack.c.b16 %v501, %v500
    %v547 = vpack.c.b16 %v503, %v502
    %v548 = vpack.c.b16 %v505, %v504
    %v549 = vpack.c.b16 %v507, %v506
    %v550 = vpack.c.b16 %v509, %v508
    %v551 = vpack.c.b16 %v511, %v510
    %592 = vmatprep.subr.bf16.mxu0 0
    %593 = vmatpush1.bf16.msra.mxu0 %v512
    %594 = vmatprep.subr.bf16.mxu0 0
    %595 = vmatpush1.bf16.msra.mxu0 %v513
    %596 = vmatprep.subr.bf16.mxu0 0
    %597 = vmatpush1.bf16.msra.mxu0 %v514
    %598 = vmatprep.subr.bf16.mxu0 0
    %599 = vmatpush1.bf16.msra.mxu0 %v515
    %600 = vmatprep.subr.bf16.mxu0 0
    %601 = vmatpush1.bf16.msra.mxu0 %v516
    %602 = vmatprep.subr.bf16.mxu0 0
    %603 = vmatpush1.bf16.msra.mxu0 %v517
    %604 = vmatprep.subr.bf16.mxu0 0
    %605 = vmatpush1.bf16.msra.mxu0 %v518
    %606 = vmatprep.subr.bf16.mxu0 0
    %607 = vmatpush1.bf16.msra.mxu0 %v519
    %608 = vmatprep.subr.bf16.mxu0 0
    %609 = vmatpush1.bf16.msra.mxu0 %v520
    %610 = vmatprep.subr.bf16.mxu0 0
    %611 = vmatpush1.bf16.msra.mxu0 %v521
    %612 = vmatprep.subr.bf16.mxu0 0
    %613 = vmatpush1.bf16.msra.mxu0 %v522
    %614 = vmatprep.subr.bf16.mxu0 0
    %615 = vmatpush1.bf16.msra.mxu0 %v523
    %616 = vmatprep.subr.bf16.mxu0 0
    %617 = vmatpush1.bf16.msra.mxu0 %v524
    %618 = vmatprep.subr.bf16.mxu0 0
    %619 = vmatpush1.bf16.msra.mxu0 %v525
    %620 = vmatprep.subr.bf16.mxu0 0
    %621 = vmatpush1.bf16.msra.mxu0 %v526
    %622 = vmatprep.subr.bf16.mxu0 0
    %623 = vmatpush1.bf16.msra.mxu0 %v527
    %624 = vmatprep.mubr.bf16.mxu0 %v333
    %625 = vmatmul.mubr.bf16.gmra.mrb[0].mxu0 %v332
    %v626 = vpop.f32.mrb[0].mxu0
    %v627 = vadd.f32 %v306, %v626
    %v628 = vpop.f32.mrb[0].mxu0
    %v629 = vpop.f32.mrb[0].mxu0
    %v630 = vadd.f32 %v306, %v629
    %v631 = vpop.f32.mrb[0].mxu0
    %632 = vmatprep.mubr.bf16.mxu0 %v338
    %633 = vmatmul.mubr.bf16.gmra.mrb[0].mxu0 %v337
    %v634 = vpop.f32.mrb[0].mxu0
    %v635 = vadd.f32 %v306, %v634
    %v636 = vpop.f32.mrb[0].mxu0
    %v637 = vpop.f32.mrb[0].mxu0
    %v638 = vpop.f32.mrb[0].mxu0
    %639 = vdwg.mxu0
    %640 = vmatprep.subr.bf16.mxu0 0
    %641 = vmatpush1.bf16.msra.mxu0 %v528
    %642 = vmatprep.subr.bf16.mxu0 0
    %643 = vmatpush1.bf16.msra.mxu0 %v529
    %644 = vmatprep.subr.bf16.mxu0 0
    %645 = vmatpush1.bf16.msra.mxu0 %v530
    %646 = vmatprep.subr.bf16.mxu0 0
    %647 = vmatpush1.bf16.msra.mxu0 %v531
    %648 = vmatprep.subr.bf16.mxu0 0
    %649 = vmatpush1.bf16.msra.mxu0 %v532
    %650 = vmatprep.subr.bf16.mxu0 0
    %651 = vmatpush1.bf16.msra.mxu0 %v533
    %652 = vmatprep.subr.bf16.mxu0 0
    %653 = vmatpush1.bf16.msra.mxu0 %v534
    %654 = vmatprep.subr.bf16.mxu0 0
    %655 = vmatpush1.bf16.msra.mxu0 %v535
    %656 = vmatprep.subr.bf16.mxu0 0
    %657 = vmatpush1.bf16.msra.mxu0 %v536
    %658 = vmatprep.subr.bf16.mxu0 0
    %659 = vmatpush1.bf16.msra.mxu0 %v537
    %660 = vmatprep.subr.bf16.mxu0 0
    %661 = vmatpush1.bf16.msra.mxu0 %v538
    %662 = vmatprep.subr.bf16.mxu0 0
    %663 = vmatpush1.bf16.msra.mxu0 %v539
    %664 = vmatprep.subr.bf16.mxu0 0
    %665 = vmatpush1.bf16.msra.mxu0 %v540
    %666 = vmatprep.subr.bf16.mxu0 0
    %667 = vmatpush1.bf16.msra.mxu0 %v541
    %668 = vmatprep.subr.bf16.mxu0 0
    %669 = vmatpush1.bf16.msra.mxu0 %v542
    %670 = vmatprep.subr.bf16.mxu0 0
    %671 = vmatpush1.bf16.msra.mxu0 %v543
    %672 = vmatprep.mubr.bf16.mxu0 %v335
    %673 = vmatmul.mubr.bf16.gmra.mrb[0].mxu0 %v334
    %v674 = vpop.f32.mrb[0].mxu0
    %v675 = vadd.f32 %v627, %v674
    %v676 = vpop.f32.mrb[0].mxu0
    %v677 = vpop.f32.mrb[0].mxu0
    %v678 = vadd.f32 %v630, %v677
    %v679 = vpop.f32.mrb[0].mxu0
    %680 = vmatprep.mubr.bf16.mxu0 %v340
    %681 = vmatmul.mubr.bf16.gmra.mrb[0].mxu0 %v339
    %v682 = vpop.f32.mrb[0].mxu0
    %v683 = vadd.f32 %v635, %v682
    %v684 = vpop.f32.mrb[0].mxu0
    %v685 = vpop.f32.mrb[0].mxu0
    %v686 = vpop.f32.mrb[0].mxu0
    %687 = vdwg.mxu0
    %688 = vmatprep.subr.bf16.mxu0 0
    %689 = vmatpush1.bf16.msra.mxu0 %v544
    %690 = vmatprep.subr.bf16.mxu0 0
    %691 = vmatpush1.bf16.msra.mxu0 %v545
    %692 = vmatprep.subr.bf16.mxu0 0
    %693 = vmatpush1.bf16.msra.mxu0 %v546
    %694 = vmatprep.subr.bf16.mxu0 0
    %695 = vmatpush1.bf16.msra.mxu0 %v547
    %696 = vmatprep.subr.bf16.mxu0 0
    %697 = vmatpush1.bf16.msra.mxu0 %v548
    %698 = vmatprep.subr.bf16.mxu0 0
    %699 = vmatpush1.bf16.msra.mxu0 %v549
    %700 = vmatprep.subr.bf16.mxu0 0
    %701 = vmatpush1.bf16.msra.mxu0 %v550
    %702 = vmatprep.subr.bf16.mxu0 0
    %703 = vmatpush1.bf16.msra.mxu0 %v551
    %704 = vmatprep.subr.bf16.mxu0 0
    %705 = vmatpush1.bf16.msra.mxu0 0
    %706 = vmatprep.subr.bf16.mxu0 0
    %707 = vmatpush1.bf16.msra.mxu0 0
    %708 = vmatprep.subr.bf16.mxu0 0
    %709 = vmatpush1.bf16.msra.mxu0 0
    %710 = vmatprep.subr.bf16.mxu0 0
    %711 = vmatpush1.bf16.msra.mxu0 0
    %712 = vmatprep.subr.bf16.mxu0 0
    %713 = vmatpush1.bf16.msra.mxu0 0
    %714 = vmatprep.subr.bf16.mxu0 0
    %715 = vmatpush1.bf16.msra.mxu0 0
    %716 = vmatprep.subr.bf16.mxu0 0
    %717 = vmatpush1.bf16.msra.mxu0 0
    %718 = vmatprep.subr.bf16.mxu0 0
    %719 = vmatpush1.bf16.msra.mxu0 0
    %720 = vmatprep.mubr.bf16.mxu0 0
    %721 = vmatmul.mubr.bf16.gmra.mrb[0].mxu0 %v336
    %v722 = vpop.f32.mrb[0].mxu0
    %v723 = vadd.f32 %v675, %v722
    %v724 = vpop.f32.mrb[0].mxu0
    %v725 = vpop.f32.mrb[0].mxu0
    %v726 = vadd.f32 %v678, %v725
    %v727 = vpop.f32.mrb[0].mxu0
    %728 = vmatprep.mubr.bf16.mxu0 0
    %729 = vmatmul.mubr.bf16.gmra.mrb[0].mxu0 %v341
    %v730 = vpop.f32.mrb[0].mxu0
    %v731 = vadd.f32 %v683, %v730
    %v732 = vpop.f32.mrb[0].mxu0
    %v733 = vpop.f32.mrb[0].mxu0
    %v734 = vpop.f32.mrb[0].mxu0
    %735 = vdwg.mxu0
    %v736 = vlaneseq
    %v737 = vshrl.u32 %v736, 7
    %s738 = sld [smem:[#allocation3]]
    %v739 = vstv %s738
    %vm740 = vcmp.lt.s32.totalorder %v737, %v739
    %v741 = vsel %vm740, %v723, -inf
    %v742 = vrot.slane %v741, 4
    %v743 = vmax.f32 %v741, %v742
    %v744 = vrot.slane %v743, 2
    %v745 = vmax.f32 %v743, %v744
    %v746 = vrot.slane %v745, 1
    %v747 = vmax.f32 %v745, %v746
    %s748 = sld [smem:[#allocation7]]
    %v749 = vstv %s748
    %vm750 = vcmp.eq.s32.totalorder %v737, %v749
    %v751 = vsel %vm750, %v723, 0.0
    %v752 = vrot.slane %v751, 4
    %v753 = vadd.f32 %v751, %v752
    %v754 = vrot.slane %v753, 2
    %v755 = vadd.f32 %v753, %v754
    %v756 = vrot.slane %v755, 1
    %v757 = vadd.f32 %v755, %v756
    %s758 = sld [smem:[#allocation3 + $0x1]]
    %v759 = vstv %s758
    %vm760 = vcmp.lt.s32.totalorder %v737, %v759
    %v761 = vsel %vm760, %v726, -inf
    %v762 = vrot.slane %v761, 4
    %v763 = vmax.f32 %v761, %v762
    %v764 = vrot.slane %v763, 2
    %v765 = vmax.f32 %v763, %v764
    %v766 = vrot.slane %v765, 1
    %v767 = vmax.f32 %v765, %v766
    %s768 = sld [smem:[#allocation7 + $0x1]]
    %v769 = vstv %s768
    %vm770 = vcmp.eq.s32.totalorder %v737, %v769
    %v771 = vsel %vm770, %v726, 0.0
    %v772 = vrot.slane %v771, 4
    %v773 = vadd.f32 %v771, %v772
    %v774 = vrot.slane %v773, 2
    %v775 = vadd.f32 %v773, %v774
    %v776 = vrot.slane %v775, 1
    %v777 = vadd.f32 %v775, %v776
    %s778 = sld [smem:[#allocation3 + $0x2]]
    %v779 = vstv %s778
    %vm780 = vcmp.lt.s32.totalorder %v737, %v779
    %v781 = vsel %vm780, %v731, -inf
    %v782 = vrot.slane %v781, 4
    %v783 = vmax.f32 %v781, %v782
    %v784 = vrot.slane %v783, 2
    %v785 = vmax.f32 %v783, %v784
    %v786 = vrot.slane %v785, 1
    %v787 = vmax.f32 %v785, %v786
    %vm788 = vcmask 1040384
    %v789 = vsel %vm788, 0.0, %v747
    %vm790 = vcmask 1041408
    %v791 = vsel %vm790, %v789, %v767
    %v792 = vsel %vm788, 0.0, %v757
    %v793 = vsel %vm790, %v792, %v777
    %v794 = vld [vmem:[#allocation10] sm:$0x7]
    %v795 = vld [vmem:[#allocation13] sm:$0xff]
    %v796 = vld [vmem:[#allocation13 + $0x8] sm:$0xff]
    %v797 = vld [vmem:[#allocation13 + $0x10] sm:$0xff]
    %v798 = vld [vmem:[#allocation13 + $0x18] sm:$0xff]
    %v799 = vld [vmem:[#allocation13 + $0x20] sm:$0xff]
    %v800 = vld [vmem:[#allocation13 + $0x28] sm:$0xff]
    %v801 = vld [vmem:[#allocation13 + $0x30] sm:$0xff]
    %v802 = vld [vmem:[#allocation13 + $0x38] sm:$0xff]
    %v803 = vld [vmem:[#allocation13 + $0x40] sm:$0xff]
    %v804 = vld [vmem:[#allocation13 + $0x48] sm:$0xff]
    %v805 = vld [vmem:[#allocation13 + $0x50] sm:$0xff]
    %v806 = vld [vmem:[#allocation13 + $0x58] sm:$0xff]
    %v807 = vld [vmem:[#allocation13 + $0x60] sm:$0xff]
    %v808 = vld [vmem:[#allocation13 + $0x68] sm:$0xff]
    %v809 = vld [vmem:[#allocation13 + $0x70] sm:$0xff]
    %v810 = vld [vmem:[#allocation13 + $0x78] sm:$0xff]
    %v811 = vld [vmem:[#allocation13 + $0x80] sm:$0xff]
    %v812 = vld [vmem:[#allocation13 + $0x88] sm:$0xff]
    %v813 = vld [vmem:[#allocation13 + $0x90] sm:$0xff]
    %v814 = vld [vmem:[#allocation13 + $0x98] sm:$0xff]
    %v815 = vld [vmem:[#allocation13 + $0xa0] sm:$0xff]
    %v816 = vld [vmem:[#allocation13 + $0xa8] sm:$0xff]
    %v817 = vld [vmem:[#allocation13 + $0xb0] sm:$0xff]
    %v818 = vld [vmem:[#allocation13 + $0xb8] sm:$0xff]
    %v819 = vld [vmem:[#allocation13 + $0xc0] sm:$0xff]
    %v820 = vld [vmem:[#allocation13 + $0xc8] sm:$0xff]
    %v821 = vld [vmem:[#allocation13 + $0xd0] sm:$0xff]
    %v822 = vld [vmem:[#allocation13 + $0xd8] sm:$0xff]
    %v823 = vld [vmem:[#allocation13 + $0xe0] sm:$0xff]
    %v824 = vld [vmem:[#allocation13 + $0xe8] sm:$0xff]
    %v825 = vld [vmem:[#allocation13 + $0xf0] sm:$0xff]
    %v826 = vld [vmem:[#allocation13 + $0xf8] sm:$0xff]
    %v827 = vld [vmem:[#allocation13 + $0x100] sm:$0xff]
    %v828 = vld [vmem:[#allocation13 + $0x108] sm:$0xff]
    %v829 = vld [vmem:[#allocation13 + $0x110] sm:$0xff]
    %v830 = vld [vmem:[#allocation13 + $0x118] sm:$0xff]
    %v831 = vld [vmem:[#allocation13 + $0x120] sm:$0xff]
    %v832 = vld [vmem:[#allocation13 + $0x128] sm:$0xff]
    %v833 = vld [vmem:[#allocation13 + $0x130] sm:$0xff]
    %v834 = vld [vmem:[#allocation13 + $0x138] sm:$0xff]
    %v835 = vld [vmem:[#allocation13 + $0x140] sm:$0xff]
    %v836 = vld [vmem:[#allocation13 + $0x148] sm:$0xff]
    %v837 = vld [vmem:[#allocation13 + $0x150] sm:$0xff]
    %v838 = vld [vmem:[#allocation13 + $0x158] sm:$0xff]
    %v839 = vld [vmem:[#allocation13 + $0x160] sm:$0xff]
    %v840 = vld [vmem:[#allocation13 + $0x168] sm:$0xff]
    %v841 = vld [vmem:[#allocation13 + $0x170] sm:$0xff]
    %v842 = vld [vmem:[#allocation13 + $0x178] sm:$0xff]
    %v843 = vld [vmem:[#allocation13 + $0x180] sm:$0xff]
    %v844 = vld [vmem:[#allocation13 + $0x188] sm:$0xff]
    %v845 = vld [vmem:[#allocation13 + $0x190] sm:$0xff]
    %v846 = vld [vmem:[#allocation13 + $0x198] sm:$0xff]
    %v847 = vld [vmem:[#allocation13 + $0x1a0] sm:$0xff]
    %v848 = vld [vmem:[#allocation13 + $0x1a8] sm:$0xff]
    %v849 = vld [vmem:[#allocation13 + $0x1b0] sm:$0xff]
    %v850 = vld [vmem:[#allocation13 + $0x1b8] sm:$0xff]
    %v851 = vld [vmem:[#allocation13 + $0x1c0] sm:$0xff]
    %v852 = vld [vmem:[#allocation13 + $0x1c8] sm:$0xff]
    %v853 = vld [vmem:[#allocation13 + $0x1d0] sm:$0xff]
    %v854 = vld [vmem:[#allocation13 + $0x1d8] sm:$0xff]
    %v855 = vld [vmem:[#allocation13 + $0x1e0] sm:$0xff]
    %v856 = vld [vmem:[#allocation13 + $0x1e8] sm:$0xff]
    %v857 = vld [vmem:[#allocation13 + $0x1f0] sm:$0xff]
    %v858 = vld [vmem:[#allocation13 + $0x1f8] sm:$0xff]
    %v859 = vld [vmem:[#allocation13 + $0x200] sm:$0xff]
    %v860 = vld [vmem:[#allocation13 + $0x208] sm:$0xff]
    %v861 = vld [vmem:[#allocation13 + $0x210] sm:$0xff]
    %v862 = vld [vmem:[#allocation13 + $0x218] sm:$0xff]
    %v863 = vld [vmem:[#allocation13 + $0x220] sm:$0xff]
    %v864 = vld [vmem:[#allocation13 + $0x228] sm:$0xff]
    %v865 = vld [vmem:[#allocation13 + $0x230] sm:$0xff]
    %v866 = vld [vmem:[#allocation13 + $0x238] sm:$0xff]
    %v867 = vld [vmem:[#allocation13 + $0x240] sm:$0xff]
    %v868 = vld [vmem:[#allocation13 + $0x248] sm:$0xff]
    %v869 = vld [vmem:[#allocation13 + $0x250] sm:$0xff]
    %v870 = vld [vmem:[#allocation13 + $0x258] sm:$0xff]
    %v871 = vld [vmem:[#allocation13 + $0x260] sm:$0xff]
    %v872 = vld [vmem:[#allocation13 + $0x268] sm:$0xff]
    %v873 = vld [vmem:[#allocation13 + $0x270] sm:$0xff]
    %v874 = vld [vmem:[#allocation13 + $0x278] sm:$0xff]
    %v875 = vld [vmem:[#allocation13 + $0x280] sm:$0xff]
    %v876 = vld [vmem:[#allocation13 + $0x288] sm:$0xff]
    %v877 = vld [vmem:[#allocation13 + $0x290] sm:$0xff]
    %v878 = vld [vmem:[#allocation13 + $0x298] sm:$0xff]
    %v879 = vld [vmem:[#allocation13 + $0x2a0] sm:$0xff]
    %v880 = vld [vmem:[#allocation13 + $0x2a8] sm:$0xff]
    %v881 = vld [vmem:[#allocation13 + $0x2b0] sm:$0xff]
    %v882 = vld [vmem:[#allocation13 + $0x2b8] sm:$0xff]
    %v883 = vld [vmem:[#allocation13 + $0x2c0] sm:$0xff]
    %v884 = vld [vmem:[#allocation13 + $0x2c8] sm:$0xff]
    %v885 = vld [vmem:[#allocation13 + $0x2d0] sm:$0xff]
    %v886 = vld [vmem:[#allocation13 + $0x2d8] sm:$0xff]
    %v887 = vld [vmem:[#allocation13 + $0x2e0] sm:$0xff]
    %v888 = vld [vmem:[#allocation13 + $0x2e8] sm:$0xff]
    %v889 = vld [vmem:[#allocation13 + $0x2f0] sm:$0xff]
    %v890 = vld [vmem:[#allocation13 + $0x2f8] sm:$0xff]
    %v891 = vld [vmem:[#allocation13 + $0x300] sm:$0xff]
    %v892 = vld [vmem:[#allocation13 + $0x308] sm:$0xff]
    %v893 = vld [vmem:[#allocation13 + $0x310] sm:$0xff]
    %v894 = vld [vmem:[#allocation13 + $0x318] sm:$0xff]
    %v895 = vld [vmem:[#allocation13 + $0x320] sm:$0xff]
    %v896 = vld [vmem:[#allocation13 + $0x328] sm:$0xff]
    %v897 = vld [vmem:[#allocation13 + $0x330] sm:$0xff]
    %v898 = vld [vmem:[#allocation13 + $0x338] sm:$0xff]
    %v899 = vld [vmem:[#allocation13 + $0x340] sm:$0xff]
    %v900 = vld [vmem:[#allocation13 + $0x348] sm:$0xff]
    %v901 = vld [vmem:[#allocation13 + $0x350] sm:$0xff]
    %v902 = vld [vmem:[#allocation13 + $0x358] sm:$0xff]
    %v903 = vld [vmem:[#allocation13 + $0x360] sm:$0xff]
    %v904 = vld [vmem:[#allocation13 + $0x368] sm:$0xff]
    %v905 = vld [vmem:[#allocation13 + $0x370] sm:$0xff]
    %v906 = vld [vmem:[#allocation13 + $0x378] sm:$0xff]
    %v907 = vld [vmem:[#allocation13 + $0x380] sm:$0xff]
    %v908 = vld [vmem:[#allocation13 + $0x388] sm:$0xff]
    %v909 = vld [vmem:[#allocation13 + $0x390] sm:$0xff]
    %v910 = vld [vmem:[#allocation13 + $0x398] sm:$0xff]
    %v911 = vld [vmem:[#allocation13 + $0x3a0] sm:$0xff]
    %v912 = vld [vmem:[#allocation13 + $0x3a8] sm:$0xff]
    %v913 = vld [vmem:[#allocation13 + $0x3b0] sm:$0xff]
    %v914 = vld [vmem:[#allocation13 + $0x3b8] sm:$0xff]
    %v915 = vld [vmem:[#allocation13 + $0x3c0] sm:$0xff]
    %v916 = vld [vmem:[#allocation13 + $0x3c8] sm:$0xff]
    %v917 = vld [vmem:[#allocation13 + $0x3d0] sm:$0xff]
    %v918 = vld [vmem:[#allocation13 + $0x3d8] sm:$0xff]
    %v919 = vld [vmem:[#allocation13 + $0x3e0] sm:$0xff]
    %v920 = vld [vmem:[#allocation13 + $0x3e8] sm:$0xff]
    %v921 = vld [vmem:[#allocation13 + $0x3f0] sm:$0xff]
    %v922 = vld [vmem:[#allocation13 + $0x3f8] sm:$0xff]
    %v923 = vld [vmem:[#allocation13 + $0x400] sm:$0xff]
    %v924 = vld [vmem:[#allocation13 + $0x408] sm:$0xff]
    %v925 = vld [vmem:[#allocation13 + $0x410] sm:$0xff]
    %v926 = vld [vmem:[#allocation13 + $0x418] sm:$0xff]
    %v927 = vld [vmem:[#allocation13 + $0x420] sm:$0xff]
    %v928 = vld [vmem:[#allocation13 + $0x428] sm:$0xff]
    %v929 = vld [vmem:[#allocation13 + $0x430] sm:$0xff]
    %v930 = vld [vmem:[#allocation13 + $0x438] sm:$0xff]
    %v931 = vld [vmem:[#allocation13 + $0x440] sm:$0xff]
    %v932 = vld [vmem:[#allocation13 + $0x448] sm:$0xff]
    %v933 = vld [vmem:[#allocation13 + $0x450] sm:$0xff]
    %v934 = vld [vmem:[#allocation13 + $0x458] sm:$0xff]
    %v935 = vld [vmem:[#allocation13 + $0x460] sm:$0xff]
    %v936 = vld [vmem:[#allocation13 + $0x468] sm:$0xff]
    %v937 = vld [vmem:[#allocation13 + $0x470] sm:$0xff]
    %v938 = vld [vmem:[#allocation13 + $0x478] sm:$0xff]
    %v939 = vld [vmem:[#allocation13 + $0x480] sm:$0xff]
    %v940 = vld [vmem:[#allocation13 + $0x488] sm:$0xff]
    %v941 = vld [vmem:[#allocation13 + $0x490] sm:$0xff]
    %v942 = vld [vmem:[#allocation13 + $0x498] sm:$0xff]
    %v943 = vld [vmem:[#allocation13 + $0x4a0] sm:$0xff]
    %v944 = vld [vmem:[#allocation13 + $0x4a8] sm:$0xff]
    %v945 = vld [vmem:[#allocation13 + $0x4b0] sm:$0xff]
    %v946 = vld [vmem:[#allocation13 + $0x4b8] sm:$0xff]
    %v947 = vld [vmem:[#allocation13 + $0x4c0] sm:$0xff]
    %v948 = vld [vmem:[#allocation13 + $0x4c8] sm:$0xff]
    %v949 = vld [vmem:[#allocation13 + $0x4d0] sm:$0xff]
    %v950 = vld [vmem:[#allocation13 + $0x4d8] sm:$0xff]
    %v951 = vld [vmem:[#allocation13 + $0x4e0] sm:$0xff]
    %v952 = vld [vmem:[#allocation13 + $0x4e8] sm:$0xff]
    %v953 = vld [vmem:[#allocation13 + $0x4f0] sm:$0xff]
    %v954 = vld [vmem:[#allocation13 + $0x4f8] sm:$0xff]
    %v955 = vld [vmem:[#allocation13 + $0x500] sm:$0xff]
    %v956 = vld [vmem:[#allocation13 + $0x508] sm:$0xff]
    %v957 = vld [vmem:[#allocation13 + $0x510] sm:$0xff]
    %v958 = vld [vmem:[#allocation13 + $0x518] sm:$0xff]
    %v959 = vld [vmem:[#allocation13 + $0x520] sm:$0xff]
    %v960 = vld [vmem:[#allocation13 + $0x528] sm:$0xff]
    %v961 = vld [vmem:[#allocation13 + $0x530] sm:$0xff]
    %v962 = vld [vmem:[#allocation13 + $0x538] sm:$0xff]
    %v963 = vld [vmem:[#allocation13 + $0x540] sm:$0xff]
    %v964 = vld [vmem:[#allocation13 + $0x548] sm:$0xff]
    %v965 = vld [vmem:[#allocation13 + $0x550] sm:$0xff]
    %v966 = vld [vmem:[#allocation13 + $0x558] sm:$0xff]
    %v967 = vld [vmem:[#allocation13 + $0x560] sm:$0xff]
    %v968 = vld [vmem:[#allocation13 + $0x568] sm:$0xff]
    %v969 = vld [vmem:[#allocation13 + $0x570] sm:$0xff]
    %v970 = vld [vmem:[#allocation13 + $0x578] sm:$0xff]
    %v971 = vld [vmem:[#allocation13 + $0x580] sm:$0xff]
    %v972 = vld [vmem:[#allocation13 + $0x588] sm:$0xff]
    %v973 = vld [vmem:[#allocation13 + $0x590] sm:$0xff]
    %v974 = vld [vmem:[#allocation13 + $0x598] sm:$0xff]
    %v975 = vld [vmem:[#allocation13 + $0x5a0] sm:$0xff]
    %v976 = vld [vmem:[#allocation13 + $0x5a8] sm:$0xff]
    %v977 = vld [vmem:[#allocation13 + $0x5b0] sm:$0xff]
    %v978 = vld [vmem:[#allocation13 + $0x5b8] sm:$0xff]
    %v979 = vld [vmem:[#allocation13 + $0x5c0] sm:$0xff]
    %v980 = vld [vmem:[#allocation13 + $0x5c8] sm:$0xff]
    %v981 = vld [vmem:[#allocation13 + $0x5d0] sm:$0xff]
    %v982 = vld [vmem:[#allocation13 + $0x5d8] sm:$0xff]
    %v983 = vld [vmem:[#allocation13 + $0x5e0] sm:$0xff]
    %v984 = vld [vmem:[#allocation13 + $0x5e8] sm:$0xff]
    %v985 = vld [vmem:[#allocation13 + $0x5f0] sm:$0xff]
    %v986 = vld [vmem:[#allocation13 + $0x5f8] sm:$0xff]
    %v987 = vld [vmem:[#allocation13 + $0x600] sm:$0xff]
    %v988 = vld [vmem:[#allocation13 + $0x608] sm:$0xff]
    %v989 = vld [vmem:[#allocation13 + $0x610] sm:$0xff]
    %v990 = vld [vmem:[#allocation13 + $0x618] sm:$0xff]
    %v991 = vld [vmem:[#allocation13 + $0x620] sm:$0xff]
    %v992 = vld [vmem:[#allocation13 + $0x628] sm:$0xff]
    %v993 = vld [vmem:[#allocation13 + $0x630] sm:$0xff]
    %v994 = vld [vmem:[#allocation13 + $0x638] sm:$0xff]
    %v995 = vld [vmem:[#allocation13 + $0x640] sm:$0xff]
    %v996 = vld [vmem:[#allocation13 + $0x648] sm:$0xff]
    %v997 = vld [vmem:[#allocation13 + $0x650] sm:$0xff]
    %v998 = vld [vmem:[#allocation13 + $0x658] sm:$0xff]
    %v999 = vld [vmem:[#allocation13 + $0x660] sm:$0xff]
    %v1000 = vld [vmem:[#allocation13 + $0x668] sm:$0xff]
    %v1001 = vld [vmem:[#allocation13 + $0x670] sm:$0xff]
    %v1002 = vld [vmem:[#allocation13 + $0x678] sm:$0xff]
    %v1003 = vld [vmem:[#allocation13 + $0x680] sm:$0xff]
    %v1004 = vld [vmem:[#allocation13 + $0x688] sm:$0xff]
    %v1005 = vld [vmem:[#allocation13 + $0x690] sm:$0xff]
    %v1006 = vld [vmem:[#allocation13 + $0x698] sm:$0xff]
    %v1007 = vld [vmem:[#allocation13 + $0x6a0] sm:$0xff]
    %v1008 = vld [vmem:[#allocation13 + $0x6a8] sm:$0xff]
    %v1009 = vld [vmem:[#allocation13 + $0x6b0] sm:$0xff]
    %v1010 = vld [vmem:[#allocation13 + $0x6b8] sm:$0xff]
    %v1011 = vld [vmem:[#allocation13 + $0x6c0] sm:$0xff]
    %v1012 = vld [vmem:[#allocation13 + $0x6c8] sm:$0xff]
    %v1013 = vld [vmem:[#allocation13 + $0x6d0] sm:$0xff]
    %v1014 = vld [vmem:[#allocation13 + $0x6d8] sm:$0xff]
    %v1015 = vld [vmem:[#allocation13 + $0x6e0] sm:$0xff]
    %v1016 = vld [vmem:[#allocation13 + $0x6e8] sm:$0xff]
    %v1017 = vld [vmem:[#allocation13 + $0x6f0] sm:$0xff]
    %v1018 = vld [vmem:[#allocation13 + $0x6f8] sm:$0xff]
    %v1019 = vld [vmem:[#allocation13 + $0x700] sm:$0xff]
    %v1020 = vld [vmem:[#allocation13 + $0x708] sm:$0xff]
    %v1021 = vld [vmem:[#allocation13 + $0x710] sm:$0xff]
    %v1022 = vld [vmem:[#allocation13 + $0x718] sm:$0xff]
    %v1023 = vld [vmem:[#allocation13 + $0x720] sm:$0xff]
    %v1024 = vld [vmem:[#allocation13 + $0x728] sm:$0xff]
    %v1025 = vld [vmem:[#allocation13 + $0x730] sm:$0xff]
    %v1026 = vld [vmem:[#allocation13 + $0x738] sm:$0xff]
    %v1027 = vld [vmem:[#allocation13 + $0x740] sm:$0xff]
    %v1028 = vld [vmem:[#allocation13 + $0x748] sm:$0xff]
    %v1029 = vld [vmem:[#allocation13 + $0x750] sm:$0xff]
    %v1030 = vld [vmem:[#allocation13 + $0x758] sm:$0xff]
    %v1031 = vld [vmem:[#allocation13 + $0x760] sm:$0xff]
    %v1032 = vld [vmem:[#allocation13 + $0x768] sm:$0xff]
    %v1033 = vld [vmem:[#allocation13 + $0x770] sm:$0xff]
    %v1034 = vld [vmem:[#allocation13 + $0x778] sm:$0xff]
    %v1035 = vld [vmem:[#allocation13 + $0x780] sm:$0xff]
    %v1036 = vld [vmem:[#allocation13 + $0x788] sm:$0xff]
    %v1037 = vld [vmem:[#allocation13 + $0x790] sm:$0xff]
    %v1038 = vld [vmem:[#allocation13 + $0x798] sm:$0xff]
    %v1039 = vld [vmem:[#allocation13 + $0x7a0] sm:$0xff]
    %v1040 = vld [vmem:[#allocation13 + $0x7a8] sm:$0xff]
    %v1041 = vld [vmem:[#allocation13 + $0x7b0] sm:$0xff]
    %v1042 = vld [vmem:[#allocation13 + $0x7b8] sm:$0xff]
    %v1043 = vld [vmem:[#allocation13 + $0x7c0] sm:$0xff]
    %v1044 = vld [vmem:[#allocation13 + $0x7c8] sm:$0xff]
    %v1045 = vld [vmem:[#allocation13 + $0x7d0] sm:$0xff]
    %v1046 = vld [vmem:[#allocation13 + $0x7d8] sm:$0xff]
    %v1047 = vld [vmem:[#allocation13 + $0x7e0] sm:$0xff]
    %v1048 = vld [vmem:[#allocation13 + $0x7e8] sm:$0xff]
    %v1049 = vld [vmem:[#allocation13 + $0x7f0] sm:$0xff]
    %v1050 = vld [vmem:[#allocation13 + $0x7f8] sm:$0xff]
    %v1051 = vld [vmem:[#allocation13 + $0x800] sm:$0xff]
    %v1052 = vld [vmem:[#allocation13 + $0x808] sm:$0xff]
    %v1053 = vld [vmem:[#allocation13 + $0x810] sm:$0xff]
    %v1054 = vld [vmem:[#allocation13 + $0x818] sm:$0xff]
    %v1055 = vld [vmem:[#allocation13 + $0x820] sm:$0xff]
    %v1056 = vld [vmem:[#allocation13 + $0x828] sm:$0xff]
    %v1057 = vld [vmem:[#allocation13 + $0x830] sm:$0xff]
    %v1058 = vld [vmem:[#allocation13 + $0x838] sm:$0xff]
    %v1059 = vld [vmem:[#allocation13 + $0x840] sm:$0xff]
    %v1060 = vld [vmem:[#allocation13 + $0x848] sm:$0xff]
    %v1061 = vld [vmem:[#allocation13 + $0x850] sm:$0xff]
    %v1062 = vld [vmem:[#allocation13 + $0x858] sm:$0xff]
    %v1063 = vld [vmem:[#allocation13 + $0x860] sm:$0xff]
    %v1064 = vld [vmem:[#allocation13 + $0x868] sm:$0xff]
    %v1065 = vld [vmem:[#allocation13 + $0x870] sm:$0xff]
    %v1066 = vld [vmem:[#allocation13 + $0x878] sm:$0xff]
    %v1067 = vld [vmem:[#allocation13 + $0x880] sm:$0xff]
    %v1068 = vld [vmem:[#allocation13 + $0x888] sm:$0xff]
    %v1069 = vld [vmem:[#allocation13 + $0x890] sm:$0xff]
    %v1070 = vld [vmem:[#allocation13 + $0x898] sm:$0xff]
    %v1071 = vld [vmem:[#allocation13 + $0x8a0] sm:$0xff]
    %v1072 = vld [vmem:[#allocation13 + $0x8a8] sm:$0xff]
    %v1073 = vld [vmem:[#allocation13 + $0x8b0] sm:$0xff]
    %v1074 = vld [vmem:[#allocation13 + $0x8b8] sm:$0xff]
    %v1075 = vld [vmem:[#allocation13 + $0x8c0] sm:$0xff]
    %v1076 = vld [vmem:[#allocation13 + $0x8c8] sm:$0xff]
    %v1077 = vld [vmem:[#allocation13 + $0x8d0] sm:$0xff]
    %v1078 = vld [vmem:[#allocation13 + $0x8d8] sm:$0xff]
    %v1079 = vld [vmem:[#allocation13 + $0x8e0] sm:$0xff]
    %v1080 = vld [vmem:[#allocation13 + $0x8e8] sm:$0xff]
    %v1081 = vld [vmem:[#allocation13 + $0x8f0] sm:$0xff]
    %v1082 = vld [vmem:[#allocation13 + $0x8f8] sm:$0xff]
    %v1083 = vpack.c.bf16 %v791, %v791
    %v1084 = vpack.c.bf16 %v793, %v793
    %v1085 = vpack.c.bf16 %v794, %v794
    %v1086 = vld [vmem:[#allocation16] sm:$0xff]
    %v1087 = vld [vmem:[#allocation16 + $0x8] sm:$0xf]
    %v1090 = vlaneseq
    %v1091 = vshrl.u32 %v1090, 7
    %v1092 = vsub.s32 0, %v1091
    %v1093 = vrot.slane %v1086, %v1092
    %v1094 = vlaneseq
    %v1095 = vshrl.u32 %v1094, 7
    %v1096 = vsub.s32 1, %v1095
    %v1097 = vrot.slane %v1086, %v1096
    %v1098 = vlaneseq
    %v1099 = vshrl.u32 %v1098, 7
    %v1100 = vsub.s32 2, %v1099
    %v1101 = vrot.slane %v1086, %v1100
    %v1102 = vlaneseq
    %v1103 = vshrl.u32 %v1102, 7
    %v1104 = vsub.s32 3, %v1103
    %v1105 = vrot.slane %v1086, %v1104
    %v1106 = vlaneseq
    %v1107 = vshrl.u32 %v1106, 7
    %v1108 = vsub.s32 4, %v1107
    %v1109 = vrot.slane %v1086, %v1108
    %v1110 = vlaneseq
    %v1111 = vshrl.u32 %v1110, 7
    %v1112 = vsub.s32 5, %v1111
    %v1113 = vrot.slane %v1086, %v1112
    %v1114 = vlaneseq
    %v1115 = vshrl.u32 %v1114, 7
    %v1116 = vsub.s32 6, %v1115
    %v1117 = vrot.slane %v1086, %v1116
    %v1118 = vlaneseq
    %v1119 = vshrl.u32 %v1118, 7
    %v1120 = vsub.s32 7, %v1119
    %v1121 = vrot.slane %v1086, %v1120
    %v1122 = vlaneseq
    %v1123 = vshrl.u32 %v1122, 7
    %v1124 = vsub.s32 0, %v1123
    %v1125 = vrot.slane %v1087, %v1124
    %v1126 = vlaneseq
    %v1127 = vshrl.u32 %v1126, 7
    %v1128 = vsub.s32 1, %v1127
    %v1129 = vrot.slane %v1087, %v1128
    %v1130 = vlaneseq
    %v1131 = vshrl.u32 %v1130, 7
    %v1132 = vsub.s32 2, %v1131
    %v1133 = vrot.slane %v1087, %v1132
    %v1134 = vlaneseq
    %v1135 = vshrl.u32 %v1134, 7
    %v1136 = vsub.s32 3, %v1135
    %v1137 = vrot.slane %v1087, %v1136
    %v1438 = vunpack.c.l.b16 %v795
    %v1439 = vunpack.c.h.b16 %v795
    %v1440 = vunpack.c.l.b16 %v796
    %v1441 = vunpack.c.h.b16 %v796
    %v1442 = vunpack.c.l.b16 %v797
    %v1443 = vunpack.c.h.b16 %v797
    %v1444 = vunpack.c.l.b16 %v798
    %v1445 = vunpack.c.h.b16 %v798
    %v1446 = vunpack.c.l.b16 %v799
    %v1447 = vunpack.c.h.b16 %v799
    %v1448 = vunpack.c.l.b16 %v800
    %v1449 = vunpack.c.h.b16 %v800
    %v1450 = vunpack.c.l.b16 %v801
    %v1451 = vunpack.c.h.b16 %v801
    %v1452 = vunpack.c.l.b16 %v802
    %v1453 = vunpack.c.h.b16 %v802
    %v1454 = vunpack.c.l.b16 %v803
    %v1455 = vunpack.c.h.b16 %v803
    %v1456 = vunpack.c.l.b16 %v804
    %v1457 = vunpack.c.h.b16 %v804
    %v1458 = vunpack.c.l.b16 %v805
    %v1459 = vunpack.c.h.b16 %v805
    %v1460 = vunpack.c.l.b16 %v806
    %v1461 = vunpack.c.h.b16 %v806
    %v1462 = vunpack.c.l.b16 %v807
    %v1463 = vunpack.c.h.b16 %v807
    %v1464 = vunpack.c.l.b16 %v808
    %v1465 = vunpack.c.h.b16 %v808
    %v1466 = vunpack.c.l.b16 %v809
    %v1467 = vunpack.c.h.b16 %v809
    %v1468 = vunpack.c.l.b16 %v810
    %v1469 = vunpack.c.h.b16 %v810
    %v1470 = vunpack.c.l.b16 %v811
    %v1471 = vunpack.c.h.b16 %v811
    %v1472 = vunpack.c.l.b16 %v812
    %v1473 = vunpack.c.h.b16 %v812
    %v1474 = vunpack.c.l.b16 %v813
    %v1475 = vunpack.c.h.b16 %v813
    %v1476 = vunpack.c.l.b16 %v814
    %v1477 = vunpack.c.h.b16 %v814
    %v1478 = vunpack.c.l.b16 %v815
    %v1479 = vunpack.c.h.b16 %v815
    %v1480 = vunpack.c.l.b16 %v816
    %v1481 = vunpack.c.h.b16 %v816
    %v1482 = vunpack.c.l.b16 %v817
    %v1483 = vunpack.c.h.b16 %v817
    %v1484 = vunpack.c.l.b16 %v818
    %v1485 = vunpack.c.h.b16 %v818
    %v1486 = vunpack.c.l.b16 %v819
    %v1487 = vunpack.c.h.b16 %v819
    %v1488 = vunpack.c.l.b16 %v820
    %v1489 = vunpack.c.h.b16 %v820
    %v1490 = vunpack.c.l.b16 %v821
    %v1491 = vunpack.c.h.b16 %v821
    %v1492 = vunpack.c.l.b16 %v822
    %v1493 = vunpack.c.h.b16 %v822
    %v1494 = vunpack.c.l.b16 %v823
    %v1495 = vunpack.c.h.b16 %v823
    %v1496 = vunpack.c.l.b16 %v824
    %v1497 = vunpack.c.h.b16 %v824
    %v1498 = vunpack.c.l.b16 %v825
    %v1499 = vunpack.c.h.b16 %v825
    %v1500 = vunpack.c.l.b16 %v826
    %v1501 = vunpack.c.h.b16 %v826
    %v1502 = vunpack.c.l.b16 %v827
    %v1503 = vunpack.c.h.b16 %v827
    %v1504 = vunpack.c.l.b16 %v828
    %v1505 = vunpack.c.h.b16 %v828
    %v1506 = vunpack.c.l.b16 %v829
    %v1507 = vunpack.c.h.b16 %v829
    %v1508 = vunpack.c.l.b16 %v830
    %v1509 = vunpack.c.h.b16 %v830
    %v1510 = vunpack.c.l.b16 %v831
    %v1511 = vunpack.c.h.b16 %v831
    %v1512 = vunpack.c.l.b16 %v832
    %v1513 = vunpack.c.h.b16 %v832
    %v1514 = vunpack.c.l.b16 %v833
    %v1515 = vunpack.c.h.b16 %v833
    %v1516 = vunpack.c.l.b16 %v834
    %v1517 = vunpack.c.h.b16 %v834
    %v1518 = vunpack.c.l.b16 %v835
    %v1519 = vunpack.c.h.b16 %v835
    %v1520 = vunpack.c.l.b16 %v836
    %v1521 = vunpack.c.h.b16 %v836
    %v1522 = vunpack.c.l.b16 %v837
    %v1523 = vunpack.c.h.b16 %v837
    %v1524 = vunpack.c.l.b16 %v838
    %v1525 = vunpack.c.h.b16 %v838
    %v1526 = vunpack.c.l.b16 %v839
    %v1527 = vunpack.c.h.b16 %v839
    %v1528 = vunpack.c.l.b16 %v840
    %v1529 = vunpack.c.h.b16 %v840
    %v1530 = vunpack.c.l.b16 %v841
    %v1531 = vunpack.c.h.b16 %v841
    %v1532 = vunpack.c.l.b16 %v842
    %v1533 = vunpack.c.h.b16 %v842
    %v1534 = vunpack.c.l.b16 %v843
    %v1535 = vunpack.c.h.b16 %v843
    %v1536 = vunpack.c.l.b16 %v844
    %v1537 = vunpack.c.h.b16 %v844
    %v1538 = vunpack.c.l.b16 %v845
    %v1539 = vunpack.c.h.b16 %v845
    %v1540 = vunpack.c.l.b16 %v846
    %v1541 = vunpack.c.h.b16 %v846
    %v1542 = vunpack.c.l.b16 %v847
    %v1543 = vunpack.c.h.b16 %v847
    %v1544 = vunpack.c.l.b16 %v848
    %v1545 = vunpack.c.h.b16 %v848
    %v1546 = vunpack.c.l.b16 %v849
    %v1547 = vunpack.c.h.b16 %v849
    %v1548 = vunpack.c.l.b16 %v850
    %v1549 = vunpack.c.h.b16 %v850
    %v1550 = vunpack.c.l.b16 %v851
    %v1551 = vunpack.c.h.b16 %v851
    %v1552 = vunpack.c.l.b16 %v852
    %v1553 = vunpack.c.h.b16 %v852
    %v1554 = vunpack.c.l.b16 %v853
    %v1555 = vunpack.c.h.b16 %v853
    %v1556 = vunpack.c.l.b16 %v854
    %v1557 = vunpack.c.h.b16 %v854
    %v1558 = vunpack.c.l.b16 %v855
    %v1559 = vunpack.c.h.b16 %v855
    %v1560 = vunpack.c.l.b16 %v856
    %v1561 = vunpack.c.h.b16 %v856
    %v1562 = vunpack.c.l.b16 %v857
    %v1563 = vunpack.c.h.b16 %v857
    %v1564 = vunpack.c.l.b16 %v858
    %v1565 = vunpack.c.h.b16 %v858
    %v1566 = vunpack.c.l.b16 %v859
    %v1567 = vunpack.c.h.b16 %v859
    %v1568 = vunpack.c.l.b16 %v860
    %v1569 = vunpack.c.h.b16 %v860
    %v1570 = vunpack.c.l.b16 %v861
    %v1571 = vunpack.c.h.b16 %v861
    %v1572 = vunpack.c.l.b16 %v862
    %v1573 = vunpack.c.h.b16 %v862
    %v1574 = vunpack.c.l.b16 %v863
    %v1575 = vunpack.c.h.b16 %v863
    %v1576 = vunpack.c.l.b16 %v864
    %v1577 = vunpack.c.h.b16 %v864
    %v1578 = vunpack.c.l.b16 %v865
    %v1579 = vunpack.c.h.b16 %v865
    %v1580 = vunpack.c.l.b16 %v866
    %v1581 = vunpack.c.h.b16 %v866
    %v1582 = vunpack.c.l.b16 %v867
    %v1583 = vunpack.c.h.b16 %v867
    %v1584 = vunpack.c.l.b16 %v868
    %v1585 = vunpack.c.h.b16 %v868
    %v1586 = vunpack.c.l.b16 %v869
    %v1587 = vunpack.c.h.b16 %v869
    %v1588 = vunpack.c.l.b16 %v870
    %v1589 = vunpack.c.h.b16 %v870
    %v1590 = vunpack.c.l.b16 %v871
    %v1591 = vunpack.c.h.b16 %v871
    %v1592 = vunpack.c.l.b16 %v872
    %v1593 = vunpack.c.h.b16 %v872
    %v1594 = vunpack.c.l.b16 %v873
    %v1595 = vunpack.c.h.b16 %v873
    %v1596 = vunpack.c.l.b16 %v874
    %v1597 = vunpack.c.h.b16 %v874
    %v1598 = vunpack.c.l.b16 %v875
    %v1599 = vunpack.c.h.b16 %v875
    %v1600 = vunpack.c.l.b16 %v876
    %v1601 = vunpack.c.h.b16 %v876
    %v1602 = vunpack.c.l.b16 %v877
    %v1603 = vunpack.c.h.b16 %v877
    %v1604 = vunpack.c.l.b16 %v878
    %v1605 = vunpack.c.h.b16 %v878
    %v1606 = vunpack.c.l.b16 %v879
    %v1607 = vunpack.c.h.b16 %v879
    %v1608 = vunpack.c.l.b16 %v880
    %v1609 = vunpack.c.h.b16 %v880
    %v1610 = vunpack.c.l.b16 %v881
    %v1611 = vunpack.c.h.b16 %v881
    %v1612 = vunpack.c.l.b16 %v882
    %v1613 = vunpack.c.h.b16 %v882
    %v1614 = vunpack.c.l.b16 %v883
    %v1615 = vunpack.c.h.b16 %v883
    %v1616 = vunpack.c.l.b16 %v884
    %v1617 = vunpack.c.h.b16 %v884
    %v1618 = vunpack.c.l.b16 %v885
    %v1619 = vunpack.c.h.b16 %v885
    %v1620 = vunpack.c.l.b16 %v886
    %v1621 = vunpack.c.h.b16 %v886
    %v1622 = vunpack.c.l.b16 %v887
    %v1623 = vunpack.c.h.b16 %v887
    %v1624 = vunpack.c.l.b16 %v888
    %v1625 = vunpack.c.h.b16 %v888
    %v1626 = vunpack.c.l.b16 %v889
    %v1627 = vunpack.c.h.b16 %v889
    %v1628 = vunpack.c.l.b16 %v890
    %v1629 = vunpack.c.h.b16 %v890
    %v1630 = vunpack.c.l.b16 %v891
    %v1631 = vunpack.c.h.b16 %v891
    %v1632 = vunpack.c.l.b16 %v892
    %v1633 = vunpack.c.h.b16 %v892
    %v1634 = vunpack.c.l.b16 %v893
    %v1635 = vunpack.c.h.b16 %v893
    %v1636 = vunpack.c.l.b16 %v894
    %v1637 = vunpack.c.h.b16 %v894
    %v1638 = vunpack.c.l.b16 %v895
    %v1639 = vunpack.c.h.b16 %v895
    %v1640 = vunpack.c.l.b16 %v896
    %v1641 = vunpack.c.h.b16 %v896
    %v1642 = vunpack.c.l.b16 %v897
    %v1643 = vunpack.c.h.b16 %v897
    %v1644 = vunpack.c.l.b16 %v898
    %v1645 = vunpack.c.h.b16 %v898
    %v1646 = vunpack.c.l.b16 %v899
    %v1647 = vunpack.c.h.b16 %v899
    %v1648 = vunpack.c.l.b16 %v900
    %v1649 = vunpack.c.h.b16 %v900
    %v1650 = vunpack.c.l.b16 %v901
    %v1651 = vunpack.c.h.b16 %v901
    %v1652 = vunpack.c.l.b16 %v902
    %v1653 = vunpack.c.h.b16 %v902
    %v1654 = vunpack.c.l.b16 %v903
    %v1655 = vunpack.c.h.b16 %v903
    %v1656 = vunpack.c.l.b16 %v904
    %v1657 = vunpack.c.h.b16 %v904
    %v1658 = vunpack.c.l.b16 %v905
    %v1659 = vunpack.c.h.b16 %v905
    %v1660 = vunpack.c.l.b16 %v906
    %v1661 = vunpack.c.h.b16 %v906
    %v1662 = vunpack.c.l.b16 %v907
    %v1663 = vunpack.c.h.b16 %v907
    %v1664 = vunpack.c.l.b16 %v908
    %v1665 = vunpack.c.h.b16 %v908
    %v1666 = vunpack.c.l.b16 %v909
    %v1667 = vunpack.c.h.b16 %v909
    %v1668 = vunpack.c.l.b16 %v910
    %v1669 = vunpack.c.h.b16 %v910
    %v1670 = vunpack.c.l.b16 %v911
    %v1671 = vunpack.c.h.b16 %v911
    %v1672 = vunpack.c.l.b16 %v912
    %v1673 = vunpack.c.h.b16 %v912
    %v1674 = vunpack.c.l.b16 %v913
    %v1675 = vunpack.c.h.b16 %v913
    %v1676 = vunpack.c.l.b16 %v914
    %v1677 = vunpack.c.h.b16 %v914
    %v1678 = vunpack.c.l.b16 %v915
    %v1679 = vunpack.c.h.b16 %v915
    %v1680 = vunpack.c.l.b16 %v916
    %v1681 = vunpack.c.h.b16 %v916
    %v1682 = vunpack.c.l.b16 %v917
    %v1683 = vunpack.c.h.b16 %v917
    %v1684 = vunpack.c.l.b16 %v918
    %v1685 = vunpack.c.h.b16 %v918
    %v1686 = vunpack.c.l.b16 %v919
    %v1687 = vunpack.c.h.b16 %v919
    %v1688 = vunpack.c.l.b16 %v920
    %v1689 = vunpack.c.h.b16 %v920
    %v1690 = vunpack.c.l.b16 %v921
    %v1691 = vunpack.c.h.b16 %v921
    %v1692 = vunpack.c.l.b16 %v922
    %v1693 = vunpack.c.h.b16 %v922
    %v1694 = vunpack.c.l.b16 %v923
    %v1695 = vunpack.c.h.b16 %v923
    %v1696 = vunpack.c.l.b16 %v924
    %v1697 = vunpack.c.h.b16 %v924
    %v1698 = vunpack.c.l.b16 %v925
    %v1699 = vunpack.c.h.b16 %v925
    %v1700 = vunpack.c.l.b16 %v926
    %v1701 = vunpack.c.h.b16 %v926
    %v1702 = vunpack.c.l.b16 %v927
    %v1703 = vunpack.c.h.b16 %v927
    %v1704 = vunpack.c.l.b16 %v928
    %v1705 = vunpack.c.h.b16 %v928
    %v1706 = vunpack.c.l.b16 %v929
    %v1707 = vunpack.c.h.b16 %v929
    %v1708 = vunpack.c.l.b16 %v930
    %v1709 = vunpack.c.h.b16 %v930
    %v1710 = vunpack.c.l.b16 %v931
    %v1711 = vunpack.c.h.b16 %v931
    %v1712 = vunpack.c.l.b16 %v932
    %v1713 = vunpack.c.h.b16 %v932
    %v1714 = vunpack.c.l.b16 %v933
    %v1715 = vunpack.c.h.b16 %v933
    %v1716 = vunpack.c.l.b16 %v934
    %v1717 = vunpack.c.h.b16 %v934
    %v1718 = vunpack.c.l.b16 %v935
    %v1719 = vunpack.c.h.b16 %v935
    %v1720 = vunpack.c.l.b16 %v936
    %v1721 = vunpack.c.h.b16 %v936
    %v1722 = vunpack.c.l.b16 %v937
    %v1723 = vunpack.c.h.b16 %v937
    %v1724 = vunpack.c.l.b16 %v938
    %v1725 = vunpack.c.h.b16 %v938
    %v1726 = vunpack.c.l.b16 %v939
    %v1727 = vunpack.c.h.b16 %v939
    %v1728 = vunpack.c.l.b16 %v940
    %v1729 = vunpack.c.h.b16 %v940
    %v1730 = vunpack.c.l.b16 %v941
    %v1731 = vunpack.c.h.b16 %v941
    %v1732 = vunpack.c.l.b16 %v942
    %v1733 = vunpack.c.h.b16 %v942
    %v1734 = vunpack.c.l.b16 %v943
    %v1735 = vunpack.c.h.b16 %v943
    %v1736 = vunpack.c.l.b16 %v944
    %v1737 = vunpack.c.h.b16 %v944
    %v1738 = vunpack.c.l.b16 %v945
    %v1739 = vunpack.c.h.b16 %v945
    %v1740 = vunpack.c.l.b16 %v946
    %v1741 = vunpack.c.h.b16 %v946
    %v1742 = vunpack.c.l.b16 %v947
    %v1743 = vunpack.c.h.b16 %v947
    %v1744 = vunpack.c.l.b16 %v948
    %v1745 = vunpack.c.h.b16 %v948
    %v1746 = vunpack.c.l.b16 %v949
    %v1747 = vunpack.c.h.b16 %v949
    %v1748 = vunpack.c.l.b16 %v950
    %v1749 = vunpack.c.h.b16 %v950
    %v1750 = vunpack.c.l.b16 %v951
    %v1751 = vunpack.c.h.b16 %v951
    %v1752 = vunpack.c.l.b16 %v952
    %v1753 = vunpack.c.h.b16 %v952
    %v1754 = vunpack.c.l.b16 %v953
    %v1755 = vunpack.c.h.b16 %v953
    %v1756 = vunpack.c.l.b16 %v954
    %v1757 = vunpack.c.h.b16 %v954
    %v1758 = vunpack.c.l.b16 %v955
    %v1759 = vunpack.c.h.b16 %v955
    %v1760 = vunpack.c.l.b16 %v956
    %v1761 = vunpack.c.h.b16 %v956
    %v1762 = vunpack.c.l.b16 %v957
    %v1763 = vunpack.c.h.b16 %v957
    %v1764 = vunpack.c.l.b16 %v958
    %v1765 = vunpack.c.h.b16 %v958
    %v1766 = vunpack.c.l.b16 %v959
    %v1767 = vunpack.c.h.b16 %v959
    %v1768 = vunpack.c.l.b16 %v960
    %v1769 = vunpack.c.h.b16 %v960
    %v1770 = vunpack.c.l.b16 %v961
    %v1771 = vunpack.c.h.b16 %v961
    %v1772 = vunpack.c.l.b16 %v962
    %v1773 = vunpack.c.h.b16 %v962
    %v1774 = vunpack.c.l.b16 %v963
    %v1775 = vunpack.c.h.b16 %v963
    %v1776 = vunpack.c.l.b16 %v964
    %v1777 = vunpack.c.h.b16 %v964
    %v1778 = vunpack.c.l.b16 %v965
    %v1779 = vunpack.c.h.b16 %v965
    %v1780 = vunpack.c.l.b16 %v966
    %v1781 = vunpack.c.h.b16 %v966
    %v1782 = vunpack.c.l.b16 %v967
    %v1783 = vunpack.c.h.b16 %v967
    %v1784 = vunpack.c.l.b16 %v968
    %v1785 = vunpack.c.h.b16 %v968
    %v1786 = vunpack.c.l.b16 %v969
    %v1787 = vunpack.c.h.b16 %v969
    %v1788 = vunpack.c.l.b16 %v970
    %v1789 = vunpack.c.h.b16 %v970
    %v1790 = vunpack.c.l.b16 %v971
    %v1791 = vunpack.c.h.b16 %v971
    %v1792 = vunpack.c.l.b16 %v972
    %v1793 = vunpack.c.h.b16 %v972
    %v1794 = vunpack.c.l.b16 %v973
    %v1795 = vunpack.c.h.b16 %v973
    %v1796 = vunpack.c.l.b16 %v974
    %v1797 = vunpack.c.h.b16 %v974
    %v1798 = vunpack.c.l.b16 %v975
    %v1799 = vunpack.c.h.b16 %v975
    %v1800 = vunpack.c.l.b16 %v976
    %v1801 = vunpack.c.h.b16 %v976
    %v1802 = vunpack.c.l.b16 %v977
    %v1803 = vunpack.c.h.b16 %v977
    %v1804 = vunpack.c.l.b16 %v978
    %v1805 = vunpack.c.h.b16 %v978
    %v1806 = vunpack.c.l.b16 %v979
    %v1807 = vunpack.c.h.b16 %v979
    %v1808 = vunpack.c.l.b16 %v980
    %v1809 = vunpack.c.h.b16 %v980
    %v1810 = vunpack.c.l.b16 %v981
    %v1811 = vunpack.c.h.b16 %v981
    %v1812 = vunpack.c.l.b16 %v982
    %v1813 = vunpack.c.h.b16 %v982
    %v1814 = vunpack.c.l.b16 %v983
    %v1815 = vunpack.c.h.b16 %v983
    %v1816 = vunpack.c.l.b16 %v984
    %v1817 = vunpack.c.h.b16 %v984
    %v1818 = vunpack.c.l.b16 %v985
    %v1819 = vunpack.c.h.b16 %v985
    %v1820 = vunpack.c.l.b16 %v986
    %v1821 = vunpack.c.h.b16 %v986
    %v1822 = vunpack.c.l.b16 %v987
    %v1823 = vunpack.c.h.b16 %v987
    %v1824 = vunpack.c.l.b16 %v988
    %v1825 = vunpack.c.h.b16 %v988
    %v1826 = vunpack.c.l.b16 %v989
    %v1827 = vunpack.c.h.b16 %v989
    %v1828 = vunpack.c.l.b16 %v990
    %v1829 = vunpack.c.h.b16 %v990
    %v1830 = vunpack.c.l.b16 %v991
    %v1831 = vunpack.c.h.b16 %v991
    %v1832 = vunpack.c.l.b16 %v992
    %v1833 = vunpack.c.h.b16 %v992
    %v1834 = vunpack.c.l.b16 %v993
    %v1835 = vunpack.c.h.b16 %v993
    %v1836 = vunpack.c.l.b16 %v994
    %v1837 = vunpack.c.h.b16 %v994
    %v1838 = vunpack.c.l.b16 %v995
    %v1839 = vunpack.c.h.b16 %v995
    %v1840 = vunpack.c.l.b16 %v996
    %v1841 = vunpack.c.h.b16 %v996
    %v1842 = vunpack.c.l.b16 %v997
    %v1843 = vunpack.c.h.b16 %v997
    %v1844 = vunpack.c.l.b16 %v998
    %v1845 = vunpack.c.h.b16 %v998
    %v1846 = vunpack.c.l.b16 %v999
    %v1847 = vunpack.c.h.b16 %v999
    %v1848 = vunpack.c.l.b16 %v1000
    %v1849 = vunpack.c.h.b16 %v1000
    %v1850 = vunpack.c.l.b16 %v1001
    %v1851 = vunpack.c.h.b16 %v1001
    %v1852 = vunpack.c.l.b16 %v1002
    %v1853 = vunpack.c.h.b16 %v1002
    %v1854 = vunpack.c.l.b16 %v1003
    %v1855 = vunpack.c.h.b16 %v1003
    %v1856 = vunpack.c.l.b16 %v1004
    %v1857 = vunpack.c.h.b16 %v1004
    %v1858 = vunpack.c.l.b16 %v1005
    %v1859 = vunpack.c.h.b16 %v1005
    %v1860 = vunpack.c.l.b16 %v1006
    %v1861 = vunpack.c.h.b16 %v1006
    %v1862 = vunpack.c.l.b16 %v1007
    %v1863 = vunpack.c.h.b16 %v1007
    %v1864 = vunpack.c.l.b16 %v1008
    %v1865 = vunpack.c.h.b16 %v1008
    %v1866 = vunpack.c.l.b16 %v1009
    %v1867 = vunpack.c.h.b16 %v1009
    %v1868 = vunpack.c.l.b16 %v1010
    %v1869 = vunpack.c.h.b16 %v1010
    %v1870 = vunpack.c.l.b16 %v1011
    %v1871 = vunpack.c.h.b16 %v1011
    %v1872 = vunpack.c.l.b16 %v1012
    %v1873 = vunpack.c.h.b16 %v1012
    %v1874 = vunpack.c.l.b16 %v1013
    %v1875 = vunpack.c.h.b16 %v1013
    %v1876 = vunpack.c.l.b16 %v1014
    %v1877 = vunpack.c.h.b16 %v1014
    %v1878 = vunpack.c.l.b16 %v1015
    %v1879 = vunpack.c.h.b16 %v1015
    %v1880 = vunpack.c.l.b16 %v1016
    %v1881 = vunpack.c.h.b16 %v1016
    %v1882 = vunpack.c.l.b16 %v1017
    %v1883 = vunpack.c.h.b16 %v1017
    %v1884 = vunpack.c.l.b16 %v1018
    %v1885 = vunpack.c.h.b16 %v1018
    %v1886 = vunpack.c.l.b16 %v1019
    %v1887 = vunpack.c.h.b16 %v1019
    %v1888 = vunpack.c.l.b16 %v1020
    %v1889 = vunpack.c.h.b16 %v1020
    %v1890 = vunpack.c.l.b16 %v1021
    %v1891 = vunpack.c.h.b16 %v1021
    %v1892 = vunpack.c.l.b16 %v1022
    %v1893 = vunpack.c.h.b16 %v1022
    %v1894 = vunpack.c.l.b16 %v1023
    %v1895 = vunpack.c.h.b16 %v1023
    %v1896 = vunpack.c.l.b16 %v1024
    %v1897 = vunpack.c.h.b16 %v1024
    %v1898 = vunpack.c.l.b16 %v1025
    %v1899 = vunpack.c.h.b16 %v1025
    %v1900 = vunpack.c.l.b16 %v1026
    %v1901 = vunpack.c.h.b16 %v1026
    %v1902 = vunpack.c.l.b16 %v1027
    %v1903 = vunpack.c.h.b16 %v1027
    %v1904 = vunpack.c.l.b16 %v1028
    %v1905 = vunpack.c.h.b16 %v1028
    %v1906 = vunpack.c.l.b16 %v1029
    %v1907 = vunpack.c.h.b16 %v1029
    %v1908 = vunpack.c.l.b16 %v1030
    %v1909 = vunpack.c.h.b16 %v1030
    %v1910 = vunpack.c.l.b16 %v1031
    %v1911 = vunpack.c.h.b16 %v1031
    %v1912 = vunpack.c.l.b16 %v1032
    %v1913 = vunpack.c.h.b16 %v1032
    %v1914 = vunpack.c.l.b16 %v1033
    %v1915 = vunpack.c.h.b16 %v1033
    %v1916 = vunpack.c.l.b16 %v1034
    %v1917 = vunpack.c.h.b16 %v1034
    %v1918 = vunpack.c.l.b16 %v1035
    %v1919 = vunpack.c.h.b16 %v1035
    %v1920 = vunpack.c.l.b16 %v1036
    %v1921 = vunpack.c.h.b16 %v1036
    %v1922 = vunpack.c.l.b16 %v1037
    %v1923 = vunpack.c.h.b16 %v1037
    %v1924 = vunpack.c.l.b16 %v1038
    %v1925 = vunpack.c.h.b16 %v1038
    %v1926 = vunpack.c.l.b16 %v1039
    %v1927 = vunpack.c.h.b16 %v1039
    %v1928 = vunpack.c.l.b16 %v1040
    %v1929 = vunpack.c.h.b16 %v1040
    %v1930 = vunpack.c.l.b16 %v1041
    %v1931 = vunpack.c.h.b16 %v1041
    %v1932 = vunpack.c.l.b16 %v1042
    %v1933 = vunpack.c.h.b16 %v1042
    %v1934 = vunpack.c.l.b16 %v1043
    %v1935 = vunpack.c.h.b16 %v1043
    %v1936 = vunpack.c.l.b16 %v1044
    %v1937 = vunpack.c.h.b16 %v1044
    %v1938 = vunpack.c.l.b16 %v1045
    %v1939 = vunpack.c.h.b16 %v1045
    %v1940 = vunpack.c.l.b16 %v1046
    %v1941 = vunpack.c.h.b16 %v1046
    %v1942 = vunpack.c.l.b16 %v1047
    %v1943 = vunpack.c.h.b16 %v1047
    %v1944 = vunpack.c.l.b16 %v1048
    %v1945 = vunpack.c.h.b16 %v1048
    %v1946 = vunpack.c.l.b16 %v1049
    %v1947 = vunpack.c.h.b16 %v1049
    %v1948 = vunpack.c.l.b16 %v1050
    %v1949 = vunpack.c.h.b16 %v1050
    %v1950 = vunpack.c.l.b16 %v1051
    %v1951 = vunpack.c.h.b16 %v1051
    %v1952 = vunpack.c.l.b16 %v1052
    %v1953 = vunpack.c.h.b16 %v1052
    %v1954 = vunpack.c.l.b16 %v1053
    %v1955 = vunpack.c.h.b16 %v1053
    %v1956 = vunpack.c.l.b16 %v1054
    %v1957 = vunpack.c.h.b16 %v1054
    %v1958 = vunpack.c.l.b16 %v1055
    %v1959 = vunpack.c.h.b16 %v1055
    %v1960 = vunpack.c.l.b16 %v1056
    %v1961 = vunpack.c.h.b16 %v1056
    %v1962 = vunpack.c.l.b16 %v1057
    %v1963 = vunpack.c.h.b16 %v1057
    %v1964 = vunpack.c.l.b16 %v1058
    %v1965 = vunpack.c.h.b16 %v1058
    %v1966 = vunpack.c.l.b16 %v1059
    %v1967 = vunpack.c.h.b16 %v1059
    %v1968 = vunpack.c.l.b16 %v1060
    %v1969 = vunpack.c.h.b16 %v1060
    %v1970 = vunpack.c.l.b16 %v1061
    %v1971 = vunpack.c.h.b16 %v1061
    %v1972 = vunpack.c.l.b16 %v1062
    %v1973 = vunpack.c.h.b16 %v1062
    %v1974 = vunpack.c.l.b16 %v1063
    %v1975 = vunpack.c.h.b16 %v1063
    %v1976 = vunpack.c.l.b16 %v1064
    %v1977 = vunpack.c.h.b16 %v1064
    %v1978 = vunpack.c.l.b16 %v1065
    %v1979 = vunpack.c.h.b16 %v1065
    %v1980 = vunpack.c.l.b16 %v1066
    %v1981 = vunpack.c.h.b16 %v1066
    %v1982 = vunpack.c.l.b16 %v1067
    %v1983 = vunpack.c.h.b16 %v1067
    %v1984 = vunpack.c.l.b16 %v1068
    %v1985 = vunpack.c.h.b16 %v1068
    %v1986 = vunpack.c.l.b16 %v1069
    %v1987 = vunpack.c.h.b16 %v1069
    %v1988 = vunpack.c.l.b16 %v1070
    %v1989 = vunpack.c.h.b16 %v1070
    %v1990 = vunpack.c.l.b16 %v1071
    %v1991 = vunpack.c.h.b16 %v1071
    %v1992 = vunpack.c.l.b16 %v1072
    %v1993 = vunpack.c.h.b16 %v1072
    %v1994 = vunpack.c.l.b16 %v1073
    %v1995 = vunpack.c.h.b16 %v1073
    %v1996 = vunpack.c.l.b16 %v1074
    %v1997 = vunpack.c.h.b16 %v1074
    %v1998 = vunpack.c.l.b16 %v1075
    %v1999 = vunpack.c.h.b16 %v1075
    %v2000 = vunpack.c.l.b16 %v1076
    %v2001 = vunpack.c.h.b16 %v1076
    %v2002 = vunpack.c.l.b16 %v1077
    %v2003 = vunpack.c.h.b16 %v1077
    %v2004 = vunpack.c.l.b16 %v1078
    %v2005 = vunpack.c.h.b16 %v1078
    %v2006 = vunpack.c.l.b16 %v1079
    %v2007 = vunpack.c.h.b16 %v1079
    %v2008 = vunpack.c.l.b16 %v1080
    %v2009 = vunpack.c.h.b16 %v1080
    %v2010 = vunpack.c.l.b16 %v1081
    %v2011 = vunpack.c.h.b16 %v1081
    %v2012 = vunpack.c.l.b16 %v1082
    %v2013 = vunpack.c.h.b16 %v1082
    %v2014 = vpack.c.b16 %v1450, %v1438
    %v2015 = vpack.c.b16 %v1451, %v1439
    %v2016 = vpack.c.b16 %v1452, %v1440
    %v2017 = vpack.c.b16 %v1453, %v1441
    %v2018 = vpack.c.b16 %v1454, %v1442
    %v2019 = vpack.c.b16 %v1455, %v1443
    %v2020 = vpack.c.b16 %v1456, %v1444
    %v2021 = vpack.c.b16 %v1457, %v1445
    %v2022 = vpack.c.b16 %v1458, %v1446
    %v2023 = vpack.c.b16 %v1459, %v1447
    %v2024 = vpack.c.b16 %v1460, %v1448
    %v2025 = vpack.c.b16 %v1461, %v1449
    %v2026 = vpack.c.b16 %v1474, %v1462
    %v2027 = vpack.c.b16 %v1475, %v1463
    %v2028 = vpack.c.b16 %v1476, %v1464
    %v2029 = vpack.c.b16 %v1477, %v1465
    %v2030 = vpack.c.b16 %v1478, %v1466
    %v2031 = vpack.c.b16 %v1479, %v1467
    %v2032 = vpack.c.b16 %v1480, %v1468
    %v2033 = vpack.c.b16 %v1481, %v1469
    %v2034 = vpack.c.b16 %v1482, %v1470
    %v2035 = vpack.c.b16 %v1483, %v1471
    %v2036 = vpack.c.b16 %v1484, %v1472
    %v2037 = vpack.c.b16 %v1485, %v1473
    %v2038 = vpack.c.b16 %v1498, %v1486
    %v2039 = vpack.c.b16 %v1499, %v1487
    %v2040 = vpack.c.b16 %v1500, %v1488
    %v2041 = vpack.c.b16 %v1501, %v1489
    %v2042 = vpack.c.b16 %v1502, %v1490
    %v2043 = vpack.c.b16 %v1503, %v1491
    %v2044 = vpack.c.b16 %v1504, %v1492
    %v2045 = vpack.c.b16 %v1505, %v1493
    %v2046 = vpack.c.b16 %v1506, %v1494
    %v2047 = vpack.c.b16 %v1507, %v1495
    %v2048 = vpack.c.b16 %v1508, %v1496
    %v2049 = vpack.c.b16 %v1509, %v1497
    %v2050 = vpack.c.b16 %v1522, %v1510
    %v2051 = vpack.c.b16 %v1523, %v1511
    %v2052 = vpack.c.b16 %v1524, %v1512
    %v2053 = vpack.c.b16 %v1525, %v1513
    %v2054 = vpack.c.b16 %v1526, %v1514
    %v2055 = vpack.c.b16 %v1527, %v1515
    %v2056 = vpack.c.b16 %v1528, %v1516
    %v2057 = vpack.c.b16 %v1529, %v1517
    %v2058 = vpack.c.b16 %v1530, %v1518
    %v2059 = vpack.c.b16 %v1531, %v1519
    %v2060 = vpack.c.b16 %v1532, %v1520
    %v2061 = vpack.c.b16 %v1533, %v1521
    %v2062 = vpack.c.b16 %v1546, %v1534
    %v2063 = vpack.c.b16 %v1547, %v1535
    %v2064 = vpack.c.b16 %v1548, %v1536
    %v2065 = vpack.c.b16 %v1549, %v1537
    %v2066 = vpack.c.b16 %v1550, %v1538
    %v2067 = vpack.c.b16 %v1551, %v1539
    %v2068 = vpack.c.b16 %v1552, %v1540
    %v2069 = vpack.c.b16 %v1553, %v1541
    %v2070 = vpack.c.b16 %v1554, %v1542
    %v2071 = vpack.c.b16 %v1555, %v1543
    %v2072 = vpack.c.b16 %v1556, %v1544
    %v2073 = vpack.c.b16 %v1557, %v1545
    %v2074 = vpack.c.b16 %v1570, %v1558
    %v2075 = vpack.c.b16 %v1571, %v1559
    %v2076 = vpack.c.b16 %v1572, %v1560
    %v2077 = vpack.c.b16 %v1573, %v1561
    %v2078 = vpack.c.b16 %v1574, %v1562
    %v2079 = vpack.c.b16 %v1575, %v1563
    %v2080 = vpack.c.b16 %v1576, %v1564
    %v2081 = vpack.c.b16 %v1577, %v1565
    %v2082 = vpack.c.b16 %v1578, %v1566
    %v2083 = vpack.c.b16 %v1579, %v1567
    %v2084 = vpack.c.b16 %v1580, %v1568
    %v2085 = vpack.c.b16 %v1581, %v1569
    %v2086 = vpack.c.b16 %v1594, %v1582
    %v2087 = vpack.c.b16 %v1595, %v1583
    %v2088 = vpack.c.b16 %v1596, %v1584
    %v2089 = vpack.c.b16 %v1597, %v1585
    %v2090 = vpack.c.b16 %v1598, %v1586
    %v2091 = vpack.c.b16 %v1599, %v1587
    %v2092 = vpack.c.b16 %v1600, %v1588
    %v2093 = vpack.c.b16 %v1601, %v1589
    %v2094 = vpack.c.b16 %v1602, %v1590
    %v2095 = vpack.c.b16 %v1603, %v1591
    %v2096 = vpack.c.b16 %v1604, %v1592
    %v2097 = vpack.c.b16 %v1605, %v1593
    %v2098 = vpack.c.b16 %v1618, %v1606
    %v2099 = vpack.c.b16 %v1619, %v1607
    %v2100 = vpack.c.b16 %v1620, %v1608
    %v2101 = vpack.c.b16 %v1621, %v1609
    %v2102 = vpack.c.b16 %v1622, %v1610
    %v2103 = vpack.c.b16 %v1623, %v1611
    %v2104 = vpack.c.b16 %v1624, %v1612
    %v2105 = vpack.c.b16 %v1625, %v1613
    %v2106 = vpack.c.b16 %v1626, %v1614
    %v2107 = vpack.c.b16 %v1627, %v1615
    %v2108 = vpack.c.b16 %v1628, %v1616
    %v2109 = vpack.c.b16 %v1629, %v1617
    %v2110 = vpack.c.b16 %v1642, %v1630
    %v2111 = vpack.c.b16 %v1643, %v1631
    %v2112 = vpack.c.b16 %v1644, %v1632
    %v2113 = vpack.c.b16 %v1645, %v1633
    %v2114 = vpack.c.b16 %v1646, %v1634
    %v2115 = vpack.c.b16 %v1647, %v1635
    %v2116 = vpack.c.b16 %v1648, %v1636
    %v2117 = vpack.c.b16 %v1649, %v1637
    %v2118 = vpack.c.b16 %v1650, %v1638
    %v2119 = vpack.c.b16 %v1651, %v1639
    %v2120 = vpack.c.b16 %v1652, %v1640
    %v2121 = vpack.c.b16 %v1653, %v1641
    %v2122 = vpack.c.b16 %v1666, %v1654
    %v2123 = vpack.c.b16 %v1667, %v1655
    %v2124 = vpack.c.b16 %v1668, %v1656
    %v2125 = vpack.c.b16 %v1669, %v1657
    %v2126 = vpack.c.b16 %v1670, %v1658
    %v2127 = vpack.c.b16 %v1671, %v1659
    %v2128 = vpack.c.b16 %v1672, %v1660
    %v2129 = vpack.c.b16 %v1673, %v1661
    %v2130 = vpack.c.b16 %v1674, %v1662
    %v2131 = vpack.c.b16 %v1675, %v1663
    %v2132 = vpack.c.b16 %v1676, %v1664
    %v2133 = vpack.c.b16 %v1677, %v1665
    %v2134 = vpack.c.b16 %v1690, %v1678
    %v2135 = vpack.c.b16 %v1691, %v1679
    %v2136 = vpack.c.b16 %v1692, %v1680
    %v2137 = vpack.c.b16 %v1693, %v1681
    %v2138 = vpack.c.b16 %v1694, %v1682
    %v2139 = vpack.c.b16 %v1695, %v1683
    %v2140 = vpack.c.b16 %v1696, %v1684
    %v2141 = vpack.c.b16 %v1697, %v1685
    %v2142 = vpack.c.b16 %v1698, %v1686
    %v2143 = vpack.c.b16 %v1699, %v1687
    %v2144 = vpack.c.b16 %v1700, %v1688
    %v2145 = vpack.c.b16 %v1701, %v1689
    %v2146 = vpack.c.b16 %v1714, %v1702
    %v2147 = vpack.c.b16 %v1715, %v1703
    %v2148 = vpack.c.b16 %v1716, %v1704
    %v2149 = vpack.c.b16 %v1717, %v1705
    %v2150 = vpack.c.b16 %v1718, %v1706
    %v2151 = vpack.c.b16 %v1719, %v1707
    %v2152 = vpack.c.b16 %v1720, %v1708
    %v2153 = vpack.c.b16 %v1721, %v1709
    %v2154 = vpack.c.b16 %v1722, %v1710
    %v2155 = vpack.c.b16 %v1723, %v1711
    %v2156 = vpack.c.b16 %v1724, %v1712
    %v2157 = vpack.c.b16 %v1725, %v1713
    %v2158 = vpack.c.b16 %v1738, %v1726
    %v2159 = vpack.c.b16 %v1739, %v1727
    %v2160 = vpack.c.b16 %v1740, %v1728
    %v2161 = vpack.c.b16 %v1741, %v1729
    %v2162 = vpack.c.b16 %v1742, %v1730
    %v2163 = vpack.c.b16 %v1743, %v1731
    %v2164 = vpack.c.b16 %v1744, %v1732
    %v2165 = vpack.c.b16 %v1745, %v1733
    %v2166 = vpack.c.b16 %v1746, %v1734
    %v2167 = vpack.c.b16 %v1747, %v1735
    %v2168 = vpack.c.b16 %v1748, %v1736
    %v2169 = vpack.c.b16 %v1749, %v1737
    %v2170 = vpack.c.b16 %v1762, %v1750
    %v2171 = vpack.c.b16 %v1763, %v1751
    %v2172 = vpack.c.b16 %v1764, %v1752
    %v2173 = vpack.c.b16 %v1765, %v1753
    %v2174 = vpack.c.b16 %v1766, %v1754
    %v2175 = vpack.c.b16 %v1767, %v1755
    %v2176 = vpack.c.b16 %v1768, %v1756
    %v2177 = vpack.c.b16 %v1769, %v1757
    %v2178 = vpack.c.b16 %v1770, %v1758
    %v2179 = vpack.c.b16 %v1771, %v1759
    %v2180 = vpack.c.b16 %v1772, %v1760
    %v2181 = vpack.c.b16 %v1773, %v1761
    %v2182 = vpack.c.b16 %v1786, %v1774
    %v2183 = vpack.c.b16 %v1787, %v1775
    %v2184 = vpack.c.b16 %v1788, %v1776
    %v2185 = vpack.c.b16 %v1789, %v1777
    %v2186 = vpack.c.b16 %v1790, %v1778
    %v2187 = vpack.c.b16 %v1791, %v1779
    %v2188 = vpack.c.b16 %v1792, %v1780
    %v2189 = vpack.c.b16 %v1793, %v1781
    %v2190 = vpack.c.b16 %v1794, %v1782
    %v2191 = vpack.c.b16 %v1795, %v1783
    %v2192 = vpack.c.b16 %v1796, %v1784
    %v2193 = vpack.c.b16 %v1797, %v1785
    %v2194 = vpack.c.b16 %v1810, %v1798
    %v2195 = vpack.c.b16 %v1811, %v1799
    %v2196 = vpack.c.b16 %v1812, %v1800
    %v2197 = vpack.c.b16 %v1813, %v1801
    %v2198 = vpack.c.b16 %v1814, %v1802
    %v2199 = vpack.c.b16 %v1815, %v1803
    %v2200 = vpack.c.b16 %v1816, %v1804
    %v2201 = vpack.c.b16 %v1817, %v1805
    %v2202 = vpack.c.b16 %v1818, %v1806
    %v2203 = vpack.c.b16 %v1819, %v1807
    %v2204 = vpack.c.b16 %v1820, %v1808
    %v2205 = vpack.c.b16 %v1821, %v1809
    %v2206 = vpack.c.b16 %v1834, %v1822
    %v2207 = vpack.c.b16 %v1835, %v1823
    %v2208 = vpack.c.b16 %v1836, %v1824
    %v2209 = vpack.c.b16 %v1837, %v1825
    %v2210 = vpack.c.b16 %v1838, %v1826
    %v2211 = vpack.c.b16 %v1839, %v1827
    %v2212 = vpack.c.b16 %v1840, %v1828
    %v2213 = vpack.c.b16 %v1841, %v1829
    %v2214 = vpack.c.b16 %v1842, %v1830
    %v2215 = vpack.c.b16 %v1843, %v1831
    %v2216 = vpack.c.b16 %v1844, %v1832
    %v2217 = vpack.c.b16 %v1845, %v1833
    %v2218 = vpack.c.b16 %v1858, %v1846
    %v2219 = vpack.c.b16 %v1859, %v1847
    %v2220 = vpack.c.b16 %v1860, %v1848
    %v2221 = vpack.c.b16 %v1861, %v1849
    %v2222 = vpack.c.b16 %v1862, %v1850
    %v2223 = vpack.c.b16 %v1863, %v1851
    %v2224 = vpack.c.b16 %v1864, %v1852
    %v2225 = vpack.c.b16 %v1865, %v1853
    %v2226 = vpack.c.b16 %v1866, %v1854
    %v2227 = vpack.c.b16 %v1867, %v1855
    %v2228 = vpack.c.b16 %v1868, %v1856
    %v2229 = vpack.c.b16 %v1869, %v1857
    %v2230 = vpack.c.b16 %v1882, %v1870
    %v2231 = vpack.c.b16 %v1883, %v1871
    %v2232 = vpack.c.b16 %v1884, %v1872
    %v2233 = vpack.c.b16 %v1885, %v1873
    %v2234 = vpack.c.b16 %v1886, %v1874
    %v2235 = vpack.c.b16 %v1887, %v1875
    %v2236 = vpack.c.b16 %v1888, %v1876
    %v2237 = vpack.c.b16 %v1889, %v1877
    %v2238 = vpack.c.b16 %v1890, %v1878
    %v2239 = vpack.c.b16 %v1891, %v1879
    %v2240 = vpack.c.b16 %v1892, %v1880
    %v2241 = vpack.c.b16 %v1893, %v1881
    %v2242 = vpack.c.b16 %v1906, %v1894
    %v2243 = vpack.c.b16 %v1907, %v1895
    %v2244 = vpack.c.b16 %v1908, %v1896
    %v2245 = vpack.c.b16 %v1909, %v1897
    %v2246 = vpack.c.b16 %v1910, %v1898
    %v2247 = vpack.c.b16 %v1911, %v1899
    %v2248 = vpack.c.b16 %v1912, %v1900
    %v2249 = vpack.c.b16 %v1913, %v1901
    %v2250 = vpack.c.b16 %v1914, %v1902
    %v2251 = vpack.c.b16 %v1915, %v1903
    %v2252 = vpack.c.b16 %v1916, %v1904
    %v2253 = vpack.c.b16 %v1917, %v1905
    %v2254 = vpack.c.b16 %v1930, %v1918
    %v2255 = vpack.c.b16 %v1931, %v1919
    %v2256 = vpack.c.b16 %v1932, %v1920
    %v2257 = vpack.c.b16 %v1933, %v1921
    %v2258 = vpack.c.b16 %v1934, %v1922
    %v2259 = vpack.c.b16 %v1935, %v1923
    %v2260 = vpack.c.b16 %v1936, %v1924
    %v2261 = vpack.c.b16 %v1937, %v1925
    %v2262 = vpack.c.b16 %v1938, %v1926
    %v2263 = vpack.c.b16 %v1939, %v1927
    %v2264 = vpack.c.b16 %v1940, %v1928
    %v2265 = vpack.c.b16 %v1941, %v1929
    %v2266 = vpack.c.b16 %v1954, %v1942
    %v2267 = vpack.c.b16 %v1955, %v1943
    %v2268 = vpack.c.b16 %v1956, %v1944
    %v2269 = vpack.c.b16 %v1957, %v1945
    %v2270 = vpack.c.b16 %v1958, %v1946
    %v2271 = vpack.c.b16 %v1959, %v1947
    %v2272 = vpack.c.b16 %v1960, %v1948
    %v2273 = vpack.c.b16 %v1961, %v1949
    %v2274 = vpack.c.b16 %v1962, %v1950
    %v2275 = vpack.c.b16 %v1963, %v1951
    %v2276 = vpack.c.b16 %v1964, %v1952
    %v2277 = vpack.c.b16 %v1965, %v1953
    %v2278 = vpack.c.b16 %v1978, %v1966
    %v2279 = vpack.c.b16 %v1979, %v1967
    %v2280 = vpack.c.b16 %v1980, %v1968
    %v2281 = vpack.c.b16 %v1981, %v1969
    %v2282 = vpack.c.b16 %v1982, %v1970
    %v2283 = vpack.c.b16 %v1983, %v1971
    %v2284 = vpack.c.b16 %v1984, %v1972
    %v2285 = vpack.c.b16 %v1985, %v1973
    %v2286 = vpack.c.b16 %v1986, %v1974
    %v2287 = vpack.c.b16 %v1987, %v1975
    %v2288 = vpack.c.b16 %v1988, %v1976
    %v2289 = vpack.c.b16 %v1989, %v1977
    %v2290 = vpack.c.b16 %v2002, %v1990
    %v2291 = vpack.c.b16 %v2003, %v1991
    %v2292 = vpack.c.b16 %v2004, %v1992
    %v2293 = vpack.c.b16 %v2005, %v1993
    %v2294 = vpack.c.b16 %v2006, %v1994
    %v2295 = vpack.c.b16 %v2007, %v1995
    %v2296 = vpack.c.b16 %v2008, %v1996
    %v2297 = vpack.c.b16 %v2009, %v1997
    %v2298 = vpack.c.b16 %v2010, %v1998
    %v2299 = vpack.c.b16 %v2011, %v1999
    %v2300 = vpack.c.b16 %v2012, %v2000
    %v2301 = vpack.c.b16 %v2013, %v2001
    %2590 = vmatprep.subr.bf16.mxu0 %v2015
    %2591 = vmatpush1.bf16.msra.mxu0 %v2014
    %2592 = vmatprep.subr.bf16.mxu0 %v2027
    %2593 = vmatpush1.bf16.msra.mxu0 %v2026
    %2594 = vmatprep.subr.bf16.mxu0 %v2039
    %2595 = vmatpush1.bf16.msra.mxu0 %v2038
    %2596 = vmatprep.subr.bf16.mxu0 %v2051
    %2597 = vmatpush1.bf16.msra.mxu0 %v2050
    %2598 = vmatprep.subr.bf16.mxu0 %v2063
    %2599 = vmatpush1.bf16.msra.mxu0 %v2062
    %2600 = vmatprep.subr.bf16.mxu0 %v2075
    %2601 = vmatpush1.bf16.msra.mxu0 %v2074
    %2602 = vmatprep.subr.bf16.mxu0 %v2087
    %2603 = vmatpush1.bf16.msra.mxu0 %v2086
    %2604 = vmatprep.subr.bf16.mxu0 %v2099
    %2605 = vmatpush1.bf16.msra.mxu0 %v2098
    %2606 = vmatprep.subr.bf16.mxu0 %v2111
    %2607 = vmatpush1.bf16.msra.mxu0 %v2110
    %2608 = vmatprep.subr.bf16.mxu0 %v2123
    %2609 = vmatpush1.bf16.msra.mxu0 %v2122
    %2610 = vmatprep.subr.bf16.mxu0 %v2135
    %2611 = vmatpush1.bf16.msra.mxu0 %v2134
    %2612 = vmatprep.subr.bf16.mxu0 %v2147
    %2613 = vmatpush1.bf16.msra.mxu0 %v2146
    %2614 = vmatprep.subr.bf16.mxu0 %v2159
    %2615 = vmatpush1.bf16.msra.mxu0 %v2158
    %2616 = vmatprep.subr.bf16.mxu0 %v2171
    %2617 = vmatpush1.bf16.msra.mxu0 %v2170
    %2618 = vmatprep.subr.bf16.mxu0 %v2183
    %2619 = vmatpush1.bf16.msra.mxu0 %v2182
    %2620 = vmatprep.subr.bf16.mxu0 %v2195
    %2621 = vmatpush1.bf16.msra.mxu0 %v2194
    %2622 = vmatprep.mubr.bf16.mxu0 %v1084
    %2623 = vmatmul.mubr.bf16.gmra.mrb[0].mxu0 %v1083
    %v2624 = vpop.f32.mrb[0].mxu0
    %v2625 = vadd.f32 %v1093, %v2624
    %v2626 = vpop.f32.mrb[0].mxu0
    %v2627 = vadd.f32 %v1097, %v2626
    %v2628 = vpop.f32.mrb[0].mxu0
    %v2629 = vpop.f32.mrb[0].mxu0
    %2630 = vdwg.mxu0
    %2631 = vmatprep.subr.bf16.mxu0 %v2207
    %2632 = vmatpush1.bf16.msra.mxu0 %v2206
    %2633 = vmatprep.subr.bf16.mxu0 %v2219
    %2634 = vmatpush1.bf16.msra.mxu0 %v2218
    %2635 = vmatprep.subr.bf16.mxu0 %v2231
    %2636 = vmatpush1.bf16.msra.mxu0 %v2230
    %2637 = vmatprep.subr.bf16.mxu0 %v2243
    %2638 = vmatpush1.bf16.msra.mxu0 %v2242
    %2639 = vmatprep.subr.bf16.mxu0 %v2255
    %2640 = vmatpush1.bf16.msra.mxu0 %v2254
    %2641 = vmatprep.subr.bf16.mxu0 %v2267
    %2642 = vmatpush1.bf16.msra.mxu0 %v2266
    %2643 = vmatprep.subr.bf16.mxu0 %v2279
    %2644 = vmatpush1.bf16.msra.mxu0 %v2278
    %2645 = vmatprep.subr.bf16.mxu0 %v2291
    %2646 = vmatpush1.bf16.msra.mxu0 %v2290
    %2647 = vmatprep.subr.bf16.mxu0 0
    %2648 = vmatpush1.bf16.msra.mxu0 0
    %2649 = vmatprep.subr.bf16.mxu0 0
    %2650 = vmatpush1.bf16.msra.mxu0 0
    %2651 = vmatprep.subr.bf16.mxu0 0
    %2652 = vmatpush1.bf16.msra.mxu0 0
    %2653 = vmatprep.subr.bf16.mxu0 0
    %2654 = vmatpush1.bf16.msra.mxu0 0
    %2655 = vmatprep.subr.bf16.mxu0 0
    %2656 = vmatpush1.bf16.msra.mxu0 0
    %2657 = vmatprep.subr.bf16.mxu0 0
    %2658 = vmatpush1.bf16.msra.mxu0 0
    %2659 = vmatprep.subr.bf16.mxu0 0
    %2660 = vmatpush1.bf16.msra.mxu0 0
    %2661 = vmatprep.subr.bf16.mxu0 0
    %2662 = vmatpush1.bf16.msra.mxu0 0
    %2663 = vmatprep.mubr.bf16.mxu0 0
    %2664 = vmatmul.mubr.bf16.gmra.mrb[0].mxu0 %v1085
    %v2665 = vpop.f32.mrb[0].mxu0
    %v2666 = vadd.f32 %v2625, %v2665
    %v2667 = vpop.f32.mrb[0].mxu0
    %v2668 = vadd.f32 %v2627, %v2667
    %v2669 = vpop.f32.mrb[0].mxu0
    %v2670 = vpop.f32.mrb[0].mxu0
    %2671 = vdwg.mxu0
    %2672 = vmatprep.subr.bf16.mxu0 %v2017
    %2673 = vmatpush1.bf16.msra.mxu0 %v2016
    %2674 = vmatprep.subr.bf16.mxu0 %v2029
    %2675 = vmatpush1.bf16.msra.mxu0 %v2028
    %2676 = vmatprep.subr.bf16.mxu0 %v2041
    %2677 = vmatpush1.bf16.msra.mxu0 %v2040
    %2678 = vmatprep.subr.bf16.mxu0 %v2053
    %2679 = vmatpush1.bf16.msra.mxu0 %v2052
    %2680 = vmatprep.subr.bf16.mxu0 %v2065
    %2681 = vmatpush1.bf16.msra.mxu0 %v2064
    %2682 = vmatprep.subr.bf16.mxu0 %v2077
    %2683 = vmatpush1.bf16.msra.mxu0 %v2076
    %2684 = vmatprep.subr.bf16.mxu0 %v2089
    %2685 = vmatpush1.bf16.msra.mxu0 %v2088
    %2686 = vmatprep.subr.bf16.mxu0 %v2101
    %2687 = vmatpush1.bf16.msra.mxu0 %v2100
    %2688 = vmatprep.subr.bf16.mxu0 %v2113
    %2689 = vmatpush1.bf16.msra.mxu0 %v2112
    %2690 = vmatprep.subr.bf16.mxu0 %v2125
    %2691 = vmatpush1.bf16.msra.mxu0 %v2124
    %2692 = vmatprep.subr.bf16.mxu0 %v2137
    %2693 = vmatpush1.bf16.msra.mxu0 %v2136
    %2694 = vmatprep.subr.bf16.mxu0 %v2149
    %2695 = vmatpush1.bf16.msra.mxu0 %v2148
    %2696 = vmatprep.subr.bf16.mxu0 %v2161
    %2697 = vmatpush1.bf16.msra.mxu0 %v2160
    %2698 = vmatprep.subr.bf16.mxu0 %v2173
    %2699 = vmatpush1.bf16.msra.mxu0 %v2172
    %2700 = vmatprep.subr.bf16.mxu0 %v2185
    %2701 = vmatpush1.bf16.msra.mxu0 %v2184
    %2702 = vmatprep.subr.bf16.mxu0 %v2197
    %2703 = vmatpush1.bf16.msra.mxu0 %v2196
    %2704 = vmatprep.mubr.bf16.mxu0 %v1084
    %2705 = vmatmul.mubr.bf16.gmra.mrb[0].mxu0 %v1083
    %v2706 = vpop.f32.mrb[0].mxu0
    %v2707 = vadd.f32 %v1101, %v2706
    %v2708 = vpop.f32.mrb[0].mxu0
    %v2709 = vadd.f32 %v1105, %v2708
    %v2710 = vpop.f32.mrb[0].mxu0
    %v2711 = vpop.f32.mrb[0].mxu0
    %2712 = vdwg.mxu0
    %2713 = vmatprep.subr.bf16.mxu0 %v2209
    %2714 = vmatpush1.bf16.msra.mxu0 %v2208
    %2715 = vmatprep.subr.bf16.mxu0 %v2221
    %2716 = vmatpush1.bf16.msra.mxu0 %v2220
    %2717 = vmatprep.subr.bf16.mxu0 %v2233
    %2718 = vmatpush1.bf16.msra.mxu0 %v2232
    %2719 = vmatprep.subr.bf16.mxu0 %v2245
    %2720 = vmatpush1.bf16.msra.mxu0 %v2244
    %2721 = vmatprep.subr.bf16.mxu0 %v2257
    %2722 = vmatpush1.bf16.msra.mxu0 %v2256
    %2723 = vmatprep.subr.bf16.mxu0 %v2269
    %2724 = vmatpush1.bf16.msra.mxu0 %v2268
    %2725 = vmatprep.subr.bf16.mxu0 %v2281
    %2726 = vmatpush1.bf16.msra.mxu0 %v2280
    %2727 = vmatprep.subr.bf16.mxu0 %v2293
    %2728 = vmatpush1.bf16.msra.mxu0 %v2292
    %2729 = vmatprep.subr.bf16.mxu0 0
    %2730 = vmatpush1.bf16.msra.mxu0 0
    %2731 = vmatprep.subr.bf16.mxu0 0
    %2732 = vmatpush1.bf16.msra.mxu0 0
    %2733 = vmatprep.subr.bf16.mxu0 0
    %2734 = vmatpush1.bf16.msra.mxu0 0
    %2735 = vmatprep.subr.bf16.mxu0 0
    %2736 = vmatpush1.bf16.msra.mxu0 0
    %2737 = vmatprep.subr.bf16.mxu0 0
    %2738 = vmatpush1.bf16.msra.mxu0 0
    %2739 = vmatprep.subr.bf16.mxu0 0
    %2740 = vmatpush1.bf16.msra.mxu0 0
    %2741 = vmatprep.subr.bf16.mxu0 0
    %2742 = vmatpush1.bf16.msra.mxu0 0
    %2743 = vmatprep.subr.bf16.mxu0 0
    %2744 = vmatpush1.bf16.msra.mxu0 0
    %2745 = vmatprep.mubr.bf16.mxu0 0
    %2746 = vmatmul.mubr.bf16.gmra.mrb[0].mxu0 %v1085
    %v2747 = vpop.f32.mrb[0].mxu0
    %v2748 = vadd.f32 %v2707, %v2747
    %v2749 = vpop.f32.mrb[0].mxu0
    %v2750 = vadd.f32 %v2709, %v2749
    %v2751 = vpop.f32.mrb[0].mxu0
    %v2752 = vpop.f32.mrb[0].mxu0
    %2753 = vdwg.mxu0
    %2754 = vmatprep.subr.bf16.mxu0 %v2019
    %2755 = vmatpush1.bf16.msra.mxu0 %v2018
    %2756 = vmatprep.subr.bf16.mxu0 %v2031
    %2757 = vmatpush1.bf16.msra.mxu0 %v2030
    %2758 = vmatprep.subr.bf16.mxu0 %v2043
    %2759 = vmatpush1.bf16.msra.mxu0 %v2042
    %2760 = vmatprep.subr.bf16.mxu0 %v2055
    %2761 = vmatpush1.bf16.msra.mxu0 %v2054
    %2762 = vmatprep.subr.bf16.mxu0 %v2067
    %2763 = vmatpush1.bf16.msra.mxu0 %v2066
    %2764 = vmatprep.subr.bf16.mxu0 %v2079
    %2765 = vmatpush1.bf16.msra.mxu0 %v2078
    %2766 = vmatprep.subr.bf16.mxu0 %v2091
    %2767 = vmatpush1.bf16.msra.mxu0 %v2090
    %2768 = vmatprep.subr.bf16.mxu0 %v2103
    %2769 = vmatpush1.bf16.msra.mxu0 %v2102
    %2770 = vmatprep.subr.bf16.mxu0 %v2115
    %2771 = vmatpush1.bf16.msra.mxu0 %v2114
    %2772 = vmatprep.subr.bf16.mxu0 %v2127
    %2773 = vmatpush1.bf16.msra.mxu0 %v2126
    %2774 = vmatprep.subr.bf16.mxu0 %v2139
    %2775 = vmatpush1.bf16.msra.mxu0 %v2138
    %2776 = vmatprep.subr.bf16.mxu0 %v2151
    %2777 = vmatpush1.bf16.msra.mxu0 %v2150
    %2778 = vmatprep.subr.bf16.mxu0 %v2163
    %2779 = vmatpush1.bf16.msra.mxu0 %v2162
    %2780 = vmatprep.subr.bf16.mxu0 %v2175
    %2781 = vmatpush1.bf16.msra.mxu0 %v2174
    %2782 = vmatprep.subr.bf16.mxu0 %v2187
    %2783 = vmatpush1.bf16.msra.mxu0 %v2186
    %2784 = vmatprep.subr.bf16.mxu0 %v2199
    %2785 = vmatpush1.bf16.msra.mxu0 %v2198
    %2786 = vmatprep.mubr.bf16.mxu0 %v1084
    %2787 = vmatmul.mubr.bf16.gmra.mrb[0].mxu0 %v1083
    %v2788 = vpop.f32.mrb[0].mxu0
    %v2789 = vadd.f32 %v1109, %v2788
    %v2790 = vpop.f32.mrb[0].mxu0
    %v2791 = vadd.f32 %v1113, %v2790
    %v2792 = vpop.f32.mrb[0].mxu0
    %v2793 = vpop.f32.mrb[0].mxu0
    %2794 = vdwg.mxu0
    %2795 = vmatprep.subr.bf16.mxu0 %v2211
    %2796 = vmatpush1.bf16.msra.mxu0 %v2210
    %2797 = vmatprep.subr.bf16.mxu0 %v2223
    %2798 = vmatpush1.bf16.msra.mxu0 %v2222
    %2799 = vmatprep.subr.bf16.mxu0 %v2235
    %2800 = vmatpush1.bf16.msra.mxu0 %v2234
    %2801 = vmatprep.subr.bf16.mxu0 %v2247
    %2802 = vmatpush1.bf16.msra.mxu0 %v2246
    %2803 = vmatprep.subr.bf16.mxu0 %v2259
    %2804 = vmatpush1.bf16.msra.mxu0 %v2258
    %2805 = vmatprep.subr.bf16.mxu0 %v2271
    %2806 = vmatpush1.bf16.msra.mxu0 %v2270
    %2807 = vmatprep.subr.bf16.mxu0 %v2283
    %2808 = vmatpush1.bf16.msra.mxu0 %v2282
    %2809 = vmatprep.subr.bf16.mxu0 %v2295
    %2810 = vmatpush1.bf16.msra.mxu0 %v2294
    %2811 = vmatprep.subr.bf16.mxu0 0
    %2812 = vmatpush1.bf16.msra.mxu0 0
    %2813 = vmatprep.subr.bf16.mxu0 0
    %2814 = vmatpush1.bf16.msra.mxu0 0
    %2815 = vmatprep.subr.bf16.mxu0 0
    %2816 = vmatpush1.bf16.msra.mxu0 0
    %2817 = vmatprep.subr.bf16.mxu0 0
    %2818 = vmatpush1.bf16.msra.mxu0 0
    %2819 = vmatprep.subr.bf16.mxu0 0
    %2820 = vmatpush1.bf16.msra.mxu0 0
    %2821 = vmatprep.subr.bf16.mxu0 0
    %2822 = vmatpush1.bf16.msra.mxu0 0
    %2823 = vmatprep.subr.bf16.mxu0 0
    %2824 = vmatpush1.bf16.msra.mxu0 0
    %2825 = vmatprep.subr.bf16.mxu0 0
    %2826 = vmatpush1.bf16.msra.mxu0 0
    %2827 = vmatprep.mubr.bf16.mxu0 0
    %2828 = vmatmul.mubr.bf16.gmra.mrb[0].mxu0 %v1085
    %v2829 = vpop.f32.mrb[0].mxu0
    %v2830 = vadd.f32 %v2789, %v2829
    %v2831 = vpop.f32.mrb[0].mxu0
    %v2832 = vadd.f32 %v2791, %v2831
    %v2833 = vpop.f32.mrb[0].mxu0
    %v2834 = vpop.f32.mrb[0].mxu0
    %2835 = vdwg.mxu0
    %2836 = vmatprep.subr.bf16.mxu0 %v2021
    %2837 = vmatpush1.bf16.msra.mxu0 %v2020
    %2838 = vmatprep.subr.bf16.mxu0 %v2033
    %2839 = vmatpush1.bf16.msra.mxu0 %v2032
    %2840 = vmatprep.subr.bf16.mxu0 %v2045
    %2841 = vmatpush1.bf16.msra.mxu0 %v2044
    %2842 = vmatprep.subr.bf16.mxu0 %v2057
    %2843 = vmatpush1.bf16.msra.mxu0 %v2056
    %2844 = vmatprep.subr.bf16.mxu0 %v2069
    %2845 = vmatpush1.bf16.msra.mxu0 %v2068
    %2846 = vmatprep.subr.bf16.mxu0 %v2081
    %2847 = vmatpush1.bf16.msra.mxu0 %v2080
    %2848 = vmatprep.subr.bf16.mxu0 %v2093
    %2849 = vmatpush1.bf16.msra.mxu0 %v2092
    %2850 = vmatprep.subr.bf16.mxu0 %v2105
    %2851 = vmatpush1.bf16.msra.mxu0 %v2104
    %2852 = vmatprep.subr.bf16.mxu0 %v2117
    %2853 = vmatpush1.bf16.msra.mxu0 %v2116
    %2854 = vmatprep.subr.bf16.mxu0 %v2129
    %2855 = vmatpush1.bf16.msra.mxu0 %v2128
    %2856 = vmatprep.subr.bf16.mxu0 %v2141
    %2857 = vmatpush1.bf16.msra.mxu0 %v2140
    %2858 = vmatprep.subr.bf16.mxu0 %v2153
    %2859 = vmatpush1.bf16.msra.mxu0 %v2152
    %2860 = vmatprep.subr.bf16.mxu0 %v2165
    %2861 = vmatpush1.bf16.msra.mxu0 %v2164
    %2862 = vmatprep.subr.bf16.mxu0 %v2177
    %2863 = vmatpush1.bf16.msra.mxu0 %v2176
    %2864 = vmatprep.subr.bf16.mxu0 %v2189
    %2865 = vmatpush1.bf16.msra.mxu0 %v2188
    %2866 = vmatprep.subr.bf16.mxu0 %v2201
    %2867 = vmatpush1.bf16.msra.mxu0 %v2200
    %2868 = vmatprep.mubr.bf16.mxu0 %v1084
    %2869 = vmatmul.mubr.bf16.gmra.mrb[0].mxu0 %v1083
    %v2870 = vpop.f32.mrb[0].mxu0
    %v2871 = vadd.f32 %v1117, %v2870
    %v2872 = vpop.f32.mrb[0].mxu0
    %v2873 = vadd.f32 %v1121, %v2872
    %v2874 = vpop.f32.mrb[0].mxu0
    %v2875 = vpop.f32.mrb[0].mxu0
    %2876 = vdwg.mxu0
    %2877 = vmatprep.subr.bf16.mxu0 %v2213
    %2878 = vmatpush1.bf16.msra.mxu0 %v2212
    %2879 = vmatprep.subr.bf16.mxu0 %v2225
    %2880 = vmatpush1.bf16.msra.mxu0 %v2224
    %2881 = vmatprep.subr.bf16.mxu0 %v2237
    %2882 = vmatpush1.bf16.msra.mxu0 %v2236
    %2883 = vmatprep.subr.bf16.mxu0 %v2249
    %2884 = vmatpush1.bf16.msra.mxu0 %v2248
    %2885 = vmatprep.subr.bf16.mxu0 %v2261
    %2886 = vmatpush1.bf16.msra.mxu0 %v2260
    %2887 = vmatprep.subr.bf16.mxu0 %v2273
    %2888 = vmatpush1.bf16.msra.mxu0 %v2272
    %2889 = vmatprep.subr.bf16.mxu0 %v2285
    %2890 = vmatpush1.bf16.msra.mxu0 %v2284
    %2891 = vmatprep.subr.bf16.mxu0 %v2297
    %2892 = vmatpush1.bf16.msra.mxu0 %v2296
    %2893 = vmatprep.subr.bf16.mxu0 0
    %2894 = vmatpush1.bf16.msra.mxu0 0
    %2895 = vmatprep.subr.bf16.mxu0 0
    %2896 = vmatpush1.bf16.msra.mxu0 0
    %2897 = vmatprep.subr.bf16.mxu0 0
    %2898 = vmatpush1.bf16.msra.mxu0 0
    %2899 = vmatprep.subr.bf16.mxu0 0
    %2900 = vmatpush1.bf16.msra.mxu0 0
    %2901 = vmatprep.subr.bf16.mxu0 0
    %2902 = vmatpush1.bf16.msra.mxu0 0
    %2903 = vmatprep.subr.bf16.mxu0 0
    %2904 = vmatpush1.bf16.msra.mxu0 0
    %2905 = vmatprep.subr.bf16.mxu0 0
    %2906 = vmatpush1.bf16.msra.mxu0 0
    %2907 = vmatprep.subr.bf16.mxu0 0
    %2908 = vmatpush1.bf16.msra.mxu0 0
    %2909 = vmatprep.mubr.bf16.mxu0 0
    %2910 = vmatmul.mubr.bf16.gmra.mrb[0].mxu0 %v1085
    %v2911 = vpop.f32.mrb[0].mxu0
    %v2912 = vadd.f32 %v2871, %v2911
    %v2913 = vpop.f32.mrb[0].mxu0
    %v2914 = vadd.f32 %v2873, %v2913
    %v2915 = vpop.f32.mrb[0].mxu0
    %v2916 = vpop.f32.mrb[0].mxu0
    %2917 = vdwg.mxu0
    %2918 = vmatprep.subr.bf16.mxu0 %v2023
    %2919 = vmatpush1.bf16.msra.mxu0 %v2022
    %2920 = vmatprep.subr.bf16.mxu0 %v2035
    %2921 = vmatpush1.bf16.msra.mxu0 %v2034
    %2922 = vmatprep.subr.bf16.mxu0 %v2047
    %2923 = vmatpush1.bf16.msra.mxu0 %v2046
    %2924 = vmatprep.subr.bf16.mxu0 %v2059
    %2925 = vmatpush1.bf16.msra.mxu0 %v2058
    %2926 = vmatprep.subr.bf16.mxu0 %v2071
    %2927 = vmatpush1.bf16.msra.mxu0 %v2070
    %2928 = vmatprep.subr.bf16.mxu0 %v2083
    %2929 = vmatpush1.bf16.msra.mxu0 %v2082
    %2930 = vmatprep.subr.bf16.mxu0 %v2095
    %2931 = vmatpush1.bf16.msra.mxu0 %v2094
    %2932 = vmatprep.subr.bf16.mxu0 %v2107
    %2933 = vmatpush1.bf16.msra.mxu0 %v2106
    %2934 = vmatprep.subr.bf16.mxu0 %v2119
    %2935 = vmatpush1.bf16.msra.mxu0 %v2118
    %2936 = vmatprep.subr.bf16.mxu0 %v2131
    %2937 = vmatpush1.bf16.msra.mxu0 %v2130
    %2938 = vmatprep.subr.bf16.mxu0 %v2143
    %2939 = vmatpush1.bf16.msra.mxu0 %v2142
    %2940 = vmatprep.subr.bf16.mxu0 %v2155
    %2941 = vmatpush1.bf16.msra.mxu0 %v2154
    %2942 = vmatprep.subr.bf16.mxu0 %v2167
    %2943 = vmatpush1.bf16.msra.mxu0 %v2166
    %2944 = vmatprep.subr.bf16.mxu0 %v2179
    %2945 = vmatpush1.bf16.msra.mxu0 %v2178
    %2946 = vmatprep.subr.bf16.mxu0 %v2191
    %2947 = vmatpush1.bf16.msra.mxu0 %v2190
    %2948 = vmatprep.subr.bf16.mxu0 %v2203
    %2949 = vmatpush1.bf16.msra.mxu0 %v2202
    %2950 = vmatprep.mubr.bf16.mxu0 %v1084
    %2951 = vmatmul.mubr.bf16.gmra.mrb[0].mxu0 %v1083
    %v2952 = vpop.f32.mrb[0].mxu0
    %v2953 = vadd.f32 %v1125, %v2952
    %v2954 = vpop.f32.mrb[0].mxu0
    %v2955 = vadd.f32 %v1129, %v2954
    %v2956 = vpop.f32.mrb[0].mxu0
    %v2957 = vpop.f32.mrb[0].mxu0
    %2958 = vdwg.mxu0
    %2959 = vmatprep.subr.bf16.mxu0 %v2215
    %2960 = vmatpush1.bf16.msra.mxu0 %v2214
    %2961 = vmatprep.subr.bf16.mxu0 %v2227
    %2962 = vmatpush1.bf16.msra.mxu0 %v2226
    %2963 = vmatprep.subr.bf16.mxu0 %v2239
    %2964 = vmatpush1.bf16.msra.mxu0 %v2238
    %2965 = vmatprep.subr.bf16.mxu0 %v2251
    %2966 = vmatpush1.bf16.msra.mxu0 %v2250
    %2967 = vmatprep.subr.bf16.mxu0 %v2263
    %2968 = vmatpush1.bf16.msra.mxu0 %v2262
    %2969 = vmatprep.subr.bf16.mxu0 %v2275
    %2970 = vmatpush1.bf16.msra.mxu0 %v2274
    %2971 = vmatprep.subr.bf16.mxu0 %v2287
    %2972 = vmatpush1.bf16.msra.mxu0 %v2286
    %2973 = vmatprep.subr.bf16.mxu0 %v2299
    %2974 = vmatpush1.bf16.msra.mxu0 %v2298
    %2975 = vmatprep.subr.bf16.mxu0 0
    %2976 = vmatpush1.bf16.msra.mxu0 0
    %2977 = vmatprep.subr.bf16.mxu0 0
    %2978 = vmatpush1.bf16.msra.mxu0 0
    %2979 = vmatprep.subr.bf16.mxu0 0
    %2980 = vmatpush1.bf16.msra.mxu0 0
    %2981 = vmatprep.subr.bf16.mxu0 0
    %2982 = vmatpush1.bf16.msra.mxu0 0
    %2983 = vmatprep.subr.bf16.mxu0 0
    %2984 = vmatpush1.bf16.msra.mxu0 0
    %2985 = vmatprep.subr.bf16.mxu0 0
    %2986 = vmatpush1.bf16.msra.mxu0 0
    %2987 = vmatprep.subr.bf16.mxu0 0
    %2988 = vmatpush1.bf16.msra.mxu0 0
    %2989 = vmatprep.subr.bf16.mxu0 0
    %2990 = vmatpush1.bf16.msra.mxu0 0
    %2991 = vmatprep.mubr.bf16.mxu0 0
    %2992 = vmatmul.mubr.bf16.gmra.mrb[0].mxu0 %v1085
    %v2993 = vpop.f32.mrb[0].mxu0
    %v2994 = vadd.f32 %v2953, %v2993
    %v2995 = vpop.f32.mrb[0].mxu0
    %v2996 = vadd.f32 %v2955, %v2995
    %v2997 = vpop.f32.mrb[0].mxu0
    %v2998 = vpop.f32.mrb[0].mxu0
    %2999 = vdwg.mxu0
    %3000 = vmatprep.subr.bf16.mxu0 %v2025
    %3001 = vmatpush1.bf16.msra.mxu0 %v2024
    %3002 = vmatprep.subr.bf16.mxu0 %v2037
    %3003 = vmatpush1.bf16.msra.mxu0 %v2036
    %3004 = vmatprep.subr.bf16.mxu0 %v2049
    %3005 = vmatpush1.bf16.msra.mxu0 %v2048
    %3006 = vmatprep.subr.bf16.mxu0 %v2061
    %3007 = vmatpush1.bf16.msra.mxu0 %v2060
    %3008 = vmatprep.subr.bf16.mxu0 %v2073
    %3009 = vmatpush1.bf16.msra.mxu0 %v2072
    %3010 = vmatprep.subr.bf16.mxu0 %v2085
    %3011 = vmatpush1.bf16.msra.mxu0 %v2084
    %3012 = vmatprep.subr.bf16.mxu0 %v2097
    %3013 = vmatpush1.bf16.msra.mxu0 %v2096
    %3014 = vmatprep.subr.bf16.mxu0 %v2109
    %3015 = vmatpush1.bf16.msra.mxu0 %v2108
    %3016 = vmatprep.subr.bf16.mxu0 %v2121
    %3017 = vmatpush1.bf16.msra.mxu0 %v2120
    %3018 = vmatprep.subr.bf16.mxu0 %v2133
    %3019 = vmatpush1.bf16.msra.mxu0 %v2132
    %3020 = vmatprep.subr.bf16.mxu0 %v2145
    %3021 = vmatpush1.bf16.msra.mxu0 %v2144
    %3022 = vmatprep.subr.bf16.mxu0 %v2157
    %3023 = vmatpush1.bf16.msra.mxu0 %v2156
    %3024 = vmatprep.subr.bf16.mxu0 %v2169
    %3025 = vmatpush1.bf16.msra.mxu0 %v2168
    %3026 = vmatprep.subr.bf16.mxu0 %v2181
    %3027 = vmatpush1.bf16.msra.mxu0 %v2180
    %3028 = vmatprep.subr.bf16.mxu0 %v2193
    %3029 = vmatpush1.bf16.msra.mxu0 %v2192
    %3030 = vmatprep.subr.bf16.mxu0 %v2205
    %3031 = vmatpush1.bf16.msra.mxu0 %v2204
    %3032 = vmatprep.mubr.bf16.mxu0 %v1084
    %3033 = vmatmul.mubr.bf16.gmra.mrb[0].mxu0 %v1083
    %v3034 = vpop.f32.mrb[0].mxu0
    %v3035 = vadd.f32 %v1133, %v3034
    %v3036 = vpop.f32.mrb[0].mxu0
    %v3037 = vadd.f32 %v1137, %v3036
    %v3038 = vpop.f32.mrb[0].mxu0
    %v3039 = vpop.f32.mrb[0].mxu0
    %3040 = vdwg.mxu0
    %3041 = vmatprep.subr.bf16.mxu0 %v2217
    %3042 = vmatpush1.bf16.msra.mxu0 %v2216
    %3043 = vmatprep.subr.bf16.mxu0 %v2229
    %3044 = vmatpush1.bf16.msra.mxu0 %v2228
    %3045 = vmatprep.subr.bf16.mxu0 %v2241
    %3046 = vmatpush1.bf16.msra.mxu0 %v2240
    %3047 = vmatprep.subr.bf16.mxu0 %v2253
    %3048 = vmatpush1.bf16.msra.mxu0 %v2252
    %3049 = vmatprep.subr.bf16.mxu0 %v2265
    %3050 = vmatpush1.bf16.msra.mxu0 %v2264
    %3051 = vmatprep.subr.bf16.mxu0 %v2277
    %3052 = vmatpush1.bf16.msra.mxu0 %v2276
    %3053 = vmatprep.subr.bf16.mxu0 %v2289
    %3054 = vmatpush1.bf16.msra.mxu0 %v2288
    %3055 = vmatprep.subr.bf16.mxu0 %v2301
    %3056 = vmatpush1.bf16.msra.mxu0 %v2300
    %3057 = vmatprep.subr.bf16.mxu0 0
    %3058 = vmatpush1.bf16.msra.mxu0 0
    %3059 = vmatprep.subr.bf16.mxu0 0
    %3060 = vmatpush1.bf16.msra.mxu0 0
    %3061 = vmatprep.subr.bf16.mxu0 0
    %3062 = vmatpush1.bf16.msra.mxu0 0
    %3063 = vmatprep.subr.bf16.mxu0 0
    %3064 = vmatpush1.bf16.msra.mxu0 0
    %3065 = vmatprep.subr.bf16.mxu0 0
    %3066 = vmatpush1.bf16.msra.mxu0 0
    %3067 = vmatprep.subr.bf16.mxu0 0
    %3068 = vmatpush1.bf16.msra.mxu0 0
    %3069 = vmatprep.subr.bf16.mxu0 0
    %3070 = vmatpush1.bf16.msra.mxu0 0
    %3071 = vmatprep.subr.bf16.mxu0 0
    %3072 = vmatpush1.bf16.msra.mxu0 0
    %3073 = vmatprep.mubr.bf16.mxu0 0
    %3074 = vmatmul.mubr.bf16.gmra.mrb[0].mxu0 %v1085
    %v3075 = vpop.f32.mrb[0].mxu0
    %v3076 = vadd.f32 %v3035, %v3075
    %v3077 = vpop.f32.mrb[0].mxu0
    %v3078 = vadd.f32 %v3037, %v3077
    %v3079 = vpop.f32.mrb[0].mxu0
    %v3080 = vpop.f32.mrb[0].mxu0
    %3081 = vdwg.mxu0
    %v3082 = vld [vmem:[#allocation15] sm:$0xff]
    %v3083 = vld [vmem:[#allocation15 + $0x8] sm:$0xff]
    %v3084 = vld [vmem:[#allocation15 + $0x10] sm:$0xff]
    %v3085 = vld [vmem:[#allocation15 + $0x18] sm:$0xff]
    %v3086 = vld [vmem:[#allocation15 + $0x20] sm:$0xff]
    %v3087 = vld [vmem:[#allocation15 + $0x28] sm:$0xff]
    %v3088 = vld [vmem:[#allocation15 + $0x30] sm:$0xff]
    %v3089 = vld [vmem:[#allocation15 + $0x38] sm:$0xff]
    %v3090 = vld [vmem:[#allocation15 + $0x40] sm:$0xff]
    %v3091 = vld [vmem:[#allocation15 + $0x48] sm:$0xff]
    %v3092 = vld [vmem:[#allocation15 + $0x50] sm:$0xff]
    %v3093 = vld [vmem:[#allocation15 + $0x58] sm:$0xff]
    %v3094 = vld [vmem:[#allocation15 + $0x60] sm:$0xff]
    %v3095 = vld [vmem:[#allocation15 + $0x68] sm:$0xff]
    %v3096 = vld [vmem:[#allocation15 + $0x70] sm:$0xff]
    %v3097 = vld [vmem:[#allocation15 + $0x78] sm:$0xff]
    %v3098 = vld [vmem:[#allocation15 + $0x80] sm:$0xff]
    %v3099 = vld [vmem:[#allocation15 + $0x88] sm:$0xff]
    %v3100 = vld [vmem:[#allocation15 + $0x90] sm:$0xff]
    %v3101 = vld [vmem:[#allocation15 + $0x98] sm:$0xff]
    %v3102 = vld [vmem:[#allocation15 + $0xa0] sm:$0xff]
    %v3103 = vld [vmem:[#allocation15 + $0xa8] sm:$0xff]
    %v3104 = vld [vmem:[#allocation15 + $0xb0] sm:$0xff]
    %v3105 = vld [vmem:[#allocation15 + $0xb8] sm:$0xff]
    %v3106 = vld [vmem:[#allocation15 + $0xc0] sm:$0xff]
    %v3107 = vld [vmem:[#allocation15 + $0xc8] sm:$0xff]
    %v3108 = vld [vmem:[#allocation15 + $0xd0] sm:$0xff]
    %v3109 = vld [vmem:[#allocation15 + $0xd8] sm:$0xff]
    %v3110 = vld [vmem:[#allocation15 + $0xe0] sm:$0xff]
    %v3111 = vld [vmem:[#allocation15 + $0xe8] sm:$0xff]
    %v3112 = vld [vmem:[#allocation15 + $0xf0] sm:$0xff]
    %v3113 = vld [vmem:[#allocation15 + $0xf8] sm:$0xff]
    %v3114 = vld [vmem:[#allocation15 + $0x100] sm:$0xff]
    %v3115 = vld [vmem:[#allocation15 + $0x108] sm:$0xff]
    %v3116 = vld [vmem:[#allocation15 + $0x110] sm:$0xff]
    %v3117 = vld [vmem:[#allocation15 + $0x118] sm:$0xff]
    %v3118 = vld [vmem:[#allocation15 + $0x120] sm:$0xff]
    %v3119 = vld [vmem:[#allocation15 + $0x128] sm:$0xff]
    %v3120 = vld [vmem:[#allocation15 + $0x130] sm:$0xff]
    %v3121 = vld [vmem:[#allocation15 + $0x138] sm:$0xff]
    %v3122 = vld [vmem:[#allocation15 + $0x140] sm:$0xff]
    %v3123 = vld [vmem:[#allocation15 + $0x148] sm:$0xff]
    %v3124 = vld [vmem:[#allocation15 + $0x150] sm:$0xff]
    %v3125 = vld [vmem:[#allocation15 + $0x158] sm:$0xff]
    %v3126 = vld [vmem:[#allocation15 + $0x160] sm:$0xff]
    %v3127 = vld [vmem:[#allocation15 + $0x168] sm:$0xff]
    %v3128 = vld [vmem:[#allocation15 + $0x170] sm:$0xff]
    %v3129 = vld [vmem:[#allocation15 + $0x178] sm:$0xff]
    %v3130 = vld [vmem:[#allocation15 + $0x180] sm:$0xff]
    %v3131 = vld [vmem:[#allocation15 + $0x188] sm:$0xff]
    %v3132 = vld [vmem:[#allocation15 + $0x190] sm:$0xff]
    %v3133 = vld [vmem:[#allocation15 + $0x198] sm:$0xff]
    %v3134 = vld [vmem:[#allocation15 + $0x1a0] sm:$0xff]
    %v3135 = vld [vmem:[#allocation15 + $0x1a8] sm:$0xff]
    %v3136 = vld [vmem:[#allocation15 + $0x1b0] sm:$0xff]
    %v3137 = vld [vmem:[#allocation15 + $0x1b8] sm:$0xff]
    %v3138 = vld [vmem:[#allocation15 + $0x1c0] sm:$0xff]
    %v3139 = vld [vmem:[#allocation15 + $0x1c8] sm:$0xff]
    %v3140 = vld [vmem:[#allocation15 + $0x1d0] sm:$0xff]
    %v3141 = vld [vmem:[#allocation15 + $0x1d8] sm:$0xff]
    %v3142 = vld [vmem:[#allocation15 + $0x1e0] sm:$0xff]
    %v3143 = vld [vmem:[#allocation15 + $0x1e8] sm:$0xff]
    %v3144 = vld [vmem:[#allocation15 + $0x1f0] sm:$0xff]
    %v3145 = vld [vmem:[#allocation15 + $0x1f8] sm:$0xff]
    %v3146 = vld [vmem:[#allocation15 + $0x200] sm:$0xff]
    %v3147 = vld [vmem:[#allocation15 + $0x208] sm:$0xff]
    %v3148 = vld [vmem:[#allocation15 + $0x210] sm:$0xff]
    %v3149 = vld [vmem:[#allocation15 + $0x218] sm:$0xff]
    %v3150 = vld [vmem:[#allocation15 + $0x220] sm:$0xff]
    %v3151 = vld [vmem:[#allocation15 + $0x228] sm:$0xff]
    %v3152 = vld [vmem:[#allocation15 + $0x230] sm:$0xff]
    %v3153 = vld [vmem:[#allocation15 + $0x238] sm:$0xff]
    %v3154 = vld [vmem:[#allocation15 + $0x240] sm:$0xff]
    %v3155 = vld [vmem:[#allocation15 + $0x248] sm:$0xff]
    %v3156 = vld [vmem:[#allocation15 + $0x250] sm:$0xff]
    %v3157 = vld [vmem:[#allocation15 + $0x258] sm:$0xff]
    %v3158 = vld [vmem:[#allocation15 + $0x260] sm:$0xff]
    %v3159 = vld [vmem:[#allocation15 + $0x268] sm:$0xff]
    %v3160 = vld [vmem:[#allocation15 + $0x270] sm:$0xff]
    %v3161 = vld [vmem:[#allocation15 + $0x278] sm:$0xff]
    %v3162 = vld [vmem:[#allocation15 + $0x280] sm:$0xff]
    %v3163 = vld [vmem:[#allocation15 + $0x288] sm:$0xff]
    %v3164 = vld [vmem:[#allocation15 + $0x290] sm:$0xff]
    %v3165 = vld [vmem:[#allocation15 + $0x298] sm:$0xff]
    %v3166 = vld [vmem:[#allocation15 + $0x2a0] sm:$0xff]
    %v3167 = vld [vmem:[#allocation15 + $0x2a8] sm:$0xff]
    %v3168 = vld [vmem:[#allocation15 + $0x2b0] sm:$0xff]
    %v3169 = vld [vmem:[#allocation15 + $0x2b8] sm:$0xff]
    %v3170 = vld [vmem:[#allocation15 + $0x2c0] sm:$0xff]
    %v3171 = vld [vmem:[#allocation15 + $0x2c8] sm:$0xff]
    %v3172 = vld [vmem:[#allocation15 + $0x2d0] sm:$0xff]
    %v3173 = vld [vmem:[#allocation15 + $0x2d8] sm:$0xff]
    %v3174 = vld [vmem:[#allocation15 + $0x2e0] sm:$0xff]
    %v3175 = vld [vmem:[#allocation15 + $0x2e8] sm:$0xff]
    %v3176 = vld [vmem:[#allocation15 + $0x2f0] sm:$0xff]
    %v3177 = vld [vmem:[#allocation15 + $0x2f8] sm:$0xff]
    %v3178 = vld [vmem:[#allocation15 + $0x300] sm:$0xff]
    %v3179 = vld [vmem:[#allocation15 + $0x308] sm:$0xff]
    %v3180 = vld [vmem:[#allocation15 + $0x310] sm:$0xff]
    %v3181 = vld [vmem:[#allocation15 + $0x318] sm:$0xff]
    %v3182 = vld [vmem:[#allocation15 + $0x320] sm:$0xff]
    %v3183 = vld [vmem:[#allocation15 + $0x328] sm:$0xff]
    %v3184 = vld [vmem:[#allocation15 + $0x330] sm:$0xff]
    %v3185 = vld [vmem:[#allocation15 + $0x338] sm:$0xff]
    %v3186 = vld [vmem:[#allocation15 + $0x340] sm:$0xff]
    %v3187 = vld [vmem:[#allocation15 + $0x348] sm:$0xff]
    %v3188 = vld [vmem:[#allocation15 + $0x350] sm:$0xff]
    %v3189 = vld [vmem:[#allocation15 + $0x358] sm:$0xff]
    %v3190 = vld [vmem:[#allocation15 + $0x360] sm:$0xff]
    %v3191 = vld [vmem:[#allocation15 + $0x368] sm:$0xff]
    %v3192 = vld [vmem:[#allocation15 + $0x370] sm:$0xff]
    %v3193 = vld [vmem:[#allocation15 + $0x378] sm:$0xff]
    %v3194 = vld [vmem:[#allocation15 + $0x380] sm:$0xff]
    %v3195 = vld [vmem:[#allocation15 + $0x388] sm:$0xff]
    %v3196 = vld [vmem:[#allocation15 + $0x390] sm:$0xff]
    %v3197 = vld [vmem:[#allocation15 + $0x398] sm:$0xff]
    %v3198 = vld [vmem:[#allocation15 + $0x3a0] sm:$0xff]
    %v3199 = vld [vmem:[#allocation15 + $0x3a8] sm:$0xff]
    %v3200 = vld [vmem:[#allocation15 + $0x3b0] sm:$0xff]
    %v3201 = vld [vmem:[#allocation15 + $0x3b8] sm:$0xff]
    %v3202 = vld [vmem:[#allocation15 + $0x3c0] sm:$0xff]
    %v3203 = vld [vmem:[#allocation15 + $0x3c8] sm:$0xff]
    %v3204 = vld [vmem:[#allocation15 + $0x3d0] sm:$0xff]
    %v3205 = vld [vmem:[#allocation15 + $0x3d8] sm:$0xff]
    %v3206 = vld [vmem:[#allocation15 + $0x3e0] sm:$0xff]
    %v3207 = vld [vmem:[#allocation15 + $0x3e8] sm:$0xff]
    %v3208 = vld [vmem:[#allocation15 + $0x3f0] sm:$0xff]
    %v3209 = vld [vmem:[#allocation15 + $0x3f8] sm:$0xff]
    %v3210 = vld [vmem:[#allocation15 + $0x400] sm:$0xff]
    %v3211 = vld [vmem:[#allocation15 + $0x408] sm:$0xff]
    %v3212 = vld [vmem:[#allocation15 + $0x410] sm:$0xff]
    %v3213 = vld [vmem:[#allocation15 + $0x418] sm:$0xff]
    %v3214 = vld [vmem:[#allocation15 + $0x420] sm:$0xff]
    %v3215 = vld [vmem:[#allocation15 + $0x428] sm:$0xff]
    %v3216 = vld [vmem:[#allocation15 + $0x430] sm:$0xff]
    %v3217 = vld [vmem:[#allocation15 + $0x438] sm:$0xff]
    %v3218 = vld [vmem:[#allocation15 + $0x440] sm:$0xff]
    %v3219 = vld [vmem:[#allocation15 + $0x448] sm:$0xff]
    %v3220 = vld [vmem:[#allocation15 + $0x450] sm:$0xff]
    %v3221 = vld [vmem:[#allocation15 + $0x458] sm:$0xff]
    %v3222 = vld [vmem:[#allocation15 + $0x460] sm:$0xff]
    %v3223 = vld [vmem:[#allocation15 + $0x468] sm:$0xff]
    %v3224 = vld [vmem:[#allocation15 + $0x470] sm:$0xff]
    %v3225 = vld [vmem:[#allocation15 + $0x478] sm:$0xff]
    %v3226 = vld [vmem:[#allocation15 + $0x480] sm:$0xff]
    %v3227 = vld [vmem:[#allocation15 + $0x488] sm:$0xff]
    %v3228 = vld [vmem:[#allocation15 + $0x490] sm:$0xff]
    %v3229 = vld [vmem:[#allocation15 + $0x498] sm:$0xff]
    %v3230 = vld [vmem:[#allocation15 + $0x4a0] sm:$0xff]
    %v3231 = vld [vmem:[#allocation15 + $0x4a8] sm:$0xff]
    %v3232 = vld [vmem:[#allocation15 + $0x4b0] sm:$0xff]
    %v3233 = vld [vmem:[#allocation15 + $0x4b8] sm:$0xff]
    %v3234 = vld [vmem:[#allocation15 + $0x4c0] sm:$0xff]
    %v3235 = vld [vmem:[#allocation15 + $0x4c8] sm:$0xff]
    %v3236 = vld [vmem:[#allocation15 + $0x4d0] sm:$0xff]
    %v3237 = vld [vmem:[#allocation15 + $0x4d8] sm:$0xff]
    %v3238 = vld [vmem:[#allocation15 + $0x4e0] sm:$0xff]
    %v3239 = vld [vmem:[#allocation15 + $0x4e8] sm:$0xff]
    %v3240 = vld [vmem:[#allocation15 + $0x4f0] sm:$0xff]
    %v3241 = vld [vmem:[#allocation15 + $0x4f8] sm:$0xff]
    %v3242 = vld [vmem:[#allocation15 + $0x500] sm:$0xff]
    %v3243 = vld [vmem:[#allocation15 + $0x508] sm:$0xff]
    %v3244 = vld [vmem:[#allocation15 + $0x510] sm:$0xff]
    %v3245 = vld [vmem:[#allocation15 + $0x518] sm:$0xff]
    %v3246 = vld [vmem:[#allocation15 + $0x520] sm:$0xff]
    %v3247 = vld [vmem:[#allocation15 + $0x528] sm:$0xff]
    %v3248 = vld [vmem:[#allocation15 + $0x530] sm:$0xff]
    %v3249 = vld [vmem:[#allocation15 + $0x538] sm:$0xff]
    %v3250 = vld [vmem:[#allocation15 + $0x540] sm:$0xff]
    %v3251 = vld [vmem:[#allocation15 + $0x548] sm:$0xff]
    %v3252 = vld [vmem:[#allocation15 + $0x550] sm:$0xff]
    %v3253 = vld [vmem:[#allocation15 + $0x558] sm:$0xff]
    %v3254 = vld [vmem:[#allocation15 + $0x560] sm:$0xff]
    %v3255 = vld [vmem:[#allocation15 + $0x568] sm:$0xff]
    %v3256 = vld [vmem:[#allocation15 + $0x570] sm:$0xff]
    %v3257 = vld [vmem:[#allocation15 + $0x578] sm:$0xff]
    %v3258 = vld [vmem:[#allocation15 + $0x580] sm:$0xff]
    %v3259 = vld [vmem:[#allocation15 + $0x588] sm:$0xff]
    %v3260 = vld [vmem:[#allocation15 + $0x590] sm:$0xff]
    %v3261 = vld [vmem:[#allocation15 + $0x598] sm:$0xff]
    %v3262 = vld [vmem:[#allocation15 + $0x5a0] sm:$0xff]
    %v3263 = vld [vmem:[#allocation15 + $0x5a8] sm:$0xff]
    %v3264 = vld [vmem:[#allocation15 + $0x5b0] sm:$0xff]
    %v3265 = vld [vmem:[#allocation15 + $0x5b8] sm:$0xff]
    %v3266 = vld [vmem:[#allocation15 + $0x5c0] sm:$0xff]
    %v3267 = vld [vmem:[#allocation15 + $0x5c8] sm:$0xff]
    %v3268 = vld [vmem:[#allocation15 + $0x5d0] sm:$0xff]
    %v3269 = vld [vmem:[#allocation15 + $0x5d8] sm:$0xff]
    %v3270 = vld [vmem:[#allocation15 + $0x5e0] sm:$0xff]
    %v3271 = vld [vmem:[#allocation15 + $0x5e8] sm:$0xff]
    %v3272 = vld [vmem:[#allocation15 + $0x5f0] sm:$0xff]
    %v3273 = vld [vmem:[#allocation15 + $0x5f8] sm:$0xff]
    %v3274 = vld [vmem:[#allocation15 + $0x600] sm:$0xff]
    %v3275 = vld [vmem:[#allocation15 + $0x608] sm:$0xff]
    %v3276 = vld [vmem:[#allocation15 + $0x610] sm:$0xff]
    %v3277 = vld [vmem:[#allocation15 + $0x618] sm:$0xff]
    %v3278 = vld [vmem:[#allocation15 + $0x620] sm:$0xff]
    %v3279 = vld [vmem:[#allocation15 + $0x628] sm:$0xff]
    %v3280 = vld [vmem:[#allocation15 + $0x630] sm:$0xff]
    %v3281 = vld [vmem:[#allocation15 + $0x638] sm:$0xff]
    %v3282 = vld [vmem:[#allocation15 + $0x640] sm:$0xff]
    %v3283 = vld [vmem:[#allocation15 + $0x648] sm:$0xff]
    %v3284 = vld [vmem:[#allocation15 + $0x650] sm:$0xff]
    %v3285 = vld [vmem:[#allocation15 + $0x658] sm:$0xff]
    %v3286 = vld [vmem:[#allocation15 + $0x660] sm:$0xff]
    %v3287 = vld [vmem:[#allocation15 + $0x668] sm:$0xff]
    %v3288 = vld [vmem:[#allocation15 + $0x670] sm:$0xff]
    %v3289 = vld [vmem:[#allocation15 + $0x678] sm:$0xff]
    %v3290 = vld [vmem:[#allocation15 + $0x680] sm:$0xff]
    %v3291 = vld [vmem:[#allocation15 + $0x688] sm:$0xff]
    %v3292 = vld [vmem:[#allocation15 + $0x690] sm:$0xff]
    %v3293 = vld [vmem:[#allocation15 + $0x698] sm:$0xff]
    %v3294 = vld [vmem:[#allocation15 + $0x6a0] sm:$0xff]
    %v3295 = vld [vmem:[#allocation15 + $0x6a8] sm:$0xff]
    %v3296 = vld [vmem:[#allocation15 + $0x6b0] sm:$0xff]
    %v3297 = vld [vmem:[#allocation15 + $0x6b8] sm:$0xff]
    %v3298 = vld [vmem:[#allocation15 + $0x6c0] sm:$0xff]
    %v3299 = vld [vmem:[#allocation15 + $0x6c8] sm:$0xff]
    %v3300 = vld [vmem:[#allocation15 + $0x6d0] sm:$0xff]
    %v3301 = vld [vmem:[#allocation15 + $0x6d8] sm:$0xff]
    %v3302 = vld [vmem:[#allocation15 + $0x6e0] sm:$0xff]
    %v3303 = vld [vmem:[#allocation15 + $0x6e8] sm:$0xff]
    %v3304 = vld [vmem:[#allocation15 + $0x6f0] sm:$0xff]
    %v3305 = vld [vmem:[#allocation15 + $0x6f8] sm:$0xff]
    %v3306 = vld [vmem:[#allocation15 + $0x700] sm:$0xff]
    %v3307 = vld [vmem:[#allocation15 + $0x708] sm:$0xff]
    %v3308 = vld [vmem:[#allocation15 + $0x710] sm:$0xff]
    %v3309 = vld [vmem:[#allocation15 + $0x718] sm:$0xff]
    %v3310 = vld [vmem:[#allocation15 + $0x720] sm:$0xff]
    %v3311 = vld [vmem:[#allocation15 + $0x728] sm:$0xff]
    %v3312 = vld [vmem:[#allocation15 + $0x730] sm:$0xff]
    %v3313 = vld [vmem:[#allocation15 + $0x738] sm:$0xff]
    %v3314 = vld [vmem:[#allocation15 + $0x740] sm:$0xff]
    %v3315 = vld [vmem:[#allocation15 + $0x748] sm:$0xff]
    %v3316 = vld [vmem:[#allocation15 + $0x750] sm:$0xff]
    %v3317 = vld [vmem:[#allocation15 + $0x758] sm:$0xff]
    %v3318 = vld [vmem:[#allocation15 + $0x760] sm:$0xff]
    %v3319 = vld [vmem:[#allocation15 + $0x768] sm:$0xff]
    %v3320 = vld [vmem:[#allocation15 + $0x770] sm:$0xff]
    %v3321 = vld [vmem:[#allocation15 + $0x778] sm:$0xff]
    %v3322 = vld [vmem:[#allocation15 + $0x780] sm:$0xff]
    %v3323 = vld [vmem:[#allocation15 + $0x788] sm:$0xff]
    %v3324 = vld [vmem:[#allocation15 + $0x790] sm:$0xff]
    %v3325 = vld [vmem:[#allocation15 + $0x798] sm:$0xff]
    %v3326 = vld [vmem:[#allocation15 + $0x7a0] sm:$0xff]
    %v3327 = vld [vmem:[#allocation15 + $0x7a8] sm:$0xff]
    %v3328 = vld [vmem:[#allocation15 + $0x7b0] sm:$0xff]
    %v3329 = vld [vmem:[#allocation15 + $0x7b8] sm:$0xff]
    %v3330 = vld [vmem:[#allocation15 + $0x7c0] sm:$0xff]
    %v3331 = vld [vmem:[#allocation15 + $0x7c8] sm:$0xff]
    %v3332 = vld [vmem:[#allocation15 + $0x7d0] sm:$0xff]
    %v3333 = vld [vmem:[#allocation15 + $0x7d8] sm:$0xff]
    %v3334 = vld [vmem:[#allocation15 + $0x7e0] sm:$0xff]
    %v3335 = vld [vmem:[#allocation15 + $0x7e8] sm:$0xff]
    %v3336 = vld [vmem:[#allocation15 + $0x7f0] sm:$0xff]
    %v3337 = vld [vmem:[#allocation15 + $0x7f8] sm:$0xff]
    %v3338 = vld [vmem:[#allocation15 + $0x800] sm:$0xff]
    %v3339 = vld [vmem:[#allocation15 + $0x808] sm:$0xff]
    %v3340 = vld [vmem:[#allocation15 + $0x810] sm:$0xff]
    %v3341 = vld [vmem:[#allocation15 + $0x818] sm:$0xff]
    %v3342 = vld [vmem:[#allocation15 + $0x820] sm:$0xff]
    %v3343 = vld [vmem:[#allocation15 + $0x828] sm:$0xff]
    %v3344 = vld [vmem:[#allocation15 + $0x830] sm:$0xff]
    %v3345 = vld [vmem:[#allocation15 + $0x838] sm:$0xff]
    %v3346 = vld [vmem:[#allocation15 + $0x840] sm:$0xff]
    %v3347 = vld [vmem:[#allocation15 + $0x848] sm:$0xff]
    %v3348 = vld [vmem:[#allocation15 + $0x850] sm:$0xff]
    %v3349 = vld [vmem:[#allocation15 + $0x858] sm:$0xff]
    %v3350 = vld [vmem:[#allocation15 + $0x860] sm:$0xff]
    %v3351 = vld [vmem:[#allocation15 + $0x868] sm:$0xff]
    %v3352 = vld [vmem:[#allocation15 + $0x870] sm:$0xff]
    %v3353 = vld [vmem:[#allocation15 + $0x878] sm:$0xff]
    %v3354 = vld [vmem:[#allocation15 + $0x880] sm:$0xff]
    %v3355 = vld [vmem:[#allocation15 + $0x888] sm:$0xff]
    %v3356 = vld [vmem:[#allocation15 + $0x890] sm:$0xff]
    %v3357 = vld [vmem:[#allocation15 + $0x898] sm:$0xff]
    %v3358 = vld [vmem:[#allocation15 + $0x8a0] sm:$0xff]
    %v3359 = vld [vmem:[#allocation15 + $0x8a8] sm:$0xff]
    %v3360 = vld [vmem:[#allocation15 + $0x8b0] sm:$0xff]
    %v3361 = vld [vmem:[#allocation15 + $0x8b8] sm:$0xff]
    %v3362 = vld [vmem:[#allocation15 + $0x8c0] sm:$0xff]
    %v3363 = vld [vmem:[#allocation15 + $0x8c8] sm:$0xff]
    %v3364 = vld [vmem:[#allocation15 + $0x8d0] sm:$0xff]
    %v3365 = vld [vmem:[#allocation15 + $0x8d8] sm:$0xff]
    %v3366 = vld [vmem:[#allocation15 + $0x8e0] sm:$0xff]
    %v3367 = vld [vmem:[#allocation15 + $0x8e8] sm:$0xff]
    %v3368 = vld [vmem:[#allocation15 + $0x8f0] sm:$0xff]
    %v3369 = vld [vmem:[#allocation15 + $0x8f8] sm:$0xff]
    %v3370 = vld [vmem:[#allocation15 + $0x900] sm:$0xff]
    %v3371 = vld [vmem:[#allocation15 + $0x908] sm:$0xff]
    %v3372 = vld [vmem:[#allocation15 + $0x910] sm:$0xff]
    %v3373 = vld [vmem:[#allocation15 + $0x918] sm:$0xff]
    %v3374 = vld [vmem:[#allocation15 + $0x920] sm:$0xff]
    %v3375 = vld [vmem:[#allocation15 + $0x928] sm:$0xff]
    %v3376 = vld [vmem:[#allocation15 + $0x930] sm:$0xff]
    %v3377 = vld [vmem:[#allocation15 + $0x938] sm:$0xff]
    %v3378 = vld [vmem:[#allocation15 + $0x940] sm:$0xff]
    %v3379 = vld [vmem:[#allocation15 + $0x948] sm:$0xff]
    %v3380 = vld [vmem:[#allocation15 + $0x950] sm:$0xff]
    %v3381 = vld [vmem:[#allocation15 + $0x958] sm:$0xff]
    %v3382 = vld [vmem:[#allocation15 + $0x960] sm:$0xff]
    %v3383 = vld [vmem:[#allocation15 + $0x968] sm:$0xff]
    %v3384 = vld [vmem:[#allocation15 + $0x970] sm:$0xff]
    %v3385 = vld [vmem:[#allocation15 + $0x978] sm:$0xff]
    %v3386 = vld [vmem:[#allocation15 + $0x980] sm:$0xff]
    %v3387 = vld [vmem:[#allocation15 + $0x988] sm:$0xff]
    %v3388 = vld [vmem:[#allocation15 + $0x990] sm:$0xff]
    %v3389 = vld [vmem:[#allocation15 + $0x998] sm:$0xff]
    %v3390 = vld [vmem:[#allocation15 + $0x9a0] sm:$0xff]
    %v3391 = vld [vmem:[#allocation15 + $0x9a8] sm:$0xff]
    %v3392 = vld [vmem:[#allocation15 + $0x9b0] sm:$0xff]
    %v3393 = vld [vmem:[#allocation15 + $0x9b8] sm:$0xff]
    %v3394 = vld [vmem:[#allocation15 + $0x9c0] sm:$0xff]
    %v3395 = vld [vmem:[#allocation15 + $0x9c8] sm:$0xff]
    %v3396 = vld [vmem:[#allocation15 + $0x9d0] sm:$0xff]
    %v3397 = vld [vmem:[#allocation15 + $0x9d8] sm:$0xff]
    %v3398 = vld [vmem:[#allocation15 + $0x9e0] sm:$0xff]
    %v3399 = vld [vmem:[#allocation15 + $0x9e8] sm:$0xff]
    %v3400 = vld [vmem:[#allocation15 + $0x9f0] sm:$0xff]
    %v3401 = vld [vmem:[#allocation15 + $0x9f8] sm:$0xff]
    %v3402 = vld [vmem:[#allocation15 + $0xa00] sm:$0xff]
    %v3403 = vld [vmem:[#allocation15 + $0xa08] sm:$0xff]
    %v3404 = vld [vmem:[#allocation15 + $0xa10] sm:$0xff]
    %v3405 = vld [vmem:[#allocation15 + $0xa18] sm:$0xff]
    %v3406 = vld [vmem:[#allocation15 + $0xa20] sm:$0xff]
    %v3407 = vld [vmem:[#allocation15 + $0xa28] sm:$0xff]
    %v3408 = vld [vmem:[#allocation15 + $0xa30] sm:$0xff]
    %v3409 = vld [vmem:[#allocation15 + $0xa38] sm:$0xff]
    %v3410 = vld [vmem:[#allocation15 + $0xa40] sm:$0xff]
    %v3411 = vld [vmem:[#allocation15 + $0xa48] sm:$0xff]
    %v3412 = vld [vmem:[#allocation15 + $0xa50] sm:$0xff]
    %v3413 = vld [vmem:[#allocation15 + $0xa58] sm:$0xff]
    %v3414 = vld [vmem:[#allocation15 + $0xa60] sm:$0xff]
    %v3415 = vld [vmem:[#allocation15 + $0xa68] sm:$0xff]
    %v3416 = vld [vmem:[#allocation15 + $0xa70] sm:$0xff]
    %v3417 = vld [vmem:[#allocation15 + $0xa78] sm:$0xff]
    %v3418 = vld [vmem:[#allocation15 + $0xa80] sm:$0xff]
    %v3419 = vld [vmem:[#allocation15 + $0xa88] sm:$0xff]
    %v3420 = vld [vmem:[#allocation15 + $0xa90] sm:$0xff]
    %v3421 = vld [vmem:[#allocation15 + $0xa98] sm:$0xff]
    %v3422 = vld [vmem:[#allocation15 + $0xaa0] sm:$0xff]
    %v3423 = vld [vmem:[#allocation15 + $0xaa8] sm:$0xff]
    %v3424 = vld [vmem:[#allocation15 + $0xab0] sm:$0xff]
    %v3425 = vld [vmem:[#allocation15 + $0xab8] sm:$0xff]
    %v3426 = vld [vmem:[#allocation15 + $0xac0] sm:$0xff]
    %v3427 = vld [vmem:[#allocation15 + $0xac8] sm:$0xff]
    %v3428 = vld [vmem:[#allocation15 + $0xad0] sm:$0xff]
    %v3429 = vld [vmem:[#allocation15 + $0xad8] sm:$0xff]
    %v3430 = vld [vmem:[#allocation15 + $0xae0] sm:$0xff]
    %v3431 = vld [vmem:[#allocation15 + $0xae8] sm:$0xff]
    %v3432 = vld [vmem:[#allocation15 + $0xaf0] sm:$0xff]
    %v3433 = vld [vmem:[#allocation15 + $0xaf8] sm:$0xff]
    %v3434 = vld [vmem:[#allocation15 + $0xb00] sm:$0xff]
    %v3435 = vld [vmem:[#allocation15 + $0xb08] sm:$0xff]
    %v3436 = vld [vmem:[#allocation15 + $0xb10] sm:$0xff]
    %v3437 = vld [vmem:[#allocation15 + $0xb18] sm:$0xff]
    %v3438 = vld [vmem:[#allocation15 + $0xb20] sm:$0xff]
    %v3439 = vld [vmem:[#allocation15 + $0xb28] sm:$0xff]
    %v3440 = vld [vmem:[#allocation15 + $0xb30] sm:$0xff]
    %v3441 = vld [vmem:[#allocation15 + $0xb38] sm:$0xff]
    %v3442 = vld [vmem:[#allocation15 + $0xb40] sm:$0xff]
    %v3443 = vld [vmem:[#allocation15 + $0xb48] sm:$0xff]
    %v3444 = vld [vmem:[#allocation15 + $0xb50] sm:$0xff]
    %v3445 = vld [vmem:[#allocation15 + $0xb58] sm:$0xff]
    %v3446 = vld [vmem:[#allocation15 + $0xb60] sm:$0xff]
    %v3447 = vld [vmem:[#allocation15 + $0xb68] sm:$0xff]
    %v3448 = vld [vmem:[#allocation15 + $0xb70] sm:$0xff]
    %v3449 = vld [vmem:[#allocation15 + $0xb78] sm:$0xff]
    %v3450 = vld [vmem:[#allocation15 + $0xb80] sm:$0xff]
    %v3451 = vld [vmem:[#allocation15 + $0xb88] sm:$0xff]
    %v3452 = vld [vmem:[#allocation15 + $0xb90] sm:$0xff]
    %v3453 = vld [vmem:[#allocation15 + $0xb98] sm:$0xff]
    %v3454 = vld [vmem:[#allocation15 + $0xba0] sm:$0xff]
    %v3455 = vld [vmem:[#allocation15 + $0xba8] sm:$0xff]
    %v3456 = vld [vmem:[#allocation15 + $0xbb0] sm:$0xff]
    %v3457 = vld [vmem:[#allocation15 + $0xbb8] sm:$0xff]
    %v3458 = vld [vmem:[#allocation15 + $0xbc0] sm:$0xff]
    %v3459 = vld [vmem:[#allocation15 + $0xbc8] sm:$0xff]
    %v3460 = vld [vmem:[#allocation15 + $0xbd0] sm:$0xff]
    %v3461 = vld [vmem:[#allocation15 + $0xbd8] sm:$0xff]
    %v3462 = vld [vmem:[#allocation15 + $0xbe0] sm:$0xff]
    %v3463 = vld [vmem:[#allocation15 + $0xbe8] sm:$0xff]
    %v3464 = vld [vmem:[#allocation15 + $0xbf0] sm:$0xff]
    %v3465 = vld [vmem:[#allocation15 + $0xbf8] sm:$0xff]
    %v3466 = vld [vmem:[#allocation18] sm:$0xff]
    %v3467 = vld [vmem:[#allocation18 + $0x8] sm:$0xf]
    %v3468 = vld [vmem:[#allocation9] sm:$0xf]
    %v3470 = vlaneseq
    %v3471 = vshrl.u32 %v3470, 7
    %v3472 = vsub.s32 0, %v3471
    %v3473 = vrot.slane %v3468, %v3472
    %v3474 = vlaneseq
    %v3475 = vshrl.u32 %v3474, 7
    %v3476 = vsub.s32 1, %v3475
    %v3477 = vrot.slane %v3468, %v3476
    %v3478 = vlaneseq
    %v3479 = vshrl.u32 %v3478, 7
    %v3480 = vsub.s32 2, %v3479
    %v3481 = vrot.slane %v3468, %v3480
    %v3482 = vlaneseq
    %v3483 = vshrl.u32 %v3482, 7
    %v3484 = vsub.s32 3, %v3483
    %v3485 = vrot.slane %v3468, %v3484
    %v3490 = vpack.c.bf16 %v3473, %v3473
    %v3491 = vpack.c.bf16 %v3477, %v3477
    %v3492 = vpack.c.bf16 %v3481, %v3481
    %v3493 = vpack.c.bf16 %v3485, %v3485
    %v3878 = vunpack.c.l.b16 %v3082
    %v3879 = vunpack.c.h.b16 %v3082
    %v3880 = vunpack.c.l.b16 %v3083
    %v3881 = vunpack.c.h.b16 %v3083
    %v3882 = vunpack.c.l.b16 %v3084
    %v3883 = vunpack.c.h.b16 %v3084
    %v3884 = vunpack.c.l.b16 %v3085
    %v3885 = vunpack.c.h.b16 %v3085
    %v3886 = vunpack.c.l.b16 %v3086
    %v3887 = vunpack.c.h.b16 %v3086
    %v3888 = vunpack.c.l.b16 %v3087
    %v3889 = vunpack.c.h.b16 %v3087
    %v3890 = vunpack.c.l.b16 %v3088
    %v3891 = vunpack.c.h.b16 %v3088
    %v3892 = vunpack.c.l.b16 %v3089
    %v3893 = vunpack.c.h.b16 %v3089
    %v3894 = vunpack.c.l.b16 %v3090
    %v3895 = vunpack.c.h.b16 %v3090
    %v3896 = vunpack.c.l.b16 %v3091
    %v3897 = vunpack.c.h.b16 %v3091
    %v3898 = vunpack.c.l.b16 %v3092
    %v3899 = vunpack.c.h.b16 %v3092
    %v3900 = vunpack.c.l.b16 %v3093
    %v3901 = vunpack.c.h.b16 %v3093
    %v3902 = vunpack.c.l.b16 %v3094
    %v3903 = vunpack.c.h.b16 %v3094
    %v3904 = vunpack.c.l.b16 %v3095
    %v3905 = vunpack.c.h.b16 %v3095
    %v3906 = vunpack.c.l.b16 %v3096
    %v3907 = vunpack.c.h.b16 %v3096
    %v3908 = vunpack.c.l.b16 %v3097
    %v3909 = vunpack.c.h.b16 %v3097
    %v3910 = vunpack.c.l.b16 %v3098
    %v3911 = vunpack.c.h.b16 %v3098
    %v3912 = vunpack.c.l.b16 %v3099
    %v3913 = vunpack.c.h.b16 %v3099
    %v3914 = vunpack.c.l.b16 %v3100
    %v3915 = vunpack.c.h.b16 %v3100
    %v3916 = vunpack.c.l.b16 %v3101
    %v3917 = vunpack.c.h.b16 %v3101
    %v3918 = vunpack.c.l.b16 %v3102
    %v3919 = vunpack.c.h.b16 %v3102
    %v3920 = vunpack.c.l.b16 %v3103
    %v3921 = vunpack.c.h.b16 %v3103
    %v3922 = vunpack.c.l.b16 %v3104
    %v3923 = vunpack.c.h.b16 %v3104
    %v3924 = vunpack.c.l.b16 %v3105
    %v3925 = vunpack.c.h.b16 %v3105
    %v3926 = vunpack.c.l.b16 %v3106
    %v3927 = vunpack.c.h.b16 %v3106
    %v3928 = vunpack.c.l.b16 %v3107
    %v3929 = vunpack.c.h.b16 %v3107
    %v3930 = vunpack.c.l.b16 %v3108
    %v3931 = vunpack.c.h.b16 %v3108
    %v3932 = vunpack.c.l.b16 %v3109
    %v3933 = vunpack.c.h.b16 %v3109
    %v3934 = vunpack.c.l.b16 %v3110
    %v3935 = vunpack.c.h.b16 %v3110
    %v3936 = vunpack.c.l.b16 %v3111
    %v3937 = vunpack.c.h.b16 %v3111
    %v3938 = vunpack.c.l.b16 %v3112
    %v3939 = vunpack.c.h.b16 %v3112
    %v3940 = vunpack.c.l.b16 %v3113
    %v3941 = vunpack.c.h.b16 %v3113
    %v3942 = vunpack.c.l.b16 %v3114
    %v3943 = vunpack.c.h.b16 %v3114
    %v3944 = vunpack.c.l.b16 %v3115
    %v3945 = vunpack.c.h.b16 %v3115
    %v3946 = vunpack.c.l.b16 %v3116
    %v3947 = vunpack.c.h.b16 %v3116
    %v3948 = vunpack.c.l.b16 %v3117
    %v3949 = vunpack.c.h.b16 %v3117
    %v3950 = vunpack.c.l.b16 %v3118
    %v3951 = vunpack.c.h.b16 %v3118
    %v3952 = vunpack.c.l.b16 %v3119
    %v3953 = vunpack.c.h.b16 %v3119
    %v3954 = vunpack.c.l.b16 %v3120
    %v3955 = vunpack.c.h.b16 %v3120
    %v3956 = vunpack.c.l.b16 %v3121
    %v3957 = vunpack.c.h.b16 %v3121
    %v3958 = vunpack.c.l.b16 %v3122
    %v3959 = vunpack.c.h.b16 %v3122
    %v3960 = vunpack.c.l.b16 %v3123
    %v3961 = vunpack.c.h.b16 %v3123
    %v3962 = vunpack.c.l.b16 %v3124
    %v3963 = vunpack.c.h.b16 %v3124
    %v3964 = vunpack.c.l.b16 %v3125
    %v3965 = vunpack.c.h.b16 %v3125
    %v3966 = vunpack.c.l.b16 %v3126
    %v3967 = vunpack.c.h.b16 %v3126
    %v3968 = vunpack.c.l.b16 %v3127
    %v3969 = vunpack.c.h.b16 %v3127
    %v3970 = vunpack.c.l.b16 %v3128
    %v3971 = vunpack.c.h.b16 %v3128
    %v3972 = vunpack.c.l.b16 %v3129
    %v3973 = vunpack.c.h.b16 %v3129
    %v3974 = vunpack.c.l.b16 %v3130
    %v3975 = vunpack.c.h.b16 %v3130
    %v3976 = vunpack.c.l.b16 %v3131
    %v3977 = vunpack.c.h.b16 %v3131
    %v3978 = vunpack.c.l.b16 %v3132
    %v3979 = vunpack.c.h.b16 %v3132
    %v3980 = vunpack.c.l.b16 %v3133
    %v3981 = vunpack.c.h.b16 %v3133
    %v3982 = vunpack.c.l.b16 %v3134
    %v3983 = vunpack.c.h.b16 %v3134
    %v3984 = vunpack.c.l.b16 %v3135
    %v3985 = vunpack.c.h.b16 %v3135
    %v3986 = vunpack.c.l.b16 %v3136
    %v3987 = vunpack.c.h.b16 %v3136
    %v3988 = vunpack.c.l.b16 %v3137
    %v3989 = vunpack.c.h.b16 %v3137
    %v3990 = vunpack.c.l.b16 %v3138
    %v3991 = vunpack.c.h.b16 %v3138
    %v3992 = vunpack.c.l.b16 %v3139
    %v3993 = vunpack.c.h.b16 %v3139
    %v3994 = vunpack.c.l.b16 %v3140
    %v3995 = vunpack.c.h.b16 %v3140
    %v3996 = vunpack.c.l.b16 %v3141
    %v3997 = vunpack.c.h.b16 %v3141
    %v3998 = vunpack.c.l.b16 %v3142
    %v3999 = vunpack.c.h.b16 %v3142
    %v4000 = vunpack.c.l.b16 %v3143
    %v4001 = vunpack.c.h.b16 %v3143
    %v4002 = vunpack.c.l.b16 %v3144
    %v4003 = vunpack.c.h.b16 %v3144
    %v4004 = vunpack.c.l.b16 %v3145
    %v4005 = vunpack.c.h.b16 %v3145
    %v4006 = vunpack.c.l.b16 %v3146
    %v4007 = vunpack.c.h.b16 %v3146
    %v4008 = vunpack.c.l.b16 %v3147
    %v4009 = vunpack.c.h.b16 %v3147
    %v4010 = vunpack.c.l.b16 %v3148
    %v4011 = vunpack.c.h.b16 %v3148
    %v4012 = vunpack.c.l.b16 %v3149
    %v4013 = vunpack.c.h.b16 %v3149
    %v4014 = vunpack.c.l.b16 %v3150
    %v4015 = vunpack.c.h.b16 %v3150
    %v4016 = vunpack.c.l.b16 %v3151
    %v4017 = vunpack.c.h.b16 %v3151
    %v4018 = vunpack.c.l.b16 %v3152
    %v4019 = vunpack.c.h.b16 %v3152
    %v4020 = vunpack.c.l.b16 %v3153
    %v4021 = vunpack.c.h.b16 %v3153
    %v4022 = vunpack.c.l.b16 %v3154
    %v4023 = vunpack.c.h.b16 %v3154
    %v4024 = vunpack.c.l.b16 %v3155
    %v4025 = vunpack.c.h.b16 %v3155
    %v4026 = vunpack.c.l.b16 %v3156
    %v4027 = vunpack.c.h.b16 %v3156
    %v4028 = vunpack.c.l.b16 %v3157
    %v4029 = vunpack.c.h.b16 %v3157
    %v4030 = vunpack.c.l.b16 %v3158
    %v4031 = vunpack.c.h.b16 %v3158
    %v4032 = vunpack.c.l.b16 %v3159
    %v4033 = vunpack.c.h.b16 %v3159
    %v4034 = vunpack.c.l.b16 %v3160
    %v4035 = vunpack.c.h.b16 %v3160
    %v4036 = vunpack.c.l.b16 %v3161
    %v4037 = vunpack.c.h.b16 %v3161
    %v4038 = vunpack.c.l.b16 %v3162
    %v4039 = vunpack.c.h.b16 %v3162
    %v4040 = vunpack.c.l.b16 %v3163
    %v4041 = vunpack.c.h.b16 %v3163
    %v4042 = vunpack.c.l.b16 %v3164
    %v4043 = vunpack.c.h.b16 %v3164
    %v4044 = vunpack.c.l.b16 %v3165
    %v4045 = vunpack.c.h.b16 %v3165
    %v4046 = vunpack.c.l.b16 %v3166
    %v4047 = vunpack.c.h.b16 %v3166
    %v4048 = vunpack.c.l.b16 %v3167
    %v4049 = vunpack.c.h.b16 %v3167
    %v4050 = vunpack.c.l.b16 %v3168
    %v4051 = vunpack.c.h.b16 %v3168
    %v4052 = vunpack.c.l.b16 %v3169
    %v4053 = vunpack.c.h.b16 %v3169
    %v4054 = vunpack.c.l.b16 %v3170
    %v4055 = vunpack.c.h.b16 %v3170
    %v4056 = vunpack.c.l.b16 %v3171
    %v4057 = vunpack.c.h.b16 %v3171
    %v4058 = vunpack.c.l.b16 %v3172
    %v4059 = vunpack.c.h.b16 %v3172
    %v4060 = vunpack.c.l.b16 %v3173
    %v4061 = vunpack.c.h.b16 %v3173
    %v4062 = vunpack.c.l.b16 %v3174
    %v4063 = vunpack.c.h.b16 %v3174
    %v4064 = vunpack.c.l.b16 %v3175
    %v4065 = vunpack.c.h.b16 %v3175
    %v4066 = vunpack.c.l.b16 %v3176
    %v4067 = vunpack.c.h.b16 %v3176
    %v4068 = vunpack.c.l.b16 %v3177
    %v4069 = vunpack.c.h.b16 %v3177
    %v4070 = vunpack.c.l.b16 %v3178
    %v4071 = vunpack.c.h.b16 %v3178
    %v4072 = vunpack.c.l.b16 %v3179
    %v4073 = vunpack.c.h.b16 %v3179
    %v4074 = vunpack.c.l.b16 %v3180
    %v4075 = vunpack.c.h.b16 %v3180
    %v4076 = vunpack.c.l.b16 %v3181
    %v4077 = vunpack.c.h.b16 %v3181
    %v4078 = vunpack.c.l.b16 %v3182
    %v4079 = vunpack.c.h.b16 %v3182
    %v4080 = vunpack.c.l.b16 %v3183
    %v4081 = vunpack.c.h.b16 %v3183
    %v4082 = vunpack.c.l.b16 %v3184
    %v4083 = vunpack.c.h.b16 %v3184
    %v4084 = vunpack.c.l.b16 %v3185
    %v4085 = vunpack.c.h.b16 %v3185
    %v4086 = vunpack.c.l.b16 %v3186
    %v4087 = vunpack.c.h.b16 %v3186
    %v4088 = vunpack.c.l.b16 %v3187
    %v4089 = vunpack.c.h.b16 %v3187
    %v4090 = vunpack.c.l.b16 %v3188
    %v4091 = vunpack.c.h.b16 %v3188
    %v4092 = vunpack.c.l.b16 %v3189
    %v4093 = vunpack.c.h.b16 %v3189
    %v4094 = vunpack.c.l.b16 %v3190
    %v4095 = vunpack.c.h.b16 %v3190
    %v4096 = vunpack.c.l.b16 %v3191
    %v4097 = vunpack.c.h.b16 %v3191
    %v4098 = vunpack.c.l.b16 %v3192
    %v4099 = vunpack.c.h.b16 %v3192
    %v4100 = vunpack.c.l.b16 %v3193
    %v4101 = vunpack.c.h.b16 %v3193
    %v4102 = vunpack.c.l.b16 %v3194
    %v4103 = vunpack.c.h.b16 %v3194
    %v4104 = vunpack.c.l.b16 %v3195
    %v4105 = vunpack.c.h.b16 %v3195
    %v4106 = vunpack.c.l.b16 %v3196
    %v4107 = vunpack.c.h.b16 %v3196
    %v4108 = vunpack.c.l.b16 %v3197
    %v4109 = vunpack.c.h.b16 %v3197
    %v4110 = vunpack.c.l.b16 %v3198
    %v4111 = vunpack.c.h.b16 %v3198
    %v4112 = vunpack.c.l.b16 %v3199
    %v4113 = vunpack.c.h.b16 %v3199
    %v4114 = vunpack.c.l.b16 %v3200
    %v4115 = vunpack.c.h.b16 %v3200
    %v4116 = vunpack.c.l.b16 %v3201
    %v4117 = vunpack.c.h.b16 %v3201
    %v4118 = vunpack.c.l.b16 %v3202
    %v4119 = vunpack.c.h.b16 %v3202
    %v4120 = vunpack.c.l.b16 %v3203
    %v4121 = vunpack.c.h.b16 %v3203
    %v4122 = vunpack.c.l.b16 %v3204
    %v4123 = vunpack.c.h.b16 %v3204
    %v4124 = vunpack.c.l.b16 %v3205
    %v4125 = vunpack.c.h.b16 %v3205
    %v4126 = vunpack.c.l.b16 %v3206
    %v4127 = vunpack.c.h.b16 %v3206
    %v4128 = vunpack.c.l.b16 %v3207
    %v4129 = vunpack.c.h.b16 %v3207
    %v4130 = vunpack.c.l.b16 %v3208
    %v4131 = vunpack.c.h.b16 %v3208
    %v4132 = vunpack.c.l.b16 %v3209
    %v4133 = vunpack.c.h.b16 %v3209
    %v4134 = vunpack.c.l.b16 %v3210
    %v4135 = vunpack.c.h.b16 %v3210
    %v4136 = vunpack.c.l.b16 %v3211
    %v4137 = vunpack.c.h.b16 %v3211
    %v4138 = vunpack.c.l.b16 %v3212
    %v4139 = vunpack.c.h.b16 %v3212
    %v4140 = vunpack.c.l.b16 %v3213
    %v4141 = vunpack.c.h.b16 %v3213
    %v4142 = vunpack.c.l.b16 %v3214
    %v4143 = vunpack.c.h.b16 %v3214
    %v4144 = vunpack.c.l.b16 %v3215
    %v4145 = vunpack.c.h.b16 %v3215
    %v4146 = vunpack.c.l.b16 %v3216
    %v4147 = vunpack.c.h.b16 %v3216
    %v4148 = vunpack.c.l.b16 %v3217
    %v4149 = vunpack.c.h.b16 %v3217
    %v4150 = vunpack.c.l.b16 %v3218
    %v4151 = vunpack.c.h.b16 %v3218
    %v4152 = vunpack.c.l.b16 %v3219
    %v4153 = vunpack.c.h.b16 %v3219
    %v4154 = vunpack.c.l.b16 %v3220
    %v4155 = vunpack.c.h.b16 %v3220
    %v4156 = vunpack.c.l.b16 %v3221
    %v4157 = vunpack.c.h.b16 %v3221
    %v4158 = vunpack.c.l.b16 %v3222
    %v4159 = vunpack.c.h.b16 %v3222
    %v4160 = vunpack.c.l.b16 %v3223
    %v4161 = vunpack.c.h.b16 %v3223
    %v4162 = vunpack.c.l.b16 %v3224
    %v4163 = vunpack.c.h.b16 %v3224
    %v4164 = vunpack.c.l.b16 %v3225
    %v4165 = vunpack.c.h.b16 %v3225
    %v4166 = vunpack.c.l.b16 %v3226
    %v4167 = vunpack.c.h.b16 %v3226
    %v4168 = vunpack.c.l.b16 %v3227
    %v4169 = vunpack.c.h.b16 %v3227
    %v4170 = vunpack.c.l.b16 %v3228
    %v4171 = vunpack.c.h.b16 %v3228
    %v4172 = vunpack.c.l.b16 %v3229
    %v4173 = vunpack.c.h.b16 %v3229
    %v4174 = vunpack.c.l.b16 %v3230
    %v4175 = vunpack.c.h.b16 %v3230
    %v4176 = vunpack.c.l.b16 %v3231
    %v4177 = vunpack.c.h.b16 %v3231
    %v4178 = vunpack.c.l.b16 %v3232
    %v4179 = vunpack.c.h.b16 %v3232
    %v4180 = vunpack.c.l.b16 %v3233
    %v4181 = vunpack.c.h.b16 %v3233
    %v4182 = vunpack.c.l.b16 %v3234
    %v4183 = vunpack.c.h.b16 %v3234
    %v4184 = vunpack.c.l.b16 %v3235
    %v4185 = vunpack.c.h.b16 %v3235
    %v4186 = vunpack.c.l.b16 %v3236
    %v4187 = vunpack.c.h.b16 %v3236
    %v4188 = vunpack.c.l.b16 %v3237
    %v4189 = vunpack.c.h.b16 %v3237
    %v4190 = vunpack.c.l.b16 %v3238
    %v4191 = vunpack.c.h.b16 %v3238
    %v4192 = vunpack.c.l.b16 %v3239
    %v4193 = vunpack.c.h.b16 %v3239
    %v4194 = vunpack.c.l.b16 %v3240
    %v4195 = vunpack.c.h.b16 %v3240
    %v4196 = vunpack.c.l.b16 %v3241
    %v4197 = vunpack.c.h.b16 %v3241
    %v4198 = vunpack.c.l.b16 %v3242
    %v4199 = vunpack.c.h.b16 %v3242
    %v4200 = vunpack.c.l.b16 %v3243
    %v4201 = vunpack.c.h.b16 %v3243
    %v4202 = vunpack.c.l.b16 %v3244
    %v4203 = vunpack.c.h.b16 %v3244
    %v4204 = vunpack.c.l.b16 %v3245
    %v4205 = vunpack.c.h.b16 %v3245
    %v4206 = vunpack.c.l.b16 %v3246
    %v4207 = vunpack.c.h.b16 %v3246
    %v4208 = vunpack.c.l.b16 %v3247
    %v4209 = vunpack.c.h.b16 %v3247
    %v4210 = vunpack.c.l.b16 %v3248
    %v4211 = vunpack.c.h.b16 %v3248
    %v4212 = vunpack.c.l.b16 %v3249
    %v4213 = vunpack.c.h.b16 %v3249
    %v4214 = vunpack.c.l.b16 %v3250
    %v4215 = vunpack.c.h.b16 %v3250
    %v4216 = vunpack.c.l.b16 %v3251
    %v4217 = vunpack.c.h.b16 %v3251
    %v4218 = vunpack.c.l.b16 %v3252
    %v4219 = vunpack.c.h.b16 %v3252
    %v4220 = vunpack.c.l.b16 %v3253
    %v4221 = vunpack.c.h.b16 %v3253
    %v4222 = vunpack.c.l.b16 %v3254
    %v4223 = vunpack.c.h.b16 %v3254
    %v4224 = vunpack.c.l.b16 %v3255
    %v4225 = vunpack.c.h.b16 %v3255
    %v4226 = vunpack.c.l.b16 %v3256
    %v4227 = vunpack.c.h.b16 %v3256
    %v4228 = vunpack.c.l.b16 %v3257
    %v4229 = vunpack.c.h.b16 %v3257
    %v4230 = vunpack.c.l.b16 %v3258
    %v4231 = vunpack.c.h.b16 %v3258
    %v4232 = vunpack.c.l.b16 %v3259
    %v4233 = vunpack.c.h.b16 %v3259
    %v4234 = vunpack.c.l.b16 %v3260
    %v4235 = vunpack.c.h.b16 %v3260
    %v4236 = vunpack.c.l.b16 %v3261
    %v4237 = vunpack.c.h.b16 %v3261
    %v4238 = vunpack.c.l.b16 %v3262
    %v4239 = vunpack.c.h.b16 %v3262
    %v4240 = vunpack.c.l.b16 %v3263
    %v4241 = vunpack.c.h.b16 %v3263
    %v4242 = vunpack.c.l.b16 %v3264
    %v4243 = vunpack.c.h.b16 %v3264
    %v4244 = vunpack.c.l.b16 %v3265
    %v4245 = vunpack.c.h.b16 %v3265
    %v4246 = vunpack.c.l.b16 %v3266
    %v4247 = vunpack.c.h.b16 %v3266
    %v4248 = vunpack.c.l.b16 %v3267
    %v4249 = vunpack.c.h.b16 %v3267
    %v4250 = vunpack.c.l.b16 %v3268
    %v4251 = vunpack.c.h.b16 %v3268
    %v4252 = vunpack.c.l.b16 %v3269
    %v4253 = vunpack.c.h.b16 %v3269
    %v4254 = vunpack.c.l.b16 %v3270
    %v4255 = vunpack.c.h.b16 %v3270
    %v4256 = vunpack.c.l.b16 %v3271
    %v4257 = vunpack.c.h.b16 %v3271
    %v4258 = vunpack.c.l.b16 %v3272
    %v4259 = vunpack.c.h.b16 %v3272
    %v4260 = vunpack.c.l.b16 %v3273
    %v4261 = vunpack.c.h.b16 %v3273
    %v4262 = vunpack.c.l.b16 %v3274
    %v4263 = vunpack.c.h.b16 %v3274
    %v4264 = vunpack.c.l.b16 %v3275
    %v4265 = vunpack.c.h.b16 %v3275
    %v4266 = vunpack.c.l.b16 %v3276
    %v4267 = vunpack.c.h.b16 %v3276
    %v4268 = vunpack.c.l.b16 %v3277
    %v4269 = vunpack.c.h.b16 %v3277
    %v4270 = vunpack.c.l.b16 %v3278
    %v4271 = vunpack.c.h.b16 %v3278
    %v4272 = vunpack.c.l.b16 %v3279
    %v4273 = vunpack.c.h.b16 %v3279
    %v4274 = vunpack.c.l.b16 %v3280
    %v4275 = vunpack.c.h.b16 %v3280
    %v4276 = vunpack.c.l.b16 %v3281
    %v4277 = vunpack.c.h.b16 %v3281
    %v4278 = vunpack.c.l.b16 %v3282
    %v4279 = vunpack.c.h.b16 %v3282
    %v4280 = vunpack.c.l.b16 %v3283
    %v4281 = vunpack.c.h.b16 %v3283
    %v4282 = vunpack.c.l.b16 %v3284
    %v4283 = vunpack.c.h.b16 %v3284
    %v4284 = vunpack.c.l.b16 %v3285
    %v4285 = vunpack.c.h.b16 %v3285
    %v4286 = vunpack.c.l.b16 %v3286
    %v4287 = vunpack.c.h.b16 %v3286
    %v4288 = vunpack.c.l.b16 %v3287
    %v4289 = vunpack.c.h.b16 %v3287
    %v4290 = vunpack.c.l.b16 %v3288
    %v4291 = vunpack.c.h.b16 %v3288
    %v4292 = vunpack.c.l.b16 %v3289
    %v4293 = vunpack.c.h.b16 %v3289
    %v4294 = vunpack.c.l.b16 %v3290
    %v4295 = vunpack.c.h.b16 %v3290
    %v4296 = vunpack.c.l.b16 %v3291
    %v4297 = vunpack.c.h.b16 %v3291
    %v4298 = vunpack.c.l.b16 %v3292
    %v4299 = vunpack.c.h.b16 %v3292
    %v4300 = vunpack.c.l.b16 %v3293
    %v4301 = vunpack.c.h.b16 %v3293
    %v4302 = vunpack.c.l.b16 %v3294
    %v4303 = vunpack.c.h.b16 %v3294
    %v4304 = vunpack.c.l.b16 %v3295
    %v4305 = vunpack.c.h.b16 %v3295
    %v4306 = vunpack.c.l.b16 %v3296
    %v4307 = vunpack.c.h.b16 %v3296
    %v4308 = vunpack.c.l.b16 %v3297
    %v4309 = vunpack.c.h.b16 %v3297
    %v4310 = vunpack.c.l.b16 %v3298
    %v4311 = vunpack.c.h.b16 %v3298
    %v4312 = vunpack.c.l.b16 %v3299
    %v4313 = vunpack.c.h.b16 %v3299
    %v4314 = vunpack.c.l.b16 %v3300
    %v4315 = vunpack.c.h.b16 %v3300
    %v4316 = vunpack.c.l.b16 %v3301
    %v4317 = vunpack.c.h.b16 %v3301
    %v4318 = vunpack.c.l.b16 %v3302
    %v4319 = vunpack.c.h.b16 %v3302
    %v4320 = vunpack.c.l.b16 %v3303
    %v4321 = vunpack.c.h.b16 %v3303
    %v4322 = vunpack.c.l.b16 %v3304
    %v4323 = vunpack.c.h.b16 %v3304
    %v4324 = vunpack.c.l.b16 %v3305
    %v4325 = vunpack.c.h.b16 %v3305
    %v4326 = vunpack.c.l.b16 %v3306
    %v4327 = vunpack.c.h.b16 %v3306
    %v4328 = vunpack.c.l.b16 %v3307
    %v4329 = vunpack.c.h.b16 %v3307
    %v4330 = vunpack.c.l.b16 %v3308
    %v4331 = vunpack.c.h.b16 %v3308
    %v4332 = vunpack.c.l.b16 %v3309
    %v4333 = vunpack.c.h.b16 %v3309
    %v4334 = vunpack.c.l.b16 %v3310
    %v4335 = vunpack.c.h.b16 %v3310
    %v4336 = vunpack.c.l.b16 %v3311
    %v4337 = vunpack.c.h.b16 %v3311
    %v4338 = vunpack.c.l.b16 %v3312
    %v4339 = vunpack.c.h.b16 %v3312
    %v4340 = vunpack.c.l.b16 %v3313
    %v4341 = vunpack.c.h.b16 %v3313
    %v4342 = vunpack.c.l.b16 %v3314
    %v4343 = vunpack.c.h.b16 %v3314
    %v4344 = vunpack.c.l.b16 %v3315
    %v4345 = vunpack.c.h.b16 %v3315
    %v4346 = vunpack.c.l.b16 %v3316
    %v4347 = vunpack.c.h.b16 %v3316
    %v4348 = vunpack.c.l.b16 %v3317
    %v4349 = vunpack.c.h.b16 %v3317
    %v4350 = vunpack.c.l.b16 %v3318
    %v4351 = vunpack.c.h.b16 %v3318
    %v4352 = vunpack.c.l.b16 %v3319
    %v4353 = vunpack.c.h.b16 %v3319
    %v4354 = vunpack.c.l.b16 %v3320
    %v4355 = vunpack.c.h.b16 %v3320
    %v4356 = vunpack.c.l.b16 %v3321
    %v4357 = vunpack.c.h.b16 %v3321
    %v4358 = vunpack.c.l.b16 %v3322
    %v4359 = vunpack.c.h.b16 %v3322
    %v4360 = vunpack.c.l.b16 %v3323
    %v4361 = vunpack.c.h.b16 %v3323
    %v4362 = vunpack.c.l.b16 %v3324
    %v4363 = vunpack.c.h.b16 %v3324
    %v4364 = vunpack.c.l.b16 %v3325
    %v4365 = vunpack.c.h.b16 %v3325
    %v4366 = vunpack.c.l.b16 %v3326
    %v4367 = vunpack.c.h.b16 %v3326
    %v4368 = vunpack.c.l.b16 %v3327
    %v4369 = vunpack.c.h.b16 %v3327
    %v4370 = vunpack.c.l.b16 %v3328
    %v4371 = vunpack.c.h.b16 %v3328
    %v4372 = vunpack.c.l.b16 %v3329
    %v4373 = vunpack.c.h.b16 %v3329
    %v4374 = vunpack.c.l.b16 %v3330
    %v4375 = vunpack.c.h.b16 %v3330
    %v4376 = vunpack.c.l.b16 %v3331
    %v4377 = vunpack.c.h.b16 %v3331
    %v4378 = vunpack.c.l.b16 %v3332
    %v4379 = vunpack.c.h.b16 %v3332
    %v4380 = vunpack.c.l.b16 %v3333
    %v4381 = vunpack.c.h.b16 %v3333
    %v4382 = vunpack.c.l.b16 %v3334
    %v4383 = vunpack.c.h.b16 %v3334
    %v4384 = vunpack.c.l.b16 %v3335
    %v4385 = vunpack.c.h.b16 %v3335
    %v4386 = vunpack.c.l.b16 %v3336
    %v4387 = vunpack.c.h.b16 %v3336
    %v4388 = vunpack.c.l.b16 %v3337
    %v4389 = vunpack.c.h.b16 %v3337
    %v4390 = vunpack.c.l.b16 %v3338
    %v4391 = vunpack.c.h.b16 %v3338
    %v4392 = vunpack.c.l.b16 %v3339
    %v4393 = vunpack.c.h.b16 %v3339
    %v4394 = vunpack.c.l.b16 %v3340
    %v4395 = vunpack.c.h.b16 %v3340
    %v4396 = vunpack.c.l.b16 %v3341
    %v4397 = vunpack.c.h.b16 %v3341
    %v4398 = vunpack.c.l.b16 %v3342
    %v4399 = vunpack.c.h.b16 %v3342
    %v4400 = vunpack.c.l.b16 %v3343
    %v4401 = vunpack.c.h.b16 %v3343
    %v4402 = vunpack.c.l.b16 %v3344
    %v4403 = vunpack.c.h.b16 %v3344
    %v4404 = vunpack.c.l.b16 %v3345
    %v4405 = vunpack.c.h.b16 %v3345
    %v4406 = vunpack.c.l.b16 %v3346
    %v4407 = vunpack.c.h.b16 %v3346
    %v4408 = vunpack.c.l.b16 %v3347
    %v4409 = vunpack.c.h.b16 %v3347
    %v4410 = vunpack.c.l.b16 %v3348
    %v4411 = vunpack.c.h.b16 %v3348
    %v4412 = vunpack.c.l.b16 %v3349
    %v4413 = vunpack.c.h.b16 %v3349
    %v4414 = vunpack.c.l.b16 %v3350
    %v4415 = vunpack.c.h.b16 %v3350
    %v4416 = vunpack.c.l.b16 %v3351
    %v4417 = vunpack.c.h.b16 %v3351
    %v4418 = vunpack.c.l.b16 %v3352
    %v4419 = vunpack.c.h.b16 %v3352
    %v4420 = vunpack.c.l.b16 %v3353
    %v4421 = vunpack.c.h.b16 %v3353
    %v4422 = vunpack.c.l.b16 %v3354
    %v4423 = vunpack.c.h.b16 %v3354
    %v4424 = vunpack.c.l.b16 %v3355
    %v4425 = vunpack.c.h.b16 %v3355
    %v4426 = vunpack.c.l.b16 %v3356
    %v4427 = vunpack.c.h.b16 %v3356
    %v4428 = vunpack.c.l.b16 %v3357
    %v4429 = vunpack.c.h.b16 %v3357
    %v4430 = vunpack.c.l.b16 %v3358
    %v4431 = vunpack.c.h.b16 %v3358
    %v4432 = vunpack.c.l.b16 %v3359
    %v4433 = vunpack.c.h.b16 %v3359
    %v4434 = vunpack.c.l.b16 %v3360
    %v4435 = vunpack.c.h.b16 %v3360
    %v4436 = vunpack.c.l.b16 %v3361
    %v4437 = vunpack.c.h.b16 %v3361
    %v4438 = vunpack.c.l.b16 %v3362
    %v4439 = vunpack.c.h.b16 %v3362
    %v4440 = vunpack.c.l.b16 %v3363
    %v4441 = vunpack.c.h.b16 %v3363
    %v4442 = vunpack.c.l.b16 %v3364
    %v4443 = vunpack.c.h.b16 %v3364
    %v4444 = vunpack.c.l.b16 %v3365
    %v4445 = vunpack.c.h.b16 %v3365
    %v4446 = vunpack.c.l.b16 %v3366
    %v4447 = vunpack.c.h.b16 %v3366
    %v4448 = vunpack.c.l.b16 %v3367
    %v4449 = vunpack.c.h.b16 %v3367
    %v4450 = vunpack.c.l.b16 %v3368
    %v4451 = vunpack.c.h.b16 %v3368
    %v4452 = vunpack.c.l.b16 %v3369
    %v4453 = vunpack.c.h.b16 %v3369
    %v4454 = vunpack.c.l.b16 %v3370
    %v4455 = vunpack.c.h.b16 %v3370
    %v4456 = vunpack.c.l.b16 %v3371
    %v4457 = vunpack.c.h.b16 %v3371
    %v4458 = vunpack.c.l.b16 %v3372
    %v4459 = vunpack.c.h.b16 %v3372
    %v4460 = vunpack.c.l.b16 %v3373
    %v4461 = vunpack.c.h.b16 %v3373
    %v4462 = vunpack.c.l.b16 %v3374
    %v4463 = vunpack.c.h.b16 %v3374
    %v4464 = vunpack.c.l.b16 %v3375
    %v4465 = vunpack.c.h.b16 %v3375
    %v4466 = vunpack.c.l.b16 %v3376
    %v4467 = vunpack.c.h.b16 %v3376
    %v4468 = vunpack.c.l.b16 %v3377
    %v4469 = vunpack.c.h.b16 %v3377
    %v4470 = vunpack.c.l.b16 %v3378
    %v4471 = vunpack.c.h.b16 %v3378
    %v4472 = vunpack.c.l.b16 %v3379
    %v4473 = vunpack.c.h.b16 %v3379
    %v4474 = vunpack.c.l.b16 %v3380
    %v4475 = vunpack.c.h.b16 %v3380
    %v4476 = vunpack.c.l.b16 %v3381
    %v4477 = vunpack.c.h.b16 %v3381
    %v4478 = vunpack.c.l.b16 %v3382
    %v4479 = vunpack.c.h.b16 %v3382
    %v4480 = vunpack.c.l.b16 %v3383
    %v4481 = vunpack.c.h.b16 %v3383
    %v4482 = vunpack.c.l.b16 %v3384
    %v4483 = vunpack.c.h.b16 %v3384
    %v4484 = vunpack.c.l.b16 %v3385
    %v4485 = vunpack.c.h.b16 %v3385
    %v4486 = vunpack.c.l.b16 %v3386
    %v4487 = vunpack.c.h.b16 %v3386
    %v4488 = vunpack.c.l.b16 %v3387
    %v4489 = vunpack.c.h.b16 %v3387
    %v4490 = vunpack.c.l.b16 %v3388
    %v4491 = vunpack.c.h.b16 %v3388
    %v4492 = vunpack.c.l.b16 %v3389
    %v4493 = vunpack.c.h.b16 %v3389
    %v4494 = vunpack.c.l.b16 %v3390
    %v4495 = vunpack.c.h.b16 %v3390
    %v4496 = vunpack.c.l.b16 %v3391
    %v4497 = vunpack.c.h.b16 %v3391
    %v4498 = vunpack.c.l.b16 %v3392
    %v4499 = vunpack.c.h.b16 %v3392
    %v4500 = vunpack.c.l.b16 %v3393
    %v4501 = vunpack.c.h.b16 %v3393
    %v4502 = vunpack.c.l.b16 %v3394
    %v4503 = vunpack.c.h.b16 %v3394
    %v4504 = vunpack.c.l.b16 %v3395
    %v4505 = vunpack.c.h.b16 %v3395
    %v4506 = vunpack.c.l.b16 %v3396
    %v4507 = vunpack.c.h.b16 %v3396
    %v4508 = vunpack.c.l.b16 %v3397
    %v4509 = vunpack.c.h.b16 %v3397
    %v4510 = vunpack.c.l.b16 %v3398
    %v4511 = vunpack.c.h.b16 %v3398
    %v4512 = vunpack.c.l.b16 %v3399
    %v4513 = vunpack.c.h.b16 %v3399
    %v4514 = vunpack.c.l.b16 %v3400
    %v4515 = vunpack.c.h.b16 %v3400
    %v4516 = vunpack.c.l.b16 %v3401
    %v4517 = vunpack.c.h.b16 %v3401
    %v4518 = vunpack.c.l.b16 %v3402
    %v4519 = vunpack.c.h.b16 %v3402
    %v4520 = vunpack.c.l.b16 %v3403
    %v4521 = vunpack.c.h.b16 %v3403
    %v4522 = vunpack.c.l.b16 %v3404
    %v4523 = vunpack.c.h.b16 %v3404
    %v4524 = vunpack.c.l.b16 %v3405
    %v4525 = vunpack.c.h.b16 %v3405
    %v4526 = vunpack.c.l.b16 %v3406
    %v4527 = vunpack.c.h.b16 %v3406
    %v4528 = vunpack.c.l.b16 %v3407
    %v4529 = vunpack.c.h.b16 %v3407
    %v4530 = vunpack.c.l.b16 %v3408
    %v4531 = vunpack.c.h.b16 %v3408
    %v4532 = vunpack.c.l.b16 %v3409
    %v4533 = vunpack.c.h.b16 %v3409
    %v4534 = vunpack.c.l.b16 %v3410
    %v4535 = vunpack.c.h.b16 %v3410
    %v4536 = vunpack.c.l.b16 %v3411
    %v4537 = vunpack.c.h.b16 %v3411
    %v4538 = vunpack.c.l.b16 %v3412
    %v4539 = vunpack.c.h.b16 %v3412
    %v4540 = vunpack.c.l.b16 %v3413
    %v4541 = vunpack.c.h.b16 %v3413
    %v4542 = vunpack.c.l.b16 %v3414
    %v4543 = vunpack.c.h.b16 %v3414
    %v4544 = vunpack.c.l.b16 %v3415
    %v4545 = vunpack.c.h.b16 %v3415
    %v4546 = vunpack.c.l.b16 %v3416
    %v4547 = vunpack.c.h.b16 %v3416
    %v4548 = vunpack.c.l.b16 %v3417
    %v4549 = vunpack.c.h.b16 %v3417
    %v4550 = vunpack.c.l.b16 %v3418
    %v4551 = vunpack.c.h.b16 %v3418
    %v4552 = vunpack.c.l.b16 %v3419
    %v4553 = vunpack.c.h.b16 %v3419
    %v4554 = vunpack.c.l.b16 %v3420
    %v4555 = vunpack.c.h.b16 %v3420
    %v4556 = vunpack.c.l.b16 %v3421
    %v4557 = vunpack.c.h.b16 %v3421
    %v4558 = vunpack.c.l.b16 %v3422
    %v4559 = vunpack.c.h.b16 %v3422
    %v4560 = vunpack.c.l.b16 %v3423
    %v4561 = vunpack.c.h.b16 %v3423
    %v4562 = vunpack.c.l.b16 %v3424
    %v4563 = vunpack.c.h.b16 %v3424
    %v4564 = vunpack.c.l.b16 %v3425
    %v4565 = vunpack.c.h.b16 %v3425
    %v4566 = vunpack.c.l.b16 %v3426
    %v4567 = vunpack.c.h.b16 %v3426
    %v4568 = vunpack.c.l.b16 %v3427
    %v4569 = vunpack.c.h.b16 %v3427
    %v4570 = vunpack.c.l.b16 %v3428
    %v4571 = vunpack.c.h.b16 %v3428
    %v4572 = vunpack.c.l.b16 %v3429
    %v4573 = vunpack.c.h.b16 %v3429
    %v4574 = vunpack.c.l.b16 %v3430
    %v4575 = vunpack.c.h.b16 %v3430
    %v4576 = vunpack.c.l.b16 %v3431
    %v4577 = vunpack.c.h.b16 %v3431
    %v4578 = vunpack.c.l.b16 %v3432
    %v4579 = vunpack.c.h.b16 %v3432
    %v4580 = vunpack.c.l.b16 %v3433
    %v4581 = vunpack.c.h.b16 %v3433
    %v4582 = vunpack.c.l.b16 %v3434
    %v4583 = vunpack.c.h.b16 %v3434
    %v4584 = vunpack.c.l.b16 %v3435
    %v4585 = vunpack.c.h.b16 %v3435
    %v4586 = vunpack.c.l.b16 %v3436
    %v4587 = vunpack.c.h.b16 %v3436
    %v4588 = vunpack.c.l.b16 %v3437
    %v4589 = vunpack.c.h.b16 %v3437
    %v4590 = vunpack.c.l.b16 %v3438
    %v4591 = vunpack.c.h.b16 %v3438
    %v4592 = vunpack.c.l.b16 %v3439
    %v4593 = vunpack.c.h.b16 %v3439
    %v4594 = vunpack.c.l.b16 %v3440
    %v4595 = vunpack.c.h.b16 %v3440
    %v4596 = vunpack.c.l.b16 %v3441
    %v4597 = vunpack.c.h.b16 %v3441
    %v4598 = vunpack.c.l.b16 %v3442
    %v4599 = vunpack.c.h.b16 %v3442
    %v4600 = vunpack.c.l.b16 %v3443
    %v4601 = vunpack.c.h.b16 %v3443
    %v4602 = vunpack.c.l.b16 %v3444
    %v4603 = vunpack.c.h.b16 %v3444
    %v4604 = vunpack.c.l.b16 %v3445
    %v4605 = vunpack.c.h.b16 %v3445
    %v4606 = vunpack.c.l.b16 %v3446
    %v4607 = vunpack.c.h.b16 %v3446
    %v4608 = vunpack.c.l.b16 %v3447
    %v4609 = vunpack.c.h.b16 %v3447
    %v4610 = vunpack.c.l.b16 %v3448
    %v4611 = vunpack.c.h.b16 %v3448
    %v4612 = vunpack.c.l.b16 %v3449
    %v4613 = vunpack.c.h.b16 %v3449
    %v4614 = vunpack.c.l.b16 %v3450
    %v4615 = vunpack.c.h.b16 %v3450
    %v4616 = vunpack.c.l.b16 %v3451
    %v4617 = vunpack.c.h.b16 %v3451
    %v4618 = vunpack.c.l.b16 %v3452
    %v4619 = vunpack.c.h.b16 %v3452
    %v4620 = vunpack.c.l.b16 %v3453
    %v4621 = vunpack.c.h.b16 %v3453
    %v4622 = vunpack.c.l.b16 %v3454
    %v4623 = vunpack.c.h.b16 %v3454
    %v4624 = vunpack.c.l.b16 %v3455
    %v4625 = vunpack.c.h.b16 %v3455
    %v4626 = vunpack.c.l.b16 %v3456
    %v4627 = vunpack.c.h.b16 %v3456
    %v4628 = vunpack.c.l.b16 %v3457
    %v4629 = vunpack.c.h.b16 %v3457
    %v4630 = vunpack.c.l.b16 %v3458
    %v4631 = vunpack.c.h.b16 %v3458
    %v4632 = vunpack.c.l.b16 %v3459
    %v4633 = vunpack.c.h.b16 %v3459
    %v4634 = vunpack.c.l.b16 %v3460
    %v4635 = vunpack.c.h.b16 %v3460
    %v4636 = vunpack.c.l.b16 %v3461
    %v4637 = vunpack.c.h.b16 %v3461
    %v4638 = vunpack.c.l.b16 %v3462
    %v4639 = vunpack.c.h.b16 %v3462
    %v4640 = vunpack.c.l.b16 %v3463
    %v4641 = vunpack.c.h.b16 %v3463
    %v4642 = vunpack.c.l.b16 %v3464
    %v4643 = vunpack.c.h.b16 %v3464
    %v4644 = vunpack.c.l.b16 %v3465
    %v4645 = vunpack.c.h.b16 %v3465
    %v4646 = vpack.c.b16 %v3890, %v3878
    %v4647 = vpack.c.b16 %v3891, %v3879
    %v4648 = vpack.c.b16 %v3892, %v3880
    %v4649 = vpack.c.b16 %v3893, %v3881
    %v4650 = vpack.c.b16 %v3894, %v3882
    %v4651 = vpack.c.b16 %v3895, %v3883
    %v4652 = vpack.c.b16 %v3896, %v3884
    %v4653 = vpack.c.b16 %v3897, %v3885
    %v4654 = vpack.c.b16 %v3898, %v3886
    %v4655 = vpack.c.b16 %v3899, %v3887
    %v4656 = vpack.c.b16 %v3900, %v3888
    %v4657 = vpack.c.b16 %v3901, %v3889
    %v4658 = vpack.c.b16 %v3914, %v3902
    %v4659 = vpack.c.b16 %v3915, %v3903
    %v4660 = vpack.c.b16 %v3916, %v3904
    %v4661 = vpack.c.b16 %v3917, %v3905
    %v4662 = vpack.c.b16 %v3918, %v3906
    %v4663 = vpack.c.b16 %v3919, %v3907
    %v4664 = vpack.c.b16 %v3920, %v3908
    %v4665 = vpack.c.b16 %v3921, %v3909
    %v4666 = vpack.c.b16 %v3922, %v3910
    %v4667 = vpack.c.b16 %v3923, %v3911
    %v4668 = vpack.c.b16 %v3924, %v3912
    %v4669 = vpack.c.b16 %v3925, %v3913
    %v4670 = vpack.c.b16 %v3938, %v3926
    %v4671 = vpack.c.b16 %v3939, %v3927
    %v4672 = vpack.c.b16 %v3940, %v3928
    %v4673 = vpack.c.b16 %v3941, %v3929
    %v4674 = vpack.c.b16 %v3942, %v3930
    %v4675 = vpack.c.b16 %v3943, %v3931
    %v4676 = vpack.c.b16 %v3944, %v3932
    %v4677 = vpack.c.b16 %v3945, %v3933
    %v4678 = vpack.c.b16 %v3946, %v3934
    %v4679 = vpack.c.b16 %v3947, %v3935
    %v4680 = vpack.c.b16 %v3948, %v3936
    %v4681 = vpack.c.b16 %v3949, %v3937
    %v4682 = vpack.c.b16 %v3962, %v3950
    %v4683 = vpack.c.b16 %v3963, %v3951
    %v4684 = vpack.c.b16 %v3964, %v3952
    %v4685 = vpack.c.b16 %v3965, %v3953
    %v4686 = vpack.c.b16 %v3966, %v3954
    %v4687 = vpack.c.b16 %v3967, %v3955
    %v4688 = vpack.c.b16 %v3968, %v3956
    %v4689 = vpack.c.b16 %v3969, %v3957
    %v4690 = vpack.c.b16 %v3970, %v3958
    %v4691 = vpack.c.b16 %v3971, %v3959
    %v4692 = vpack.c.b16 %v3972, %v3960
    %v4693 = vpack.c.b16 %v3973, %v3961
    %v4694 = vpack.c.b16 %v3986, %v3974
    %v4695 = vpack.c.b16 %v3987, %v3975
    %v4696 = vpack.c.b16 %v3988, %v3976
    %v4697 = vpack.c.b16 %v3989, %v3977
    %v4698 = vpack.c.b16 %v3990, %v3978
    %v4699 = vpack.c.b16 %v3991, %v3979
    %v4700 = vpack.c.b16 %v3992, %v3980
    %v4701 = vpack.c.b16 %v3993, %v3981
    %v4702 = vpack.c.b16 %v3994, %v3982
    %v4703 = vpack.c.b16 %v3995, %v3983
    %v4704 = vpack.c.b16 %v3996, %v3984
    %v4705 = vpack.c.b16 %v3997, %v3985
    %v4706 = vpack.c.b16 %v4010, %v3998
    %v4707 = vpack.c.b16 %v4011, %v3999
    %v4708 = vpack.c.b16 %v4012, %v4000
    %v4709 = vpack.c.b16 %v4013, %v4001
    %v4710 = vpack.c.b16 %v4014, %v4002
    %v4711 = vpack.c.b16 %v4015, %v4003
    %v4712 = vpack.c.b16 %v4016, %v4004
    %v4713 = vpack.c.b16 %v4017, %v4005
    %v4714 = vpack.c.b16 %v4018, %v4006
    %v4715 = vpack.c.b16 %v4019, %v4007
    %v4716 = vpack.c.b16 %v4020, %v4008
    %v4717 = vpack.c.b16 %v4021, %v4009
    %v4718 = vpack.c.b16 %v4034, %v4022
    %v4719 = vpack.c.b16 %v4035, %v4023
    %v4720 = vpack.c.b16 %v4036, %v4024
    %v4721 = vpack.c.b16 %v4037, %v4025
    %v4722 = vpack.c.b16 %v4038, %v4026
    %v4723 = vpack.c.b16 %v4039, %v4027
    %v4724 = vpack.c.b16 %v4040, %v4028
    %v4725 = vpack.c.b16 %v4041, %v4029
    %v4726 = vpack.c.b16 %v4042, %v4030
    %v4727 = vpack.c.b16 %v4043, %v4031
    %v4728 = vpack.c.b16 %v4044, %v4032
    %v4729 = vpack.c.b16 %v4045, %v4033
    %v4730 = vpack.c.b16 %v4058, %v4046
    %v4731 = vpack.c.b16 %v4059, %v4047
    %v4732 = vpack.c.b16 %v4060, %v4048
    %v4733 = vpack.c.b16 %v4061, %v4049
    %v4734 = vpack.c.b16 %v4062, %v4050
    %v4735 = vpack.c.b16 %v4063, %v4051
    %v4736 = vpack.c.b16 %v4064, %v4052
    %v4737 = vpack.c.b16 %v4065, %v4053
    %v4738 = vpack.c.b16 %v4066, %v4054
    %v4739 = vpack.c.b16 %v4067, %v4055
    %v4740 = vpack.c.b16 %v4068, %v4056
    %v4741 = vpack.c.b16 %v4069, %v4057
    %v4742 = vpack.c.b16 %v4082, %v4070
    %v4743 = vpack.c.b16 %v4083, %v4071
    %v4744 = vpack.c.b16 %v4084, %v4072
    %v4745 = vpack.c.b16 %v4085, %v4073
    %v4746 = vpack.c.b16 %v4086, %v4074
    %v4747 = vpack.c.b16 %v4087, %v4075
    %v4748 = vpack.c.b16 %v4088, %v4076
    %v4749 = vpack.c.b16 %v4089, %v4077
    %v4750 = vpack.c.b16 %v4090, %v4078
    %v4751 = vpack.c.b16 %v4091, %v4079
    %v4752 = vpack.c.b16 %v4092, %v4080
    %v4753 = vpack.c.b16 %v4093, %v4081
    %v4754 = vpack.c.b16 %v4106, %v4094
    %v4755 = vpack.c.b16 %v4107, %v4095
    %v4756 = vpack.c.b16 %v4108, %v4096
    %v4757 = vpack.c.b16 %v4109, %v4097
    %v4758 = vpack.c.b16 %v4110, %v4098
    %v4759 = vpack.c.b16 %v4111, %v4099
    %v4760 = vpack.c.b16 %v4112, %v4100
    %v4761 = vpack.c.b16 %v4113, %v4101
    %v4762 = vpack.c.b16 %v4114, %v4102
    %v4763 = vpack.c.b16 %v4115, %v4103
    %v4764 = vpack.c.b16 %v4116, %v4104
    %v4765 = vpack.c.b16 %v4117, %v4105
    %v4766 = vpack.c.b16 %v4130, %v4118
    %v4767 = vpack.c.b16 %v4131, %v4119
    %v4768 = vpack.c.b16 %v4132, %v4120
    %v4769 = vpack.c.b16 %v4133, %v4121
    %v4770 = vpack.c.b16 %v4134, %v4122
    %v4771 = vpack.c.b16 %v4135, %v4123
    %v4772 = vpack.c.b16 %v4136, %v4124
    %v4773 = vpack.c.b16 %v4137, %v4125
    %v4774 = vpack.c.b16 %v4138, %v4126
    %v4775 = vpack.c.b16 %v4139, %v4127
    %v4776 = vpack.c.b16 %v4140, %v4128
    %v4777 = vpack.c.b16 %v4141, %v4129
    %v4778 = vpack.c.b16 %v4154, %v4142
    %v4779 = vpack.c.b16 %v4155, %v4143
    %v4780 = vpack.c.b16 %v4156, %v4144
    %v4781 = vpack.c.b16 %v4157, %v4145
    %v4782 = vpack.c.b16 %v4158, %v4146
    %v4783 = vpack.c.b16 %v4159, %v4147
    %v4784 = vpack.c.b16 %v4160, %v4148
    %v4785 = vpack.c.b16 %v4161, %v4149
    %v4786 = vpack.c.b16 %v4162, %v4150
    %v4787 = vpack.c.b16 %v4163, %v4151
    %v4788 = vpack.c.b16 %v4164, %v4152
    %v4789 = vpack.c.b16 %v4165, %v4153
    %v4790 = vpack.c.b16 %v4178, %v4166
    %v4791 = vpack.c.b16 %v4179, %v4167
    %v4792 = vpack.c.b16 %v4180, %v4168
    %v4793 = vpack.c.b16 %v4181, %v4169
    %v4794 = vpack.c.b16 %v4182, %v4170
    %v4795 = vpack.c.b16 %v4183, %v4171
    %v4796 = vpack.c.b16 %v4184, %v4172
    %v4797 = vpack.c.b16 %v4185, %v4173
    %v4798 = vpack.c.b16 %v4186, %v4174
    %v4799 = vpack.c.b16 %v4187, %v4175
    %v4800 = vpack.c.b16 %v4188, %v4176
    %v4801 = vpack.c.b16 %v4189, %v4177
    %v4802 = vpack.c.b16 %v4202, %v4190
    %v4803 = vpack.c.b16 %v4203, %v4191
    %v4804 = vpack.c.b16 %v4204, %v4192
    %v4805 = vpack.c.b16 %v4205, %v4193
    %v4806 = vpack.c.b16 %v4206, %v4194
    %v4807 = vpack.c.b16 %v4207, %v4195
    %v4808 = vpack.c.b16 %v4208, %v4196
    %v4809 = vpack.c.b16 %v4209, %v4197
    %v4810 = vpack.c.b16 %v4210, %v4198
    %v4811 = vpack.c.b16 %v4211, %v4199
    %v4812 = vpack.c.b16 %v4212, %v4200
    %v4813 = vpack.c.b16 %v4213, %v4201
    %v4814 = vpack.c.b16 %v4226, %v4214
    %v4815 = vpack.c.b16 %v4227, %v4215
    %v4816 = vpack.c.b16 %v4228, %v4216
    %v4817 = vpack.c.b16 %v4229, %v4217
    %v4818 = vpack.c.b16 %v4230, %v4218
    %v4819 = vpack.c.b16 %v4231, %v4219
    %v4820 = vpack.c.b16 %v4232, %v4220
    %v4821 = vpack.c.b16 %v4233, %v4221
    %v4822 = vpack.c.b16 %v4234, %v4222
    %v4823 = vpack.c.b16 %v4235, %v4223
    %v4824 = vpack.c.b16 %v4236, %v4224
    %v4825 = vpack.c.b16 %v4237, %v4225
    %v4826 = vpack.c.b16 %v4250, %v4238
    %v4827 = vpack.c.b16 %v4251, %v4239
    %v4828 = vpack.c.b16 %v4252, %v4240
    %v4829 = vpack.c.b16 %v4253, %v4241
    %v4830 = vpack.c.b16 %v4254, %v4242
    %v4831 = vpack.c.b16 %v4255, %v4243
    %v4832 = vpack.c.b16 %v4256, %v4244
    %v4833 = vpack.c.b16 %v4257, %v4245
    %v4834 = vpack.c.b16 %v4258, %v4246
    %v4835 = vpack.c.b16 %v4259, %v4247
    %v4836 = vpack.c.b16 %v4260, %v4248
    %v4837 = vpack.c.b16 %v4261, %v4249
    %v4838 = vpack.c.b16 %v4274, %v4262
    %v4839 = vpack.c.b16 %v4275, %v4263
    %v4840 = vpack.c.b16 %v4276, %v4264
    %v4841 = vpack.c.b16 %v4277, %v4265
    %v4842 = vpack.c.b16 %v4278, %v4266
    %v4843 = vpack.c.b16 %v4279, %v4267
    %v4844 = vpack.c.b16 %v4280, %v4268
    %v4845 = vpack.c.b16 %v4281, %v4269
    %v4846 = vpack.c.b16 %v4282, %v4270
    %v4847 = vpack.c.b16 %v4283, %v4271
    %v4848 = vpack.c.b16 %v4284, %v4272
    %v4849 = vpack.c.b16 %v4285, %v4273
    %v4850 = vpack.c.b16 %v4298, %v4286
    %v4851 = vpack.c.b16 %v4299, %v4287
    %v4852 = vpack.c.b16 %v4300, %v4288
    %v4853 = vpack.c.b16 %v4301, %v4289
    %v4854 = vpack.c.b16 %v4302, %v4290
    %v4855 = vpack.c.b16 %v4303, %v4291
    %v4856 = vpack.c.b16 %v4304, %v4292
    %v4857 = vpack.c.b16 %v4305, %v4293
    %v4858 = vpack.c.b16 %v4306, %v4294
    %v4859 = vpack.c.b16 %v4307, %v4295
    %v4860 = vpack.c.b16 %v4308, %v4296
    %v4861 = vpack.c.b16 %v4309, %v4297
    %v4862 = vpack.c.b16 %v4322, %v4310
    %v4863 = vpack.c.b16 %v4323, %v4311
    %v4864 = vpack.c.b16 %v4324, %v4312
    %v4865 = vpack.c.b16 %v4325, %v4313
    %v4866 = vpack.c.b16 %v4326, %v4314
    %v4867 = vpack.c.b16 %v4327, %v4315
    %v4868 = vpack.c.b16 %v4328, %v4316
    %v4869 = vpack.c.b16 %v4329, %v4317
    %v4870 = vpack.c.b16 %v4330, %v4318
    %v4871 = vpack.c.b16 %v4331, %v4319
    %v4872 = vpack.c.b16 %v4332, %v4320
    %v4873 = vpack.c.b16 %v4333, %v4321
    %v4874 = vpack.c.b16 %v4346, %v4334
    %v4875 = vpack.c.b16 %v4347, %v4335
    %v4876 = vpack.c.b16 %v4348, %v4336
    %v4877 = vpack.c.b16 %v4349, %v4337
    %v4878 = vpack.c.b16 %v4350, %v4338
    %v4879 = vpack.c.b16 %v4351, %v4339
    %v4880 = vpack.c.b16 %v4352, %v4340
    %v4881 = vpack.c.b16 %v4353, %v4341
    %v4882 = vpack.c.b16 %v4354, %v4342
    %v4883 = vpack.c.b16 %v4355, %v4343
    %v4884 = vpack.c.b16 %v4356, %v4344
    %v4885 = vpack.c.b16 %v4357, %v4345
    %v4886 = vpack.c.b16 %v4370, %v4358
    %v4887 = vpack.c.b16 %v4371, %v4359
    %v4888 = vpack.c.b16 %v4372, %v4360
    %v4889 = vpack.c.b16 %v4373, %v4361
    %v4890 = vpack.c.b16 %v4374, %v4362
    %v4891 = vpack.c.b16 %v4375, %v4363
    %v4892 = vpack.c.b16 %v4376, %v4364
    %v4893 = vpack.c.b16 %v4377, %v4365
    %v4894 = vpack.c.b16 %v4378, %v4366
    %v4895 = vpack.c.b16 %v4379, %v4367
    %v4896 = vpack.c.b16 %v4380, %v4368
    %v4897 = vpack.c.b16 %v4381, %v4369
    %v4898 = vpack.c.b16 %v4394, %v4382
    %v4899 = vpack.c.b16 %v4395, %v4383
    %v4900 = vpack.c.b16 %v4396, %v4384
    %v4901 = vpack.c.b16 %v4397, %v4385
    %v4902 = vpack.c.b16 %v4398, %v4386
    %v4903 = vpack.c.b16 %v4399, %v4387
    %v4904 = vpack.c.b16 %v4400, %v4388
    %v4905 = vpack.c.b16 %v4401, %v4389
    %v4906 = vpack.c.b16 %v4402, %v4390
    %v4907 = vpack.c.b16 %v4403, %v4391
    %v4908 = vpack.c.b16 %v4404, %v4392
    %v4909 = vpack.c.b16 %v4405, %v4393
    %v4910 = vpack.c.b16 %v4418, %v4406
    %v4911 = vpack.c.b16 %v4419, %v4407
    %v4912 = vpack.c.b16 %v4420, %v4408
    %v4913 = vpack.c.b16 %v4421, %v4409
    %v4914 = vpack.c.b16 %v4422, %v4410
    %v4915 = vpack.c.b16 %v4423, %v4411
    %v4916 = vpack.c.b16 %v4424, %v4412
    %v4917 = vpack.c.b16 %v4425, %v4413
    %v4918 = vpack.c.b16 %v4426, %v4414
    %v4919 = vpack.c.b16 %v4427, %v4415
    %v4920 = vpack.c.b16 %v4428, %v4416
    %v4921 = vpack.c.b16 %v4429, %v4417
    %v4922 = vpack.c.b16 %v4442, %v4430
    %v4923 = vpack.c.b16 %v4443, %v4431
    %v4924 = vpack.c.b16 %v4444, %v4432
    %v4925 = vpack.c.b16 %v4445, %v4433
    %v4926 = vpack.c.b16 %v4446, %v4434
    %v4927 = vpack.c.b16 %v4447, %v4435
    %v4928 = vpack.c.b16 %v4448, %v4436
    %v4929 = vpack.c.b16 %v4449, %v4437
    %v4930 = vpack.c.b16 %v4450, %v4438
    %v4931 = vpack.c.b16 %v4451, %v4439
    %v4932 = vpack.c.b16 %v4452, %v4440
    %v4933 = vpack.c.b16 %v4453, %v4441
    %v4934 = vpack.c.b16 %v4466, %v4454
    %v4935 = vpack.c.b16 %v4467, %v4455
    %v4936 = vpack.c.b16 %v4468, %v4456
    %v4937 = vpack.c.b16 %v4469, %v4457
    %v4938 = vpack.c.b16 %v4470, %v4458
    %v4939 = vpack.c.b16 %v4471, %v4459
    %v4940 = vpack.c.b16 %v4472, %v4460
    %v4941 = vpack.c.b16 %v4473, %v4461
    %v4942 = vpack.c.b16 %v4474, %v4462
    %v4943 = vpack.c.b16 %v4475, %v4463
    %v4944 = vpack.c.b16 %v4476, %v4464
    %v4945 = vpack.c.b16 %v4477, %v4465
    %v4946 = vpack.c.b16 %v4490, %v4478
    %v4947 = vpack.c.b16 %v4491, %v4479
    %v4948 = vpack.c.b16 %v4492, %v4480
    %v4949 = vpack.c.b16 %v4493, %v4481
    %v4950 = vpack.c.b16 %v4494, %v4482
    %v4951 = vpack.c.b16 %v4495, %v4483
    %v4952 = vpack.c.b16 %v4496, %v4484
    %v4953 = vpack.c.b16 %v4497, %v4485
    %v4954 = vpack.c.b16 %v4498, %v4486
    %v4955 = vpack.c.b16 %v4499, %v4487
    %v4956 = vpack.c.b16 %v4500, %v4488
    %v4957 = vpack.c.b16 %v4501, %v4489
    %v4958 = vpack.c.b16 %v4514, %v4502
    %v4959 = vpack.c.b16 %v4515, %v4503
    %v4960 = vpack.c.b16 %v4516, %v4504
    %v4961 = vpack.c.b16 %v4517, %v4505
    %v4962 = vpack.c.b16 %v4518, %v4506
    %v4963 = vpack.c.b16 %v4519, %v4507
    %v4964 = vpack.c.b16 %v4520, %v4508
    %v4965 = vpack.c.b16 %v4521, %v4509
    %v4966 = vpack.c.b16 %v4522, %v4510
    %v4967 = vpack.c.b16 %v4523, %v4511
    %v4968 = vpack.c.b16 %v4524, %v4512
    %v4969 = vpack.c.b16 %v4525, %v4513
    %v4970 = vpack.c.b16 %v4538, %v4526
    %v4971 = vpack.c.b16 %v4539, %v4527
    %v4972 = vpack.c.b16 %v4540, %v4528
    %v4973 = vpack.c.b16 %v4541, %v4529
    %v4974 = vpack.c.b16 %v4542, %v4530
    %v4975 = vpack.c.b16 %v4543, %v4531
    %v4976 = vpack.c.b16 %v4544, %v4532
    %v4977 = vpack.c.b16 %v4545, %v4533
    %v4978 = vpack.c.b16 %v4546, %v4534
    %v4979 = vpack.c.b16 %v4547, %v4535
    %v4980 = vpack.c.b16 %v4548, %v4536
    %v4981 = vpack.c.b16 %v4549, %v4537
    %v4982 = vpack.c.b16 %v4562, %v4550
    %v4983 = vpack.c.b16 %v4563, %v4551
    %v4984 = vpack.c.b16 %v4564, %v4552
    %v4985 = vpack.c.b16 %v4565, %v4553
    %v4986 = vpack.c.b16 %v4566, %v4554
    %v4987 = vpack.c.b16 %v4567, %v4555
    %v4988 = vpack.c.b16 %v4568, %v4556
    %v4989 = vpack.c.b16 %v4569, %v4557
    %v4990 = vpack.c.b16 %v4570, %v4558
    %v4991 = vpack.c.b16 %v4571, %v4559
    %v4992 = vpack.c.b16 %v4572, %v4560
    %v4993 = vpack.c.b16 %v4573, %v4561
    %v4994 = vpack.c.b16 %v4586, %v4574
    %v4995 = vpack.c.b16 %v4587, %v4575
    %v4996 = vpack.c.b16 %v4588, %v4576
    %v4997 = vpack.c.b16 %v4589, %v4577
    %v4998 = vpack.c.b16 %v4590, %v4578
    %v4999 = vpack.c.b16 %v4591, %v4579
    %v5000 = vpack.c.b16 %v4592, %v4580
    %v5001 = vpack.c.b16 %v4593, %v4581
    %v5002 = vpack.c.b16 %v4594, %v4582
    %v5003 = vpack.c.b16 %v4595, %v4583
    %v5004 = vpack.c.b16 %v4596, %v4584
    %v5005 = vpack.c.b16 %v4597, %v4585
    %v5006 = vpack.c.b16 %v4610, %v4598
    %v5007 = vpack.c.b16 %v4611, %v4599
    %v5008 = vpack.c.b16 %v4612, %v4600
    %v5009 = vpack.c.b16 %v4613, %v4601
    %v5010 = vpack.c.b16 %v4614, %v4602
    %v5011 = vpack.c.b16 %v4615, %v4603
    %v5012 = vpack.c.b16 %v4616, %v4604
    %v5013 = vpack.c.b16 %v4617, %v4605
    %v5014 = vpack.c.b16 %v4618, %v4606
    %v5015 = vpack.c.b16 %v4619, %v4607
    %v5016 = vpack.c.b16 %v4620, %v4608
    %v5017 = vpack.c.b16 %v4621, %v4609
    %v5018 = vpack.c.b16 %v4634, %v4622
    %v5019 = vpack.c.b16 %v4635, %v4623
    %v5020 = vpack.c.b16 %v4636, %v4624
    %v5021 = vpack.c.b16 %v4637, %v4625
    %v5022 = vpack.c.b16 %v4638, %v4626
    %v5023 = vpack.c.b16 %v4639, %v4627
    %v5024 = vpack.c.b16 %v4640, %v4628
    %v5025 = vpack.c.b16 %v4641, %v4629
    %v5026 = vpack.c.b16 %v4642, %v4630
    %v5027 = vpack.c.b16 %v4643, %v4631
    %v5028 = vpack.c.b16 %v4644, %v4632
    %v5029 = vpack.c.b16 %v4645, %v4633
    %v5416 = vlaneseq
    %v5417 = vshrl.u32 %v5416, 7
    %v5418 = vsub.s32 0, %v5417
    %v5419 = vrot.slane %v3466, %v5418
    %v5420 = vlaneseq
    %v5421 = vshrl.u32 %v5420, 7
    %v5422 = vsub.s32 1, %v5421
    %v5423 = vrot.slane %v3466, %v5422
    %v5424 = vlaneseq
    %v5425 = vshrl.u32 %v5424, 7
    %v5426 = vsub.s32 2, %v5425
    %v5427 = vrot.slane %v3466, %v5426
    %v5428 = vlaneseq
    %v5429 = vshrl.u32 %v5428, 7
    %v5430 = vsub.s32 3, %v5429
    %v5431 = vrot.slane %v3466, %v5430
    %v5432 = vlaneseq
    %v5433 = vshrl.u32 %v5432, 7
    %v5434 = vsub.s32 4, %v5433
    %v5435 = vrot.slane %v3466, %v5434
    %v5436 = vlaneseq
    %v5437 = vshrl.u32 %v5436, 7
    %v5438 = vsub.s32 5, %v5437
    %v5439 = vrot.slane %v3466, %v5438
    %v5440 = vlaneseq
    %v5441 = vshrl.u32 %v5440, 7
    %v5442 = vsub.s32 6, %v5441
    %v5443 = vrot.slane %v3466, %v5442
    %v5444 = vlaneseq
    %v5445 = vshrl.u32 %v5444, 7
    %v5446 = vsub.s32 7, %v5445
    %v5447 = vrot.slane %v3466, %v5446
    %v5448 = vlaneseq
    %v5449 = vshrl.u32 %v5448, 7
    %v5450 = vsub.s32 0, %v5449
    %v5451 = vrot.slane %v3467, %v5450
    %v5452 = vlaneseq
    %v5453 = vshrl.u32 %v5452, 7
    %v5454 = vsub.s32 1, %v5453
    %v5455 = vrot.slane %v3467, %v5454
    %v5456 = vlaneseq
    %v5457 = vshrl.u32 %v5456, 7
    %v5458 = vsub.s32 2, %v5457
    %v5459 = vrot.slane %v3467, %v5458
    %v5460 = vlaneseq
    %v5461 = vshrl.u32 %v5460, 7
    %v5462 = vsub.s32 3, %v5461
    %v5463 = vrot.slane %v3467, %v5462
    %5476 = vmatprep.subr.bf16.mxu0 %v4647
    %5477 = vmatpush1.bf16.msra.mxu0 %v4646
    %5478 = vmatprep.subr.bf16.mxu0 %v4659
    %5479 = vmatpush1.bf16.msra.mxu0 %v4658
    %5480 = vmatprep.subr.bf16.mxu0 %v4671
    %5481 = vmatpush1.bf16.msra.mxu0 %v4670
    %5482 = vmatprep.subr.bf16.mxu0 %v4683
    %5483 = vmatpush1.bf16.msra.mxu0 %v4682
    %5484 = vmatprep.subr.bf16.mxu0 %v4695
    %5485 = vmatpush1.bf16.msra.mxu0 %v4694
    %5486 = vmatprep.subr.bf16.mxu0 %v4707
    %5487 = vmatpush1.bf16.msra.mxu0 %v4706
    %5488 = vmatprep.subr.bf16.mxu0 %v4719
    %5489 = vmatpush1.bf16.msra.mxu0 %v4718
    %5490 = vmatprep.subr.bf16.mxu0 %v4731
    %5491 = vmatpush1.bf16.msra.mxu0 %v4730
    %5492 = vmatprep.subr.bf16.mxu0 %v4743
    %5493 = vmatpush1.bf16.msra.mxu0 %v4742
    %5494 = vmatprep.subr.bf16.mxu0 %v4755
    %5495 = vmatpush1.bf16.msra.mxu0 %v4754
    %5496 = vmatprep.subr.bf16.mxu0 %v4767
    %5497 = vmatpush1.bf16.msra.mxu0 %v4766
    %5498 = vmatprep.subr.bf16.mxu0 %v4779
    %5499 = vmatpush1.bf16.msra.mxu0 %v4778
    %5500 = vmatprep.subr.bf16.mxu0 %v4791
    %5501 = vmatpush1.bf16.msra.mxu0 %v4790
    %5502 = vmatprep.subr.bf16.mxu0 %v4803
    %5503 = vmatpush1.bf16.msra.mxu0 %v4802
    %5504 = vmatprep.subr.bf16.mxu0 %v4815
    %5505 = vmatpush1.bf16.msra.mxu0 %v4814
    %5506 = vmatprep.subr.bf16.mxu0 %v4827
    %5507 = vmatpush1.bf16.msra.mxu0 %v4826
    %5508 = vmatprep.mubr.bf16.mxu0 %v3491
    %5509 = vmatmul.mubr.bf16.gmra.mrb[0].mxu0 %v3490
    %v5510 = vpop.f32.mrb[0].mxu0
    %v5511 = vadd.f32 %v5419, %v5510
    %v5512 = vpop.f32.mrb[0].mxu0
    %v5513 = vadd.f32 %v5423, %v5512
    %v5514 = vpop.f32.mrb[0].mxu0
    %v5515 = vpop.f32.mrb[0].mxu0
    %5516 = vdwg.mxu0
    %5517 = vmatprep.subr.bf16.mxu0 %v4839
    %5518 = vmatpush1.bf16.msra.mxu0 %v4838
    %5519 = vmatprep.subr.bf16.mxu0 %v4851
    %5520 = vmatpush1.bf16.msra.mxu0 %v4850
    %5521 = vmatprep.subr.bf16.mxu0 %v4863
    %5522 = vmatpush1.bf16.msra.mxu0 %v4862
    %5523 = vmatprep.subr.bf16.mxu0 %v4875
    %5524 = vmatpush1.bf16.msra.mxu0 %v4874
    %5525 = vmatprep.subr.bf16.mxu0 %v4887
    %5526 = vmatpush1.bf16.msra.mxu0 %v4886
    %5527 = vmatprep.subr.bf16.mxu0 %v4899
    %5528 = vmatpush1.bf16.msra.mxu0 %v4898
    %5529 = vmatprep.subr.bf16.mxu0 %v4911
    %5530 = vmatpush1.bf16.msra.mxu0 %v4910
    %5531 = vmatprep.subr.bf16.mxu0 %v4923
    %5532 = vmatpush1.bf16.msra.mxu0 %v4922
    %5533 = vmatprep.subr.bf16.mxu0 %v4935
    %5534 = vmatpush1.bf16.msra.mxu0 %v4934
    %5535 = vmatprep.subr.bf16.mxu0 %v4947
    %5536 = vmatpush1.bf16.msra.mxu0 %v4946
    %5537 = vmatprep.subr.bf16.mxu0 %v4959
    %5538 = vmatpush1.bf16.msra.mxu0 %v4958
    %5539 = vmatprep.subr.bf16.mxu0 %v4971
    %5540 = vmatpush1.bf16.msra.mxu0 %v4970
    %5541 = vmatprep.subr.bf16.mxu0 %v4983
    %5542 = vmatpush1.bf16.msra.mxu0 %v4982
    %5543 = vmatprep.subr.bf16.mxu0 %v4995
    %5544 = vmatpush1.bf16.msra.mxu0 %v4994
    %5545 = vmatprep.subr.bf16.mxu0 %v5007
    %5546 = vmatpush1.bf16.msra.mxu0 %v5006
    %5547 = vmatprep.subr.bf16.mxu0 %v5019
    %5548 = vmatpush1.bf16.msra.mxu0 %v5018
    %5549 = vmatprep.mubr.bf16.mxu0 %v3493
    %5550 = vmatmul.mubr.bf16.gmra.mrb[0].mxu0 %v3492
    %v5551 = vpop.f32.mrb[0].mxu0
    %v5552 = vadd.f32 %v5511, %v5551
    %v5553 = vpop.f32.mrb[0].mxu0
    %v5554 = vadd.f32 %v5513, %v5553
    %v5555 = vpop.f32.mrb[0].mxu0
    %v5556 = vpop.f32.mrb[0].mxu0
    %5557 = vdwg.mxu0
    %5558 = vmatprep.subr.bf16.mxu0 %v4649
    %5559 = vmatpush1.bf16.msra.mxu0 %v4648
    %5560 = vmatprep.subr.bf16.mxu0 %v4661
    %5561 = vmatpush1.bf16.msra.mxu0 %v4660
    %5562 = vmatprep.subr.bf16.mxu0 %v4673
    %5563 = vmatpush1.bf16.msra.mxu0 %v4672
    %5564 = vmatprep.subr.bf16.mxu0 %v4685
    %5565 = vmatpush1.bf16.msra.mxu0 %v4684
    %5566 = vmatprep.subr.bf16.mxu0 %v4697
    %5567 = vmatpush1.bf16.msra.mxu0 %v4696
    %5568 = vmatprep.subr.bf16.mxu0 %v4709
    %5569 = vmatpush1.bf16.msra.mxu0 %v4708
    %5570 = vmatprep.subr.bf16.mxu0 %v4721
    %5571 = vmatpush1.bf16.msra.mxu0 %v4720
    %5572 = vmatprep.subr.bf16.mxu0 %v4733
    %5573 = vmatpush1.bf16.msra.mxu0 %v4732
    %5574 = vmatprep.subr.bf16.mxu0 %v4745
    %5575 = vmatpush1.bf16.msra.mxu0 %v4744
    %5576 = vmatprep.subr.bf16.mxu0 %v4757
    %5577 = vmatpush1.bf16.msra.mxu0 %v4756
    %5578 = vmatprep.subr.bf16.mxu0 %v4769
    %5579 = vmatpush1.bf16.msra.mxu0 %v4768
    %5580 = vmatprep.subr.bf16.mxu0 %v4781
    %5581 = vmatpush1.bf16.msra.mxu0 %v4780
    %5582 = vmatprep.subr.bf16.mxu0 %v4793
    %5583 = vmatpush1.bf16.msra.mxu0 %v4792
    %5584 = vmatprep.subr.bf16.mxu0 %v4805
    %5585 = vmatpush1.bf16.msra.mxu0 %v4804
    %5586 = vmatprep.subr.bf16.mxu0 %v4817
    %5587 = vmatpush1.bf16.msra.mxu0 %v4816
    %5588 = vmatprep.subr.bf16.mxu0 %v4829
    %5589 = vmatpush1.bf16.msra.mxu0 %v4828
    %5590 = vmatprep.mubr.bf16.mxu0 %v3491
    %5591 = vmatmul.mubr.bf16.gmra.mrb[0].mxu0 %v3490
    %v5592 = vpop.f32.mrb[0].mxu0
    %v5593 = vadd.f32 %v5427, %v5592
    %v5594 = vpop.f32.mrb[0].mxu0
    %v5595 = vadd.f32 %v5431, %v5594
    %v5596 = vpop.f32.mrb[0].mxu0
    %v5597 = vpop.f32.mrb[0].mxu0
    %5598 = vdwg.mxu0
    %5599 = vmatprep.subr.bf16.mxu0 %v4841
    %5600 = vmatpush1.bf16.msra.mxu0 %v4840
    %5601 = vmatprep.subr.bf16.mxu0 %v4853
    %5602 = vmatpush1.bf16.msra.mxu0 %v4852
    %5603 = vmatprep.subr.bf16.mxu0 %v4865
    %5604 = vmatpush1.bf16.msra.mxu0 %v4864
    %5605 = vmatprep.subr.bf16.mxu0 %v4877
    %5606 = vmatpush1.bf16.msra.mxu0 %v4876
    %5607 = vmatprep.subr.bf16.mxu0 %v4889
    %5608 = vmatpush1.bf16.msra.mxu0 %v4888
    %5609 = vmatprep.subr.bf16.mxu0 %v4901
    %5610 = vmatpush1.bf16.msra.mxu0 %v4900
    %5611 = vmatprep.subr.bf16.mxu0 %v4913
    %5612 = vmatpush1.bf16.msra.mxu0 %v4912
    %5613 = vmatprep.subr.bf16.mxu0 %v4925
    %5614 = vmatpush1.bf16.msra.mxu0 %v4924
    %5615 = vmatprep.subr.bf16.mxu0 %v4937
    %5616 = vmatpush1.bf16.msra.mxu0 %v4936
    %5617 = vmatprep.subr.bf16.mxu0 %v4949
    %5618 = vmatpush1.bf16.msra.mxu0 %v4948
    %5619 = vmatprep.subr.bf16.mxu0 %v4961
    %5620 = vmatpush1.bf16.msra.mxu0 %v4960
    %5621 = vmatprep.subr.bf16.mxu0 %v4973
    %5622 = vmatpush1.bf16.msra.mxu0 %v4972
    %5623 = vmatprep.subr.bf16.mxu0 %v4985
    %5624 = vmatpush1.bf16.msra.mxu0 %v4984
    %5625 = vmatprep.subr.bf16.mxu0 %v4997
    %5626 = vmatpush1.bf16.msra.mxu0 %v4996
    %5627 = vmatprep.subr.bf16.mxu0 %v5009
    %5628 = vmatpush1.bf16.msra.mxu0 %v5008
    %5629 = vmatprep.subr.bf16.mxu0 %v5021
    %5630 = vmatpush1.bf16.msra.mxu0 %v5020
    %5631 = vmatprep.mubr.bf16.mxu0 %v3493
    %5632 = vmatmul.mubr.bf16.gmra.mrb[0].mxu0 %v3492
    %v5633 = vpop.f32.mrb[0].mxu0
    %v5634 = vadd.f32 %v5593, %v5633
    %v5635 = vpop.f32.mrb[0].mxu0
    %v5636 = vadd.f32 %v5595, %v5635
    %v5637 = vpop.f32.mrb[0].mxu0
    %v5638 = vpop.f32.mrb[0].mxu0
    %5639 = vdwg.mxu0
    %5640 = vmatprep.subr.bf16.mxu0 %v4651
    %5641 = vmatpush1.bf16.msra.mxu0 %v4650
    %5642 = vmatprep.subr.bf16.mxu0 %v4663
    %5643 = vmatpush1.bf16.msra.mxu0 %v4662
    %5644 = vmatprep.subr.bf16.mxu0 %v4675
    %5645 = vmatpush1.bf16.msra.mxu0 %v4674
    %5646 = vmatprep.subr.bf16.mxu0 %v4687
    %5647 = vmatpush1.bf16.msra.mxu0 %v4686
    %5648 = vmatprep.subr.bf16.mxu0 %v4699
    %5649 = vmatpush1.bf16.msra.mxu0 %v4698
    %5650 = vmatprep.subr.bf16.mxu0 %v4711
    %5651 = vmatpush1.bf16.msra.mxu0 %v4710
    %5652 = vmatprep.subr.bf16.mxu0 %v4723
    %5653 = vmatpush1.bf16.msra.mxu0 %v4722
    %5654 = vmatprep.subr.bf16.mxu0 %v4735
    %5655 = vmatpush1.bf16.msra.mxu0 %v4734
    %5656 = vmatprep.subr.bf16.mxu0 %v4747
    %5657 = vmatpush1.bf16.msra.mxu0 %v4746
    %5658 = vmatprep.subr.bf16.mxu0 %v4759
    %5659 = vmatpush1.bf16.msra.mxu0 %v4758
    %5660 = vmatprep.subr.bf16.mxu0 %v4771
    %5661 = vmatpush1.bf16.msra.mxu0 %v4770
    %5662 = vmatprep.subr.bf16.mxu0 %v4783
    %5663 = vmatpush1.bf16.msra.mxu0 %v4782
    %5664 = vmatprep.subr.bf16.mxu0 %v4795
    %5665 = vmatpush1.bf16.msra.mxu0 %v4794
    %5666 = vmatprep.subr.bf16.mxu0 %v4807
    %5667 = vmatpush1.bf16.msra.mxu0 %v4806
    %5668 = vmatprep.subr.bf16.mxu0 %v4819
    %5669 = vmatpush1.bf16.msra.mxu0 %v4818
    %5670 = vmatprep.subr.bf16.mxu0 %v4831
    %5671 = vmatpush1.bf16.msra.mxu0 %v4830
    %5672 = vmatprep.mubr.bf16.mxu0 %v3491
    %5673 = vmatmul.mubr.bf16.gmra.mrb[0].mxu0 %v3490
    %v5674 = vpop.f32.mrb[0].mxu0
    %v5675 = vadd.f32 %v5435, %v5674
    %v5676 = vpop.f32.mrb[0].mxu0
    %v5677 = vadd.f32 %v5439, %v5676
    %v5678 = vpop.f32.mrb[0].mxu0
    %v5679 = vpop.f32.mrb[0].mxu0
    %5680 = vdwg.mxu0
    %5681 = vmatprep.subr.bf16.mxu0 %v4843
    %5682 = vmatpush1.bf16.msra.mxu0 %v4842
    %5683 = vmatprep.subr.bf16.mxu0 %v4855
    %5684 = vmatpush1.bf16.msra.mxu0 %v4854
    %5685 = vmatprep.subr.bf16.mxu0 %v4867
    %5686 = vmatpush1.bf16.msra.mxu0 %v4866
    %5687 = vmatprep.subr.bf16.mxu0 %v4879
    %5688 = vmatpush1.bf16.msra.mxu0 %v4878
    %5689 = vmatprep.subr.bf16.mxu0 %v4891
    %5690 = vmatpush1.bf16.msra.mxu0 %v4890
    %5691 = vmatprep.subr.bf16.mxu0 %v4903
    %5692 = vmatpush1.bf16.msra.mxu0 %v4902
    %5693 = vmatprep.subr.bf16.mxu0 %v4915
    %5694 = vmatpush1.bf16.msra.mxu0 %v4914
    %5695 = vmatprep.subr.bf16.mxu0 %v4927
    %5696 = vmatpush1.bf16.msra.mxu0 %v4926
    %5697 = vmatprep.subr.bf16.mxu0 %v4939
    %5698 = vmatpush1.bf16.msra.mxu0 %v4938
    %5699 = vmatprep.subr.bf16.mxu0 %v4951
    %5700 = vmatpush1.bf16.msra.mxu0 %v4950
    %5701 = vmatprep.subr.bf16.mxu0 %v4963
    %5702 = vmatpush1.bf16.msra.mxu0 %v4962
    %5703 = vmatprep.subr.bf16.mxu0 %v4975
    %5704 = vmatpush1.bf16.msra.mxu0 %v4974
    %5705 = vmatprep.subr.bf16.mxu0 %v4987
    %5706 = vmatpush1.bf16.msra.mxu0 %v4986
    %5707 = vmatprep.subr.bf16.mxu0 %v4999
    %5708 = vmatpush1.bf16.msra.mxu0 %v4998
    %5709 = vmatprep.subr.bf16.mxu0 %v5011
    %5710 = vmatpush1.bf16.msra.mxu0 %v5010
    %5711 = vmatprep.subr.bf16.mxu0 %v5023
    %5712 = vmatpush1.bf16.msra.mxu0 %v5022
    %5713 = vmatprep.mubr.bf16.mxu0 %v3493
    %5714 = vmatmul.mubr.bf16.gmra.mrb[0].mxu0 %v3492
    %v5715 = vpop.f32.mrb[0].mxu0
    %v5716 = vadd.f32 %v5675, %v5715
    %v5717 = vpop.f32.mrb[0].mxu0
    %v5718 = vadd.f32 %v5677, %v5717
    %v5719 = vpop.f32.mrb[0].mxu0
    %v5720 = vpop.f32.mrb[0].mxu0
    %5721 = vdwg.mxu0
    %5722 = vmatprep.subr.bf16.mxu0 %v4653
    %5723 = vmatpush1.bf16.msra.mxu0 %v4652
    %5724 = vmatprep.subr.bf16.mxu0 %v4665
    %5725 = vmatpush1.bf16.msra.mxu0 %v4664
    %5726 = vmatprep.subr.bf16.mxu0 %v4677
    %5727 = vmatpush1.bf16.msra.mxu0 %v4676
    %5728 = vmatprep.subr.bf16.mxu0 %v4689
    %5729 = vmatpush1.bf16.msra.mxu0 %v4688
    %5730 = vmatprep.subr.bf16.mxu0 %v4701
    %5731 = vmatpush1.bf16.msra.mxu0 %v4700
    %5732 = vmatprep.subr.bf16.mxu0 %v4713
    %5733 = vmatpush1.bf16.msra.mxu0 %v4712
    %5734 = vmatprep.subr.bf16.mxu0 %v4725
    %5735 = vmatpush1.bf16.msra.mxu0 %v4724
    %5736 = vmatprep.subr.bf16.mxu0 %v4737
    %5737 = vmatpush1.bf16.msra.mxu0 %v4736
    %5738 = vmatprep.subr.bf16.mxu0 %v4749
    %5739 = vmatpush1.bf16.msra.mxu0 %v4748
    %5740 = vmatprep.subr.bf16.mxu0 %v4761
    %5741 = vmatpush1.bf16.msra.mxu0 %v4760
    %5742 = vmatprep.subr.bf16.mxu0 %v4773
    %5743 = vmatpush1.bf16.msra.mxu0 %v4772
    %5744 = vmatprep.subr.bf16.mxu0 %v4785
    %5745 = vmatpush1.bf16.msra.mxu0 %v4784
    %5746 = vmatprep.subr.bf16.mxu0 %v4797
    %5747 = vmatpush1.bf16.msra.mxu0 %v4796
    %5748 = vmatprep.subr.bf16.mxu0 %v4809
    %5749 = vmatpush1.bf16.msra.mxu0 %v4808
    %5750 = vmatprep.subr.bf16.mxu0 %v4821
    %5751 = vmatpush1.bf16.msra.mxu0 %v4820
    %5752 = vmatprep.subr.bf16.mxu0 %v4833
    %5753 = vmatpush1.bf16.msra.mxu0 %v4832
    %5754 = vmatprep.mubr.bf16.mxu0 %v3491
    %5755 = vmatmul.mubr.bf16.gmra.mrb[0].mxu0 %v3490
    %v5756 = vpop.f32.mrb[0].mxu0
    %v5757 = vadd.f32 %v5443, %v5756
    %v5758 = vpop.f32.mrb[0].mxu0
    %v5759 = vadd.f32 %v5447, %v5758
    %v5760 = vpop.f32.mrb[0].mxu0
    %v5761 = vpop.f32.mrb[0].mxu0
    %5762 = vdwg.mxu0
    %5763 = vmatprep.subr.bf16.mxu0 %v4845
    %5764 = vmatpush1.bf16.msra.mxu0 %v4844
    %5765 = vmatprep.subr.bf16.mxu0 %v4857
    %5766 = vmatpush1.bf16.msra.mxu0 %v4856
    %5767 = vmatprep.subr.bf16.mxu0 %v4869
    %5768 = vmatpush1.bf16.msra.mxu0 %v4868
    %5769 = vmatprep.subr.bf16.mxu0 %v4881
    %5770 = vmatpush1.bf16.msra.mxu0 %v4880
    %5771 = vmatprep.subr.bf16.mxu0 %v4893
    %5772 = vmatpush1.bf16.msra.mxu0 %v4892
    %5773 = vmatprep.subr.bf16.mxu0 %v4905
    %5774 = vmatpush1.bf16.msra.mxu0 %v4904
    %5775 = vmatprep.subr.bf16.mxu0 %v4917
    %5776 = vmatpush1.bf16.msra.mxu0 %v4916
    %5777 = vmatprep.subr.bf16.mxu0 %v4929
    %5778 = vmatpush1.bf16.msra.mxu0 %v4928
    %5779 = vmatprep.subr.bf16.mxu0 %v4941
    %5780 = vmatpush1.bf16.msra.mxu0 %v4940
    %5781 = vmatprep.subr.bf16.mxu0 %v4953
    %5782 = vmatpush1.bf16.msra.mxu0 %v4952
    %5783 = vmatprep.subr.bf16.mxu0 %v4965
    %5784 = vmatpush1.bf16.msra.mxu0 %v4964
    %5785 = vmatprep.subr.bf16.mxu0 %v4977
    %5786 = vmatpush1.bf16.msra.mxu0 %v4976
    %5787 = vmatprep.subr.bf16.mxu0 %v4989
    %5788 = vmatpush1.bf16.msra.mxu0 %v4988
    %5789 = vmatprep.subr.bf16.mxu0 %v5001
    %5790 = vmatpush1.bf16.msra.mxu0 %v5000
    %5791 = vmatprep.subr.bf16.mxu0 %v5013
    %5792 = vmatpush1.bf16.msra.mxu0 %v5012
    %5793 = vmatprep.subr.bf16.mxu0 %v5025
    %5794 = vmatpush1.bf16.msra.mxu0 %v5024
    %5795 = vmatprep.mubr.bf16.mxu0 %v3493
    %5796 = vmatmul.mubr.bf16.gmra.mrb[0].mxu0 %v3492
    %v5797 = vpop.f32.mrb[0].mxu0
    %v5798 = vadd.f32 %v5757, %v5797
    %v5799 = vpop.f32.mrb[0].mxu0
    %v5800 = vadd.f32 %v5759, %v5799
    %v5801 = vpop.f32.mrb[0].mxu0
    %v5802 = vpop.f32.mrb[0].mxu0
    %5803 = vdwg.mxu0
    %5804 = vmatprep.subr.bf16.mxu0 %v4655
    %5805 = vmatpush1.bf16.msra.mxu0 %v4654
    %5806 = vmatprep.subr.bf16.mxu0 %v4667
    %5807 = vmatpush1.bf16.msra.mxu0 %v4666
    %5808 = vmatprep.subr.bf16.mxu0 %v4679
    %5809 = vmatpush1.bf16.msra.mxu0 %v4678
    %5810 = vmatprep.subr.bf16.mxu0 %v4691
    %5811 = vmatpush1.bf16.msra.mxu0 %v4690
    %5812 = vmatprep.subr.bf16.mxu0 %v4703
    %5813 = vmatpush1.bf16.msra.mxu0 %v4702
    %5814 = vmatprep.subr.bf16.mxu0 %v4715
    %5815 = vmatpush1.bf16.msra.mxu0 %v4714
    %5816 = vmatprep.subr.bf16.mxu0 %v4727
    %5817 = vmatpush1.bf16.msra.mxu0 %v4726
    %5818 = vmatprep.subr.bf16.mxu0 %v4739
    %5819 = vmatpush1.bf16.msra.mxu0 %v4738
    %5820 = vmatprep.subr.bf16.mxu0 %v4751
    %5821 = vmatpush1.bf16.msra.mxu0 %v4750
    %5822 = vmatprep.subr.bf16.mxu0 %v4763
    %5823 = vmatpush1.bf16.msra.mxu0 %v4762
    %5824 = vmatprep.subr.bf16.mxu0 %v4775
    %5825 = vmatpush1.bf16.msra.mxu0 %v4774
    %5826 = vmatprep.subr.bf16.mxu0 %v4787
    %5827 = vmatpush1.bf16.msra.mxu0 %v4786
    %5828 = vmatprep.subr.bf16.mxu0 %v4799
    %5829 = vmatpush1.bf16.msra.mxu0 %v4798
    %5830 = vmatprep.subr.bf16.mxu0 %v4811
    %5831 = vmatpush1.bf16.msra.mxu0 %v4810
    %5832 = vmatprep.subr.bf16.mxu0 %v4823
    %5833 = vmatpush1.bf16.msra.mxu0 %v4822
    %5834 = vmatprep.subr.bf16.mxu0 %v4835
    %5835 = vmatpush1.bf16.msra.mxu0 %v4834
    %5836 = vmatprep.mubr.bf16.mxu0 %v3491
    %5837 = vmatmul.mubr.bf16.gmra.mrb[0].mxu0 %v3490
    %v5838 = vpop.f32.mrb[0].mxu0
    %v5839 = vadd.f32 %v5451, %v5838
    %v5840 = vpop.f32.mrb[0].mxu0
    %v5841 = vadd.f32 %v5455, %v5840
    %v5842 = vpop.f32.mrb[0].mxu0
    %v5843 = vpop.f32.mrb[0].mxu0
    %5844 = vdwg.mxu0
    %5845 = vmatprep.subr.bf16.mxu0 %v4847
    %5846 = vmatpush1.bf16.msra.mxu0 %v4846
    %5847 = vmatprep.subr.bf16.mxu0 %v4859
    %5848 = vmatpush1.bf16.msra.mxu0 %v4858
    %5849 = vmatprep.subr.bf16.mxu0 %v4871
    %5850 = vmatpush1.bf16.msra.mxu0 %v4870
    %5851 = vmatprep.subr.bf16.mxu0 %v4883
    %5852 = vmatpush1.bf16.msra.mxu0 %v4882
    %5853 = vmatprep.subr.bf16.mxu0 %v4895
    %5854 = vmatpush1.bf16.msra.mxu0 %v4894
    %5855 = vmatprep.subr.bf16.mxu0 %v4907
    %5856 = vmatpush1.bf16.msra.mxu0 %v4906
    %5857 = vmatprep.subr.bf16.mxu0 %v4919
    %5858 = vmatpush1.bf16.msra.mxu0 %v4918
    %5859 = vmatprep.subr.bf16.mxu0 %v4931
    %5860 = vmatpush1.bf16.msra.mxu0 %v4930
    %5861 = vmatprep.subr.bf16.mxu0 %v4943
    %5862 = vmatpush1.bf16.msra.mxu0 %v4942
    %5863 = vmatprep.subr.bf16.mxu0 %v4955
    %5864 = vmatpush1.bf16.msra.mxu0 %v4954
    %5865 = vmatprep.subr.bf16.mxu0 %v4967
    %5866 = vmatpush1.bf16.msra.mxu0 %v4966
    %5867 = vmatprep.subr.bf16.mxu0 %v4979
    %5868 = vmatpush1.bf16.msra.mxu0 %v4978
    %5869 = vmatprep.subr.bf16.mxu0 %v4991
    %5870 = vmatpush1.bf16.msra.mxu0 %v4990
    %5871 = vmatprep.subr.bf16.mxu0 %v5003
    %5872 = vmatpush1.bf16.msra.mxu0 %v5002
    %5873 = vmatprep.subr.bf16.mxu0 %v5015
    %5874 = vmatpush1.bf16.msra.mxu0 %v5014
    %5875 = vmatprep.subr.bf16.mxu0 %v5027
    %5876 = vmatpush1.bf16.msra.mxu0 %v5026
    %5877 = vmatprep.mubr.bf16.mxu0 %v3493
    %5878 = vmatmul.mubr.bf16.gmra.mrb[0].mxu0 %v3492
    %v5879 = vpop.f32.mrb[0].mxu0
    %v5880 = vadd.f32 %v5839, %v5879
    %v5881 = vpop.f32.mrb[0].mxu0
    %v5882 = vadd.f32 %v5841, %v5881
    %v5883 = vpop.f32.mrb[0].mxu0
    %v5884 = vpop.f32.mrb[0].mxu0
    %5885 = vdwg.mxu0
    %5886 = vmatprep.subr.bf16.mxu0 %v4657
    %5887 = vmatpush1.bf16.msra.mxu0 %v4656
    %5888 = vmatprep.subr.bf16.mxu0 %v4669
    %5889 = vmatpush1.bf16.msra.mxu0 %v4668
    %5890 = vmatprep.subr.bf16.mxu0 %v4681
    %5891 = vmatpush1.bf16.msra.mxu0 %v4680
    %5892 = vmatprep.subr.bf16.mxu0 %v4693
    %5893 = vmatpush1.bf16.msra.mxu0 %v4692
    %5894 = vmatprep.subr.bf16.mxu0 %v4705
    %5895 = vmatpush1.bf16.msra.mxu0 %v4704
    %5896 = vmatprep.subr.bf16.mxu0 %v4717
    %5897 = vmatpush1.bf16.msra.mxu0 %v4716
    %5898 = vmatprep.subr.bf16.mxu0 %v4729
    %5899 = vmatpush1.bf16.msra.mxu0 %v4728
    %5900 = vmatprep.subr.bf16.mxu0 %v4741
    %5901 = vmatpush1.bf16.msra.mxu0 %v4740
    %5902 = vmatprep.subr.bf16.mxu0 %v4753
    %5903 = vmatpush1.bf16.msra.mxu0 %v4752
    %5904 = vmatprep.subr.bf16.mxu0 %v4765
    %5905 = vmatpush1.bf16.msra.mxu0 %v4764
    %5906 = vmatprep.subr.bf16.mxu0 %v4777
    %5907 = vmatpush1.bf16.msra.mxu0 %v4776
    %5908 = vmatprep.subr.bf16.mxu0 %v4789
    %5909 = vmatpush1.bf16.msra.mxu0 %v4788
    %5910 = vmatprep.subr.bf16.mxu0 %v4801
    %5911 = vmatpush1.bf16.msra.mxu0 %v4800
    %5912 = vmatprep.subr.bf16.mxu0 %v4813
    %5913 = vmatpush1.bf16.msra.mxu0 %v4812
    %5914 = vmatprep.subr.bf16.mxu0 %v4825
    %5915 = vmatpush1.bf16.msra.mxu0 %v4824
    %5916 = vmatprep.subr.bf16.mxu0 %v4837
    %5917 = vmatpush1.bf16.msra.mxu0 %v4836
    %5918 = vmatprep.mubr.bf16.mxu0 %v3491
    %5919 = vmatmul.mubr.bf16.gmra.mrb[0].mxu0 %v3490
    %v5920 = vpop.f32.mrb[0].mxu0
    %v5921 = vadd.f32 %v5459, %v5920
    %v5922 = vpop.f32.mrb[0].mxu0
    %v5923 = vadd.f32 %v5463, %v5922
    %v5924 = vpop.f32.mrb[0].mxu0
    %v5925 = vpop.f32.mrb[0].mxu0
    %5926 = vdwg.mxu0
    %5927 = vmatprep.subr.bf16.mxu0 %v4849
    %5928 = vmatpush1.bf16.msra.mxu0 %v4848
    %5929 = vmatprep.subr.bf16.mxu0 %v4861
    %5930 = vmatpush1.bf16.msra.mxu0 %v4860
    %5931 = vmatprep.subr.bf16.mxu0 %v4873
    %5932 = vmatpush1.bf16.msra.mxu0 %v4872
    %5933 = vmatprep.subr.bf16.mxu0 %v4885
    %5934 = vmatpush1.bf16.msra.mxu0 %v4884
    %5935 = vmatprep.subr.bf16.mxu0 %v4897
    %5936 = vmatpush1.bf16.msra.mxu0 %v4896
    %5937 = vmatprep.subr.bf16.mxu0 %v4909
    %5938 = vmatpush1.bf16.msra.mxu0 %v4908
    %5939 = vmatprep.subr.bf16.mxu0 %v4921
    %5940 = vmatpush1.bf16.msra.mxu0 %v4920
    %5941 = vmatprep.subr.bf16.mxu0 %v4933
    %5942 = vmatpush1.bf16.msra.mxu0 %v4932
    %5943 = vmatprep.subr.bf16.mxu0 %v4945
    %5944 = vmatpush1.bf16.msra.mxu0 %v4944
    %5945 = vmatprep.subr.bf16.mxu0 %v4957
    %5946 = vmatpush1.bf16.msra.mxu0 %v4956
    %5947 = vmatprep.subr.bf16.mxu0 %v4969
    %5948 = vmatpush1.bf16.msra.mxu0 %v4968
    %5949 = vmatprep.subr.bf16.mxu0 %v4981
    %5950 = vmatpush1.bf16.msra.mxu0 %v4980
    %5951 = vmatprep.subr.bf16.mxu0 %v4993
    %5952 = vmatpush1.bf16.msra.mxu0 %v4992
    %5953 = vmatprep.subr.bf16.mxu0 %v5005
    %5954 = vmatpush1.bf16.msra.mxu0 %v5004
    %5955 = vmatprep.subr.bf16.mxu0 %v5017
    %5956 = vmatpush1.bf16.msra.mxu0 %v5016
    %5957 = vmatprep.subr.bf16.mxu0 %v5029
    %5958 = vmatpush1.bf16.msra.mxu0 %v5028
    %5959 = vmatprep.mubr.bf16.mxu0 %v3493
    %5960 = vmatmul.mubr.bf16.gmra.mrb[0].mxu0 %v3492
    %v5961 = vpop.f32.mrb[0].mxu0
    %v5962 = vadd.f32 %v5921, %v5961
    %v5963 = vpop.f32.mrb[0].mxu0
    %v5964 = vadd.f32 %v5923, %v5963
    %v5965 = vpop.f32.mrb[0].mxu0
    %v5966 = vpop.f32.mrb[0].mxu0
    %5967 = vdwg.mxu0
    %v5968 = vadd.f32 %v2666, %v5552
    %v5969 = vadd.f32 %v2668, %v5554
    %v5970 = vadd.f32 %v2748, %v5634
    %v5971 = vadd.f32 %v2750, %v5636
    %v5972 = vxor.u32 %v5968, 2147483648
    %v5973 = vxor.u32 %v5969, 2147483648
    %v5974 = vxor.u32 %v5970, 2147483648
    %v5975 = vxor.u32 %v5971, 2147483648
    %v5976 = vmul.f32 %v5972, 1.442695
    %v5977 = vpow.pop %v5976
    %v5978 = vmul.f32 %v5973, 1.442695
    %v5979 = vpow.pop %v5978
    %v5980 = vmul.f32 %v5974, 1.442695
    %v5981 = vpow.pop %v5980
    %v5982 = vmul.f32 %v5975, 1.442695
    %v5983 = vpow.pop %v5982
    %v5984 = vadd.f32 %v5977, 1.0
    %v5985 = vadd.f32 %v5979, 1.0
    %v5986 = vadd.f32 %v5981, 1.0
    %v5987 = vadd.f32 %v5983, 1.0
    %v5988 = vrcp.pop %v5984
    %v5989 = vmul.f32 1.0, %v5988
    %v5990 = vrcp.pop %v5985
    %v5991 = vmul.f32 1.0, %v5990
    %v5992 = vrcp.pop %v5986
    %v5993 = vmul.f32 1.0, %v5992
    %v5994 = vrcp.pop %v5987
    %v5995 = vmul.f32 1.0, %v5994
    %v5996 = vadd.f32 %v2830, %v5716
    %v5997 = vadd.f32 %v2832, %v5718
    %v5998 = vadd.f32 %v2912, %v5798
    %v5999 = vadd.f32 %v2914, %v5800
    %v6000 = vxor.u32 %v5996, 2147483648
    %v6001 = vxor.u32 %v5997, 2147483648
    %v6002 = vxor.u32 %v5998, 2147483648
    %v6003 = vxor.u32 %v5999, 2147483648
    %v6004 = vmul.f32 %v6000, 1.442695
    %v6005 = vpow.pop %v6004
    %v6006 = vmul.f32 %v6001, 1.442695
    %v6007 = vpow.pop %v6006
    %v6008 = vmul.f32 %v6002, 1.442695
    %v6009 = vpow.pop %v6008
    %v6010 = vmul.f32 %v6003, 1.442695
    %v6011 = vpow.pop %v6010
    %v6012 = vadd.f32 %v6005, 1.0
    %v6013 = vadd.f32 %v6007, 1.0
    %v6014 = vadd.f32 %v6009, 1.0
    %v6015 = vadd.f32 %v6011, 1.0
    %v6016 = vrcp.pop %v6012
    %v6017 = vmul.f32 1.0, %v6016
    %v6018 = vrcp.pop %v6013
    %v6019 = vmul.f32 1.0, %v6018
    %v6020 = vrcp.pop %v6014
    %v6021 = vmul.f32 1.0, %v6020
    %v6022 = vrcp.pop %v6015
    %v6023 = vmul.f32 1.0, %v6022
    %v6024 = vmul.f32 %v5989, %v5880
    %v6025 = vmul.f32 %v5991, %v5882
    %v6026 = vmul.f32 %v5993, %v5962
    %v6027 = vmul.f32 %v5995, %v5964
    %v6028 = vadd.f32 %v2994, %v6024
    %v6029 = vadd.f32 %v2996, %v6025
    %v6030 = vadd.f32 %v3076, %v6026
    %v6031 = vadd.f32 %v3078, %v6027
    %v6032 = vtanh.pop %v6028
    %v6033 = vtanh.pop %v6029
    %v6034 = vtanh.pop %v6030
    %v6035 = vtanh.pop %v6031
    %v6036 = vsub.f32 1.0, %v6017
    %v6037 = vsub.f32 1.0, %v6019
    %v6038 = vsub.f32 1.0, %v6021
    %v6039 = vsub.f32 1.0, %v6023
    %v6040 = vmul.f32 %v6036, %v6032
    %v6041 = vmul.f32 %v6037, %v6033
    %v6042 = vmul.f32 %v6038, %v6034
    %v6043 = vmul.f32 %v6039, %v6035
    %v6044 = vmul.f32 %v6017, %v3473
    %v6045 = vmul.f32 %v6019, %v3477
    %v6046 = vmul.f32 %v6021, %v3481
    %v6047 = vmul.f32 %v6023, %v3485
    %v6048 = vadd.f32 %v6040, %v6044
    %v6049 = vadd.f32 %v6041, %v6045
    %v6050 = vadd.f32 %v6042, %v6046
    %v6051 = vadd.f32 %v6043, %v6047
    %v6052 = vpack.c.bf16 %v6048, %v6048
    %v6053 = vpack.c.bf16 %v6049, %v6049
    %v6054 = vpack.c.bf16 %v6050, %v6050
    %v6055 = vpack.c.bf16 %v6051, %v6051
    %6056 = vmatprep.subr.bf16.mxu0 %v4647
    %6057 = vmatpush1.bf16.msra.mxu0 %v4646
    %6058 = vmatprep.subr.bf16.mxu0 %v4659
    %6059 = vmatpush1.bf16.msra.mxu0 %v4658
    %6060 = vmatprep.subr.bf16.mxu0 %v4671
    %6061 = vmatpush1.bf16.msra.mxu0 %v4670
    %6062 = vmatprep.subr.bf16.mxu0 %v4683
    %6063 = vmatpush1.bf16.msra.mxu0 %v4682
    %6064 = vmatprep.subr.bf16.mxu0 %v4695
    %6065 = vmatpush1.bf16.msra.mxu0 %v4694
    %6066 = vmatprep.subr.bf16.mxu0 %v4707
    %6067 = vmatpush1.bf16.msra.mxu0 %v4706
    %6068 = vmatprep.subr.bf16.mxu0 %v4719
    %6069 = vmatpush1.bf16.msra.mxu0 %v4718
    %6070 = vmatprep.subr.bf16.mxu0 %v4731
    %6071 = vmatpush1.bf16.msra.mxu0 %v4730
    %6072 = vmatprep.subr.bf16.mxu0 %v4743
    %6073 = vmatpush1.bf16.msra.mxu0 %v4742
    %6074 = vmatprep.subr.bf16.mxu0 %v4755
    %6075 = vmatpush1.bf16.msra.mxu0 %v4754
    %6076 = vmatprep.subr.bf16.mxu0 %v4767
    %6077 = vmatpush1.bf16.msra.mxu0 %v4766
    %6078 = vmatprep.subr.bf16.mxu0 %v4779
    %6079 = vmatpush1.bf16.msra.mxu0 %v4778
    %6080 = vmatprep.subr.bf16.mxu0 %v4791
    %6081 = vmatpush1.bf16.msra.mxu0 %v4790
    %6082 = vmatprep.subr.bf16.mxu0 %v4803
    %6083 = vmatpush1.bf16.msra.mxu0 %v4802
    %6084 = vmatprep.subr.bf16.mxu0 %v4815
    %6085 = vmatpush1.bf16.msra.mxu0 %v4814
    %6086 = vmatprep.subr.bf16.mxu0 %v4827
    %6087 = vmatpush1.bf16.msra.mxu0 %v4826
    %6088 = vmatprep.mubr.bf16.mxu0 %v6053
    %6089 = vmatmul.mubr.bf16.gmra.mrb[0].mxu0 %v6052
    %v6090 = vpop.f32.mrb[0].mxu0
    %v6091 = vadd.f32 %v5419, %v6090
    %v6092 = vpop.f32.mrb[0].mxu0
    %v6093 = vadd.f32 %v5423, %v6092
    %v6094 = vpop.f32.mrb[0].mxu0
    %v6095 = vpop.f32.mrb[0].mxu0
    %6096 = vdwg.mxu0
    %6097 = vmatprep.subr.bf16.mxu0 %v4839
    %6098 = vmatpush1.bf16.msra.mxu0 %v4838
    %6099 = vmatprep.subr.bf16.mxu0 %v4851
    %6100 = vmatpush1.bf16.msra.mxu0 %v4850
    %6101 = vmatprep.subr.bf16.mxu0 %v4863
    %6102 = vmatpush1.bf16.msra.mxu0 %v4862
    %6103 = vmatprep.subr.bf16.mxu0 %v4875
    %6104 = vmatpush1.bf16.msra.mxu0 %v4874
    %6105 = vmatprep.subr.bf16.mxu0 %v4887
    %6106 = vmatpush1.bf16.msra.mxu0 %v4886
    %6107 = vmatprep.subr.bf16.mxu0 %v4899
    %6108 = vmatpush1.bf16.msra.mxu0 %v4898
    %6109 = vmatprep.subr.bf16.mxu0 %v4911
    %6110 = vmatpush1.bf16.msra.mxu0 %v4910
    %6111 = vmatprep.subr.bf16.mxu0 %v4923
    %6112 = vmatpush1.bf16.msra.mxu0 %v4922
    %6113 = vmatprep.subr.bf16.mxu0 %v4935
    %6114 = vmatpush1.bf16.msra.mxu0 %v4934
    %6115 = vmatprep.subr.bf16.mxu0 %v4947
    %6116 = vmatpush1.bf16.msra.mxu0 %v4946
    %6117 = vmatprep.subr.bf16.mxu0 %v4959
    %6118 = vmatpush1.bf16.msra.mxu0 %v4958
    %6119 = vmatprep.subr.bf16.mxu0 %v4971
    %6120 = vmatpush1.bf16.msra.mxu0 %v4970
    %6121 = vmatprep.subr.bf16.mxu0 %v4983
    %6122 = vmatpush1.bf16.msra.mxu0 %v4982
    %6123 = vmatprep.subr.bf16.mxu0 %v4995
    %6124 = vmatpush1.bf16.msra.mxu0 %v4994
    %6125 = vmatprep.subr.bf16.mxu0 %v5007
    %6126 = vmatpush1.bf16.msra.mxu0 %v5006
    %6127 = vmatprep.subr.bf16.mxu0 %v5019
    %6128 = vmatpush1.bf16.msra.mxu0 %v5018
    %6129 = vmatprep.mubr.bf16.mxu0 %v6055
    %6130 = vmatmul.mubr.bf16.gmra.mrb[0].mxu0 %v6054
    %v6131 = vpop.f32.mrb[0].mxu0
    %v6132 = vadd.f32 %v6091, %v6131
    %v6133 = vpop.f32.mrb[0].mxu0
    %v6134 = vadd.f32 %v6093, %v6133
    %v6135 = vpop.f32.mrb[0].mxu0
    %v6136 = vpop.f32.mrb[0].mxu0
    %6137 = vdwg.mxu0
    %6138 = vmatprep.subr.bf16.mxu0 %v4649
    %6139 = vmatpush1.bf16.msra.mxu0 %v4648
    %6140 = vmatprep.subr.bf16.mxu0 %v4661
    %6141 = vmatpush1.bf16.msra.mxu0 %v4660
    %6142 = vmatprep.subr.bf16.mxu0 %v4673
    %6143 = vmatpush1.bf16.msra.mxu0 %v4672
    %6144 = vmatprep.subr.bf16.mxu0 %v4685
    %6145 = vmatpush1.bf16.msra.mxu0 %v4684
    %6146 = vmatprep.subr.bf16.mxu0 %v4697
    %6147 = vmatpush1.bf16.msra.mxu0 %v4696
    %6148 = vmatprep.subr.bf16.mxu0 %v4709
    %6149 = vmatpush1.bf16.msra.mxu0 %v4708
    %6150 = vmatprep.subr.bf16.mxu0 %v4721
    %6151 = vmatpush1.bf16.msra.mxu0 %v4720
    %6152 = vmatprep.subr.bf16.mxu0 %v4733
    %6153 = vmatpush1.bf16.msra.mxu0 %v4732
    %6154 = vmatprep.subr.bf16.mxu0 %v4745
    %6155 = vmatpush1.bf16.msra.mxu0 %v4744
    %6156 = vmatprep.subr.bf16.mxu0 %v4757
    %6157 = vmatpush1.bf16.msra.mxu0 %v4756
    %6158 = vmatprep.subr.bf16.mxu0 %v4769
    %6159 = vmatpush1.bf16.msra.mxu0 %v4768
    %6160 = vmatprep.subr.bf16.mxu0 %v4781
    %6161 = vmatpush1.bf16.msra.mxu0 %v4780
    %6162 = vmatprep.subr.bf16.mxu0 %v4793
    %6163 = vmatpush1.bf16.msra.mxu0 %v4792
    %6164 = vmatprep.subr.bf16.mxu0 %v4805
    %6165 = vmatpush1.bf16.msra.mxu0 %v4804
    %6166 = vmatprep.subr.bf16.mxu0 %v4817
    %6167 = vmatpush1.bf16.msra.mxu0 %v4816
    %6168 = vmatprep.subr.bf16.mxu0 %v4829
    %6169 = vmatpush1.bf16.msra.mxu0 %v4828
    %6170 = vmatprep.mubr.bf16.mxu0 %v6053
    %6171 = vmatmul.mubr.bf16.gmra.mrb[0].mxu0 %v6052
    %v6172 = vpop.f32.mrb[0].mxu0
    %v6173 = vadd.f32 %v5427, %v6172
    %v6174 = vpop.f32.mrb[0].mxu0
    %v6175 = vadd.f32 %v5431, %v6174
    %v6176 = vpop.f32.mrb[0].mxu0
    %v6177 = vpop.f32.mrb[0].mxu0
    %6178 = vdwg.mxu0
    %6179 = vmatprep.subr.bf16.mxu0 %v4841
    %6180 = vmatpush1.bf16.msra.mxu0 %v4840
    %6181 = vmatprep.subr.bf16.mxu0 %v4853
    %6182 = vmatpush1.bf16.msra.mxu0 %v4852
    %6183 = vmatprep.subr.bf16.mxu0 %v4865
    %6184 = vmatpush1.bf16.msra.mxu0 %v4864
    %6185 = vmatprep.subr.bf16.mxu0 %v4877
    %6186 = vmatpush1.bf16.msra.mxu0 %v4876
    %6187 = vmatprep.subr.bf16.mxu0 %v4889
    %6188 = vmatpush1.bf16.msra.mxu0 %v4888
    %6189 = vmatprep.subr.bf16.mxu0 %v4901
    %6190 = vmatpush1.bf16.msra.mxu0 %v4900
    %6191 = vmatprep.subr.bf16.mxu0 %v4913
    %6192 = vmatpush1.bf16.msra.mxu0 %v4912
    %6193 = vmatprep.subr.bf16.mxu0 %v4925
    %6194 = vmatpush1.bf16.msra.mxu0 %v4924
    %6195 = vmatprep.subr.bf16.mxu0 %v4937
    %6196 = vmatpush1.bf16.msra.mxu0 %v4936
    %6197 = vmatprep.subr.bf16.mxu0 %v4949
    %6198 = vmatpush1.bf16.msra.mxu0 %v4948
    %6199 = vmatprep.subr.bf16.mxu0 %v4961
    %6200 = vmatpush1.bf16.msra.mxu0 %v4960
    %6201 = vmatprep.subr.bf16.mxu0 %v4973
    %6202 = vmatpush1.bf16.msra.mxu0 %v4972
    %6203 = vmatprep.subr.bf16.mxu0 %v4985
    %6204 = vmatpush1.bf16.msra.mxu0 %v4984
    %6205 = vmatprep.subr.bf16.mxu0 %v4997
    %6206 = vmatpush1.bf16.msra.mxu0 %v4996
    %6207 = vmatprep.subr.bf16.mxu0 %v5009
    %6208 = vmatpush1.bf16.msra.mxu0 %v5008
    %6209 = vmatprep.subr.bf16.mxu0 %v5021
    %6210 = vmatpush1.bf16.msra.mxu0 %v5020
    %6211 = vmatprep.mubr.bf16.mxu0 %v6055
    %6212 = vmatmul.mubr.bf16.gmra.mrb[0].mxu0 %v6054
    %v6213 = vpop.f32.mrb[0].mxu0
    %v6214 = vadd.f32 %v6173, %v6213
    %v6215 = vpop.f32.mrb[0].mxu0
    %v6216 = vadd.f32 %v6175, %v6215
    %v6217 = vpop.f32.mrb[0].mxu0
    %v6218 = vpop.f32.mrb[0].mxu0
    %6219 = vdwg.mxu0
    %6220 = vmatprep.subr.bf16.mxu0 %v4651
    %6221 = vmatpush1.bf16.msra.mxu0 %v4650
    %6222 = vmatprep.subr.bf16.mxu0 %v4663
    %6223 = vmatpush1.bf16.msra.mxu0 %v4662
    %6224 = vmatprep.subr.bf16.mxu0 %v4675
    %6225 = vmatpush1.bf16.msra.mxu0 %v4674
    %6226 = vmatprep.subr.bf16.mxu0 %v4687
    %6227 = vmatpush1.bf16.msra.mxu0 %v4686
    %6228 = vmatprep.subr.bf16.mxu0 %v4699
    %6229 = vmatpush1.bf16.msra.mxu0 %v4698
    %6230 = vmatprep.subr.bf16.mxu0 %v4711
    %6231 = vmatpush1.bf16.msra.mxu0 %v4710
    %6232 = vmatprep.subr.bf16.mxu0 %v4723
    %6233 = vmatpush1.bf16.msra.mxu0 %v4722
    %6234 = vmatprep.subr.bf16.mxu0 %v4735
    %6235 = vmatpush1.bf16.msra.mxu0 %v4734
    %6236 = vmatprep.subr.bf16.mxu0 %v4747
    %6237 = vmatpush1.bf16.msra.mxu0 %v4746
    %6238 = vmatprep.subr.bf16.mxu0 %v4759
    %6239 = vmatpush1.bf16.msra.mxu0 %v4758
    %6240 = vmatprep.subr.bf16.mxu0 %v4771
    %6241 = vmatpush1.bf16.msra.mxu0 %v4770
    %6242 = vmatprep.subr.bf16.mxu0 %v4783
    %6243 = vmatpush1.bf16.msra.mxu0 %v4782
    %6244 = vmatprep.subr.bf16.mxu0 %v4795
    %6245 = vmatpush1.bf16.msra.mxu0 %v4794
    %6246 = vmatprep.subr.bf16.mxu0 %v4807
    %6247 = vmatpush1.bf16.msra.mxu0 %v4806
    %6248 = vmatprep.subr.bf16.mxu0 %v4819
    %6249 = vmatpush1.bf16.msra.mxu0 %v4818
    %6250 = vmatprep.subr.bf16.mxu0 %v4831
    %6251 = vmatpush1.bf16.msra.mxu0 %v4830
    %6252 = vmatprep.mubr.bf16.mxu0 %v6053
    %6253 = vmatmul.mubr.bf16.gmra.mrb[0].mxu0 %v6052
    %v6254 = vpop.f32.mrb[0].mxu0
    %v6255 = vadd.f32 %v5435, %v6254
    %v6256 = vpop.f32.mrb[0].mxu0
    %v6257 = vadd.f32 %v5439, %v6256
    %v6258 = vpop.f32.mrb[0].mxu0
    %v6259 = vpop.f32.mrb[0].mxu0
    %6260 = vdwg.mxu0
    %6261 = vmatprep.subr.bf16.mxu0 %v4843
    %6262 = vmatpush1.bf16.msra.mxu0 %v4842
    %6263 = vmatprep.subr.bf16.mxu0 %v4855
    %6264 = vmatpush1.bf16.msra.mxu0 %v4854
    %6265 = vmatprep.subr.bf16.mxu0 %v4867
    %6266 = vmatpush1.bf16.msra.mxu0 %v4866
    %6267 = vmatprep.subr.bf16.mxu0 %v4879
    %6268 = vmatpush1.bf16.msra.mxu0 %v4878
    %6269 = vmatprep.subr.bf16.mxu0 %v4891
    %6270 = vmatpush1.bf16.msra.mxu0 %v4890
    %6271 = vmatprep.subr.bf16.mxu0 %v4903
    %6272 = vmatpush1.bf16.msra.mxu0 %v4902
    %6273 = vmatprep.subr.bf16.mxu0 %v4915
    %6274 = vmatpush1.bf16.msra.mxu0 %v4914
    %6275 = vmatprep.subr.bf16.mxu0 %v4927
    %6276 = vmatpush1.bf16.msra.mxu0 %v4926
    %6277 = vmatprep.subr.bf16.mxu0 %v4939
    %6278 = vmatpush1.bf16.msra.mxu0 %v4938
    %6279 = vmatprep.subr.bf16.mxu0 %v4951
    %6280 = vmatpush1.bf16.msra.mxu0 %v4950
    %6281 = vmatprep.subr.bf16.mxu0 %v4963
    %6282 = vmatpush1.bf16.msra.mxu0 %v4962
    %6283 = vmatprep.subr.bf16.mxu0 %v4975
    %6284 = vmatpush1.bf16.msra.mxu0 %v4974
    %6285 = vmatprep.subr.bf16.mxu0 %v4987
    %6286 = vmatpush1.bf16.msra.mxu0 %v4986
    %6287 = vmatprep.subr.bf16.mxu0 %v4999
    %6288 = vmatpush1.bf16.msra.mxu0 %v4998
    %6289 = vmatprep.subr.bf16.mxu0 %v5011
    %6290 = vmatpush1.bf16.msra.mxu0 %v5010
    %6291 = vmatprep.subr.bf16.mxu0 %v5023
    %6292 = vmatpush1.bf16.msra.mxu0 %v5022
    %6293 = vmatprep.mubr.bf16.mxu0 %v6055
    %6294 = vmatmul.mubr.bf16.gmra.mrb[0].mxu0 %v6054
    %v6295 = vpop.f32.mrb[0].mxu0
    %v6296 = vadd.f32 %v6255, %v6295
    %v6297 = vpop.f32.mrb[0].mxu0
    %v6298 = vadd.f32 %v6257, %v6297
    %v6299 = vpop.f32.mrb[0].mxu0
    %v6300 = vpop.f32.mrb[0].mxu0
    %6301 = vdwg.mxu0
    %6302 = vmatprep.subr.bf16.mxu0 %v4653
    %6303 = vmatpush1.bf16.msra.mxu0 %v4652
    %6304 = vmatprep.subr.bf16.mxu0 %v4665
    %6305 = vmatpush1.bf16.msra.mxu0 %v4664
    %6306 = vmatprep.subr.bf16.mxu0 %v4677
    %6307 = vmatpush1.bf16.msra.mxu0 %v4676
    %6308 = vmatprep.subr.bf16.mxu0 %v4689
    %6309 = vmatpush1.bf16.msra.mxu0 %v4688
    %6310 = vmatprep.subr.bf16.mxu0 %v4701
    %6311 = vmatpush1.bf16.msra.mxu0 %v4700
    %6312 = vmatprep.subr.bf16.mxu0 %v4713
    %6313 = vmatpush1.bf16.msra.mxu0 %v4712
    %6314 = vmatprep.subr.bf16.mxu0 %v4725
    %6315 = vmatpush1.bf16.msra.mxu0 %v4724
    %6316 = vmatprep.subr.bf16.mxu0 %v4737
    %6317 = vmatpush1.bf16.msra.mxu0 %v4736
    %6318 = vmatprep.subr.bf16.mxu0 %v4749
    %6319 = vmatpush1.bf16.msra.mxu0 %v4748
    %6320 = vmatprep.subr.bf16.mxu0 %v4761
    %6321 = vmatpush1.bf16.msra.mxu0 %v4760
    %6322 = vmatprep.subr.bf16.mxu0 %v4773
    %6323 = vmatpush1.bf16.msra.mxu0 %v4772
    %6324 = vmatprep.subr.bf16.mxu0 %v4785
    %6325 = vmatpush1.bf16.msra.mxu0 %v4784
    %6326 = vmatprep.subr.bf16.mxu0 %v4797
    %6327 = vmatpush1.bf16.msra.mxu0 %v4796
    %6328 = vmatprep.subr.bf16.mxu0 %v4809
    %6329 = vmatpush1.bf16.msra.mxu0 %v4808
    %6330 = vmatprep.subr.bf16.mxu0 %v4821
    %6331 = vmatpush1.bf16.msra.mxu0 %v4820
    %6332 = vmatprep.subr.bf16.mxu0 %v4833
    %6333 = vmatpush1.bf16.msra.mxu0 %v4832
    %6334 = vmatprep.mubr.bf16.mxu0 %v6053
    %6335 = vmatmul.mubr.bf16.gmra.mrb[0].mxu0 %v6052
    %v6336 = vpop.f32.mrb[0].mxu0
    %v6337 = vadd.f32 %v5443, %v6336
    %v6338 = vpop.f32.mrb[0].mxu0
    %v6339 = vadd.f32 %v5447, %v6338
    %v6340 = vpop.f32.mrb[0].mxu0
    %v6341 = vpop.f32.mrb[0].mxu0
    %6342 = vdwg.mxu0
    %6343 = vmatprep.subr.bf16.mxu0 %v4845
    %6344 = vmatpush1.bf16.msra.mxu0 %v4844
    %6345 = vmatprep.subr.bf16.mxu0 %v4857
    %6346 = vmatpush1.bf16.msra.mxu0 %v4856
    %6347 = vmatprep.subr.bf16.mxu0 %v4869
    %6348 = vmatpush1.bf16.msra.mxu0 %v4868
    %6349 = vmatprep.subr.bf16.mxu0 %v4881
    %6350 = vmatpush1.bf16.msra.mxu0 %v4880
    %6351 = vmatprep.subr.bf16.mxu0 %v4893
    %6352 = vmatpush1.bf16.msra.mxu0 %v4892
    %6353 = vmatprep.subr.bf16.mxu0 %v4905
    %6354 = vmatpush1.bf16.msra.mxu0 %v4904
    %6355 = vmatprep.subr.bf16.mxu0 %v4917
    %6356 = vmatpush1.bf16.msra.mxu0 %v4916
    %6357 = vmatprep.subr.bf16.mxu0 %v4929
    %6358 = vmatpush1.bf16.msra.mxu0 %v4928
    %6359 = vmatprep.subr.bf16.mxu0 %v4941
    %6360 = vmatpush1.bf16.msra.mxu0 %v4940
    %6361 = vmatprep.subr.bf16.mxu0 %v4953
    %6362 = vmatpush1.bf16.msra.mxu0 %v4952
    %6363 = vmatprep.subr.bf16.mxu0 %v4965
    %6364 = vmatpush1.bf16.msra.mxu0 %v4964
    %6365 = vmatprep.subr.bf16.mxu0 %v4977
    %6366 = vmatpush1.bf16.msra.mxu0 %v4976
    %6367 = vmatprep.subr.bf16.mxu0 %v4989
    %6368 = vmatpush1.bf16.msra.mxu0 %v4988
    %6369 = vmatprep.subr.bf16.mxu0 %v5001
    %6370 = vmatpush1.bf16.msra.mxu0 %v5000
    %6371 = vmatprep.subr.bf16.mxu0 %v5013
    %6372 = vmatpush1.bf16.msra.mxu0 %v5012
    %6373 = vmatprep.subr.bf16.mxu0 %v5025
    %6374 = vmatpush1.bf16.msra.mxu0 %v5024
    %6375 = vmatprep.mubr.bf16.mxu0 %v6055
    %6376 = vmatmul.mubr.bf16.gmra.mrb[0].mxu0 %v6054
    %v6377 = vpop.f32.mrb[0].mxu0
    %v6378 = vadd.f32 %v6337, %v6377
    %v6379 = vpop.f32.mrb[0].mxu0
    %v6380 = vadd.f32 %v6339, %v6379
    %v6381 = vpop.f32.mrb[0].mxu0
    %v6382 = vpop.f32.mrb[0].mxu0
    %6383 = vdwg.mxu0
    %6384 = vmatprep.subr.bf16.mxu0 %v4655
    %6385 = vmatpush1.bf16.msra.mxu0 %v4654
    %6386 = vmatprep.subr.bf16.mxu0 %v4667
    %6387 = vmatpush1.bf16.msra.mxu0 %v4666
    %6388 = vmatprep.subr.bf16.mxu0 %v4679
    %6389 = vmatpush1.bf16.msra.mxu0 %v4678
    %6390 = vmatprep.subr.bf16.mxu0 %v4691
    %6391 = vmatpush1.bf16.msra.mxu0 %v4690
    %6392 = vmatprep.subr.bf16.mxu0 %v4703
    %6393 = vmatpush1.bf16.msra.mxu0 %v4702
    %6394 = vmatprep.subr.bf16.mxu0 %v4715
    %6395 = vmatpush1.bf16.msra.mxu0 %v4714
    %6396 = vmatprep.subr.bf16.mxu0 %v4727
    %6397 = vmatpush1.bf16.msra.mxu0 %v4726
    %6398 = vmatprep.subr.bf16.mxu0 %v4739
    %6399 = vmatpush1.bf16.msra.mxu0 %v4738
    %6400 = vmatprep.subr.bf16.mxu0 %v4751
    %6401 = vmatpush1.bf16.msra.mxu0 %v4750
    %6402 = vmatprep.subr.bf16.mxu0 %v4763
    %6403 = vmatpush1.bf16.msra.mxu0 %v4762
    %6404 = vmatprep.subr.bf16.mxu0 %v4775
    %6405 = vmatpush1.bf16.msra.mxu0 %v4774
    %6406 = vmatprep.subr.bf16.mxu0 %v4787
    %6407 = vmatpush1.bf16.msra.mxu0 %v4786
    %6408 = vmatprep.subr.bf16.mxu0 %v4799
    %6409 = vmatpush1.bf16.msra.mxu0 %v4798
    %6410 = vmatprep.subr.bf16.mxu0 %v4811
    %6411 = vmatpush1.bf16.msra.mxu0 %v4810
    %6412 = vmatprep.subr.bf16.mxu0 %v4823
    %6413 = vmatpush1.bf16.msra.mxu0 %v4822
    %6414 = vmatprep.subr.bf16.mxu0 %v4835
    %6415 = vmatpush1.bf16.msra.mxu0 %v4834
    %6416 = vmatprep.mubr.bf16.mxu0 %v6053
    %6417 = vmatmul.mubr.bf16.gmra.mrb[0].mxu0 %v6052
    %v6418 = vpop.f32.mrb[0].mxu0
    %v6419 = vadd.f32 %v5451, %v6418
    %v6420 = vpop.f32.mrb[0].mxu0
    %v6421 = vadd.f32 %v5455, %v6420
    %v6422 = vpop.f32.mrb[0].mxu0
    %v6423 = vpop.f32.mrb[0].mxu0
    %6424 = vdwg.mxu0
    %6425 = vmatprep.subr.bf16.mxu0 %v4847
    %6426 = vmatpush1.bf16.msra.mxu0 %v4846
    %6427 = vmatprep.subr.bf16.mxu0 %v4859
    %6428 = vmatpush1.bf16.msra.mxu0 %v4858
    %6429 = vmatprep.subr.bf16.mxu0 %v4871
    %6430 = vmatpush1.bf16.msra.mxu0 %v4870
    %6431 = vmatprep.subr.bf16.mxu0 %v4883
    %6432 = vmatpush1.bf16.msra.mxu0 %v4882
    %6433 = vmatprep.subr.bf16.mxu0 %v4895
    %6434 = vmatpush1.bf16.msra.mxu0 %v4894
    %6435 = vmatprep.subr.bf16.mxu0 %v4907
    %6436 = vmatpush1.bf16.msra.mxu0 %v4906
    %6437 = vmatprep.subr.bf16.mxu0 %v4919
    %6438 = vmatpush1.bf16.msra.mxu0 %v4918
    %6439 = vmatprep.subr.bf16.mxu0 %v4931
    %6440 = vmatpush1.bf16.msra.mxu0 %v4930
    %6441 = vmatprep.subr.bf16.mxu0 %v4943
    %6442 = vmatpush1.bf16.msra.mxu0 %v4942
    %6443 = vmatprep.subr.bf16.mxu0 %v4955
    %6444 = vmatpush1.bf16.msra.mxu0 %v4954
    %6445 = vmatprep.subr.bf16.mxu0 %v4967
    %6446 = vmatpush1.bf16.msra.mxu0 %v4966
    %6447 = vmatprep.subr.bf16.mxu0 %v4979
    %6448 = vmatpush1.bf16.msra.mxu0 %v4978
    %6449 = vmatprep.subr.bf16.mxu0 %v4991
    %6450 = vmatpush1.bf16.msra.mxu0 %v4990
    %6451 = vmatprep.subr.bf16.mxu0 %v5003
    %6452 = vmatpush1.bf16.msra.mxu0 %v5002
    %6453 = vmatprep.subr.bf16.mxu0 %v5015
    %6454 = vmatpush1.bf16.msra.mxu0 %v5014
    %6455 = vmatprep.subr.bf16.mxu0 %v5027
    %6456 = vmatpush1.bf16.msra.mxu0 %v5026
    %6457 = vmatprep.mubr.bf16.mxu0 %v6055
    %6458 = vmatmul.mubr.bf16.gmra.mrb[0].mxu0 %v6054
    %v6459 = vpop.f32.mrb[0].mxu0
    %v6460 = vadd.f32 %v6419, %v6459
    %v6461 = vpop.f32.mrb[0].mxu0
    %v6462 = vadd.f32 %v6421, %v6461
    %v6463 = vpop.f32.mrb[0].mxu0
    %v6464 = vpop.f32.mrb[0].mxu0
    %6465 = vdwg.mxu0
    %6466 = vmatprep.subr.bf16.mxu0 %v4657
    %6467 = vmatpush1.bf16.msra.mxu0 %v4656
    %6468 = vmatprep.subr.bf16.mxu0 %v4669
    %6469 = vmatpush1.bf16.msra.mxu0 %v4668
    %6470 = vmatprep.subr.bf16.mxu0 %v4681
    %6471 = vmatpush1.bf16.msra.mxu0 %v4680
    %6472 = vmatprep.subr.bf16.mxu0 %v4693
    %6473 = vmatpush1.bf16.msra.mxu0 %v4692
    %6474 = vmatprep.subr.bf16.mxu0 %v4705
    %6475 = vmatpush1.bf16.msra.mxu0 %v4704
    %6476 = vmatprep.subr.bf16.mxu0 %v4717
    %6477 = vmatpush1.bf16.msra.mxu0 %v4716
    %6478 = vmatprep.subr.bf16.mxu0 %v4729
    %6479 = vmatpush1.bf16.msra.mxu0 %v4728
    %6480 = vmatprep.subr.bf16.mxu0 %v4741
    %6481 = vmatpush1.bf16.msra.mxu0 %v4740
    %6482 = vmatprep.subr.bf16.mxu0 %v4753
    %6483 = vmatpush1.bf16.msra.mxu0 %v4752
    %6484 = vmatprep.subr.bf16.mxu0 %v4765
    %6485 = vmatpush1.bf16.msra.mxu0 %v4764
    %6486 = vmatprep.subr.bf16.mxu0 %v4777
    %6487 = vmatpush1.bf16.msra.mxu0 %v4776
    %6488 = vmatprep.subr.bf16.mxu0 %v4789
    %6489 = vmatpush1.bf16.msra.mxu0 %v4788
    %6490 = vmatprep.subr.bf16.mxu0 %v4801
    %6491 = vmatpush1.bf16.msra.mxu0 %v4800
    %6492 = vmatprep.subr.bf16.mxu0 %v4813
    %6493 = vmatpush1.bf16.msra.mxu0 %v4812
    %6494 = vmatprep.subr.bf16.mxu0 %v4825
    %6495 = vmatpush1.bf16.msra.mxu0 %v4824
    %6496 = vmatprep.subr.bf16.mxu0 %v4837
    %6497 = vmatpush1.bf16.msra.mxu0 %v4836
    %6498 = vmatprep.mubr.bf16.mxu0 %v6053
    %6499 = vmatmul.mubr.bf16.gmra.mrb[0].mxu0 %v6052
    %v6500 = vpop.f32.mrb[0].mxu0
    %v6501 = vadd.f32 %v5459, %v6500
    %v6502 = vpop.f32.mrb[0].mxu0
    %v6503 = vadd.f32 %v5463, %v6502
    %v6504 = vpop.f32.mrb[0].mxu0
    %v6505 = vpop.f32.mrb[0].mxu0
    %6506 = vdwg.mxu0
    %6507 = vmatprep.subr.bf16.mxu0 %v4849
    %6508 = vmatpush1.bf16.msra.mxu0 %v4848
    %6509 = vmatprep.subr.bf16.mxu0 %v4861
    %6510 = vmatpush1.bf16.msra.mxu0 %v4860
    %6511 = vmatprep.subr.bf16.mxu0 %v4873
    %6512 = vmatpush1.bf16.msra.mxu0 %v4872
    %6513 = vmatprep.subr.bf16.mxu0 %v4885
    %6514 = vmatpush1.bf16.msra.mxu0 %v4884
    %6515 = vmatprep.subr.bf16.mxu0 %v4897
    %6516 = vmatpush1.bf16.msra.mxu0 %v4896
    %6517 = vmatprep.subr.bf16.mxu0 %v4909
    %6518 = vmatpush1.bf16.msra.mxu0 %v4908
    %6519 = vmatprep.subr.bf16.mxu0 %v4921
    %6520 = vmatpush1.bf16.msra.mxu0 %v4920
    %6521 = vmatprep.subr.bf16.mxu0 %v4933
    %6522 = vmatpush1.bf16.msra.mxu0 %v4932
    %6523 = vmatprep.subr.bf16.mxu0 %v4945
    %6524 = vmatpush1.bf16.msra.mxu0 %v4944
    %6525 = vmatprep.subr.bf16.mxu0 %v4957
    %6526 = vmatpush1.bf16.msra.mxu0 %v4956
    %6527 = vmatprep.subr.bf16.mxu0 %v4969
    %6528 = vmatpush1.bf16.msra.mxu0 %v4968
    %6529 = vmatprep.subr.bf16.mxu0 %v4981
    %6530 = vmatpush1.bf16.msra.mxu0 %v4980
    %6531 = vmatprep.subr.bf16.mxu0 %v4993
    %6532 = vmatpush1.bf16.msra.mxu0 %v4992
    %6533 = vmatprep.subr.bf16.mxu0 %v5005
    %6534 = vmatpush1.bf16.msra.mxu0 %v5004
    %6535 = vmatprep.subr.bf16.mxu0 %v5017
    %6536 = vmatpush1.bf16.msra.mxu0 %v5016
    %6537 = vmatprep.subr.bf16.mxu0 %v5029
    %6538 = vmatpush1.bf16.msra.mxu0 %v5028
    %6539 = vmatprep.mubr.bf16.mxu0 %v6055
    %6540 = vmatmul.mubr.bf16.gmra.mrb[0].mxu0 %v6054
    %v6541 = vpop.f32.mrb[0].mxu0
    %v6542 = vadd.f32 %v6501, %v6541
    %v6543 = vpop.f32.mrb[0].mxu0
    %v6544 = vadd.f32 %v6503, %v6543
    %v6545 = vpop.f32.mrb[0].mxu0
    %v6546 = vpop.f32.mrb[0].mxu0
    %6547 = vdwg.mxu0
    %v6552 = vrot.slane %v6132, 7
    %v6553 = vrot.slane %v6134, 7
    %v6554 = vrot.slane %v6214, 7
    %v6555 = vrot.slane %v6216, 7
    %v6560 = vadd.f32 %v2666, %v6552
    %v6561 = vadd.f32 %v2668, %v6553
    %v6562 = vadd.f32 %v2748, %v6554
    %v6563 = vadd.f32 %v2750, %v6555
    %v6564 = vxor.u32 %v6560, 2147483648
    %v6565 = vxor.u32 %v6561, 2147483648
    %v6566 = vxor.u32 %v6562, 2147483648
    %v6567 = vxor.u32 %v6563, 2147483648
    %v6568 = vmul.f32 %v6564, 1.442695
    %v6569 = vpow.pop %v6568
    %v6570 = vmul.f32 %v6565, 1.442695
    %v6571 = vpow.pop %v6570
    %v6572 = vmul.f32 %v6566, 1.442695
    %v6573 = vpow.pop %v6572
    %v6574 = vmul.f32 %v6567, 1.442695
    %v6575 = vpow.pop %v6574
    %v6576 = vadd.f32 %v6569, 1.0
    %v6577 = vadd.f32 %v6571, 1.0
    %v6578 = vadd.f32 %v6573, 1.0
    %v6579 = vadd.f32 %v6575, 1.0
    %v6580 = vrcp.pop %v6576
    %v6581 = vmul.f32 1.0, %v6580
    %v6582 = vrcp.pop %v6577
    %v6583 = vmul.f32 1.0, %v6582
    %v6584 = vrcp.pop %v6578
    %v6585 = vmul.f32 1.0, %v6584
    %v6586 = vrcp.pop %v6579
    %v6587 = vmul.f32 1.0, %v6586
    %v6592 = vrot.slane %v6296, 7
    %v6593 = vrot.slane %v6298, 7
    %v6594 = vrot.slane %v6378, 7
    %v6595 = vrot.slane %v6380, 7
    %v6600 = vadd.f32 %v2830, %v6592
    %v6601 = vadd.f32 %v2832, %v6593
    %v6602 = vadd.f32 %v2912, %v6594
    %v6603 = vadd.f32 %v2914, %v6595
    %v6604 = vxor.u32 %v6600, 2147483648
    %v6605 = vxor.u32 %v6601, 2147483648
    %v6606 = vxor.u32 %v6602, 2147483648
    %v6607 = vxor.u32 %v6603, 2147483648
    %v6608 = vmul.f32 %v6604, 1.442695
    %v6609 = vpow.pop %v6608
    %v6610 = vmul.f32 %v6605, 1.442695
    %v6611 = vpow.pop %v6610
    %v6612 = vmul.f32 %v6606, 1.442695
    %v6613 = vpow.pop %v6612
    %v6614 = vmul.f32 %v6607, 1.442695
    %v6615 = vpow.pop %v6614
    %v6616 = vadd.f32 %v6609, 1.0
    %v6617 = vadd.f32 %v6611, 1.0
    %v6618 = vadd.f32 %v6613, 1.0
    %v6619 = vadd.f32 %v6615, 1.0
    %v6620 = vrcp.pop %v6616
    %v6621 = vmul.f32 1.0, %v6620
    %v6622 = vrcp.pop %v6617
    %v6623 = vmul.f32 1.0, %v6622
    %v6624 = vrcp.pop %v6618
    %v6625 = vmul.f32 1.0, %v6624
    %v6626 = vrcp.pop %v6619
    %v6627 = vmul.f32 1.0, %v6626
    %v6632 = vrot.slane %v6460, 7
    %v6633 = vrot.slane %v6462, 7
    %v6634 = vrot.slane %v6542, 7
    %v6635 = vrot.slane %v6544, 7
    %v6640 = vmul.f32 %v6581, %v6632
    %v6641 = vmul.f32 %v6583, %v6633
    %v6642 = vmul.f32 %v6585, %v6634
    %v6643 = vmul.f32 %v6587, %v6635
    %v6644 = vadd.f32 %v2994, %v6640
    %v6645 = vadd.f32 %v2996, %v6641
    %v6646 = vadd.f32 %v3076, %v6642
    %v6647 = vadd.f32 %v3078, %v6643
    %v6648 = vtanh.pop %v6644
    %v6649 = vtanh.pop %v6645
    %v6650 = vtanh.pop %v6646
    %v6651 = vtanh.pop %v6647
    %v6652 = vsub.f32 1.0, %v6621
    %v6653 = vsub.f32 1.0, %v6623
    %v6654 = vsub.f32 1.0, %v6625
    %v6655 = vsub.f32 1.0, %v6627
    %v6656 = vmul.f32 %v6652, %v6648
    %v6657 = vmul.f32 %v6653, %v6649
    %v6658 = vmul.f32 %v6654, %v6650
    %v6659 = vmul.f32 %v6655, %v6651
    %v6664 = vrot.slane %v6048, 7
    %v6665 = vrot.slane %v6049, 7
    %v6666 = vrot.slane %v6050, 7
    %v6667 = vrot.slane %v6051, 7
    %v6672 = vmul.f32 %v6621, %v6664
    %v6673 = vmul.f32 %v6623, %v6665
    %v6674 = vmul.f32 %v6625, %v6666
    %v6675 = vmul.f32 %v6627, %v6667
    %v6676 = vadd.f32 %v6656, %v6672
    %v6677 = vadd.f32 %v6657, %v6673
    %v6678 = vadd.f32 %v6658, %v6674
    %v6679 = vadd.f32 %v6659, %v6675
    %v6680 = vpack.c.bf16 %v6676, %v6676
    %v6681 = vpack.c.bf16 %v6677, %v6677
    %v6682 = vpack.c.bf16 %v6678, %v6678
    %v6683 = vpack.c.bf16 %v6679, %v6679
    %v6685 = vshrl.u32 %v6680, 16
    %v6688 = vshrl.u32 %v6681, 16
    %v6691 = vshrl.u32 %v6682, 16
    %v6694 = vshrl.u32 %v6683, 16
    %6700 = vmatprep.subr.bf16.mxu0 %v4647
    %6701 = vmatpush1.bf16.msra.mxu0 %v4646
    %6702 = vmatprep.subr.bf16.mxu0 %v4659
    %6703 = vmatpush1.bf16.msra.mxu0 %v4658
    %6704 = vmatprep.subr.bf16.mxu0 %v4671
    %6705 = vmatpush1.bf16.msra.mxu0 %v4670
    %6706 = vmatprep.subr.bf16.mxu0 %v4683
    %6707 = vmatpush1.bf16.msra.mxu0 %v4682
    %6708 = vmatprep.subr.bf16.mxu0 %v4695
    %6709 = vmatpush1.bf16.msra.mxu0 %v4694
    %6710 = vmatprep.subr.bf16.mxu0 %v4707
    %6711 = vmatpush1.bf16.msra.mxu0 %v4706
    %6712 = vmatprep.subr.bf16.mxu0 %v4719
    %6713 = vmatpush1.bf16.msra.mxu0 %v4718
    %6714 = vmatprep.subr.bf16.mxu0 %v4731
    %6715 = vmatpush1.bf16.msra.mxu0 %v4730
    %6716 = vmatprep.subr.bf16.mxu0 %v4743
    %6717 = vmatpush1.bf16.msra.mxu0 %v4742
    %6718 = vmatprep.subr.bf16.mxu0 %v4755
    %6719 = vmatpush1.bf16.msra.mxu0 %v4754
    %6720 = vmatprep.subr.bf16.mxu0 %v4767
    %6721 = vmatpush1.bf16.msra.mxu0 %v4766
    %6722 = vmatprep.subr.bf16.mxu0 %v4779
    %6723 = vmatpush1.bf16.msra.mxu0 %v4778
    %6724 = vmatprep.subr.bf16.mxu0 %v4791
    %6725 = vmatpush1.bf16.msra.mxu0 %v4790
    %6726 = vmatprep.subr.bf16.mxu0 %v4803
    %6727 = vmatpush1.bf16.msra.mxu0 %v4802
    %6728 = vmatprep.subr.bf16.mxu0 %v4815
    %6729 = vmatpush1.bf16.msra.mxu0 %v4814
    %6730 = vmatprep.subr.bf16.mxu0 %v4827
    %6731 = vmatpush1.bf16.msra.mxu0 %v4826
    %6732 = vmatprep.mubr.bf16.mxu0 %v6688
    %6733 = vmatmul.mubr.bf16.gmra.mrb[0].mxu0 %v6685
    %v6734 = vpop.f32.mrb[0].mxu0
    %v6735 = vadd.f32 %v5419, %v6734
    %v6736 = vpop.f32.mrb[0].mxu0
    %v6737 = vadd.f32 %v5423, %v6736
    %v6738 = vpop.f32.mrb[0].mxu0
    %v6739 = vpop.f32.mrb[0].mxu0
    %6740 = vdwg.mxu0
    %6741 = vmatprep.subr.bf16.mxu0 %v4839
    %6742 = vmatpush1.bf16.msra.mxu0 %v4838
    %6743 = vmatprep.subr.bf16.mxu0 %v4851
    %6744 = vmatpush1.bf16.msra.mxu0 %v4850
    %6745 = vmatprep.subr.bf16.mxu0 %v4863
    %6746 = vmatpush1.bf16.msra.mxu0 %v4862
    %6747 = vmatprep.subr.bf16.mxu0 %v4875
    %6748 = vmatpush1.bf16.msra.mxu0 %v4874
    %6749 = vmatprep.subr.bf16.mxu0 %v4887
    %6750 = vmatpush1.bf16.msra.mxu0 %v4886
    %6751 = vmatprep.subr.bf16.mxu0 %v4899
    %6752 = vmatpush1.bf16.msra.mxu0 %v4898
    %6753 = vmatprep.subr.bf16.mxu0 %v4911
    %6754 = vmatpush1.bf16.msra.mxu0 %v4910
    %6755 = vmatprep.subr.bf16.mxu0 %v4923
    %6756 = vmatpush1.bf16.msra.mxu0 %v4922
    %6757 = vmatprep.subr.bf16.mxu0 %v4935
    %6758 = vmatpush1.bf16.msra.mxu0 %v4934
    %6759 = vmatprep.subr.bf16.mxu0 %v4947
    %6760 = vmatpush1.bf16.msra.mxu0 %v4946
    %6761 = vmatprep.subr.bf16.mxu0 %v4959
    %6762 = vmatpush1.bf16.msra.mxu0 %v4958
    %6763 = vmatprep.subr.bf16.mxu0 %v4971
    %6764 = vmatpush1.bf16.msra.mxu0 %v4970
    %6765 = vmatprep.subr.bf16.mxu0 %v4983
    %6766 = vmatpush1.bf16.msra.mxu0 %v4982
    %6767 = vmatprep.subr.bf16.mxu0 %v4995
    %6768 = vmatpush1.bf16.msra.mxu0 %v4994
    %6769 = vmatprep.subr.bf16.mxu0 %v5007
    %6770 = vmatpush1.bf16.msra.mxu0 %v5006
    %6771 = vmatprep.subr.bf16.mxu0 %v5019
    %6772 = vmatpush1.bf16.msra.mxu0 %v5018
    %6773 = vmatprep.mubr.bf16.mxu0 %v6694
    %6774 = vmatmul.mubr.bf16.gmra.mrb[0].mxu0 %v6691
    %v6775 = vpop.f32.mrb[0].mxu0
    %v6776 = vadd.f32 %v6735, %v6775
    %v6777 = vpop.f32.mrb[0].mxu0
    %v6778 = vadd.f32 %v6737, %v6777
    %v6779 = vpop.f32.mrb[0].mxu0
    %v6780 = vpop.f32.mrb[0].mxu0
    %6781 = vdwg.mxu0
    %6782 = vmatprep.subr.bf16.mxu0 %v4649
    %6783 = vmatpush1.bf16.msra.mxu0 %v4648
    %6784 = vmatprep.subr.bf16.mxu0 %v4661
    %6785 = vmatpush1.bf16.msra.mxu0 %v4660
    %6786 = vmatprep.subr.bf16.mxu0 %v4673
    %6787 = vmatpush1.bf16.msra.mxu0 %v4672
    %6788 = vmatprep.subr.bf16.mxu0 %v4685
    %6789 = vmatpush1.bf16.msra.mxu0 %v4684
    %6790 = vmatprep.subr.bf16.mxu0 %v4697
    %6791 = vmatpush1.bf16.msra.mxu0 %v4696
    %6792 = vmatprep.subr.bf16.mxu0 %v4709
    %6793 = vmatpush1.bf16.msra.mxu0 %v4708
    %6794 = vmatprep.subr.bf16.mxu0 %v4721
    %6795 = vmatpush1.bf16.msra.mxu0 %v4720
    %6796 = vmatprep.subr.bf16.mxu0 %v4733
    %6797 = vmatpush1.bf16.msra.mxu0 %v4732
    %6798 = vmatprep.subr.bf16.mxu0 %v4745
    %6799 = vmatpush1.bf16.msra.mxu0 %v4744
    %6800 = vmatprep.subr.bf16.mxu0 %v4757
    %6801 = vmatpush1.bf16.msra.mxu0 %v4756
    %6802 = vmatprep.subr.bf16.mxu0 %v4769
    %6803 = vmatpush1.bf16.msra.mxu0 %v4768
    %6804 = vmatprep.subr.bf16.mxu0 %v4781
    %6805 = vmatpush1.bf16.msra.mxu0 %v4780
    %6806 = vmatprep.subr.bf16.mxu0 %v4793
    %6807 = vmatpush1.bf16.msra.mxu0 %v4792
    %6808 = vmatprep.subr.bf16.mxu0 %v4805
    %6809 = vmatpush1.bf16.msra.mxu0 %v4804
    %6810 = vmatprep.subr.bf16.mxu0 %v4817
    %6811 = vmatpush1.bf16.msra.mxu0 %v4816
    %6812 = vmatprep.subr.bf16.mxu0 %v4829
    %6813 = vmatpush1.bf16.msra.mxu0 %v4828
    %6814 = vmatprep.mubr.bf16.mxu0 %v6688
    %6815 = vmatmul.mubr.bf16.gmra.mrb[0].mxu0 %v6685
    %v6816 = vpop.f32.mrb[0].mxu0
    %v6817 = vadd.f32 %v5427, %v6816
    %v6818 = vpop.f32.mrb[0].mxu0
    %v6819 = vadd.f32 %v5431, %v6818
    %v6820 = vpop.f32.mrb[0].mxu0
    %v6821 = vpop.f32.mrb[0].mxu0
    %6822 = vdwg.mxu0
    %6823 = vmatprep.subr.bf16.mxu0 %v4841
    %6824 = vmatpush1.bf16.msra.mxu0 %v4840
    %6825 = vmatprep.subr.bf16.mxu0 %v4853
    %6826 = vmatpush1.bf16.msra.mxu0 %v4852
    %6827 = vmatprep.subr.bf16.mxu0 %v4865
    %6828 = vmatpush1.bf16.msra.mxu0 %v4864
    %6829 = vmatprep.subr.bf16.mxu0 %v4877
    %6830 = vmatpush1.bf16.msra.mxu0 %v4876
    %6831 = vmatprep.subr.bf16.mxu0 %v4889
    %6832 = vmatpush1.bf16.msra.mxu0 %v4888
    %6833 = vmatprep.subr.bf16.mxu0 %v4901
    %6834 = vmatpush1.bf16.msra.mxu0 %v4900
    %6835 = vmatprep.subr.bf16.mxu0 %v4913
    %6836 = vmatpush1.bf16.msra.mxu0 %v4912
    %6837 = vmatprep.subr.bf16.mxu0 %v4925
    %6838 = vmatpush1.bf16.msra.mxu0 %v4924
    %6839 = vmatprep.subr.bf16.mxu0 %v4937
    %6840 = vmatpush1.bf16.msra.mxu0 %v4936
    %6841 = vmatprep.subr.bf16.mxu0 %v4949
    %6842 = vmatpush1.bf16.msra.mxu0 %v4948
    %6843 = vmatprep.subr.bf16.mxu0 %v4961
    %6844 = vmatpush1.bf16.msra.mxu0 %v4960
    %6845 = vmatprep.subr.bf16.mxu0 %v4973
    %6846 = vmatpush1.bf16.msra.mxu0 %v4972
    %6847 = vmatprep.subr.bf16.mxu0 %v4985
    %6848 = vmatpush1.bf16.msra.mxu0 %v4984
    %6849 = vmatprep.subr.bf16.mxu0 %v4997
    %6850 = vmatpush1.bf16.msra.mxu0 %v4996
    %6851 = vmatprep.subr.bf16.mxu0 %v5009
    %6852 = vmatpush1.bf16.msra.mxu0 %v5008
    %6853 = vmatprep.subr.bf16.mxu0 %v5021
    %6854 = vmatpush1.bf16.msra.mxu0 %v5020
    %6855 = vmatprep.mubr.bf16.mxu0 %v6694
    %6856 = vmatmul.mubr.bf16.gmra.mrb[0].mxu0 %v6691
    %v6857 = vpop.f32.mrb[0].mxu0
    %v6858 = vadd.f32 %v6817, %v6857
    %v6859 = vpop.f32.mrb[0].mxu0
    %v6860 = vadd.f32 %v6819, %v6859
    %v6861 = vpop.f32.mrb[0].mxu0
    %v6862 = vpop.f32.mrb[0].mxu0
    %6863 = vdwg.mxu0
    %6864 = vmatprep.subr.bf16.mxu0 %v4651
    %6865 = vmatpush1.bf16.msra.mxu0 %v4650
    %6866 = vmatprep.subr.bf16.mxu0 %v4663
    %6867 = vmatpush1.bf16.msra.mxu0 %v4662
    %6868 = vmatprep.subr.bf16.mxu0 %v4675
    %6869 = vmatpush1.bf16.msra.mxu0 %v4674
    %6870 = vmatprep.subr.bf16.mxu0 %v4687
    %6871 = vmatpush1.bf16.msra.mxu0 %v4686
    %6872 = vmatprep.subr.bf16.mxu0 %v4699
    %6873 = vmatpush1.bf16.msra.mxu0 %v4698
    %6874 = vmatprep.subr.bf16.mxu0 %v4711
    %6875 = vmatpush1.bf16.msra.mxu0 %v4710
    %6876 = vmatprep.subr.bf16.mxu0 %v4723
    %6877 = vmatpush1.bf16.msra.mxu0 %v4722
    %6878 = vmatprep.subr.bf16.mxu0 %v4735
    %6879 = vmatpush1.bf16.msra.mxu0 %v4734
    %6880 = vmatprep.subr.bf16.mxu0 %v4747
    %6881 = vmatpush1.bf16.msra.mxu0 %v4746
    %6882 = vmatprep.subr.bf16.mxu0 %v4759
    %6883 = vmatpush1.bf16.msra.mxu0 %v4758
    %6884 = vmatprep.subr.bf16.mxu0 %v4771
    %6885 = vmatpush1.bf16.msra.mxu0 %v4770
    %6886 = vmatprep.subr.bf16.mxu0 %v4783
    %6887 = vmatpush1.bf16.msra.mxu0 %v4782
    %6888 = vmatprep.subr.bf16.mxu0 %v4795
    %6889 = vmatpush1.bf16.msra.mxu0 %v4794
    %6890 = vmatprep.subr.bf16.mxu0 %v4807
    %6891 = vmatpush1.bf16.msra.mxu0 %v4806
    %6892 = vmatprep.subr.bf16.mxu0 %v4819
    %6893 = vmatpush1.bf16.msra.mxu0 %v4818
    %6894 = vmatprep.subr.bf16.mxu0 %v4831
    %6895 = vmatpush1.bf16.msra.mxu0 %v4830
    %6896 = vmatprep.mubr.bf16.mxu0 %v6688
    %6897 = vmatmul.mubr.bf16.gmra.mrb[0].mxu0 %v6685
    %v6898 = vpop.f32.mrb[0].mxu0
    %v6899 = vadd.f32 %v5435, %v6898
    %v6900 = vpop.f32.mrb[0].mxu0
    %v6901 = vadd.f32 %v5439, %v6900
    %v6902 = vpop.f32.mrb[0].mxu0
    %v6903 = vpop.f32.mrb[0].mxu0
    %6904 = vdwg.mxu0
    %6905 = vmatprep.subr.bf16.mxu0 %v4843
    %6906 = vmatpush1.bf16.msra.mxu0 %v4842
    %6907 = vmatprep.subr.bf16.mxu0 %v4855
    %6908 = vmatpush1.bf16.msra.mxu0 %v4854
    %6909 = vmatprep.subr.bf16.mxu0 %v4867
    %6910 = vmatpush1.bf16.msra.mxu0 %v4866
    %6911 = vmatprep.subr.bf16.mxu0 %v4879
    %6912 = vmatpush1.bf16.msra.mxu0 %v4878
    %6913 = vmatprep.subr.bf16.mxu0 %v4891
    %6914 = vmatpush1.bf16.msra.mxu0 %v4890
    %6915 = vmatprep.subr.bf16.mxu0 %v4903
    %6916 = vmatpush1.bf16.msra.mxu0 %v4902
    %6917 = vmatprep.subr.bf16.mxu0 %v4915
    %6918 = vmatpush1.bf16.msra.mxu0 %v4914
    %6919 = vmatprep.subr.bf16.mxu0 %v4927
    %6920 = vmatpush1.bf16.msra.mxu0 %v4926
    %6921 = vmatprep.subr.bf16.mxu0 %v4939
    %6922 = vmatpush1.bf16.msra.mxu0 %v4938
    %6923 = vmatprep.subr.bf16.mxu0 %v4951
    %6924 = vmatpush1.bf16.msra.mxu0 %v4950
    %6925 = vmatprep.subr.bf16.mxu0 %v4963
    %6926 = vmatpush1.bf16.msra.mxu0 %v4962
    %6927 = vmatprep.subr.bf16.mxu0 %v4975
    %6928 = vmatpush1.bf16.msra.mxu0 %v4974
    %6929 = vmatprep.subr.bf16.mxu0 %v4987
    %6930 = vmatpush1.bf16.msra.mxu0 %v4986
    %6931 = vmatprep.subr.bf16.mxu0 %v4999
    %6932 = vmatpush1.bf16.msra.mxu0 %v4998
    %6933 = vmatprep.subr.bf16.mxu0 %v5011
    %6934 = vmatpush1.bf16.msra.mxu0 %v5010
    %6935 = vmatprep.subr.bf16.mxu0 %v5023
    %6936 = vmatpush1.bf16.msra.mxu0 %v5022
    %6937 = vmatprep.mubr.bf16.mxu0 %v6694
    %6938 = vmatmul.mubr.bf16.gmra.mrb[0].mxu0 %v6691
    %v6939 = vpop.f32.mrb[0].mxu0
    %v6940 = vadd.f32 %v6899, %v6939
    %v6941 = vpop.f32.mrb[0].mxu0
    %v6942 = vadd.f32 %v6901, %v6941
    %v6943 = vpop.f32.mrb[0].mxu0
    %v6944 = vpop.f32.mrb[0].mxu0
    %6945 = vdwg.mxu0
    %6946 = vmatprep.subr.bf16.mxu0 %v4653
    %6947 = vmatpush1.bf16.msra.mxu0 %v4652
    %6948 = vmatprep.subr.bf16.mxu0 %v4665
    %6949 = vmatpush1.bf16.msra.mxu0 %v4664
    %6950 = vmatprep.subr.bf16.mxu0 %v4677
    %6951 = vmatpush1.bf16.msra.mxu0 %v4676
    %6952 = vmatprep.subr.bf16.mxu0 %v4689
    %6953 = vmatpush1.bf16.msra.mxu0 %v4688
    %6954 = vmatprep.subr.bf16.mxu0 %v4701
    %6955 = vmatpush1.bf16.msra.mxu0 %v4700
    %6956 = vmatprep.subr.bf16.mxu0 %v4713
    %6957 = vmatpush1.bf16.msra.mxu0 %v4712
    %6958 = vmatprep.subr.bf16.mxu0 %v4725
    %6959 = vmatpush1.bf16.msra.mxu0 %v4724
    %6960 = vmatprep.subr.bf16.mxu0 %v4737
    %6961 = vmatpush1.bf16.msra.mxu0 %v4736
    %6962 = vmatprep.subr.bf16.mxu0 %v4749
    %6963 = vmatpush1.bf16.msra.mxu0 %v4748
    %6964 = vmatprep.subr.bf16.mxu0 %v4761
    %6965 = vmatpush1.bf16.msra.mxu0 %v4760
    %6966 = vmatprep.subr.bf16.mxu0 %v4773
    %6967 = vmatpush1.bf16.msra.mxu0 %v4772
    %6968 = vmatprep.subr.bf16.mxu0 %v4785
    %6969 = vmatpush1.bf16.msra.mxu0 %v4784
    %6970 = vmatprep.subr.bf16.mxu0 %v4797
    %6971 = vmatpush1.bf16.msra.mxu0 %v4796
    %6972 = vmatprep.subr.bf16.mxu0 %v4809
    %6973 = vmatpush1.bf16.msra.mxu0 %v4808
    %6974 = vmatprep.subr.bf16.mxu0 %v4821
    %6975 = vmatpush1.bf16.msra.mxu0 %v4820
    %6976 = vmatprep.subr.bf16.mxu0 %v4833
    %6977 = vmatpush1.bf16.msra.mxu0 %v4832
    %6978 = vmatprep.mubr.bf16.mxu0 %v6688
    %6979 = vmatmul.mubr.bf16.gmra.mrb[0].mxu0 %v6685
    %v6980 = vpop.f32.mrb[0].mxu0
    %v6981 = vadd.f32 %v5443, %v6980
    %v6982 = vpop.f32.mrb[0].mxu0
    %v6983 = vadd.f32 %v5447, %v6982
    %v6984 = vpop.f32.mrb[0].mxu0
    %v6985 = vpop.f32.mrb[0].mxu0
    %6986 = vdwg.mxu0
    %6987 = vmatprep.subr.bf16.mxu0 %v4845
    %6988 = vmatpush1.bf16.msra.mxu0 %v4844
    %6989 = vmatprep.subr.bf16.mxu0 %v4857
    %6990 = vmatpush1.bf16.msra.mxu0 %v4856
    %6991 = vmatprep.subr.bf16.mxu0 %v4869
    %6992 = vmatpush1.bf16.msra.mxu0 %v4868
    %6993 = vmatprep.subr.bf16.mxu0 %v4881
    %6994 = vmatpush1.bf16.msra.mxu0 %v4880
    %6995 = vmatprep.subr.bf16.mxu0 %v4893
    %6996 = vmatpush1.bf16.msra.mxu0 %v4892
    %6997 = vmatprep.subr.bf16.mxu0 %v4905
    %6998 = vmatpush1.bf16.msra.mxu0 %v4904
    %6999 = vmatprep.subr.bf16.mxu0 %v4917
    %7000 = vmatpush1.bf16.msra.mxu0 %v4916
    %7001 = vmatprep.subr.bf16.mxu0 %v4929
    %7002 = vmatpush1.bf16.msra.mxu0 %v4928
    %7003 = vmatprep.subr.bf16.mxu0 %v4941
    %7004 = vmatpush1.bf16.msra.mxu0 %v4940
    %7005 = vmatprep.subr.bf16.mxu0 %v4953
    %7006 = vmatpush1.bf16.msra.mxu0 %v4952
    %7007 = vmatprep.subr.bf16.mxu0 %v4965
    %7008 = vmatpush1.bf16.msra.mxu0 %v4964
    %7009 = vmatprep.subr.bf16.mxu0 %v4977
    %7010 = vmatpush1.bf16.msra.mxu0 %v4976
    %7011 = vmatprep.subr.bf16.mxu0 %v4989
    %7012 = vmatpush1.bf16.msra.mxu0 %v4988
    %7013 = vmatprep.subr.bf16.mxu0 %v5001
    %7014 = vmatpush1.bf16.msra.mxu0 %v5000
    %7015 = vmatprep.subr.bf16.mxu0 %v5013
    %7016 = vmatpush1.bf16.msra.mxu0 %v5012
    %7017 = vmatprep.subr.bf16.mxu0 %v5025
    %7018 = vmatpush1.bf16.msra.mxu0 %v5024
    %7019 = vmatprep.mubr.bf16.mxu0 %v6694
    %7020 = vmatmul.mubr.bf16.gmra.mrb[0].mxu0 %v6691
    %v7021 = vpop.f32.mrb[0].mxu0
    %v7022 = vadd.f32 %v6981, %v7021
    %v7023 = vpop.f32.mrb[0].mxu0
    %v7024 = vadd.f32 %v6983, %v7023
    %v7025 = vpop.f32.mrb[0].mxu0
    %v7026 = vpop.f32.mrb[0].mxu0
    %7027 = vdwg.mxu0
    %7028 = vmatprep.subr.bf16.mxu0 %v4655
    %7029 = vmatpush1.bf16.msra.mxu0 %v4654
    %7030 = vmatprep.subr.bf16.mxu0 %v4667
    %7031 = vmatpush1.bf16.msra.mxu0 %v4666
    %7032 = vmatprep.subr.bf16.mxu0 %v4679
    %7033 = vmatpush1.bf16.msra.mxu0 %v4678
    %7034 = vmatprep.subr.bf16.mxu0 %v4691
    %7035 = vmatpush1.bf16.msra.mxu0 %v4690
    %7036 = vmatprep.subr.bf16.mxu0 %v4703
    %7037 = vmatpush1.bf16.msra.mxu0 %v4702
    %7038 = vmatprep.subr.bf16.mxu0 %v4715
    %7039 = vmatpush1.bf16.msra.mxu0 %v4714
    %7040 = vmatprep.subr.bf16.mxu0 %v4727
    %7041 = vmatpush1.bf16.msra.mxu0 %v4726
    %7042 = vmatprep.subr.bf16.mxu0 %v4739
    %7043 = vmatpush1.bf16.msra.mxu0 %v4738
    %7044 = vmatprep.subr.bf16.mxu0 %v4751
    %7045 = vmatpush1.bf16.msra.mxu0 %v4750
    %7046 = vmatprep.subr.bf16.mxu0 %v4763
    %7047 = vmatpush1.bf16.msra.mxu0 %v4762
    %7048 = vmatprep.subr.bf16.mxu0 %v4775
    %7049 = vmatpush1.bf16.msra.mxu0 %v4774
    %7050 = vmatprep.subr.bf16.mxu0 %v4787
    %7051 = vmatpush1.bf16.msra.mxu0 %v4786
    %7052 = vmatprep.subr.bf16.mxu0 %v4799
    %7053 = vmatpush1.bf16.msra.mxu0 %v4798
    %7054 = vmatprep.subr.bf16.mxu0 %v4811
    %7055 = vmatpush1.bf16.msra.mxu0 %v4810
    %7056 = vmatprep.subr.bf16.mxu0 %v4823
    %7057 = vmatpush1.bf16.msra.mxu0 %v4822
    %7058 = vmatprep.subr.bf16.mxu0 %v4835
    %7059 = vmatpush1.bf16.msra.mxu0 %v4834
    %7060 = vmatprep.mubr.bf16.mxu0 %v6688
    %7061 = vmatmul.mubr.bf16.gmra.mrb[0].mxu0 %v6685
    %v7062 = vpop.f32.mrb[0].mxu0
    %v7063 = vadd.f32 %v5451, %v7062
    %v7064 = vpop.f32.mrb[0].mxu0
    %v7065 = vadd.f32 %v5455, %v7064
    %v7066 = vpop.f32.mrb[0].mxu0
    %v7067 = vpop.f32.mrb[0].mxu0
    %7068 = vdwg.mxu0
    %7069 = vmatprep.subr.bf16.mxu0 %v4847
    %7070 = vmatpush1.bf16.msra.mxu0 %v4846
    %7071 = vmatprep.subr.bf16.mxu0 %v4859
    %7072 = vmatpush1.bf16.msra.mxu0 %v4858
    %7073 = vmatprep.subr.bf16.mxu0 %v4871
    %7074 = vmatpush1.bf16.msra.mxu0 %v4870
    %7075 = vmatprep.subr.bf16.mxu0 %v4883
    %7076 = vmatpush1.bf16.msra.mxu0 %v4882
    %7077 = vmatprep.subr.bf16.mxu0 %v4895
    %7078 = vmatpush1.bf16.msra.mxu0 %v4894
    %7079 = vmatprep.subr.bf16.mxu0 %v4907
    %7080 = vmatpush1.bf16.msra.mxu0 %v4906
    %7081 = vmatprep.subr.bf16.mxu0 %v4919
    %7082 = vmatpush1.bf16.msra.mxu0 %v4918
    %7083 = vmatprep.subr.bf16.mxu0 %v4931
    %7084 = vmatpush1.bf16.msra.mxu0 %v4930
    %7085 = vmatprep.subr.bf16.mxu0 %v4943
    %7086 = vmatpush1.bf16.msra.mxu0 %v4942
    %7087 = vmatprep.subr.bf16.mxu0 %v4955
    %7088 = vmatpush1.bf16.msra.mxu0 %v4954
    %7089 = vmatprep.subr.bf16.mxu0 %v4967
    %7090 = vmatpush1.bf16.msra.mxu0 %v4966
    %7091 = vmatprep.subr.bf16.mxu0 %v4979
    %7092 = vmatpush1.bf16.msra.mxu0 %v4978
    %7093 = vmatprep.subr.bf16.mxu0 %v4991
    %7094 = vmatpush1.bf16.msra.mxu0 %v4990
    %7095 = vmatprep.subr.bf16.mxu0 %v5003
    %7096 = vmatpush1.bf16.msra.mxu0 %v5002
    %7097 = vmatprep.subr.bf16.mxu0 %v5015
    %7098 = vmatpush1.bf16.msra.mxu0 %v5014
    %7099 = vmatprep.subr.bf16.mxu0 %v5027
    %7100 = vmatpush1.bf16.msra.mxu0 %v5026
    %7101 = vmatprep.mubr.bf16.mxu0 %v6694
    %7102 = vmatmul.mubr.bf16.gmra.mrb[0].mxu0 %v6691
    %v7103 = vpop.f32.mrb[0].mxu0
    %v7104 = vadd.f32 %v7063, %v7103
    %v7105 = vpop.f32.mrb[0].mxu0
    %v7106 = vadd.f32 %v7065, %v7105
    %v7107 = vpop.f32.mrb[0].mxu0
    %v7108 = vpop.f32.mrb[0].mxu0
    %7109 = vdwg.mxu0
    %7110 = vmatprep.subr.bf16.mxu0 %v4657
    %7111 = vmatpush1.bf16.msra.mxu0 %v4656
    %7112 = vmatprep.subr.bf16.mxu0 %v4669
    %7113 = vmatpush1.bf16.msra.mxu0 %v4668
    %7114 = vmatprep.subr.bf16.mxu0 %v4681
    %7115 = vmatpush1.bf16.msra.mxu0 %v4680
    %7116 = vmatprep.subr.bf16.mxu0 %v4693
    %7117 = vmatpush1.bf16.msra.mxu0 %v4692
    %7118 = vmatprep.subr.bf16.mxu0 %v4705
    %7119 = vmatpush1.bf16.msra.mxu0 %v4704
    %7120 = vmatprep.subr.bf16.mxu0 %v4717
    %7121 = vmatpush1.bf16.msra.mxu0 %v4716
    %7122 = vmatprep.subr.bf16.mxu0 %v4729
    %7123 = vmatpush1.bf16.msra.mxu0 %v4728
    %7124 = vmatprep.subr.bf16.mxu0 %v4741
    %7125 = vmatpush1.bf16.msra.mxu0 %v4740
    %7126 = vmatprep.subr.bf16.mxu0 %v4753
    %7127 = vmatpush1.bf16.msra.mxu0 %v4752
    %7128 = vmatprep.subr.bf16.mxu0 %v4765
    %7129 = vmatpush1.bf16.msra.mxu0 %v4764
    %7130 = vmatprep.subr.bf16.mxu0 %v4777
    %7131 = vmatpush1.bf16.msra.mxu0 %v4776
    %7132 = vmatprep.subr.bf16.mxu0 %v4789
    %7133 = vmatpush1.bf16.msra.mxu0 %v4788
    %7134 = vmatprep.subr.bf16.mxu0 %v4801
    %7135 = vmatpush1.bf16.msra.mxu0 %v4800
    %7136 = vmatprep.subr.bf16.mxu0 %v4813
    %7137 = vmatpush1.bf16.msra.mxu0 %v4812
    %7138 = vmatprep.subr.bf16.mxu0 %v4825
    %7139 = vmatpush1.bf16.msra.mxu0 %v4824
    %7140 = vmatprep.subr.bf16.mxu0 %v4837
    %7141 = vmatpush1.bf16.msra.mxu0 %v4836
    %7142 = vmatprep.mubr.bf16.mxu0 %v6688
    %7143 = vmatmul.mubr.bf16.gmra.mrb[0].mxu0 %v6685
    %v7144 = vpop.f32.mrb[0].mxu0
    %v7145 = vadd.f32 %v5459, %v7144
    %v7146 = vpop.f32.mrb[0].mxu0
    %v7147 = vadd.f32 %v5463, %v7146
    %v7148 = vpop.f32.mrb[0].mxu0
    %v7149 = vpop.f32.mrb[0].mxu0
    %7150 = vdwg.mxu0
    %7151 = vmatprep.subr.bf16.mxu0 %v4849
    %7152 = vmatpush1.bf16.msra.mxu0 %v4848
    %7153 = vmatprep.subr.bf16.mxu0 %v4861
    %7154 = vmatpush1.bf16.msra.mxu0 %v4860
    %7155 = vmatprep.subr.bf16.mxu0 %v4873
    %7156 = vmatpush1.bf16.msra.mxu0 %v4872
    %7157 = vmatprep.subr.bf16.mxu0 %v4885
    %7158 = vmatpush1.bf16.msra.mxu0 %v4884
    %7159 = vmatprep.subr.bf16.mxu0 %v4897
    %7160 = vmatpush1.bf16.msra.mxu0 %v4896
    %7161 = vmatprep.subr.bf16.mxu0 %v4909
    %7162 = vmatpush1.bf16.msra.mxu0 %v4908
    %7163 = vmatprep.subr.bf16.mxu0 %v4921
    %7164 = vmatpush1.bf16.msra.mxu0 %v4920
    %7165 = vmatprep.subr.bf16.mxu0 %v4933
    %7166 = vmatpush1.bf16.msra.mxu0 %v4932
    %7167 = vmatprep.subr.bf16.mxu0 %v4945
    %7168 = vmatpush1.bf16.msra.mxu0 %v4944
    %7169 = vmatprep.subr.bf16.mxu0 %v4957
    %7170 = vmatpush1.bf16.msra.mxu0 %v4956
    %7171 = vmatprep.subr.bf16.mxu0 %v4969
    %7172 = vmatpush1.bf16.msra.mxu0 %v4968
    %7173 = vmatprep.subr.bf16.mxu0 %v4981
    %7174 = vmatpush1.bf16.msra.mxu0 %v4980
    %7175 = vmatprep.subr.bf16.mxu0 %v4993
    %7176 = vmatpush1.bf16.msra.mxu0 %v4992
    %7177 = vmatprep.subr.bf16.mxu0 %v5005
    %7178 = vmatpush1.bf16.msra.mxu0 %v5004
    %7179 = vmatprep.subr.bf16.mxu0 %v5017
    %7180 = vmatpush1.bf16.msra.mxu0 %v5016
    %7181 = vmatprep.subr.bf16.mxu0 %v5029
    %7182 = vmatpush1.bf16.msra.mxu0 %v5028
    %7183 = vmatprep.mubr.bf16.mxu0 %v6694
    %7184 = vmatmul.mubr.bf16.gmra.mrb[0].mxu0 %v6691
    %v7185 = vpop.f32.mrb[0].mxu0
    %v7186 = vadd.f32 %v7145, %v7185
    %v7187 = vpop.f32.mrb[0].mxu0
    %v7188 = vadd.f32 %v7147, %v7187
    %v7189 = vpop.f32.mrb[0].mxu0
    %v7190 = vpop.f32.mrb[0].mxu0
    %7191 = vdwg.mxu0
    %v7196 = vrot.slane %v6776, 6
    %v7197 = vrot.slane %v6778, 6
    %v7198 = vrot.slane %v6858, 6
    %v7199 = vrot.slane %v6860, 6
    %v7204 = vadd.f32 %v2666, %v7196
    %v7205 = vadd.f32 %v2668, %v7197
    %v7206 = vadd.f32 %v2748, %v7198
    %v7207 = vadd.f32 %v2750, %v7199
    %v7208 = vxor.u32 %v7204, 2147483648
    %v7209 = vxor.u32 %v7205, 2147483648
    %v7210 = vxor.u32 %v7206, 2147483648
    %v7211 = vxor.u32 %v7207, 2147483648
    %v7212 = vmul.f32 %v7208, 1.442695
    %v7213 = vpow.pop %v7212
    %v7214 = vmul.f32 %v7209, 1.442695
    %v7215 = vpow.pop %v7214
    %v7216 = vmul.f32 %v7210, 1.442695
    %v7217 = vpow.pop %v7216
    %v7218 = vmul.f32 %v7211, 1.442695
    %v7219 = vpow.pop %v7218
    %v7220 = vadd.f32 %v7213, 1.0
    %v7221 = vadd.f32 %v7215, 1.0
    %v7222 = vadd.f32 %v7217, 1.0
    %v7223 = vadd.f32 %v7219, 1.0
    %v7224 = vrcp.pop %v7220
    %v7225 = vmul.f32 1.0, %v7224
    %v7226 = vrcp.pop %v7221
    %v7227 = vmul.f32 1.0, %v7226
    %v7228 = vrcp.pop %v7222
    %v7229 = vmul.f32 1.0, %v7228
    %v7230 = vrcp.pop %v7223
    %v7231 = vmul.f32 1.0, %v7230
    %v7236 = vrot.slane %v6940, 6
    %v7237 = vrot.slane %v6942, 6
    %v7238 = vrot.slane %v7022, 6
    %v7239 = vrot.slane %v7024, 6
    %v7244 = vadd.f32 %v2830, %v7236
    %v7245 = vadd.f32 %v2832, %v7237
    %v7246 = vadd.f32 %v2912, %v7238
    %v7247 = vadd.f32 %v2914, %v7239
    %v7248 = vxor.u32 %v7244, 2147483648
    %v7249 = vxor.u32 %v7245, 2147483648
    %v7250 = vxor.u32 %v7246, 2147483648
    %v7251 = vxor.u32 %v7247, 2147483648
    %v7252 = vmul.f32 %v7248, 1.442695
    %v7253 = vpow.pop %v7252
    %v7254 = vmul.f32 %v7249, 1.442695
    %v7255 = vpow.pop %v7254
    %v7256 = vmul.f32 %v7250, 1.442695
    %v7257 = vpow.pop %v7256
    %v7258 = vmul.f32 %v7251, 1.442695
    %v7259 = vpow.pop %v7258
    %v7260 = vadd.f32 %v7253, 1.0
    %v7261 = vadd.f32 %v7255, 1.0
    %v7262 = vadd.f32 %v7257, 1.0
    %v7263 = vadd.f32 %v7259, 1.0
    %v7264 = vrcp.pop %v7260
    %v7265 = vmul.f32 1.0, %v7264
    %v7266 = vrcp.pop %v7261
    %v7267 = vmul.f32 1.0, %v7266
    %v7268 = vrcp.pop %v7262
    %v7269 = vmul.f32 1.0, %v7268
    %v7270 = vrcp.pop %v7263
    %v7271 = vmul.f32 1.0, %v7270
    %v7276 = vrot.slane %v7104, 6
    %v7277 = vrot.slane %v7106, 6
    %v7278 = vrot.slane %v7186, 6
    %v7279 = vrot.slane %v7188, 6
    %v7284 = vmul.f32 %v7225, %v7276
    %v7285 = vmul.f32 %v7227, %v7277
    %v7286 = vmul.f32 %v7229, %v7278
    %v7287 = vmul.f32 %v7231, %v7279
    %v7288 = vadd.f32 %v2994, %v7284
    %v7289 = vadd.f32 %v2996, %v7285
    %v7290 = vadd.f32 %v3076, %v7286
    %v7291 = vadd.f32 %v3078, %v7287
    %v7292 = vtanh.pop %v7288
    %v7293 = vtanh.pop %v7289
    %v7294 = vtanh.pop %v7290
    %v7295 = vtanh.pop %v7291
    %v7296 = vsub.f32 1.0, %v7265
    %v7297 = vsub.f32 1.0, %v7267
    %v7298 = vsub.f32 1.0, %v7269
    %v7299 = vsub.f32 1.0, %v7271
    %v7300 = vmul.f32 %v7296, %v7292
    %v7301 = vmul.f32 %v7297, %v7293
    %v7302 = vmul.f32 %v7298, %v7294
    %v7303 = vmul.f32 %v7299, %v7295
    %v7308 = vrot.slane %v6676, 7
    %v7309 = vrot.slane %v6677, 7
    %v7310 = vrot.slane %v6678, 7
    %v7311 = vrot.slane %v6679, 7
    %v7316 = vmul.f32 %v7265, %v7308
    %v7317 = vmul.f32 %v7267, %v7309
    %v7318 = vmul.f32 %v7269, %v7310
    %v7319 = vmul.f32 %v7271, %v7311
    %v7320 = vadd.f32 %v7300, %v7316
    %v7321 = vadd.f32 %v7301, %v7317
    %v7322 = vadd.f32 %v7302, %v7318
    %v7323 = vadd.f32 %v7303, %v7319
    %v7324 = vld [vmem:[#allocation22] sm:$0xf]
    %v7325 = vld [vmem:[#allocation22 + $0x4] sm:$0xf]
    %v7326 = vld [vmem:[#allocation22 + $0x8] sm:$0xf]
    %v7327 = vld [vmem:[#allocation22 + $0xc] sm:$0xf]
    %v7328 = vld [vmem:[#allocation22 + $0x10] sm:$0xf]
    %v7329 = vld [vmem:[#allocation22 + $0x14] sm:$0xf]
    %v7330 = vld [vmem:[#allocation22 + $0x18] sm:$0xf]
    %v7331 = vld [vmem:[#allocation22 + $0x1c] sm:$0xf]
    %v7332 = vld [vmem:[#allocation22 + $0x20] sm:$0xf]
    %v7333 = vld [vmem:[#allocation22 + $0x24] sm:$0xf]
    %v7334 = vld [vmem:[#allocation22 + $0x28] sm:$0xf]
    %v7335 = vld [vmem:[#allocation22 + $0x2c] sm:$0xf]
    %v7336 = vld [vmem:[#allocation22 + $0x30] sm:$0xf]
    %v7337 = vld [vmem:[#allocation22 + $0x34] sm:$0xf]
    %v7338 = vld [vmem:[#allocation22 + $0x38] sm:$0xf]
    %v7339 = vld [vmem:[#allocation22 + $0x3c] sm:$0xf]
    %v7340 = vld [vmem:[#allocation22 + $0x40] sm:$0xf]
    %v7341 = vld [vmem:[#allocation22 + $0x44] sm:$0xf]
    %v7342 = vld [vmem:[#allocation22 + $0x48] sm:$0xf]
    %v7343 = vld [vmem:[#allocation22 + $0x4c] sm:$0xf]
    %v7344 = vld [vmem:[#allocation22 + $0x50] sm:$0xf]
    %v7345 = vld [vmem:[#allocation22 + $0x54] sm:$0xf]
    %v7346 = vld [vmem:[#allocation22 + $0x58] sm:$0xf]
    %v7347 = vld [vmem:[#allocation22 + $0x5c] sm:$0xf]
    %v7348 = vld [vmem:[#allocation22 + $0x60] sm:$0xf]
    %v7349 = vld [vmem:[#allocation22 + $0x64] sm:$0xf]
    %v7350 = vld [vmem:[#allocation22 + $0x68] sm:$0xf]
    %v7351 = vld [vmem:[#allocation22 + $0x6c] sm:$0xf]
    %v7352 = vld [vmem:[#allocation22 + $0x70] sm:$0xf]
    %v7353 = vld [vmem:[#allocation22 + $0x74] sm:$0xf]
    %v7354 = vld [vmem:[#allocation22 + $0x78] sm:$0xf]
    %v7355 = vld [vmem:[#allocation22 + $0x7c] sm:$0xf]
    %v7356 = vld [vmem:[#allocation22 + $0x80] sm:$0xf]
    %v7357 = vld [vmem:[#allocation22 + $0x84] sm:$0xf]
    %v7358 = vld [vmem:[#allocation22 + $0x88] sm:$0xf]
    %v7359 = vld [vmem:[#allocation22 + $0x8c] sm:$0xf]
    %v7360 = vld [vmem:[#allocation22 + $0x90] sm:$0xf]
    %v7361 = vld [vmem:[#allocation22 + $0x94] sm:$0xf]
    %v7362 = vld [vmem:[#allocation22 + $0x98] sm:$0xf]
    %v7363 = vld [vmem:[#allocation22 + $0x9c] sm:$0xf]
    %v7364 = vld [vmem:[#allocation22 + $0xa0] sm:$0xf]
    %v7365 = vld [vmem:[#allocation22 + $0xa4] sm:$0xf]
    %v7366 = vld [vmem:[#allocation22 + $0xa8] sm:$0xf]
    %v7367 = vld [vmem:[#allocation22 + $0xac] sm:$0xf]
    %v7368 = vld [vmem:[#allocation22 + $0xb0] sm:$0xf]
    %v7369 = vld [vmem:[#allocation22 + $0xb4] sm:$0xf]
    %v7370 = vld [vmem:[#allocation22 + $0xb8] sm:$0xf]
    %v7371 = vld [vmem:[#allocation22 + $0xbc] sm:$0xf]
    %v7372 = vld [vmem:[#allocation22 + $0xc0] sm:$0xf]
    %v7373 = vld [vmem:[#allocation22 + $0xc4] sm:$0xf]
    %v7374 = vld [vmem:[#allocation22 + $0xc8] sm:$0xf]
    %v7375 = vld [vmem:[#allocation22 + $0xcc] sm:$0xf]
    %v7376 = vld [vmem:[#allocation22 + $0xd0] sm:$0xf]
    %v7377 = vld [vmem:[#allocation22 + $0xd4] sm:$0xf]
    %v7378 = vld [vmem:[#allocation22 + $0xd8] sm:$0xf]
    %v7379 = vld [vmem:[#allocation22 + $0xdc] sm:$0xf]
    %v7380 = vld [vmem:[#allocation22 + $0xe0] sm:$0xf]
    %v7381 = vld [vmem:[#allocation22 + $0xe4] sm:$0xf]
    %v7382 = vld [vmem:[#allocation22 + $0xe8] sm:$0xf]
    %v7383 = vld [vmem:[#allocation22 + $0xec] sm:$0xf]
    %v7384 = vld [vmem:[#allocation22 + $0xf0] sm:$0xf]
    %v7385 = vld [vmem:[#allocation22 + $0xf4] sm:$0xf]
    %v7386 = vld [vmem:[#allocation22 + $0xf8] sm:$0xf]
    %v7387 = vld [vmem:[#allocation22 + $0xfc] sm:$0xf]
    %v7388 = vpack.c.bf16 %v7320, %v7320
    %v7389 = vpack.c.bf16 %v7321, %v7321
    %v7390 = vpack.c.bf16 %v7322, %v7322
    %v7391 = vpack.c.bf16 %v7323, %v7323
    %v7392 = vld [vmem:[#allocation24] sm:$0x1]
    %v7397 = vrot.slane %v7388, 1
    %v7398 = vrot.slane %v7389, 1
    %v7399 = vrot.slane %v7390, 1
    %v7400 = vrot.slane %v7391, 1
    %v7469 = vunpack.c.l.b16 %v7324
    %v7470 = vunpack.c.l.b16 %v7325
    %v7471 = vunpack.c.l.b16 %v7326
    %v7472 = vunpack.c.l.b16 %v7327
    %v7473 = vunpack.c.l.b16 %v7328
    %v7474 = vunpack.c.l.b16 %v7329
    %v7475 = vunpack.c.l.b16 %v7330
    %v7476 = vunpack.c.l.b16 %v7331
    %v7477 = vunpack.c.l.b16 %v7332
    %v7478 = vunpack.c.l.b16 %v7333
    %v7479 = vunpack.c.l.b16 %v7334
    %v7480 = vunpack.c.l.b16 %v7335
    %v7481 = vunpack.c.l.b16 %v7336
    %v7482 = vunpack.c.l.b16 %v7337
    %v7483 = vunpack.c.l.b16 %v7338
    %v7484 = vunpack.c.l.b16 %v7339
    %v7485 = vunpack.c.l.b16 %v7340
    %v7486 = vunpack.c.l.b16 %v7341
    %v7487 = vunpack.c.l.b16 %v7342
    %v7488 = vunpack.c.l.b16 %v7343
    %v7489 = vunpack.c.l.b16 %v7344
    %v7490 = vunpack.c.l.b16 %v7345
    %v7491 = vunpack.c.l.b16 %v7346
    %v7492 = vunpack.c.l.b16 %v7347
    %v7493 = vunpack.c.l.b16 %v7348
    %v7494 = vunpack.c.l.b16 %v7349
    %v7495 = vunpack.c.l.b16 %v7350
    %v7496 = vunpack.c.l.b16 %v7351
    %v7497 = vunpack.c.l.b16 %v7352
    %v7498 = vunpack.c.l.b16 %v7353
    %v7499 = vunpack.c.l.b16 %v7354
    %v7500 = vunpack.c.l.b16 %v7355
    %v7501 = vunpack.c.l.b16 %v7356
    %v7502 = vunpack.c.l.b16 %v7357
    %v7503 = vunpack.c.l.b16 %v7358
    %v7504 = vunpack.c.l.b16 %v7359
    %v7505 = vunpack.c.l.b16 %v7360
    %v7506 = vunpack.c.l.b16 %v7361
    %v7507 = vunpack.c.l.b16 %v7362
    %v7508 = vunpack.c.l.b16 %v7363
    %v7509 = vunpack.c.l.b16 %v7364
    %v7510 = vunpack.c.l.b16 %v7365
    %v7511 = vunpack.c.l.b16 %v7366
    %v7512 = vunpack.c.l.b16 %v7367
    %v7513 = vunpack.c.l.b16 %v7368
    %v7514 = vunpack.c.l.b16 %v7369
    %v7515 = vunpack.c.l.b16 %v7370
    %v7516 = vunpack.c.l.b16 %v7371
    %v7517 = vunpack.c.l.b16 %v7372
    %v7518 = vunpack.c.l.b16 %v7373
    %v7519 = vunpack.c.l.b16 %v7374
    %v7520 = vunpack.c.l.b16 %v7375
    %v7521 = vunpack.c.l.b16 %v7376
    %v7522 = vunpack.c.l.b16 %v7377
    %v7523 = vunpack.c.l.b16 %v7378
    %v7524 = vunpack.c.l.b16 %v7379
    %v7525 = vunpack.c.l.b16 %v7380
    %v7526 = vunpack.c.l.b16 %v7381
    %v7527 = vunpack.c.l.b16 %v7382
    %v7528 = vunpack.c.l.b16 %v7383
    %v7529 = vunpack.c.l.b16 %v7384
    %v7530 = vunpack.c.l.b16 %v7385
    %v7531 = vunpack.c.l.b16 %v7386
    %v7532 = vunpack.c.l.b16 %v7387
    %v7533 = vpack.c.b16 %v7470, %v7469
    %v7534 = vpack.c.b16 %v7472, %v7471
    %v7535 = vpack.c.b16 %v7474, %v7473
    %v7536 = vpack.c.b16 %v7476, %v7475
    %v7537 = vpack.c.b16 %v7478, %v7477
    %v7538 = vpack.c.b16 %v7480, %v7479
    %v7539 = vpack.c.b16 %v7482, %v7481
    %v7540 = vpack.c.b16 %v7484, %v7483
    %v7541 = vpack.c.b16 %v7486, %v7485
    %v7542 = vpack.c.b16 %v7488, %v7487
    %v7543 = vpack.c.b16 %v7490, %v7489
    %v7544 = vpack.c.b16 %v7492, %v7491
    %v7545 = vpack.c.b16 %v7494, %v7493
    %v7546 = vpack.c.b16 %v7496, %v7495
    %v7547 = vpack.c.b16 %v7498, %v7497
    %v7548 = vpack.c.b16 %v7500, %v7499
    %v7549 = vpack.c.b16 %v7502, %v7501
    %v7550 = vpack.c.b16 %v7504, %v7503
    %v7551 = vpack.c.b16 %v7506, %v7505
    %v7552 = vpack.c.b16 %v7508, %v7507
    %v7553 = vpack.c.b16 %v7510, %v7509
    %v7554 = vpack.c.b16 %v7512, %v7511
    %v7555 = vpack.c.b16 %v7514, %v7513
    %v7556 = vpack.c.b16 %v7516, %v7515
    %v7557 = vpack.c.b16 %v7518, %v7517
    %v7558 = vpack.c.b16 %v7520, %v7519
    %v7559 = vpack.c.b16 %v7522, %v7521
    %v7560 = vpack.c.b16 %v7524, %v7523
    %v7561 = vpack.c.b16 %v7526, %v7525
    %v7562 = vpack.c.b16 %v7528, %v7527
    %v7563 = vpack.c.b16 %v7530, %v7529
    %v7564 = vpack.c.b16 %v7532, %v7531
    %7597 = vmatprep.subr.bf16.mxu0 0
    %7598 = vmatpush1.bf16.msra.mxu0 %v7533
    %7599 = vmatprep.subr.bf16.mxu0 0
    %7600 = vmatpush1.bf16.msra.mxu0 %v7534
    %7601 = vmatprep.subr.bf16.mxu0 0
    %7602 = vmatpush1.bf16.msra.mxu0 %v7535
    %7603 = vmatprep.subr.bf16.mxu0 0
    %7604 = vmatpush1.bf16.msra.mxu0 %v7536
    %7605 = vmatprep.subr.bf16.mxu0 0
    %7606 = vmatpush1.bf16.msra.mxu0 %v7537
    %7607 = vmatprep.subr.bf16.mxu0 0
    %7608 = vmatpush1.bf16.msra.mxu0 %v7538
    %7609 = vmatprep.subr.bf16.mxu0 0
    %7610 = vmatpush1.bf16.msra.mxu0 %v7539
    %7611 = vmatprep.subr.bf16.mxu0 0
    %7612 = vmatpush1.bf16.msra.mxu0 %v7540
    %7613 = vmatprep.subr.bf16.mxu0 0
    %7614 = vmatpush1.bf16.msra.mxu0 %v7541
    %7615 = vmatprep.subr.bf16.mxu0 0
    %7616 = vmatpush1.bf16.msra.mxu0 %v7542
    %7617 = vmatprep.subr.bf16.mxu0 0
    %7618 = vmatpush1.bf16.msra.mxu0 %v7543
    %7619 = vmatprep.subr.bf16.mxu0 0
    %7620 = vmatpush1.bf16.msra.mxu0 %v7544
    %7621 = vmatprep.subr.bf16.mxu0 0
    %7622 = vmatpush1.bf16.msra.mxu0 %v7545
    %7623 = vmatprep.subr.bf16.mxu0 0
    %7624 = vmatpush1.bf16.msra.mxu0 %v7546
    %7625 = vmatprep.subr.bf16.mxu0 0
    %7626 = vmatpush1.bf16.msra.mxu0 %v7547
    %7627 = vmatprep.subr.bf16.mxu0 0
    %7628 = vmatpush1.bf16.msra.mxu0 %v7548
    %7629 = vmatprep.mubr.bf16.mxu0 %v7398
    %7630 = vmatmul.mubr.bf16.gmra.mrb[0].mxu0 %v7397
    %v7631 = vpop.f32.mrb[0].mxu0
    %v7632 = vadd.f32 %v7392, %v7631
    %v7633 = vpop.f32.mrb[0].mxu0
    %v7634 = vpop.f32.mrb[0].mxu0
    %v7635 = vpop.f32.mrb[0].mxu0
    %7636 = vdwg.mxu0
    %7637 = vmatprep.subr.bf16.mxu0 0
    %7638 = vmatpush1.bf16.msra.mxu0 %v7549
    %7639 = vmatprep.subr.bf16.mxu0 0
    %7640 = vmatpush1.bf16.msra.mxu0 %v7550
    %7641 = vmatprep.subr.bf16.mxu0 0
    %7642 = vmatpush1.bf16.msra.mxu0 %v7551
    %7643 = vmatprep.subr.bf16.mxu0 0
    %7644 = vmatpush1.bf16.msra.mxu0 %v7552
    %7645 = vmatprep.subr.bf16.mxu0 0
    %7646 = vmatpush1.bf16.msra.mxu0 %v7553
    %7647 = vmatprep.subr.bf16.mxu0 0
    %7648 = vmatpush1.bf16.msra.mxu0 %v7554
    %7649 = vmatprep.subr.bf16.mxu0 0
    %7650 = vmatpush1.bf16.msra.mxu0 %v7555
    %7651 = vmatprep.subr.bf16.mxu0 0
    %7652 = vmatpush1.bf16.msra.mxu0 %v7556
    %7653 = vmatprep.subr.bf16.mxu0 0
    %7654 = vmatpush1.bf16.msra.mxu0 %v7557
    %7655 = vmatprep.subr.bf16.mxu0 0
    %7656 = vmatpush1.bf16.msra.mxu0 %v7558
    %7657 = vmatprep.subr.bf16.mxu0 0
    %7658 = vmatpush1.bf16.msra.mxu0 %v7559
    %7659 = vmatprep.subr.bf16.mxu0 0
    %7660 = vmatpush1.bf16.msra.mxu0 %v7560
    %7661 = vmatprep.subr.bf16.mxu0 0
    %7662 = vmatpush1.bf16.msra.mxu0 %v7561
    %7663 = vmatprep.subr.bf16.mxu0 0
    %7664 = vmatpush1.bf16.msra.mxu0 %v7562
    %7665 = vmatprep.subr.bf16.mxu0 0
    %7666 = vmatpush1.bf16.msra.mxu0 %v7563
    %7667 = vmatprep.subr.bf16.mxu0 0
    %7668 = vmatpush1.bf16.msra.mxu0 %v7564
    %7669 = vmatprep.mubr.bf16.mxu0 %v7400
    %7670 = vmatmul.mubr.bf16.gmra.mrb[0].mxu0 %v7399
    %v7671 = vpop.f32.mrb[0].mxu0
    %v7672 = vadd.f32 %v7632, %v7671
    %v7673 = vpop.f32.mrb[0].mxu0
    %v7674 = vpop.f32.mrb[0].mxu0
    %v7675 = vpop.f32.mrb[0].mxu0
    %7676 = vdwg.mxu0
    %v7677 = vld [vmem:[%s13] sm:$0xf]
    %v7678 = vld [vmem:[%s13 + $0x4] sm:$0xf]
    %v7679 = vld [vmem:[%s13 + $0x8] sm:$0xf]
    %v7680 = vld [vmem:[%s13 + $0xc] sm:$0xf]
    %v7681 = vld [vmem:[%s13 + $0x10] sm:$0xf]
    %v7682 = vld [vmem:[%s13 + $0x14] sm:$0xf]
    %v7683 = vld [vmem:[%s13 + $0x18] sm:$0xf]
    %v7684 = vld [vmem:[%s13 + $0x1c] sm:$0xf]
    %v7685 = vld [vmem:[%s13 + $0x20] sm:$0xf]
    %v7686 = vld [vmem:[%s13 + $0x24] sm:$0xf]
    %v7687 = vld [vmem:[%s13 + $0x28] sm:$0xf]
    %v7688 = vld [vmem:[%s13 + $0x2c] sm:$0xf]
    %v7689 = vld [vmem:[%s13 + $0x30] sm:$0xf]
    %v7690 = vld [vmem:[%s13 + $0x34] sm:$0xf]
    %v7691 = vld [vmem:[%s13 + $0x38] sm:$0xf]
    %v7692 = vld [vmem:[%s13 + $0x3c] sm:$0xf]
    %v7693 = vld [vmem:[%s13 + $0x40] sm:$0xf]
    %v7694 = vld [vmem:[%s13 + $0x44] sm:$0xf]
    %v7695 = vld [vmem:[%s13 + $0x48] sm:$0xf]
    %v7696 = vld [vmem:[%s13 + $0x4c] sm:$0xf]
    %v7697 = vld [vmem:[%s13 + $0x50] sm:$0xf]
    %v7698 = vld [vmem:[%s13 + $0x54] sm:$0xf]
    %v7699 = vld [vmem:[%s13 + $0x58] sm:$0xf]
    %v7700 = vld [vmem:[%s13 + $0x5c] sm:$0xf]
    %v7701 = vld [vmem:[%s13 + $0x60] sm:$0xf]
    %v7702 = vld [vmem:[%s13 + $0x64] sm:$0xf]
    %v7703 = vld [vmem:[%s13 + $0x68] sm:$0xf]
    %v7704 = vld [vmem:[%s13 + $0x6c] sm:$0xf]
    %v7705 = vld [vmem:[%s13 + $0x70] sm:$0xf]
    %v7706 = vld [vmem:[%s13 + $0x74] sm:$0xf]
    %v7707 = vld [vmem:[%s13 + $0x78] sm:$0xf]
    %v7708 = vld [vmem:[%s13 + $0x7c] sm:$0xf]
    %v7709 = vpack.c.bf16 %v7672, %v7672
    %v7710 = vpack.c.bf16 %v787, %v787
    %v7711 = vld [vmem:[#allocation2] sm:$0x1]
    %v7744 = vunpack.c.l.b16 %v7677
    %v7745 = vunpack.c.l.b16 %v7678
    %v7746 = vunpack.c.l.b16 %v7679
    %v7747 = vunpack.c.l.b16 %v7680
    %v7748 = vunpack.c.l.b16 %v7681
    %v7749 = vunpack.c.l.b16 %v7682
    %v7750 = vunpack.c.l.b16 %v7683
    %v7751 = vunpack.c.l.b16 %v7684
    %v7752 = vunpack.c.l.b16 %v7685
    %v7753 = vunpack.c.l.b16 %v7686
    %v7754 = vunpack.c.l.b16 %v7687
    %v7755 = vunpack.c.l.b16 %v7688
    %v7756 = vunpack.c.l.b16 %v7689
    %v7757 = vunpack.c.l.b16 %v7690
    %v7758 = vunpack.c.l.b16 %v7691
    %v7759 = vunpack.c.l.b16 %v7692
    %v7760 = vunpack.c.l.b16 %v7693
    %v7761 = vunpack.c.l.b16 %v7694
    %v7762 = vunpack.c.l.b16 %v7695
    %v7763 = vunpack.c.l.b16 %v7696
    %v7764 = vunpack.c.l.b16 %v7697
    %v7765 = vunpack.c.l.b16 %v7698
    %v7766 = vunpack.c.l.b16 %v7699
    %v7767 = vunpack.c.l.b16 %v7700
    %v7768 = vunpack.c.l.b16 %v7701
    %v7769 = vunpack.c.l.b16 %v7702
    %v7770 = vunpack.c.l.b16 %v7703
    %v7771 = vunpack.c.l.b16 %v7704
    %v7772 = vunpack.c.l.b16 %v7705
    %v7773 = vunpack.c.l.b16 %v7706
    %v7774 = vunpack.c.l.b16 %v7707
    %v7775 = vunpack.c.l.b16 %v7708
    %v7776 = vpack.c.b16 %v7745, %v7744
    %v7777 = vpack.c.b16 %v7747, %v7746
    %v7778 = vpack.c.b16 %v7749, %v7748
    %v7779 = vpack.c.b16 %v7751, %v7750
    %v7780 = vpack.c.b16 %v7753, %v7752
    %v7781 = vpack.c.b16 %v7755, %v7754
    %v7782 = vpack.c.b16 %v7757, %v7756
    %v7783 = vpack.c.b16 %v7759, %v7758
    %v7784 = vpack.c.b16 %v7761, %v7760
    %v7785 = vpack.c.b16 %v7763, %v7762
    %v7786 = vpack.c.b16 %v7765, %v7764
    %v7787 = vpack.c.b16 %v7767, %v7766
    %v7788 = vpack.c.b16 %v7769, %v7768
    %v7789 = vpack.c.b16 %v7771, %v7770
    %v7790 = vpack.c.b16 %v7773, %v7772
    %v7791 = vpack.c.b16 %v7775, %v7774
    %7808 = vmatprep.subr.bf16.mxu0 0
    %7809 = vmatpush1.bf16.msra.mxu0 %v7776
    %7810 = vmatprep.subr.bf16.mxu0 0
    %7811 = vmatpush1.bf16.msra.mxu0 %v7777
    %7812 = vmatprep.subr.bf16.mxu0 0
    %7813 = vmatpush1.bf16.msra.mxu0 %v7778
    %7814 = vmatprep.subr.bf16.mxu0 0
    %7815 = vmatpush1.bf16.msra.mxu0 %v7779
    %7816 = vmatprep.subr.bf16.mxu0 0
    %7817 = vmatpush1.bf16.msra.mxu0 %v7780
    %7818 = vmatprep.subr.bf16.mxu0 0
    %7819 = vmatpush1.bf16.msra.mxu0 %v7781
    %7820 = vmatprep.subr.bf16.mxu0 0
    %7821 = vmatpush1.bf16.msra.mxu0 %v7782
    %7822 = vmatprep.subr.bf16.mxu0 0
    %7823 = vmatpush1.bf16.msra.mxu0 %v7783
    %7824 = vmatprep.subr.bf16.mxu0 0
    %7825 = vmatpush1.bf16.msra.mxu0 %v7784
    %7826 = vmatprep.subr.bf16.mxu0 0
    %7827 = vmatpush1.bf16.msra.mxu0 %v7785
    %7828 = vmatprep.subr.bf16.mxu0 0
    %7829 = vmatpush1.bf16.msra.mxu0 %v7786
    %7830 = vmatprep.subr.bf16.mxu0 0
    %7831 = vmatpush1.bf16.msra.mxu0 %v7787
    %7832 = vmatprep.subr.bf16.mxu0 0
    %7833 = vmatpush1.bf16.msra.mxu0 %v7788
    %7834 = vmatprep.subr.bf16.mxu0 0
    %7835 = vmatpush1.bf16.msra.mxu0 %v7789
    %7836 = vmatprep.subr.bf16.mxu0 0
    %7837 = vmatpush1.bf16.msra.mxu0 %v7790
    %7838 = vmatprep.subr.bf16.mxu0 0
    %7839 = vmatpush1.bf16.msra.mxu0 %v7791
    %7840 = vmatprep.mubr.bf16.mxu0 %v7710
    %7841 = vmatmul.mubr.bf16.gmra.mrb[0].mxu0 %v7709
    %v7842 = vpop.f32.mrb[0].mxu0
    %v7843 = vadd.f32 %v7711, %v7842
    %v7844 = vpop.f32.mrb[0].mxu0
    %v7845 = vpop.f32.mrb[0].mxu0
    %v7846 = vpop.f32.mrb[0].mxu0
    %7847 = vdwg.mxu0
    %v7848 = vpack.c.bf16 %v731, %v731
    %7849 = vmatprep.subr.bf16.mxu0 0
    %7850 = vmatpush1.bf16.xpose.msra.mxu0 %v7848
    %7851 = vmatprep.subr.bf16.mxu0 0
    %7852 = vmatpush1.bf16.xpose.msra.mxu0 0
    %7853 = vmatprep.subr.bf16.mxu0 0
    %7854 = vmatpush1.bf16.xpose.msra.mxu0 0
    %7855 = vmatprep.subr.bf16.mxu0 0
    %7856 = vmatpush1.bf16.xpose.msra.mxu0 0
    %7857 = vmatprep.subr.bf16.mxu0 0
    %7858 = vmatpush1.bf16.xpose.msra.mxu0 0
    %7859 = vmatprep.subr.bf16.mxu0 0
    %7860 = vmatpush1.bf16.xpose.msra.mxu0 0
    %7861 = vmatprep.subr.bf16.mxu0 0
    %7862 = vmatpush1.bf16.xpose.msra.mxu0 0
    %7863 = vmatprep.subr.bf16.mxu0 0
    %7864 = vmatpush1.bf16.xpose.msra.mxu0 0
    %7865 = vmatprep.subr.bf16.mxu0 0
    %7866 = vmatpush1.bf16.xpose.msra.mxu0 0
    %7867 = vmatprep.subr.bf16.mxu0 0
    %7868 = vmatpush1.bf16.xpose.msra.mxu0 0
    %7869 = vmatprep.subr.bf16.mxu0 0
    %7870 = vmatpush1.bf16.xpose.msra.mxu0 0
    %7871 = vmatprep.subr.bf16.mxu0 0
    %7872 = vmatpush1.bf16.xpose.msra.mxu0 0
    %7873 = vmatprep.subr.bf16.mxu0 0
    %7874 = vmatpush1.bf16.xpose.msra.mxu0 0
    %7875 = vmatprep.subr.bf16.mxu0 0
    %7876 = vmatpush1.bf16.xpose.msra.mxu0 0
    %7877 = vmatprep.subr.bf16.mxu0 0
    %7878 = vmatpush1.bf16.xpose.msra.mxu0 0
    %7879 = vmatprep.subr.bf16.mxu0 0
    %7880 = vmatpush1.bf16.xpose.msra.mxu0 0
    %7881 = vmatprep.mubr.bf16.mxu0 0
    %7882 = vmatmul.mubr.bf16.gmra.mrb[0].mxu0 %v7709
    %v7883 = vpop.f32.mrb[0].mxu0
    %v7884 = vadd.f32 0.0, %v7883
    %v7885 = vpop.f32.mrb[0].mxu0
    %v7886 = vpop.f32.mrb[0].mxu0
    %v7887 = vpop.f32.mrb[0].mxu0
    %7888 = vdwg.mxu0
    %v7889 = vlaneseq
    %v7890 = vand.u32 %v7889, 127
    %vm7891 = vcmp.lt.s32.totalorder %v7890, %v779
    %v7892 = vsel %vm7891, %v7884, -inf
    %vm7893 = vcmask 57344
    %v7894 = vsel %vm7893, %v7892, -inf
    %7895 = vmax.xlane.f32.xlu0 %v7894
    %v7896 = vpop.xlane.xlu0 %7895
    %v7897 = vmax.f32 %v7843, %v7896
    %v7898 = vsub.f32 %v7843, %v7897
    %v7899 = vmul.f32 %v7898, 1.442695
    %v7900 = vpow.pop %v7899
    %7902 = vset.pattern.permute.xlu0 0
    %7903 = vperm.xlu0 %7902, %v7897
    %v7904 = vpop.permute.xlu0 %7903
    %v7906 = vsub.f32 %v7892, %v7904
    %v7907 = vmul.f32 %v7906, 1.442695
    %v7908 = vpow.pop %v7907
    %v7909 = vsel %vm7891, %v7908, 0.0
    %v7910 = vsel %vm7893, %v7909, 0.0
    %7911 = vadd.xlane.f32.xlu0 %v7910
    %v7912 = vpop.xlane.xlu0 %7911
    %v7913 = vadd.f32 %v7900, %v7912
    %v7914 = vrcp.pop %v7913
    %v7915 = vmul.f32 %v7900, %v7914
    %7917 = vset.pattern.permute.xlu0 0
    %7918 = vperm.xlu0 %7917, %v7914
    %v7919 = vpop.permute.xlu0 %7918
    %v7921 = vmul.f32 %v7909, %v7919
    %7923 = vrot.lane.b32.xlu0 %v7921, 1
    %v7924 = vpop.permute.xlu0 %7923
    %vm7926 = vcmask 7168
    %v7927 = vsel %vm7926, %v7915, %v7924
    %vm7928 = vcmask 72704
    %v7929 = vsel %vm7928, %v7927, 0.0
    %7930 = vst [vmem:[#allocation25] sm:$0x1] %v7929
    // Predicated region
    $region114: #{tpu_custom_call.1} parent=1 // pred_check
      _
    $region115: #{tpu_custom_call.1} parent=1 // pred_check_branch
      %7932 = sbr.rel (0) target = $region117
    $region116: #{tpu_custom_call.1} parent=1 // pred_region
      %s7934 = ssub.s32 16, 16
      %7935 = vsyncadd [#allocation5], %s7934
      %s7937 = sshll.u32 [#allocation25], 4
      %s7938 = int_to_ptr.vmem [resolvable:$true] %s7937
      %7940 = dma.vmem_to_hbm [thread:$0]  %s7938, 16, %s15, [#allocation5]
    $region117: #{tpu_custom_call.1} parent=1 // pred_fallthru
      _
    // Predicated region
    $region118: #{tpu_custom_call.1} parent=1 // pred_check
      _
    $region119: #{tpu_custom_call.1} parent=1 // pred_check_branch
      %7942 = sbr.rel (0) target = $region121
    $region120: #{tpu_custom_call.1} parent=1 // pred_region
      %7943 = dma.done [#allocation5], 16
    $region121: #{tpu_custom_call.1} parent=1 // pred_fallthru
      _
    %7944 = vsyncpa [#allocation4], 1
    %7945 = vsyncpa [#allocation11], 1
    %7946 = vsyncpa [#allocation14], 1
    %7947 = vsyncpa [#allocation17], 1
    %7948 = vsyncpa [#allocation20], 1
    %7949 = vsyncpa [#allocation23], 1
    %7950 = vsyncpa [#allocation5], 1
    %7951 = vsyncpa [#allocation6], 1
    %7952 = vsyncpa [#allocation8], 1

</llo_original>
